<compile_context>
chip_gen: v6e
topology: v6e:2x2x1
jax: 0.10.0
libtpu: 0.0.40
codegen_flags: <defaults>
</compile_context>

<pallas_src>
import functools

import numpy as np
import jax
import jax.numpy as jnp
from jax import lax
from jax.experimental import pallas as pl
from jax.experimental.pallas import tpu as pltpu

BN_EPS = 1e-5
LRELU_SLOPE = 0.2
LANE = 128

# (kernel_size, in_c, out_c, avgpool_before)  -- unrolled nn.Sequential layers 1..5
_CONV_DEFS = [
    (5, 6, 16, None),      # layer1
    (3, 16, 32, 4),        # layer2: AvgPool(4) + conv
    (3, 32, 32, None),
    (3, 32, 64, 2),        # layer3
    (3, 64, 64, None),
    (3, 64, 128, 2),       # layer4
    (3, 128, 128, None),
    (3, 128, 256, 2),      # layer5
    (3, 256, 256, None),
]


# ---------------------------------------------------------------- Pallas kernel

def _leaky(y, slope):
    return jnp.maximum(y, slope * y)


def _disc_kernel(*refs, num_blocks, slope):
    """Entire Discriminator forward for b_tile images (one grid step).

    Activation layout everywhere: rows = stacked image heights (with zero pad
    rows between / around images), lanes = width*channels (x-major,
    channel-minor).  Each 3x3 conv is ONE matmul over an in-VMEM row-im2col;
    AvgPool + garbage-row drop + re-pad is one tiny PV matmul per block.
    """
    n_in = 3 + 6 * num_blocks + 2
    in_refs, o_ref, scratch = refs[:n_in], refs[n_in], refs[n_in + 1:]

    it = iter(in_refs)
    x_ref = next(it)       # [B*(H+2*p1), W*Cin]  f32  (per-image padded, stacked)
    w1_ref = next(it)      # [kh1, W*Cin, W*C1]   bf16 (BN scale folded in)
    s1_ref = next(it)      # [1, W*C1]            f32

    # One-time init: the first / last row of each conv_b pad buffer is never
    # written by the per-step stores; every other row is fully rewritten each
    # grid step, so zero the buffers only once.
    @pl.when(pl.program_id(0) == 0)
    def _init():
        for blk in range(num_blocks):
            buf_b = scratch[4 * blk + 2]
            buf_b[...] = jnp.zeros(buf_b.shape, buf_b.dtype)

    # ---- layer1: 5x5 conv as kh banded taps (its lane width W*Cin is not a
    # multiple of 128, so a lane-concat im2col would mis-tile; these are the
    # largest-M matmuls in the net anyway).
    kh1 = w1_ref.shape[0]
    m1 = x_ref.shape[0] - (kh1 - 1)
    acc = jnp.dot(x_ref[pl.ds(0, m1), :].astype(jnp.bfloat16), w1_ref[0],
                  preferred_element_type=jnp.float32)
    for dy in range(1, kh1):
        acc = acc + jnp.dot(x_ref[pl.ds(dy, m1), :].astype(jnp.bfloat16),
                            w1_ref[dy], preferred_element_type=jnp.float32)
    h = _leaky(acc + s1_ref[...], slope)                    # [m1, W*C1] f32

    # ---- layers 2..5: AvgPool + 2x (conv3x3 + BN + LeakyReLU), all in VMEM
    for blk in range(num_blocks):
        pv_ref = next(it)    # [B*(Hk+2), m_prev]  f32  pool+select+re-pad matrix
        wa_ref = next(it)    # [3*Wp*Cp, Wk*Ca]    bf16 (pool_h folded in)
        sa_ref = next(it)    # [1, Wk*Ca]          f32
        wb_ref = next(it)    # [3*Wk*Ca, Wk*Cb]    bf16
        sb_ref = next(it)    # [1, Wk*Cb]          f32
        msk_ref = next(it)   # [B*(Hk+2)-2, 1]     f32  valid-row mask
        buf_a, col_a, buf_b, col_b = scratch[4 * blk:4 * blk + 4]

        rows = buf_a.shape[0]            # B*(Hk+2)
        m = rows - 2

        # Vertical AvgPool + drop inter-image garbage rows + insert zero pad
        # rows, all in one tiny f32 matmul; PV's zero rows write the pads, so
        # no zeroing of buf_a is ever needed.
        buf_a[...] = jnp.dot(pv_ref[...], h, preferred_element_type=jnp.float32)

        # conv_a (horizontal pooling folded into the weight) as ONE matmul
        # over an in-VMEM row-im2col (bf16, 128-aligned lane blocks).
        wca = buf_a.shape[1]
        for dy in range(3):
            col_a[:, dy * wca:(dy + 1) * wca] = (
                buf_a[pl.ds(dy, m), :].astype(jnp.bfloat16))
        a = jnp.dot(col_a[...], wa_ref[...], preferred_element_type=jnp.float32)
        a = _leaky(a + sa_ref[...], slope) * msk_ref[...]

        # The masked (zeroed) garbage rows land exactly on the interior pad
        # rows, so one shifted f32 store re-pads every image at once.
        buf_b[pl.ds(1, m), :] = a

        # conv_b as ONE matmul over the row-im2col of buf_b.
        wcb = buf_b.shape[1]
        for dy in range(3):
            col_b[:, dy * wcb:(dy + 1) * wcb] = (
                buf_b[pl.ds(dy, m), :].astype(jnp.bfloat16))
        h = jnp.dot(col_b[...], wb_ref[...], preferred_element_type=jnp.float32)
        h = _leaky(h + sb_ref[...], slope)

    # ---- layer6 (1x1 conv) head: one lane-padded matmul, full lane-dense
    # store; inter-image garbage rows are dropped by the wrapper.
    wh_ref = next(it)        # [W5*C5, 128] bf16
    bh_ref = next(it)        # [1, 128]     f32
    o_ref[...] = jnp.dot(h.astype(jnp.bfloat16), wh_ref[...],
                         preferred_element_type=jnp.float32) + bh_ref[...]


# --------------------------------------------------------- parameter preparation

def _fold_bn(p):
    """Fold eval-mode BatchNorm (+ conv bias) into a weight scale and a shift."""
    scale = p["gamma"] / jnp.sqrt(p["var"] + BN_EPS)
    shift = p["beta"] + (p["b"] - p["mean"]) * scale
    return p["w"] * scale[None, None, None, :], shift


def _band_conv_weight(w_hwio, width):
    """[kh,kw,cin,cout] -> [kh, width*cin, width*cout] banded matrices so that
    out_row[y] = sum_dy in_row_padded[y+dy] @ W[dy] implements a SAME conv
    (horizontal zero padding folded into the band structure)."""
    kh, kw, cin, cout = w_hwio.shape
    pw = (kw - 1) // 2
    xi = jnp.arange(width)[:, None]
    xo = jnp.arange(width)[None, :]
    dd = jnp.arange(kw)[:, None, None] - pw
    sel = ((xi - xo)[None, :, :] == dd).astype(w_hwio.dtype)        # [kw, W, W]
    big = jnp.einsum('kio,dkcf->dicof', sel, w_hwio)                # [kh,W,ci,W,co]
    return big.reshape(kh, width * cin, width * cout)


def _pool_h(w_in, c, p):
    """Horizontal AvgPool as a [w_in*c, (w_in//p)*c] matrix (channel-minor)."""
    xi = jnp.arange(w_in)[:, None]
    xo = jnp.arange(w_in // p)[None, :]
    sel = ((xi // p) == xo).astype(jnp.float32) / p                 # [W_in, W']
    big = jnp.einsum('io,cf->icof', sel, jnp.eye(c, dtype=jnp.float32))
    return big.reshape(w_in * c, (w_in // p) * c)


def _pool_select_repad(b_tile, h_in, pool, src_period):
    """Matrix that (a) picks each image's valid rows out of the previous conv's
    output (valid rows of image b sit at b*src_period + y), (b) average-pools
    them vertically by `pool`, and (c) re-inserts one zero pad row above and
    below each image for the next 3x3 conv."""
    h_out = h_in // pool
    m_src = b_tile * src_period - (src_period - h_in)
    pv = np.zeros((b_tile * (h_out + 2), m_src), np.float32)
    for b in range(b_tile):
        for yo in range(h_out):
            r = b * (h_out + 2) + 1 + yo
            for j in range(pool):
                pv[r, b * src_period + yo * pool + j] = 1.0 / pool
    return jnp.asarray(pv)


def _mask_valid_rows(b_tile, hk):
    """[B*(hk+2)-2, 1] mask: 1 on each image's valid conv output rows,
    0 on the inter-image garbage rows."""
    per = hk + 2
    m = b_tile * per - 2
    msk = np.zeros((m, 1), np.float32)
    for b in range(b_tile):
        msk[b * per:b * per + hk] = 1.0
    return jnp.asarray(msk)


def prepare_params(params, height, width, b_tile):
    """One-time prep: fold BN, build banded / pool-folded conv matrices (bf16),
    the per-block pool+select+repad matrices and valid-row masks."""
    conv_ps = params[:-1]
    p1 = conv_ps[0]
    w1, s1 = _fold_bn(p1)
    kh1 = p1["w"].shape[0]
    prep = {
        "b_tile": b_tile,
        "kh1": kh1,
        "w1": _band_conv_weight(w1, width).astype(jnp.bfloat16),
        "s1": jnp.tile(s1, (width,)).reshape(1, -1).astype(jnp.float32),
    }
    h_cur, w_cur, c_cur = height, width, p1["w"].shape[-1]
    src_period = height + (kh1 - 1)            # layer1 output row period / image

    blocks = []
    i = 1
    while i < len(conv_ps):
        pa, pb = conv_ps[i], conv_ps[i + 1]
        pool = _CONV_DEFS[i][3]
        pv = _pool_select_repad(b_tile, h_cur, pool, src_period)
        h_new, w_new = h_cur // pool, w_cur // pool
        ph = _pool_h(w_cur, c_cur, pool)                      # [Wc, W'c]
        wa, sa = _fold_bn(pa)
        ca = pa["w"].shape[-1]
        wa_band = _band_conv_weight(wa, w_new)                # [3, W'c, W'ca]
        wa_fold = jnp.einsum('ij,djk->dik', ph, wa_band)      # [3, Wc, W'ca]
        wb, sb = _fold_bn(pb)
        cb = pb["w"].shape[-1]
        wb_band = _band_conv_weight(wb, w_new)                # [3, W'ca, W'cb]
        blocks.append({
            "pv": pv,
            "wa": wa_fold.reshape(3 * w_cur * c_cur, w_new * ca).astype(jnp.bfloat16),
            "sa": jnp.tile(sa, (w_new,)).reshape(1, -1).astype(jnp.float32),
            "wb": wb_band.reshape(3 * w_new * ca, w_new * cb).astype(jnp.bfloat16),
            "sb": jnp.tile(sb, (w_new,)).reshape(1, -1).astype(jnp.float32),
            "msk": _mask_valid_rows(b_tile, h_new),
        })
        h_cur, w_cur, c_cur = h_new, w_new, cb
        src_period = h_cur + 2
        i += 2
    prep["blocks"] = blocks

    # layer6: Conv2d(256, 1, 1) fused into the same kernel, lane-padded to 128
    p6 = params[-1]
    w6 = p6["w"].reshape(p6["w"].shape[2], p6["w"].shape[3])        # [256, 1]
    eye_w = jnp.eye(w_cur, dtype=w6.dtype)
    wh = jnp.einsum('io,cf->icof', eye_w, w6).reshape(w_cur * w6.shape[0],
                                                      w_cur * w6.shape[1])
    ncol = wh.shape[1]
    ncol_pad = max(LANE, -(-ncol // LANE) * LANE)
    prep["wh"] = jnp.pad(wh, ((0, 0), (0, ncol_pad - ncol))).astype(jnp.bfloat16)
    bh = jnp.tile(p6["b"], (w_cur,))
    prep["bh"] = jnp.pad(bh, (0, ncol_pad - ncol)).reshape(1, ncol_pad).astype(jnp.float32)
    prep["h_out"] = h_cur
    prep["w_out"] = w_cur
    return prep


# -------------------------------------------------------------------- forward

def discriminator_forward(prep, x_nchw, x1_nchw):
    b_tile = prep["b_tile"]
    kh1 = prep["kh1"]
    blocks = prep["blocks"]
    num_blocks = len(blocks)

    x = jnp.concatenate([x_nchw, x1_nchw], axis=1)          # torch.cat((x, x1), dim=1)
    n, c_in, height, width = x.shape
    assert height % 32 == 0 and width % 32 == 0
    assert prep["w1"].shape[1] == width * c_in

    # pad the batch up to a multiple of the per-grid-step image tile
    n_pad = -(-n // b_tile) * b_tile
    if n_pad != n:
        x = jnp.pad(x, ((0, n_pad - n), (0, 0), (0, 0), (0, 0)))
    g = n_pad // b_tile

    # NCHW -> NHWC -> [N, H, W*C]; per-image vertical zero padding for the 5x5
    # conv also provides >= kh-1 zero separator rows between the b_tile images
    # stacked per grid step.  Kept f32 so the banded tap reads stay on a
    # 32-bit (unpacked) ref; the streamed block is only ~55 KiB/step here.
    p1 = (kh1 - 1) // 2
    x = jnp.transpose(x, (0, 2, 3, 1)).reshape(n_pad, height, width * c_in)
    x = jnp.pad(x, ((0, 0), (p1, p1), (0, 0)))
    rows_grp = b_tile * (height + 2 * p1)
    x = x.reshape(g, rows_grp, width * c_in).astype(jnp.float32)

    inputs = [x, prep["w1"], prep["s1"]]
    for blk in blocks:
        inputs += [blk["pv"], blk["wa"], blk["sa"], blk["wb"], blk["sb"], blk["msk"]]
    inputs += [prep["wh"], prep["bh"]]

    def _const_spec(a):                 # full array resident in VMEM every step
        nd = a.ndim
        # TODO(synk): pipeline_mode=pl.Buffered(1) would single-buffer these
        # never-refetched weights (halves weight VMEM, matters on v7x at
        # higher resolutions); left at the default for version compatibility.
        return pl.BlockSpec(a.shape, lambda i, _nd=nd: (0,) * _nd)

    in_specs = [pl.BlockSpec((None, rows_grp, width * c_in), lambda i: (i, 0, 0))]
    in_specs += [_const_spec(a) for a in inputs[1:]]

    h_out, w_out = prep["h_out"], prep["w_out"]
    ncol_pad = prep["wh"].shape[1]
    m5 = b_tile * (h_out + 2) - 2            # head rows incl. inter-image garbage
    out_specs = pl.BlockSpec((None, m5, ncol_pad), lambda i: (i, 0, 0))
    out_shape = jax.ShapeDtypeStruct((g, m5, ncol_pad), jnp.float32)

    # per block: f32 padded activation buffer + bf16 row-im2col buffer, x2 convs
    scratch = []
    for blk in blocks:
        rows = blk["pv"].shape[0]            # b_tile * (Hk + 2)
        ka = blk["wa"].shape[0]              # 3 * W_prev * C_prev
        kb = blk["wb"].shape[0]              # 3 * Wk * Ca
        scratch += [pltpu.VMEM((rows, ka // 3), jnp.float32),        # buf_a
                    pltpu.VMEM((rows - 2, ka), jnp.bfloat16),        # col_a
                    pltpu.VMEM((rows, kb // 3), jnp.float32),        # buf_b
                    pltpu.VMEM((rows - 2, kb), jnp.bfloat16)]        # col_b

    # rough flop / byte estimate so XLA can schedule neighbours around the call
    flops = 0
    hh, ww = height, width
    for (ks, ci, co, pool) in _CONV_DEFS:
        if pool:
            hh //= pool
            ww //= pool
        flops += 2 * hh * ww * co * ks * ks * ci
    flops += 2 * hh * ww * 256                                     # 1x1 head
    flops *= n_pad
    bytes_accessed = (x.size * x.dtype.itemsize
                      + sum(int(np.prod(a.shape)) * a.dtype.itemsize
                            for a in inputs[1:])
                      + g * m5 * ncol_pad * 4)

    out = pl.pallas_call(
        functools.partial(_disc_kernel, num_blocks=num_blocks, slope=LRELU_SLOPE),
        out_shape=out_shape,
        grid=(g,),
        in_specs=in_specs,
        out_specs=out_specs,
        scratch_shapes=scratch,
        compiler_params=pltpu.CompilerParams(
            dimension_semantics=("parallel",),          # image-tiles across cores
            vmem_limit_bytes=32 * 1024 * 1024),
        cost_estimate=pl.CostEstimate(flops=int(flops), transcendentals=0,
                                      bytes_accessed=int(bytes_accessed)),
    )(*inputs)

    # drop the inter-image garbage rows / lane padding and restore NCHW
    valid_idx = (np.arange(b_tile)[:, None] * (h_out + 2)
                 + np.arange(h_out)[None, :]).reshape(-1)
    out = out[:, valid_idx, :]                               # [g, b_tile*h_out, 128]
    out = out.reshape(n_pad, h_out, ncol_pad)[:n, :, :w_out]
    return out.reshape(n, h_out, w_out, 1).transpose(0, 3, 1, 2)   # NCHW, C=1


# ----------------------------------------------------------------- parameters

def init_params(key):
    params = []
    for (ks, cin, cout, _pool) in _CONV_DEFS:
        key, kw_, kb, kg, kbe, km, kv = jax.random.split(key, 7)
        fan_in = ks * ks * cin
        params.append(dict(
            w=jax.random.normal(kw_, (ks, ks, cin, cout), jnp.float32) / jnp.sqrt(fan_in),
            b=0.1 * jax.random.normal(kb, (cout,), jnp.float32),
            gamma=1.0 + 0.1 * jax.random.normal(kg, (cout,), jnp.float32),
            beta=0.1 * jax.random.normal(kbe, (cout,), jnp.float32),
            mean=0.1 * jax.random.normal(km, (cout,), jnp.float32),
            var=1.0 + 0.1 * jnp.abs(jax.random.normal(kv, (cout,), jnp.float32)),
        ))
    # layer6: Conv2d(256, 1, kernel_size=1) -- bias only, no BN, no activation
    key, kw_, kb = jax.random.split(key, 3)
    params.append(dict(
        w=jax.random.normal(kw_, (1, 1, 256, 1), jnp.float32) / jnp.sqrt(256.0),
        b=0.1 * jax.random.normal(kb, (1,), jnp.float32),
    ))
    return params


# ------------------------------------------------------------------ reference

def _ref_forward(params, x_nchw, x1_nchw):
    """Pure-JAX reference (lax.conv, f32 HIGHEST) for correctness checking."""
    x = jnp.concatenate([x_nchw, x1_nchw], axis=1)
    h = jnp.transpose(x, (0, 2, 3, 1))
    dn = ("NHWC", "HWIO", "NHWC")
    for p, (_ks, _cin, _cout, pool) in zip(params[:-1], _CONV_DEFS):
        if pool is not None:
            n_, hh, ww, cc = h.shape
            h = h.reshape(n_, hh // pool, pool, ww // pool, pool, cc).mean(axis=(2, 4))
        h = lax.conv_general_dilated(h, p["w"], (1, 1), "SAME",
                                     dimension_numbers=dn,
                                     precision=lax.Precision.HIGHEST) + p["b"]
        h = (h - p["mean"]) / jnp.sqrt(p["var"] + BN_EPS) * p["gamma"] + p["beta"]
        h = jnp.where(h >= 0, h, LRELU_SLOPE * h)
    p6 = params[-1]
    h = lax.conv_general_dilated(h, p6["w"], (1, 1), "SAME",
                                 dimension_numbers=dn,
                                 precision=lax.Precision.HIGHEST) + p6["b"]
    return jnp.transpose(h, (0, 3, 1, 2))


if __name__ == "__main__":
    key = jax.random.PRNGKey(0)
    kp, kx, kx1 = jax.random.split(key, 3)
    params = init_params(kp)

    # SMALL shapes: batch=2, 3+3 channels (concat -> 6), 32x32 spatial
    # (the net downsamples by 32 -> final map is 1x1).
    x = jax.random.normal(kx, (2, 3, 32, 32), jnp.float32)
    x1 = jax.random.normal(kx1, (2, 3, 32, 32), jnp.float32)

    # One-time prep; b_tile images share a grid step (batch folded into M).
    prep = prepare_params(params, 32, 32, b_tile=2)

    fwd = jax.jit(lambda a, b: discriminator_forward(prep, a, b))
    out = fwd(x, x1)
    jax.block_until_ready(out)
    assert out.shape == (2, 1, 1, 1), out.shape

    ref = jax.jit(_ref_forward)(params, x, x1)
    max_ref = float(jnp.max(jnp.abs(ref)))
    err = float(jnp.max(jnp.abs(out - ref)))
    tol = 1e-1 * max(1.0, max_ref)                 # bf16 MXU inputs, f32 accumulation
    if err > tol:
        raise AssertionError(f"Pallas vs reference mismatch: max abs err {err} (tol {tol})")

    print("KERNEL_OK")
</pallas_src>

<mosaic_0001>
module attributes {stable_mosaic.version = 11 : i64} {
  func.func @_disc_kernel(%arg0: i32, %arg1: memref<1x72x192xf32, #tpu.memory_space<vmem>>, %arg2: memref<5x192x512xbf16, #tpu.memory_space<vmem>>, %arg3: memref<1x512xf32, #tpu.memory_space<vmem>>, %arg4: memref<20x68xf32, #tpu.memory_space<vmem>>, %arg5: memref<1536x256xbf16, #tpu.memory_space<vmem>>, %arg6: memref<1x256xf32, #tpu.memory_space<vmem>>, %arg7: memref<768x256xbf16, #tpu.memory_space<vmem>>, %arg8: memref<1x256xf32, #tpu.memory_space<vmem>>, %arg9: memref<18x1xf32, #tpu.memory_space<vmem>>, %arg10: memref<12x18xf32, #tpu.memory_space<vmem>>, %arg11: memref<768x256xbf16, #tpu.memory_space<vmem>>, %arg12: memref<1x256xf32, #tpu.memory_space<vmem>>, %arg13: memref<768x256xbf16, #tpu.memory_space<vmem>>, %arg14: memref<1x256xf32, #tpu.memory_space<vmem>>, %arg15: memref<10x1xf32, #tpu.memory_space<vmem>>, %arg16: memref<8x10xf32, #tpu.memory_space<vmem>>, %arg17: memref<768x256xbf16, #tpu.memory_space<vmem>>, %arg18: memref<1x256xf32, #tpu.memory_space<vmem>>, %arg19: memref<768x256xbf16, #tpu.memory_space<vmem>>, %arg20: memref<1x256xf32, #tpu.memory_space<vmem>>, %arg21: memref<6x1xf32, #tpu.memory_space<vmem>>, %arg22: memref<6x6xf32, #tpu.memory_space<vmem>>, %arg23: memref<768x256xbf16, #tpu.memory_space<vmem>>, %arg24: memref<1x256xf32, #tpu.memory_space<vmem>>, %arg25: memref<768x256xbf16, #tpu.memory_space<vmem>>, %arg26: memref<1x256xf32, #tpu.memory_space<vmem>>, %arg27: memref<4x1xf32, #tpu.memory_space<vmem>>, %arg28: memref<256x128xbf16, #tpu.memory_space<vmem>>, %arg29: memref<1x128xf32, #tpu.memory_space<vmem>>, %arg30: memref<1x4x128xf32, #tpu.memory_space<vmem>>, %arg31: memref<20x512xf32, #tpu.memory_space<vmem>>, %arg32: memref<18x1536xbf16, #tpu.memory_space<vmem>>, %arg33: memref<20x256xf32, #tpu.memory_space<vmem>>, %arg34: memref<18x768xbf16, #tpu.memory_space<vmem>>, %arg35: memref<12x256xf32, #tpu.memory_space<vmem>>, %arg36: memref<10x768xbf16, #tpu.memory_space<vmem>>, %arg37: memref<12x256xf32, #tpu.memory_space<vmem>>, %arg38: memref<10x768xbf16, #tpu.memory_space<vmem>>, %arg39: memref<8x256xf32, #tpu.memory_space<vmem>>, %arg40: memref<6x768xbf16, #tpu.memory_space<vmem>>, %arg41: memref<8x256xf32, #tpu.memory_space<vmem>>, %arg42: memref<6x768xbf16, #tpu.memory_space<vmem>>, %arg43: memref<6x256xf32, #tpu.memory_space<vmem>>, %arg44: memref<4x768xbf16, #tpu.memory_space<vmem>>, %arg45: memref<6x256xf32, #tpu.memory_space<vmem>>, %arg46: memref<4x768xbf16, #tpu.memory_space<vmem>>) attributes {dimension_semantics = [#tpu.dimension_semantics<parallel>], iteration_bounds = array<i64: 1>, scalar_prefetch = 0 : i64, scratch_operands = 16 : i64, tpu.core_type = #tpu.core_type<tc>, window_params = [{transform_indices = @transform_0, window_bounds = array<i64: 1, 72, 192>}, {pipeline_mode = #tpu.pipeline_mode<synchronous>, transform_indices = @transform_1, window_bounds = array<i64: 5, 192, 512>}, {pipeline_mode = #tpu.pipeline_mode<synchronous>, transform_indices = @transform_2, window_bounds = array<i64: 1, 512>}, {pipeline_mode = #tpu.pipeline_mode<synchronous>, transform_indices = @transform_3, window_bounds = array<i64: 20, 68>}, {pipeline_mode = #tpu.pipeline_mode<synchronous>, transform_indices = @transform_4, window_bounds = array<i64: 1536, 256>}, {pipeline_mode = #tpu.pipeline_mode<synchronous>, transform_indices = @transform_5, window_bounds = array<i64: 1, 256>}, {pipeline_mode = #tpu.pipeline_mode<synchronous>, transform_indices = @transform_6, window_bounds = array<i64: 768, 256>}, {pipeline_mode = #tpu.pipeline_mode<synchronous>, transform_indices = @transform_7, window_bounds = array<i64: 1, 256>}, {pipeline_mode = #tpu.pipeline_mode<synchronous>, transform_indices = @transform_8, window_bounds = array<i64: 18, 1>}, {pipeline_mode = #tpu.pipeline_mode<synchronous>, transform_indices = @transform_9, window_bounds = array<i64: 12, 18>}, {pipeline_mode = #tpu.pipeline_mode<synchronous>, transform_indices = @transform_10, window_bounds = array<i64: 768, 256>}, {pipeline_mode = #tpu.pipeline_mode<synchronous>, transform_indices = @transform_11, window_bounds = array<i64: 1, 256>}, {pipeline_mode = #tpu.pipeline_mode<synchronous>, transform_indices = @transform_12, window_bounds = array<i64: 768, 256>}, {pipeline_mode = #tpu.pipeline_mode<synchronous>, transform_indices = @transform_13, window_bounds = array<i64: 1, 256>}, {pipeline_mode = #tpu.pipeline_mode<synchronous>, transform_indices = @transform_14, window_bounds = array<i64: 10, 1>}, {pipeline_mode = #tpu.pipeline_mode<synchronous>, transform_indices = @transform_15, window_bounds = array<i64: 8, 10>}, {pipeline_mode = #tpu.pipeline_mode<synchronous>, transform_indices = @transform_16, window_bounds = array<i64: 768, 256>}, {pipeline_mode = #tpu.pipeline_mode<synchronous>, transform_indices = @transform_17, window_bounds = array<i64: 1, 256>}, {pipeline_mode = #tpu.pipeline_mode<synchronous>, transform_indices = @transform_18, window_bounds = array<i64: 768, 256>}, {pipeline_mode = #tpu.pipeline_mode<synchronous>, transform_indices = @transform_19, window_bounds = array<i64: 1, 256>}, {pipeline_mode = #tpu.pipeline_mode<synchronous>, transform_indices = @transform_20, window_bounds = array<i64: 6, 1>}, {pipeline_mode = #tpu.pipeline_mode<synchronous>, transform_indices = @transform_21, window_bounds = array<i64: 6, 6>}, {pipeline_mode = #tpu.pipeline_mode<synchronous>, transform_indices = @transform_22, window_bounds = array<i64: 768, 256>}, {pipeline_mode = #tpu.pipeline_mode<synchronous>, transform_indices = @transform_23, window_bounds = array<i64: 1, 256>}, {pipeline_mode = #tpu.pipeline_mode<synchronous>, transform_indices = @transform_24, window_bounds = array<i64: 768, 256>}, {pipeline_mode = #tpu.pipeline_mode<synchronous>, transform_indices = @transform_25, window_bounds = array<i64: 1, 256>}, {pipeline_mode = #tpu.pipeline_mode<synchronous>, transform_indices = @transform_26, window_bounds = array<i64: 4, 1>}, {pipeline_mode = #tpu.pipeline_mode<synchronous>, transform_indices = @transform_27, window_bounds = array<i64: 256, 128>}, {pipeline_mode = #tpu.pipeline_mode<synchronous>, transform_indices = @transform_28, window_bounds = array<i64: 1, 128>}, {transform_indices = @transform_29, window_bounds = array<i64: 1, 4, 128>}]} {
    %c0_i32 = arith.constant 0 : i32
    %0 = arith.cmpi eq, %arg0, %c0_i32 : i32
    %1 = arith.extui %0 : i1 to i32
    %c0_i32_0 = arith.constant 0 : i32
    %2 = arith.cmpi ne, %1, %c0_i32_0 : i32
    scf.if %2 {
      %cst_234 = arith.constant 0.000000e+00 : f32
      %224 = vector.broadcast %cst_234 : f32 to vector<20x256xf32>
      %c0_235 = arith.constant 0 : index
      %c0_236 = arith.constant 0 : index
      %225 = vector.load %arg33[%c0_235, %c0_236] : memref<20x256xf32, #tpu.memory_space<vmem>>, vector<20x256xf32>
      tpu.vector_store %arg33[%c0_235, %c0_236], %224 {strides = array<i32>} : memref<20x256xf32, #tpu.memory_space<vmem>>, vector<20x256xf32>,
      %cst_237 = arith.constant 0.000000e+00 : f32
      %226 = vector.broadcast %cst_237 : f32 to vector<12x256xf32>
      %c0_238 = arith.constant 0 : index
      %c0_239 = arith.constant 0 : index
      %227 = vector.load %arg37[%c0_238, %c0_239] : memref<12x256xf32, #tpu.memory_space<vmem>>, vector<12x256xf32>
      tpu.vector_store %arg37[%c0_238, %c0_239], %226 {strides = array<i32>} : memref<12x256xf32, #tpu.memory_space<vmem>>, vector<12x256xf32>,
      %cst_240 = arith.constant 0.000000e+00 : f32
      %228 = vector.broadcast %cst_240 : f32 to vector<8x256xf32>
      %c0_241 = arith.constant 0 : index
      %c0_242 = arith.constant 0 : index
      %229 = vector.load %arg41[%c0_241, %c0_242] : memref<8x256xf32, #tpu.memory_space<vmem>>, vector<8x256xf32>
      tpu.vector_store %arg41[%c0_241, %c0_242], %228 {strides = array<i32>} : memref<8x256xf32, #tpu.memory_space<vmem>>, vector<8x256xf32>,
      %cst_243 = arith.constant 0.000000e+00 : f32
      %230 = vector.broadcast %cst_243 : f32 to vector<6x256xf32>
      %c0_244 = arith.constant 0 : index
      %c0_245 = arith.constant 0 : index
      %231 = vector.load %arg45[%c0_244, %c0_245] : memref<6x256xf32, #tpu.memory_space<vmem>>, vector<6x256xf32>
      tpu.vector_store %arg45[%c0_244, %c0_245], %230 {strides = array<i32>} : memref<6x256xf32, #tpu.memory_space<vmem>>, vector<6x256xf32>,
    } else {
    }
    %c0 = arith.constant 0 : index
    %c0_1 = arith.constant 0 : index
    %c0_2 = arith.constant 0 : index
    %3 = vector.load %arg1[%c0, %c0_1, %c0_2] : memref<1x72x192xf32, #tpu.memory_space<vmem>>, vector<1x68x192xf32>
    %4 = vector.shape_cast %3 : vector<1x68x192xf32> to vector<68x192xf32>
    %5 = arith.truncf %4 : vector<68x192xf32> to vector<68x192xbf16>
    %c0_3 = arith.constant 0 : index
    %c0_4 = arith.constant 0 : index
    %c0_5 = arith.constant 0 : index
    %6 = vector.load %arg2[%c0_3, %c0_4, %c0_5] : memref<5x192x512xbf16, #tpu.memory_space<vmem>>, vector<1x192x512xbf16>
    %7 = vector.shape_cast %6 : vector<1x192x512xbf16> to vector<192x512xbf16>
    %cst = arith.constant dense<0.000000e+00> : vector<68x512xf32>
    %8 = tpu.matmul %5, %7, %cst {dimension_numbers = #tpu.dot_dimension_numbers<[1], [0], [0], [1], [0, 0, 1, 1], [], []>} : vector<68x192xbf16>, vector<192x512xbf16>, vector<68x512xf32> -> vector<68x512xf32>
    %c0_6 = arith.constant 0 : index
    %c1 = arith.constant 1 : index
    %c0_7 = arith.constant 0 : index
    %9 = vector.load %arg1[%c0_6, %c1, %c0_7] : memref<1x72x192xf32, #tpu.memory_space<vmem>>, vector<1x68x192xf32>
    %10 = vector.shape_cast %9 : vector<1x68x192xf32> to vector<68x192xf32>
    %11 = arith.truncf %10 : vector<68x192xf32> to vector<68x192xbf16>
    %c1_8 = arith.constant 1 : index
    %c0_9 = arith.constant 0 : index
    %c0_10 = arith.constant 0 : index
    %12 = vector.load %arg2[%c1_8, %c0_9, %c0_10] : memref<5x192x512xbf16, #tpu.memory_space<vmem>>, vector<1x192x512xbf16>
    %13 = vector.shape_cast %12 : vector<1x192x512xbf16> to vector<192x512xbf16>
    %cst_11 = arith.constant dense<0.000000e+00> : vector<68x512xf32>
    %14 = tpu.matmul %11, %13, %cst_11 {dimension_numbers = #tpu.dot_dimension_numbers<[1], [0], [0], [1], [0, 0, 1, 1], [], []>} : vector<68x192xbf16>, vector<192x512xbf16>, vector<68x512xf32> -> vector<68x512xf32>
    %15 = arith.addf %8, %14 : vector<68x512xf32>
    %c0_12 = arith.constant 0 : index
    %c2 = arith.constant 2 : index
    %c0_13 = arith.constant 0 : index
    %16 = vector.load %arg1[%c0_12, %c2, %c0_13] : memref<1x72x192xf32, #tpu.memory_space<vmem>>, vector<1x68x192xf32>
    %17 = vector.shape_cast %16 : vector<1x68x192xf32> to vector<68x192xf32>
    %18 = arith.truncf %17 : vector<68x192xf32> to vector<68x192xbf16>
    %c2_14 = arith.constant 2 : index
    %c0_15 = arith.constant 0 : index
    %c0_16 = arith.constant 0 : index
    %19 = vector.load %arg2[%c2_14, %c0_15, %c0_16] : memref<5x192x512xbf16, #tpu.memory_space<vmem>>, vector<1x192x512xbf16>
    %20 = vector.shape_cast %19 : vector<1x192x512xbf16> to vector<192x512xbf16>
    %cst_17 = arith.constant dense<0.000000e+00> : vector<68x512xf32>
    %21 = tpu.matmul %18, %20, %cst_17 {dimension_numbers = #tpu.dot_dimension_numbers<[1], [0], [0], [1], [0, 0, 1, 1], [], []>} : vector<68x192xbf16>, vector<192x512xbf16>, vector<68x512xf32> -> vector<68x512xf32>
    %22 = arith.addf %15, %21 : vector<68x512xf32>
    %c0_18 = arith.constant 0 : index
    %c3 = arith.constant 3 : index
    %c0_19 = arith.constant 0 : index
    %23 = vector.load %arg1[%c0_18, %c3, %c0_19] : memref<1x72x192xf32, #tpu.memory_space<vmem>>, vector<1x68x192xf32>
    %24 = vector.shape_cast %23 : vector<1x68x192xf32> to vector<68x192xf32>
    %25 = arith.truncf %24 : vector<68x192xf32> to vector<68x192xbf16>
    %c3_20 = arith.constant 3 : index
    %c0_21 = arith.constant 0 : index
    %c0_22 = arith.constant 0 : index
    %26 = vector.load %arg2[%c3_20, %c0_21, %c0_22] : memref<5x192x512xbf16, #tpu.memory_space<vmem>>, vector<1x192x512xbf16>
    %27 = vector.shape_cast %26 : vector<1x192x512xbf16> to vector<192x512xbf16>
    %cst_23 = arith.constant dense<0.000000e+00> : vector<68x512xf32>
    %28 = tpu.matmul %25, %27, %cst_23 {dimension_numbers = #tpu.dot_dimension_numbers<[1], [0], [0], [1], [0, 0, 1, 1], [], []>} : vector<68x192xbf16>, vector<192x512xbf16>, vector<68x512xf32> -> vector<68x512xf32>
    %29 = arith.addf %22, %28 : vector<68x512xf32>
    %c0_24 = arith.constant 0 : index
    %c4 = arith.constant 4 : index
    %c0_25 = arith.constant 0 : index
    %30 = vector.load %arg1[%c0_24, %c4, %c0_25] : memref<1x72x192xf32, #tpu.memory_space<vmem>>, vector<1x68x192xf32>
    %31 = vector.shape_cast %30 : vector<1x68x192xf32> to vector<68x192xf32>
    %32 = arith.truncf %31 : vector<68x192xf32> to vector<68x192xbf16>
    %c4_26 = arith.constant 4 : index
    %c0_27 = arith.constant 0 : index
    %c0_28 = arith.constant 0 : index
    %33 = vector.load %arg2[%c4_26, %c0_27, %c0_28] : memref<5x192x512xbf16, #tpu.memory_space<vmem>>, vector<1x192x512xbf16>
    %34 = vector.shape_cast %33 : vector<1x192x512xbf16> to vector<192x512xbf16>
    %cst_29 = arith.constant dense<0.000000e+00> : vector<68x512xf32>
    %35 = tpu.matmul %32, %34, %cst_29 {dimension_numbers = #tpu.dot_dimension_numbers<[1], [0], [0], [1], [0, 0, 1, 1], [], []>} : vector<68x192xbf16>, vector<192x512xbf16>, vector<68x512xf32> -> vector<68x512xf32>
    %36 = arith.addf %29, %35 : vector<68x512xf32>
    %c0_30 = arith.constant 0 : index
    %c0_31 = arith.constant 0 : index
    %37 = vector.load %arg3[%c0_30, %c0_31] : memref<1x512xf32, #tpu.memory_space<vmem>>, vector<1x512xf32>
    %38 = vector.broadcast %37 : vector<1x512xf32> to vector<68x512xf32>
    %39 = arith.addf %36, %38 : vector<68x512xf32>
    %cst_32 = arith.constant 2.000000e-01 : f32
    %40 = vector.broadcast %cst_32 : f32 to vector<68x512xf32>
    %41 = arith.mulf %40, %39 : vector<68x512xf32>
    %42 = arith.maximumf %39, %41 : vector<68x512xf32>
    %c0_33 = arith.constant 0 : index
    %c0_34 = arith.constant 0 : index
    %43 = vector.load %arg4[%c0_33, %c0_34] : memref<20x68xf32, #tpu.memory_space<vmem>>, vector<20x68xf32>
    %cst_35 = arith.constant dense<0.000000e+00> : vector<20x512xf32>
    %44 = tpu.matmul %43, %42, %cst_35 {dimension_numbers = #tpu.dot_dimension_numbers<[1], [0], [0], [1], [0, 0, 1, 1], [], []>} : vector<20x68xf32>, vector<68x512xf32>, vector<20x512xf32> -> vector<20x512xf32>
    %c0_36 = arith.constant 0 : index
    %c0_37 = arith.constant 0 : index
    %45 = vector.load %arg31[%c0_36, %c0_37] : memref<20x512xf32, #tpu.memory_space<vmem>>, vector<20x512xf32>
    tpu.vector_store %arg31[%c0_36, %c0_37], %44 {strides = array<i32>} : memref<20x512xf32, #tpu.memory_space<vmem>>, vector<20x512xf32>,
    %c0_38 = arith.constant 0 : index
    %c0_39 = arith.constant 0 : index
    %46 = vector.load %arg31[%c0_38, %c0_39] : memref<20x512xf32, #tpu.memory_space<vmem>>, vector<18x512xf32>
    %47 = arith.truncf %46 : vector<18x512xf32> to vector<18x512xbf16>
    %c0_40 = arith.constant 0 : index
    %c0_41 = arith.constant 0 : index
    %48 = vector.load %arg32[%c0_40, %c0_41] : memref<18x1536xbf16, #tpu.memory_space<vmem>>, vector<18x512xbf16>
    tpu.vector_store %arg32[%c0_40, %c0_41], %47 {strides = array<i32>} : memref<18x1536xbf16, #tpu.memory_space<vmem>>, vector<18x512xbf16>,
    %c1_42 = arith.constant 1 : index
    %c0_43 = arith.constant 0 : index
    %49 = vector.load %arg31[%c1_42, %c0_43] : memref<20x512xf32, #tpu.memory_space<vmem>>, vector<18x512xf32>
    %50 = arith.truncf %49 : vector<18x512xf32> to vector<18x512xbf16>
    %c0_44 = arith.constant 0 : index
    %c512 = arith.constant 512 : index
    %51 = vector.load %arg32[%c0_44, %c512] : memref<18x1536xbf16, #tpu.memory_space<vmem>>, vector<18x512xbf16>
    tpu.vector_store %arg32[%c0_44, %c512], %50 {strides = array<i32>} : memref<18x1536xbf16, #tpu.memory_space<vmem>>, vector<18x512xbf16>,
    %c2_45 = arith.constant 2 : index
    %c0_46 = arith.constant 0 : index
    %52 = vector.load %arg31[%c2_45, %c0_46] : memref<20x512xf32, #tpu.memory_space<vmem>>, vector<18x512xf32>
    %53 = arith.truncf %52 : vector<18x512xf32> to vector<18x512xbf16>
    %c0_47 = arith.constant 0 : index
    %c1024 = arith.constant 1024 : index
    %54 = vector.load %arg32[%c0_47, %c1024] : memref<18x1536xbf16, #tpu.memory_space<vmem>>, vector<18x512xbf16>
    tpu.vector_store %arg32[%c0_47, %c1024], %53 {strides = array<i32>} : memref<18x1536xbf16, #tpu.memory_space<vmem>>, vector<18x512xbf16>,
    %c0_48 = arith.constant 0 : index
    %c0_49 = arith.constant 0 : index
    %55 = vector.load %arg32[%c0_48, %c0_49] : memref<18x1536xbf16, #tpu.memory_space<vmem>>, vector<18x1536xbf16>
    %c0_50 = arith.constant 0 : index
    %c0_51 = arith.constant 0 : index
    %56 = vector.load %arg5[%c0_50, %c0_51] : memref<1536x256xbf16, #tpu.memory_space<vmem>>, vector<1536x256xbf16>
    %cst_52 = arith.constant dense<0.000000e+00> : vector<18x256xf32>
    %57 = tpu.matmul %55, %56, %cst_52 {dimension_numbers = #tpu.dot_dimension_numbers<[1], [0], [0], [1], [0, 0, 1, 1], [], []>} : vector<18x1536xbf16>, vector<1536x256xbf16>, vector<18x256xf32> -> vector<18x256xf32>
    %c0_53 = arith.constant 0 : index
    %c0_54 = arith.constant 0 : index
    %58 = vector.load %arg6[%c0_53, %c0_54] : memref<1x256xf32, #tpu.memory_space<vmem>>, vector<1x256xf32>
    %59 = vector.broadcast %58 : vector<1x256xf32> to vector<18x256xf32>
    %60 = arith.addf %57, %59 : vector<18x256xf32>
    %cst_55 = arith.constant 2.000000e-01 : f32
    %61 = vector.broadcast %cst_55 : f32 to vector<18x256xf32>
    %62 = arith.mulf %61, %60 : vector<18x256xf32>
    %63 = arith.maximumf %60, %62 : vector<18x256xf32>
    %c0_56 = arith.constant 0 : index
    %c0_57 = arith.constant 0 : index
    %64 = vector.load %arg9[%c0_56, %c0_57] : memref<18x1xf32, #tpu.memory_space<vmem>>, vector<18x1xf32>
    %65 = vector.broadcast %64 : vector<18x1xf32> to vector<18x256xf32>
    %66 = arith.mulf %63, %65 : vector<18x256xf32>
    %c1_58 = arith.constant 1 : index
    %c0_59 = arith.constant 0 : index
    %67 = vector.load %arg33[%c1_58, %c0_59] : memref<20x256xf32, #tpu.memory_space<vmem>>, vector<18x256xf32>
    tpu.vector_store %arg33[%c1_58, %c0_59], %66 {strides = array<i32>} : memref<20x256xf32, #tpu.memory_space<vmem>>, vector<18x256xf32>,
    %c0_60 = arith.constant 0 : index
    %c0_61 = arith.constant 0 : index
    %68 = vector.load %arg33[%c0_60, %c0_61] : memref<20x256xf32, #tpu.memory_space<vmem>>, vector<18x256xf32>
    %69 = arith.truncf %68 : vector<18x256xf32> to vector<18x256xbf16>
    %c0_62 = arith.constant 0 : index
    %c0_63 = arith.constant 0 : index
    %70 = vector.load %arg34[%c0_62, %c0_63] : memref<18x768xbf16, #tpu.memory_space<vmem>>, vector<18x256xbf16>
    tpu.vector_store %arg34[%c0_62, %c0_63], %69 {strides = array<i32>} : memref<18x768xbf16, #tpu.memory_space<vmem>>, vector<18x256xbf16>,
    %c1_64 = arith.constant 1 : index
    %c0_65 = arith.constant 0 : index
    %71 = vector.load %arg33[%c1_64, %c0_65] : memref<20x256xf32, #tpu.memory_space<vmem>>, vector<18x256xf32>
    %72 = arith.truncf %71 : vector<18x256xf32> to vector<18x256xbf16>
    %c0_66 = arith.constant 0 : index
    %c256 = arith.constant 256 : index
    %73 = vector.load %arg34[%c0_66, %c256] : memref<18x768xbf16, #tpu.memory_space<vmem>>, vector<18x256xbf16>
    tpu.vector_store %arg34[%c0_66, %c256], %72 {strides = array<i32>} : memref<18x768xbf16, #tpu.memory_space<vmem>>, vector<18x256xbf16>,
    %c2_67 = arith.constant 2 : index
    %c0_68 = arith.constant 0 : index
    %74 = vector.load %arg33[%c2_67, %c0_68] : memref<20x256xf32, #tpu.memory_space<vmem>>, vector<18x256xf32>
    %75 = arith.truncf %74 : vector<18x256xf32> to vector<18x256xbf16>
    %c0_69 = arith.constant 0 : index
    %c512_70 = arith.constant 512 : index
    %76 = vector.load %arg34[%c0_69, %c512_70] : memref<18x768xbf16, #tpu.memory_space<vmem>>, vector<18x256xbf16>
    tpu.vector_store %arg34[%c0_69, %c512_70], %75 {strides = array<i32>} : memref<18x768xbf16, #tpu.memory_space<vmem>>, vector<18x256xbf16>,
    %c0_71 = arith.constant 0 : index
    %c0_72 = arith.constant 0 : index
    %77 = vector.load %arg34[%c0_71, %c0_72] : memref<18x768xbf16, #tpu.memory_space<vmem>>, vector<18x768xbf16>
    %c0_73 = arith.constant 0 : index
    %c0_74 = arith.constant 0 : index
    %78 = vector.load %arg7[%c0_73, %c0_74] : memref<768x256xbf16, #tpu.memory_space<vmem>>, vector<768x256xbf16>
    %cst_75 = arith.constant dense<0.000000e+00> : vector<18x256xf32>
    %79 = tpu.matmul %77, %78, %cst_75 {dimension_numbers = #tpu.dot_dimension_numbers<[1], [0], [0], [1], [0, 0, 1, 1], [], []>} : vector<18x768xbf16>, vector<768x256xbf16>, vector<18x256xf32> -> vector<18x256xf32>
    %c0_76 = arith.constant 0 : index
    %c0_77 = arith.constant 0 : index
    %80 = vector.load %arg8[%c0_76, %c0_77] : memref<1x256xf32, #tpu.memory_space<vmem>>, vector<1x256xf32>
    %81 = vector.broadcast %80 : vector<1x256xf32> to vector<18x256xf32>
    %82 = arith.addf %79, %81 : vector<18x256xf32>
    %cst_78 = arith.constant 2.000000e-01 : f32
    %83 = vector.broadcast %cst_78 : f32 to vector<18x256xf32>
    %84 = arith.mulf %83, %82 : vector<18x256xf32>
    %85 = arith.maximumf %82, %84 : vector<18x256xf32>
    %c0_79 = arith.constant 0 : index
    %c0_80 = arith.constant 0 : index
    %86 = vector.load %arg10[%c0_79, %c0_80] : memref<12x18xf32, #tpu.memory_space<vmem>>, vector<12x18xf32>
    %cst_81 = arith.constant dense<0.000000e+00> : vector<12x256xf32>
    %87 = tpu.matmul %86, %85, %cst_81 {dimension_numbers = #tpu.dot_dimension_numbers<[1], [0], [0], [1], [0, 0, 1, 1], [], []>} : vector<12x18xf32>, vector<18x256xf32>, vector<12x256xf32> -> vector<12x256xf32>
    %c0_82 = arith.constant 0 : index
    %c0_83 = arith.constant 0 : index
    %88 = vector.load %arg35[%c0_82, %c0_83] : memref<12x256xf32, #tpu.memory_space<vmem>>, vector<12x256xf32>
    tpu.vector_store %arg35[%c0_82, %c0_83], %87 {strides = array<i32>} : memref<12x256xf32, #tpu.memory_space<vmem>>, vector<12x256xf32>,
    %c0_84 = arith.constant 0 : index
    %c0_85 = arith.constant 0 : index
    %89 = vector.load %arg35[%c0_84, %c0_85] : memref<12x256xf32, #tpu.memory_space<vmem>>, vector<10x256xf32>
    %90 = arith.truncf %89 : vector<10x256xf32> to vector<10x256xbf16>
    %c0_86 = arith.constant 0 : index
    %c0_87 = arith.constant 0 : index
    %91 = vector.load %arg36[%c0_86, %c0_87] : memref<10x768xbf16, #tpu.memory_space<vmem>>, vector<10x256xbf16>
    tpu.vector_store %arg36[%c0_86, %c0_87], %90 {strides = array<i32>} : memref<10x768xbf16, #tpu.memory_space<vmem>>, vector<10x256xbf16>,
    %c1_88 = arith.constant 1 : index
    %c0_89 = arith.constant 0 : index
    %92 = vector.load %arg35[%c1_88, %c0_89] : memref<12x256xf32, #tpu.memory_space<vmem>>, vector<10x256xf32>
    %93 = arith.truncf %92 : vector<10x256xf32> to vector<10x256xbf16>
    %c0_90 = arith.constant 0 : index
    %c256_91 = arith.constant 256 : index
    %94 = vector.load %arg36[%c0_90, %c256_91] : memref<10x768xbf16, #tpu.memory_space<vmem>>, vector<10x256xbf16>
    tpu.vector_store %arg36[%c0_90, %c256_91], %93 {strides = array<i32>} : memref<10x768xbf16, #tpu.memory_space<vmem>>, vector<10x256xbf16>,
    %c2_92 = arith.constant 2 : index
    %c0_93 = arith.constant 0 : index
    %95 = vector.load %arg35[%c2_92, %c0_93] : memref<12x256xf32, #tpu.memory_space<vmem>>, vector<10x256xf32>
    %96 = arith.truncf %95 : vector<10x256xf32> to vector<10x256xbf16>
    %c0_94 = arith.constant 0 : index
    %c512_95 = arith.constant 512 : index
    %97 = vector.load %arg36[%c0_94, %c512_95] : memref<10x768xbf16, #tpu.memory_space<vmem>>, vector<10x256xbf16>
    tpu.vector_store %arg36[%c0_94, %c512_95], %96 {strides = array<i32>} : memref<10x768xbf16, #tpu.memory_space<vmem>>, vector<10x256xbf16>,
    %c0_96 = arith.constant 0 : index
    %c0_97 = arith.constant 0 : index
    %98 = vector.load %arg36[%c0_96, %c0_97] : memref<10x768xbf16, #tpu.memory_space<vmem>>, vector<10x768xbf16>
    %c0_98 = arith.constant 0 : index
    %c0_99 = arith.constant 0 : index
    %99 = vector.load %arg11[%c0_98, %c0_99] : memref<768x256xbf16, #tpu.memory_space<vmem>>, vector<768x256xbf16>
    %cst_100 = arith.constant dense<0.000000e+00> : vector<10x256xf32>
    %100 = tpu.matmul %98, %99, %cst_100 {dimension_numbers = #tpu.dot_dimension_numbers<[1], [0], [0], [1], [0, 0, 1, 1], [], []>} : vector<10x768xbf16>, vector<768x256xbf16>, vector<10x256xf32> -> vector<10x256xf32>
    %c0_101 = arith.constant 0 : index
    %c0_102 = arith.constant 0 : index
    %101 = vector.load %arg12[%c0_101, %c0_102] : memref<1x256xf32, #tpu.memory_space<vmem>>, vector<1x256xf32>
    %102 = vector.broadcast %101 : vector<1x256xf32> to vector<10x256xf32>
    %103 = arith.addf %100, %102 : vector<10x256xf32>
    %cst_103 = arith.constant 2.000000e-01 : f32
    %104 = vector.broadcast %cst_103 : f32 to vector<10x256xf32>
    %105 = arith.mulf %104, %103 : vector<10x256xf32>
    %106 = arith.maximumf %103, %105 : vector<10x256xf32>
    %c0_104 = arith.constant 0 : index
    %c0_105 = arith.constant 0 : index
    %107 = vector.load %arg15[%c0_104, %c0_105] : memref<10x1xf32, #tpu.memory_space<vmem>>, vector<10x1xf32>
    %108 = vector.broadcast %107 : vector<10x1xf32> to vector<10x256xf32>
    %109 = arith.mulf %106, %108 : vector<10x256xf32>
    %c1_106 = arith.constant 1 : index
    %c0_107 = arith.constant 0 : index
    %110 = vector.load %arg37[%c1_106, %c0_107] : memref<12x256xf32, #tpu.memory_space<vmem>>, vector<10x256xf32>
    tpu.vector_store %arg37[%c1_106, %c0_107], %109 {strides = array<i32>} : memref<12x256xf32, #tpu.memory_space<vmem>>, vector<10x256xf32>,
    %c0_108 = arith.constant 0 : index
    %c0_109 = arith.constant 0 : index
    %111 = vector.load %arg37[%c0_108, %c0_109] : memref<12x256xf32, #tpu.memory_space<vmem>>, vector<10x256xf32>
    %112 = arith.truncf %111 : vector<10x256xf32> to vector<10x256xbf16>
    %c0_110 = arith.constant 0 : index
    %c0_111 = arith.constant 0 : index
    %113 = vector.load %arg38[%c0_110, %c0_111] : memref<10x768xbf16, #tpu.memory_space<vmem>>, vector<10x256xbf16>
    tpu.vector_store %arg38[%c0_110, %c0_111], %112 {strides = array<i32>} : memref<10x768xbf16, #tpu.memory_space<vmem>>, vector<10x256xbf16>,
    %c1_112 = arith.constant 1 : index
    %c0_113 = arith.constant 0 : index
    %114 = vector.load %arg37[%c1_112, %c0_113] : memref<12x256xf32, #tpu.memory_space<vmem>>, vector<10x256xf32>
    %115 = arith.truncf %114 : vector<10x256xf32> to vector<10x256xbf16>
    %c0_114 = arith.constant 0 : index
    %c256_115 = arith.constant 256 : index
    %116 = vector.load %arg38[%c0_114, %c256_115] : memref<10x768xbf16, #tpu.memory_space<vmem>>, vector<10x256xbf16>
    tpu.vector_store %arg38[%c0_114, %c256_115], %115 {strides = array<i32>} : memref<10x768xbf16, #tpu.memory_space<vmem>>, vector<10x256xbf16>,
    %c2_116 = arith.constant 2 : index
    %c0_117 = arith.constant 0 : index
    %117 = vector.load %arg37[%c2_116, %c0_117] : memref<12x256xf32, #tpu.memory_space<vmem>>, vector<10x256xf32>
    %118 = arith.truncf %117 : vector<10x256xf32> to vector<10x256xbf16>
    %c0_118 = arith.constant 0 : index
    %c512_119 = arith.constant 512 : index
    %119 = vector.load %arg38[%c0_118, %c512_119] : memref<10x768xbf16, #tpu.memory_space<vmem>>, vector<10x256xbf16>
    tpu.vector_store %arg38[%c0_118, %c512_119], %118 {strides = array<i32>} : memref<10x768xbf16, #tpu.memory_space<vmem>>, vector<10x256xbf16>,
    %c0_120 = arith.constant 0 : index
    %c0_121 = arith.constant 0 : index
    %120 = vector.load %arg38[%c0_120, %c0_121] : memref<10x768xbf16, #tpu.memory_space<vmem>>, vector<10x768xbf16>
    %c0_122 = arith.constant 0 : index
    %c0_123 = arith.constant 0 : index
    %121 = vector.load %arg13[%c0_122, %c0_123] : memref<768x256xbf16, #tpu.memory_space<vmem>>, vector<768x256xbf16>
    %cst_124 = arith.constant dense<0.000000e+00> : vector<10x256xf32>
    %122 = tpu.matmul %120, %121, %cst_124 {dimension_numbers = #tpu.dot_dimension_numbers<[1], [0], [0], [1], [0, 0, 1, 1], [], []>} : vector<10x768xbf16>, vector<768x256xbf16>, vector<10x256xf32> -> vector<10x256xf32>
    %c0_125 = arith.constant 0 : index
    %c0_126 = arith.constant 0 : index
    %123 = vector.load %arg14[%c0_125, %c0_126] : memref<1x256xf32, #tpu.memory_space<vmem>>, vector<1x256xf32>
    %124 = vector.broadcast %123 : vector<1x256xf32> to vector<10x256xf32>
    %125 = arith.addf %122, %124 : vector<10x256xf32>
    %cst_127 = arith.constant 2.000000e-01 : f32
    %126 = vector.broadcast %cst_127 : f32 to vector<10x256xf32>
    %127 = arith.mulf %126, %125 : vector<10x256xf32>
    %128 = arith.maximumf %125, %127 : vector<10x256xf32>
    %c0_128 = arith.constant 0 : index
    %c0_129 = arith.constant 0 : index
    %129 = vector.load %arg16[%c0_128, %c0_129] : memref<8x10xf32, #tpu.memory_space<vmem>>, vector<8x10xf32>
    %cst_130 = arith.constant dense<0.000000e+00> : vector<8x256xf32>
    %130 = tpu.matmul %129, %128, %cst_130 {dimension_numbers = #tpu.dot_dimension_numbers<[1], [0], [0], [1], [0, 0, 1, 1], [], []>} : vector<8x10xf32>, vector<10x256xf32>, vector<8x256xf32> -> vector<8x256xf32>
    %c0_131 = arith.constant 0 : index
    %c0_132 = arith.constant 0 : index
    %131 = vector.load %arg39[%c0_131, %c0_132] : memref<8x256xf32, #tpu.memory_space<vmem>>, vector<8x256xf32>
    tpu.vector_store %arg39[%c0_131, %c0_132], %130 {strides = array<i32>} : memref<8x256xf32, #tpu.memory_space<vmem>>, vector<8x256xf32>,
    %c0_133 = arith.constant 0 : index
    %c0_134 = arith.constant 0 : index
    %132 = vector.load %arg39[%c0_133, %c0_134] : memref<8x256xf32, #tpu.memory_space<vmem>>, vector<6x256xf32>
    %133 = arith.truncf %132 : vector<6x256xf32> to vector<6x256xbf16>
    %c0_135 = arith.constant 0 : index
    %c0_136 = arith.constant 0 : index
    %134 = vector.load %arg40[%c0_135, %c0_136] : memref<6x768xbf16, #tpu.memory_space<vmem>>, vector<6x256xbf16>
    tpu.vector_store %arg40[%c0_135, %c0_136], %133 {strides = array<i32>} : memref<6x768xbf16, #tpu.memory_space<vmem>>, vector<6x256xbf16>,
    %c1_137 = arith.constant 1 : index
    %c0_138 = arith.constant 0 : index
    %135 = vector.load %arg39[%c1_137, %c0_138] : memref<8x256xf32, #tpu.memory_space<vmem>>, vector<6x256xf32>
    %136 = arith.truncf %135 : vector<6x256xf32> to vector<6x256xbf16>
    %c0_139 = arith.constant 0 : index
    %c256_140 = arith.constant 256 : index
    %137 = vector.load %arg40[%c0_139, %c256_140] : memref<6x768xbf16, #tpu.memory_space<vmem>>, vector<6x256xbf16>
    tpu.vector_store %arg40[%c0_139, %c256_140], %136 {strides = array<i32>} : memref<6x768xbf16, #tpu.memory_space<vmem>>, vector<6x256xbf16>,
    %c2_141 = arith.constant 2 : index
    %c0_142 = arith.constant 0 : index
    %138 = vector.load %arg39[%c2_141, %c0_142] : memref<8x256xf32, #tpu.memory_space<vmem>>, vector<6x256xf32>
    %139 = arith.truncf %138 : vector<6x256xf32> to vector<6x256xbf16>
    %c0_143 = arith.constant 0 : index
    %c512_144 = arith.constant 512 : index
    %140 = vector.load %arg40[%c0_143, %c512_144] : memref<6x768xbf16, #tpu.memory_space<vmem>>, vector<6x256xbf16>
    tpu.vector_store %arg40[%c0_143, %c512_144], %139 {strides = array<i32>} : memref<6x768xbf16, #tpu.memory_space<vmem>>, vector<6x256xbf16>,
    %c0_145 = arith.constant 0 : index
    %c0_146 = arith.constant 0 : index
    %141 = vector.load %arg40[%c0_145, %c0_146] : memref<6x768xbf16, #tpu.memory_space<vmem>>, vector<6x768xbf16>
    %c0_147 = arith.constant 0 : index
    %c0_148 = arith.constant 0 : index
    %142 = vector.load %arg17[%c0_147, %c0_148] : memref<768x256xbf16, #tpu.memory_space<vmem>>, vector<768x256xbf16>
    %cst_149 = arith.constant dense<0.000000e+00> : vector<6x256xf32>
    %143 = tpu.matmul %141, %142, %cst_149 {dimension_numbers = #tpu.dot_dimension_numbers<[1], [0], [0], [1], [0, 0, 1, 1], [], []>} : vector<6x768xbf16>, vector<768x256xbf16>, vector<6x256xf32> -> vector<6x256xf32>
    %c0_150 = arith.constant 0 : index
    %c0_151 = arith.constant 0 : index
    %144 = vector.load %arg18[%c0_150, %c0_151] : memref<1x256xf32, #tpu.memory_space<vmem>>, vector<1x256xf32>
    %145 = vector.broadcast %144 : vector<1x256xf32> to vector<6x256xf32>
    %146 = arith.addf %143, %145 : vector<6x256xf32>
    %cst_152 = arith.constant 2.000000e-01 : f32
    %147 = vector.broadcast %cst_152 : f32 to vector<6x256xf32>
    %148 = arith.mulf %147, %146 : vector<6x256xf32>
    %149 = arith.maximumf %146, %148 : vector<6x256xf32>
    %c0_153 = arith.constant 0 : index
    %c0_154 = arith.constant 0 : index
    %150 = vector.load %arg21[%c0_153, %c0_154] : memref<6x1xf32, #tpu.memory_space<vmem>>, vector<6x1xf32>
    %151 = vector.broadcast %150 : vector<6x1xf32> to vector<6x256xf32>
    %152 = arith.mulf %149, %151 : vector<6x256xf32>
    %c1_155 = arith.constant 1 : index
    %c0_156 = arith.constant 0 : index
    %153 = vector.load %arg41[%c1_155, %c0_156] : memref<8x256xf32, #tpu.memory_space<vmem>>, vector<6x256xf32>
    tpu.vector_store %arg41[%c1_155, %c0_156], %152 {strides = array<i32>} : memref<8x256xf32, #tpu.memory_space<vmem>>, vector<6x256xf32>,
    %c0_157 = arith.constant 0 : index
    %c0_158 = arith.constant 0 : index
    %154 = vector.load %arg41[%c0_157, %c0_158] : memref<8x256xf32, #tpu.memory_space<vmem>>, vector<6x256xf32>
    %155 = arith.truncf %154 : vector<6x256xf32> to vector<6x256xbf16>
    %c0_159 = arith.constant 0 : index
    %c0_160 = arith.constant 0 : index
    %156 = vector.load %arg42[%c0_159, %c0_160] : memref<6x768xbf16, #tpu.memory_space<vmem>>, vector<6x256xbf16>
    tpu.vector_store %arg42[%c0_159, %c0_160], %155 {strides = array<i32>} : memref<6x768xbf16, #tpu.memory_space<vmem>>, vector<6x256xbf16>,
    %c1_161 = arith.constant 1 : index
    %c0_162 = arith.constant 0 : index
    %157 = vector.load %arg41[%c1_161, %c0_162] : memref<8x256xf32, #tpu.memory_space<vmem>>, vector<6x256xf32>
    %158 = arith.truncf %157 : vector<6x256xf32> to vector<6x256xbf16>
    %c0_163 = arith.constant 0 : index
    %c256_164 = arith.constant 256 : index
    %159 = vector.load %arg42[%c0_163, %c256_164] : memref<6x768xbf16, #tpu.memory_space<vmem>>, vector<6x256xbf16>
    tpu.vector_store %arg42[%c0_163, %c256_164], %158 {strides = array<i32>} : memref<6x768xbf16, #tpu.memory_space<vmem>>, vector<6x256xbf16>,
    %c2_165 = arith.constant 2 : index
    %c0_166 = arith.constant 0 : index
    %160 = vector.load %arg41[%c2_165, %c0_166] : memref<8x256xf32, #tpu.memory_space<vmem>>, vector<6x256xf32>
    %161 = arith.truncf %160 : vector<6x256xf32> to vector<6x256xbf16>
    %c0_167 = arith.constant 0 : index
    %c512_168 = arith.constant 512 : index
    %162 = vector.load %arg42[%c0_167, %c512_168] : memref<6x768xbf16, #tpu.memory_space<vmem>>, vector<6x256xbf16>
    tpu.vector_store %arg42[%c0_167, %c512_168], %161 {strides = array<i32>} : memref<6x768xbf16, #tpu.memory_space<vmem>>, vector<6x256xbf16>,
    %c0_169 = arith.constant 0 : index
    %c0_170 = arith.constant 0 : index
    %163 = vector.load %arg42[%c0_169, %c0_170] : memref<6x768xbf16, #tpu.memory_space<vmem>>, vector<6x768xbf16>
    %c0_171 = arith.constant 0 : index
    %c0_172 = arith.constant 0 : index
    %164 = vector.load %arg19[%c0_171, %c0_172] : memref<768x256xbf16, #tpu.memory_space<vmem>>, vector<768x256xbf16>
    %cst_173 = arith.constant dense<0.000000e+00> : vector<6x256xf32>
    %165 = tpu.matmul %163, %164, %cst_173 {dimension_numbers = #tpu.dot_dimension_numbers<[1], [0], [0], [1], [0, 0, 1, 1], [], []>} : vector<6x768xbf16>, vector<768x256xbf16>, vector<6x256xf32> -> vector<6x256xf32>
    %c0_174 = arith.constant 0 : index
    %c0_175 = arith.constant 0 : index
    %166 = vector.load %arg20[%c0_174, %c0_175] : memref<1x256xf32, #tpu.memory_space<vmem>>, vector<1x256xf32>
    %167 = vector.broadcast %166 : vector<1x256xf32> to vector<6x256xf32>
    %168 = arith.addf %165, %167 : vector<6x256xf32>
    %cst_176 = arith.constant 2.000000e-01 : f32
    %169 = vector.broadcast %cst_176 : f32 to vector<6x256xf32>
    %170 = arith.mulf %169, %168 : vector<6x256xf32>
    %171 = arith.maximumf %168, %170 : vector<6x256xf32>
    %c0_177 = arith.constant 0 : index
    %c0_178 = arith.constant 0 : index
    %172 = vector.load %arg22[%c0_177, %c0_178] : memref<6x6xf32, #tpu.memory_space<vmem>>, vector<6x6xf32>
    %cst_179 = arith.constant dense<0.000000e+00> : vector<6x256xf32>
    %173 = tpu.matmul %172, %171, %cst_179 {dimension_numbers = #tpu.dot_dimension_numbers<[1], [0], [0], [1], [0, 0, 1, 1], [], []>} : vector<6x6xf32>, vector<6x256xf32>, vector<6x256xf32> -> vector<6x256xf32>
    %c0_180 = arith.constant 0 : index
    %c0_181 = arith.constant 0 : index
    %174 = vector.load %arg43[%c0_180, %c0_181] : memref<6x256xf32, #tpu.memory_space<vmem>>, vector<6x256xf32>
    tpu.vector_store %arg43[%c0_180, %c0_181], %173 {strides = array<i32>} : memref<6x256xf32, #tpu.memory_space<vmem>>, vector<6x256xf32>,
    %c0_182 = arith.constant 0 : index
    %c0_183 = arith.constant 0 : index
    %175 = vector.load %arg43[%c0_182, %c0_183] : memref<6x256xf32, #tpu.memory_space<vmem>>, vector<4x256xf32>
    %176 = arith.truncf %175 : vector<4x256xf32> to vector<4x256xbf16>
    %c0_184 = arith.constant 0 : index
    %c0_185 = arith.constant 0 : index
    %177 = vector.load %arg44[%c0_184, %c0_185] : memref<4x768xbf16, #tpu.memory_space<vmem>>, vector<4x256xbf16>
    tpu.vector_store %arg44[%c0_184, %c0_185], %176 {strides = array<i32>} : memref<4x768xbf16, #tpu.memory_space<vmem>>, vector<4x256xbf16>,
    %c1_186 = arith.constant 1 : index
    %c0_187 = arith.constant 0 : index
    %178 = vector.load %arg43[%c1_186, %c0_187] : memref<6x256xf32, #tpu.memory_space<vmem>>, vector<4x256xf32>
    %179 = arith.truncf %178 : vector<4x256xf32> to vector<4x256xbf16>
    %c0_188 = arith.constant 0 : index
    %c256_189 = arith.constant 256 : index
    %180 = vector.load %arg44[%c0_188, %c256_189] : memref<4x768xbf16, #tpu.memory_space<vmem>>, vector<4x256xbf16>
    tpu.vector_store %arg44[%c0_188, %c256_189], %179 {strides = array<i32>} : memref<4x768xbf16, #tpu.memory_space<vmem>>, vector<4x256xbf16>,
    %c2_190 = arith.constant 2 : index
    %c0_191 = arith.constant 0 : index
    %181 = vector.load %arg43[%c2_190, %c0_191] : memref<6x256xf32, #tpu.memory_space<vmem>>, vector<4x256xf32>
    %182 = arith.truncf %181 : vector<4x256xf32> to vector<4x256xbf16>
    %c0_192 = arith.constant 0 : index
    %c512_193 = arith.constant 512 : index
    %183 = vector.load %arg44[%c0_192, %c512_193] : memref<4x768xbf16, #tpu.memory_space<vmem>>, vector<4x256xbf16>
    tpu.vector_store %arg44[%c0_192, %c512_193], %182 {strides = array<i32>} : memref<4x768xbf16, #tpu.memory_space<vmem>>, vector<4x256xbf16>,
    %c0_194 = arith.constant 0 : index
    %c0_195 = arith.constant 0 : index
    %184 = vector.load %arg44[%c0_194, %c0_195] : memref<4x768xbf16, #tpu.memory_space<vmem>>, vector<4x768xbf16>
    %c0_196 = arith.constant 0 : index
    %c0_197 = arith.constant 0 : index
    %185 = vector.load %arg23[%c0_196, %c0_197] : memref<768x256xbf16, #tpu.memory_space<vmem>>, vector<768x256xbf16>
    %cst_198 = arith.constant dense<0.000000e+00> : vector<4x256xf32>
    %186 = tpu.matmul %184, %185, %cst_198 {dimension_numbers = #tpu.dot_dimension_numbers<[1], [0], [0], [1], [0, 0, 1, 1], [], []>} : vector<4x768xbf16>, vector<768x256xbf16>, vector<4x256xf32> -> vector<4x256xf32>
    %c0_199 = arith.constant 0 : index
    %c0_200 = arith.constant 0 : index
    %187 = vector.load %arg24[%c0_199, %c0_200] : memref<1x256xf32, #tpu.memory_space<vmem>>, vector<1x256xf32>
    %188 = vector.broadcast %187 : vector<1x256xf32> to vector<4x256xf32>
    %189 = arith.addf %186, %188 : vector<4x256xf32>
    %cst_201 = arith.constant 2.000000e-01 : f32
    %190 = vector.broadcast %cst_201 : f32 to vector<4x256xf32>
    %191 = arith.mulf %190, %189 : vector<4x256xf32>
    %192 = arith.maximumf %189, %191 : vector<4x256xf32>
    %c0_202 = arith.constant 0 : index
    %c0_203 = arith.constant 0 : index
    %193 = vector.load %arg27[%c0_202, %c0_203] : memref<4x1xf32, #tpu.memory_space<vmem>>, vector<4x1xf32>
    %194 = vector.broadcast %193 : vector<4x1xf32> to vector<4x256xf32>
    %195 = arith.mulf %192, %194 : vector<4x256xf32>
    %c1_204 = arith.constant 1 : index
    %c0_205 = arith.constant 0 : index
    %196 = vector.load %arg45[%c1_204, %c0_205] : memref<6x256xf32, #tpu.memory_space<vmem>>, vector<4x256xf32>
    tpu.vector_store %arg45[%c1_204, %c0_205], %195 {strides = array<i32>} : memref<6x256xf32, #tpu.memory_space<vmem>>, vector<4x256xf32>,
    %c0_206 = arith.constant 0 : index
    %c0_207 = arith.constant 0 : index
    %197 = vector.load %arg45[%c0_206, %c0_207] : memref<6x256xf32, #tpu.memory_space<vmem>>, vector<4x256xf32>
    %198 = arith.truncf %197 : vector<4x256xf32> to vector<4x256xbf16>
    %c0_208 = arith.constant 0 : index
    %c0_209 = arith.constant 0 : index
    %199 = vector.load %arg46[%c0_208, %c0_209] : memref<4x768xbf16, #tpu.memory_space<vmem>>, vector<4x256xbf16>
    tpu.vector_store %arg46[%c0_208, %c0_209], %198 {strides = array<i32>} : memref<4x768xbf16, #tpu.memory_space<vmem>>, vector<4x256xbf16>,
    %c1_210 = arith.constant 1 : index
    %c0_211 = arith.constant 0 : index
    %200 = vector.load %arg45[%c1_210, %c0_211] : memref<6x256xf32, #tpu.memory_space<vmem>>, vector<4x256xf32>
    %201 = arith.truncf %200 : vector<4x256xf32> to vector<4x256xbf16>
    %c0_212 = arith.constant 0 : index
    %c256_213 = arith.constant 256 : index
    %202 = vector.load %arg46[%c0_212, %c256_213] : memref<4x768xbf16, #tpu.memory_space<vmem>>, vector<4x256xbf16>
    tpu.vector_store %arg46[%c0_212, %c256_213], %201 {strides = array<i32>} : memref<4x768xbf16, #tpu.memory_space<vmem>>, vector<4x256xbf16>,
    %c2_214 = arith.constant 2 : index
    %c0_215 = arith.constant 0 : index
    %203 = vector.load %arg45[%c2_214, %c0_215] : memref<6x256xf32, #tpu.memory_space<vmem>>, vector<4x256xf32>
    %204 = arith.truncf %203 : vector<4x256xf32> to vector<4x256xbf16>
    %c0_216 = arith.constant 0 : index
    %c512_217 = arith.constant 512 : index
    %205 = vector.load %arg46[%c0_216, %c512_217] : memref<4x768xbf16, #tpu.memory_space<vmem>>, vector<4x256xbf16>
    tpu.vector_store %arg46[%c0_216, %c512_217], %204 {strides = array<i32>} : memref<4x768xbf16, #tpu.memory_space<vmem>>, vector<4x256xbf16>,
    %c0_218 = arith.constant 0 : index
    %c0_219 = arith.constant 0 : index
    %206 = vector.load %arg46[%c0_218, %c0_219] : memref<4x768xbf16, #tpu.memory_space<vmem>>, vector<4x768xbf16>
    %c0_220 = arith.constant 0 : index
    %c0_221 = arith.constant 0 : index
    %207 = vector.load %arg25[%c0_220, %c0_221] : memref<768x256xbf16, #tpu.memory_space<vmem>>, vector<768x256xbf16>
    %cst_222 = arith.constant dense<0.000000e+00> : vector<4x256xf32>
    %208 = tpu.matmul %206, %207, %cst_222 {dimension_numbers = #tpu.dot_dimension_numbers<[1], [0], [0], [1], [0, 0, 1, 1], [], []>} : vector<4x768xbf16>, vector<768x256xbf16>, vector<4x256xf32> -> vector<4x256xf32>
    %c0_223 = arith.constant 0 : index
    %c0_224 = arith.constant 0 : index
    %209 = vector.load %arg26[%c0_223, %c0_224] : memref<1x256xf32, #tpu.memory_space<vmem>>, vector<1x256xf32>
    %210 = vector.broadcast %209 : vector<1x256xf32> to vector<4x256xf32>
    %211 = arith.addf %208, %210 : vector<4x256xf32>
    %cst_225 = arith.constant 2.000000e-01 : f32
    %212 = vector.broadcast %cst_225 : f32 to vector<4x256xf32>
    %213 = arith.mulf %212, %211 : vector<4x256xf32>
    %214 = arith.maximumf %211, %213 : vector<4x256xf32>
    %215 = arith.truncf %214 : vector<4x256xf32> to vector<4x256xbf16>
    %c0_226 = arith.constant 0 : index
    %c0_227 = arith.constant 0 : index
    %216 = vector.load %arg28[%c0_226, %c0_227] : memref<256x128xbf16, #tpu.memory_space<vmem>>, vector<256x128xbf16>
    %cst_228 = arith.constant dense<0.000000e+00> : vector<4x128xf32>
    %217 = tpu.matmul %215, %216, %cst_228 {dimension_numbers = #tpu.dot_dimension_numbers<[1], [0], [0], [1], [0, 0, 1, 1], [], []>} : vector<4x256xbf16>, vector<256x128xbf16>, vector<4x128xf32> -> vector<4x128xf32>
    %c0_229 = arith.constant 0 : index
    %c0_230 = arith.constant 0 : index
    %218 = vector.load %arg29[%c0_229, %c0_230] : memref<1x128xf32, #tpu.memory_space<vmem>>, vector<1x128xf32>
    %219 = vector.broadcast %218 : vector<1x128xf32> to vector<4x128xf32>
    %220 = arith.addf %217, %219 : vector<4x128xf32>
    %c0_231 = arith.constant 0 : index
    %c0_232 = arith.constant 0 : index
    %c0_233 = arith.constant 0 : index
    %221 = vector.load %arg30[%c0_231, %c0_232, %c0_233] : memref<1x4x128xf32, #tpu.memory_space<vmem>>, vector<1x4x128xf32>
    %222 = vector.shape_cast %221 : vector<1x4x128xf32> to vector<4x128xf32>
    %223 = vector.shape_cast %220 : vector<4x128xf32> to vector<1x4x128xf32>
    tpu.vector_store %arg30[%c0_231, %c0_232, %c0_233], %223 {strides = array<i32>} : memref<1x4x128xf32, #tpu.memory_space<vmem>>, vector<1x4x128xf32>,
    return
  }
  func.func @transform_0(%arg0: i32) -> (i32, i32, i32) {
    %c0_i32 = arith.constant 0 : i32
    %c0_i32_0 = arith.constant 0 : i32
    %c0_i32_1 = arith.constant 0 : i32
    return %arg0, %c0_i32, %c0_i32_0 : i32, i32, i32
  }
  func.func @transform_1(%arg0: i32) -> (i32, i32, i32) {
    %c0_i32 = arith.constant 0 : i32
    %c0_i32_0 = arith.constant 0 : i32
    %c0_i32_1 = arith.constant 0 : i32
    %c0_i32_2 = arith.constant 0 : i32
    return %c0_i32, %c0_i32_0, %c0_i32_1 : i32, i32, i32
  }
  func.func @transform_2(%arg0: i32) -> (i32, i32) {
    %c0_i32 = arith.constant 0 : i32
    %c0_i32_0 = arith.constant 0 : i32
    %c0_i32_1 = arith.constant 0 : i32
    return %c0_i32, %c0_i32_0 : i32, i32
  }
  func.func @transform_3(%arg0: i32) -> (i32, i32) {
    %c0_i32 = arith.constant 0 : i32
    %c0_i32_0 = arith.constant 0 : i32
    %c0_i32_1 = arith.constant 0 : i32
    return %c0_i32, %c0_i32_0 : i32, i32
  }
  func.func @transform_4(%arg0: i32) -> (i32, i32) {
    %c0_i32 = arith.constant 0 : i32
    %c0_i32_0 = arith.constant 0 : i32
    %c0_i32_1 = arith.constant 0 : i32
    return %c0_i32, %c0_i32_0 : i32, i32
  }
  func.func @transform_5(%arg0: i32) -> (i32, i32) {
    %c0_i32 = arith.constant 0 : i32
    %c0_i32_0 = arith.constant 0 : i32
    %c0_i32_1 = arith.constant 0 : i32
    return %c0_i32, %c0_i32_0 : i32, i32
  }
  func.func @transform_6(%arg0: i32) -> (i32, i32) {
    %c0_i32 = arith.constant 0 : i32
    %c0_i32_0 = arith.constant 0 : i32
    %c0_i32_1 = arith.constant 0 : i32
    return %c0_i32, %c0_i32_0 : i32, i32
  }
  func.func @transform_7(%arg0: i32) -> (i32, i32) {
    %c0_i32 = arith.constant 0 : i32
    %c0_i32_0 = arith.constant 0 : i32
    %c0_i32_1 = arith.constant 0 : i32
    return %c0_i32, %c0_i32_0 : i32, i32
  }
  func.func @transform_8(%arg0: i32) -> (i32, i32) {
    %c0_i32 = arith.constant 0 : i32
    %c0_i32_0 = arith.constant 0 : i32
    %c0_i32_1 = arith.constant 0 : i32
    return %c0_i32, %c0_i32_0 : i32, i32
  }
  func.func @transform_9(%arg0: i32) -> (i32, i32) {
    %c0_i32 = arith.constant 0 : i32
    %c0_i32_0 = arith.constant 0 : i32
    %c0_i32_1 = arith.constant 0 : i32
    return %c0_i32, %c0_i32_0 : i32, i32
  }
  func.func @transform_10(%arg0: i32) -> (i32, i32) {
    %c0_i32 = arith.constant 0 : i32
    %c0_i32_0 = arith.constant 0 : i32
    %c0_i32_1 = arith.constant 0 : i32
    return %c0_i32, %c0_i32_0 : i32, i32
  }
  func.func @transform_11(%arg0: i32) -> (i32, i32) {
    %c0_i32 = arith.constant 0 : i32
    %c0_i32_0 = arith.constant 0 : i32
    %c0_i32_1 = arith.constant 0 : i32
    return %c0_i32, %c0_i32_0 : i32, i32
  }
  func.func @transform_12(%arg0: i32) -> (i32, i32) {
    %c0_i32 = arith.constant 0 : i32
    %c0_i32_0 = arith.constant 0 : i32
    %c0_i32_1 = arith.constant 0 : i32
    return %c0_i32, %c0_i32_0 : i32, i32
  }
  func.func @transform_13(%arg0: i32) -> (i32, i32) {
    %c0_i32 = arith.constant 0 : i32
    %c0_i32_0 = arith.constant 0 : i32
    %c0_i32_1 = arith.constant 0 : i32
    return %c0_i32, %c0_i32_0 : i32, i32
  }
  func.func @transform_14(%arg0: i32) -> (i32, i32) {
    %c0_i32 = arith.constant 0 : i32
    %c0_i32_0 = arith.constant 0 : i32
    %c0_i32_1 = arith.constant 0 : i32
    return %c0_i32, %c0_i32_0 : i32, i32
  }
  func.func @transform_15(%arg0: i32) -> (i32, i32) {
    %c0_i32 = arith.constant 0 : i32
    %c0_i32_0 = arith.constant 0 : i32
    %c0_i32_1 = arith.constant 0 : i32
    return %c0_i32, %c0_i32_0 : i32, i32
  }
  func.func @transform_16(%arg0: i32) -> (i32, i32) {
    %c0_i32 = arith.constant 0 : i32
    %c0_i32_0 = arith.constant 0 : i32
    %c0_i32_1 = arith.constant 0 : i32
    return %c0_i32, %c0_i32_0 : i32, i32
  }
  func.func @transform_17(%arg0: i32) -> (i32, i32) {
    %c0_i32 = arith.constant 0 : i32
    %c0_i32_0 = arith.constant 0 : i32
    %c0_i32_1 = arith.constant 0 : i32
    return %c0_i32, %c0_i32_0 : i32, i32
  }
  func.func @transform_18(%arg0: i32) -> (i32, i32) {
    %c0_i32 = arith.constant 0 : i32
    %c0_i32_0 = arith.constant 0 : i32
    %c0_i32_1 = arith.constant 0 : i32
    return %c0_i32, %c0_i32_0 : i32, i32
  }
  func.func @transform_19(%arg0: i32) -> (i32, i32) {
    %c0_i32 = arith.constant 0 : i32
    %c0_i32_0 = arith.constant 0 : i32
    %c0_i32_1 = arith.constant 0 : i32
    return %c0_i32, %c0_i32_0 : i32, i32
  }
  func.func @transform_20(%arg0: i32) -> (i32, i32) {
    %c0_i32 = arith.constant 0 : i32
    %c0_i32_0 = arith.constant 0 : i32
    %c0_i32_1 = arith.constant 0 : i32
    return %c0_i32, %c0_i32_0 : i32, i32
  }
  func.func @transform_21(%arg0: i32) -> (i32, i32) {
    %c0_i32 = arith.constant 0 : i32
    %c0_i32_0 = arith.constant 0 : i32
    %c0_i32_1 = arith.constant 0 : i32
    return %c0_i32, %c0_i32_0 : i32, i32
  }
  func.func @transform_22(%arg0: i32) -> (i32, i32) {
    %c0_i32 = arith.constant 0 : i32
    %c0_i32_0 = arith.constant 0 : i32
    %c0_i32_1 = arith.constant 0 : i32
    return %c0_i32, %c0_i32_0 : i32, i32
  }
  func.func @transform_23(%arg0: i32) -> (i32, i32) {
    %c0_i32 = arith.constant 0 : i32
    %c0_i32_0 = arith.constant 0 : i32
    %c0_i32_1 = arith.constant 0 : i32
    return %c0_i32, %c0_i32_0 : i32, i32
  }
  func.func @transform_24(%arg0: i32) -> (i32, i32) {
    %c0_i32 = arith.constant 0 : i32
    %c0_i32_0 = arith.constant 0 : i32
    %c0_i32_1 = arith.constant 0 : i32
    return %c0_i32, %c0_i32_0 : i32, i32
  }
  func.func @transform_25(%arg0: i32) -> (i32, i32) {
    %c0_i32 = arith.constant 0 : i32
    %c0_i32_0 = arith.constant 0 : i32
    %c0_i32_1 = arith.constant 0 : i32
    return %c0_i32, %c0_i32_0 : i32, i32
  }
  func.func @transform_26(%arg0: i32) -> (i32, i32) {
    %c0_i32 = arith.constant 0 : i32
    %c0_i32_0 = arith.constant 0 : i32
    %c0_i32_1 = arith.constant 0 : i32
    return %c0_i32, %c0_i32_0 : i32, i32
  }
  func.func @transform_27(%arg0: i32) -> (i32, i32) {
    %c0_i32 = arith.constant 0 : i32
    %c0_i32_0 = arith.constant 0 : i32
    %c0_i32_1 = arith.constant 0 : i32
    return %c0_i32, %c0_i32_0 : i32, i32
  }
  func.func @transform_28(%arg0: i32) -> (i32, i32) {
    %c0_i32 = arith.constant 0 : i32
    %c0_i32_0 = arith.constant 0 : i32
    %c0_i32_1 = arith.constant 0 : i32
    return %c0_i32, %c0_i32_0 : i32, i32
  }
  func.func @transform_29(%arg0: i32) -> (i32, i32, i32) {
    %c0_i32 = arith.constant 0 : i32
    %c0_i32_0 = arith.constant 0 : i32
    %c0_i32_1 = arith.constant 0 : i32
    return %arg0, %c0_i32, %c0_i32_0 : i32, i32, i32
  }
}

</mosaic_0001>

<llo_original>
// kernel: _lambda_.1
$region0: #{_lambda_.1}
  #allocation0 [shape = 'u32[]', space=smem, size = 0x4, offset = 0x4, fixed_abs, tag = 'smem constant byte address 0x4 - core index']
  #allocation1 [shape = 'u32[144,128]{1,0:T(1,128)}', space=vmem, size = 0x12000, scoped, tag = 'internal scratch']
  #allocation2 [shape = 'f32[20,512]{1,0:T(8,128)}', space=vmem, size = 0xc000, scoped, tag = 'scratch operand']
  #allocation3 [shape = 'bf16[18,1536]{1,0:T(8,128)(2,1)}', space=vmem, size = 0x12000, scoped, tag = 'scratch operand']
  #allocation4 [shape = 'f32[20,256]{1,0:T(8,128)}', space=vmem, size = 0x6000, scoped, tag = 'scratch operand']
  #allocation5 [shape = 'bf16[18,768]{1,0:T(8,128)(2,1)}', space=vmem, size = 0x9000, scoped, tag = 'scratch operand']
  #allocation6 [shape = 'f32[12,256]{1,0:T(8,128)}', space=vmem, size = 0x4000, scoped, tag = 'scratch operand']
  #allocation7 [shape = 'bf16[10,768]{1,0:T(8,128)(2,1)}', space=vmem, size = 0x6000, scoped, tag = 'scratch operand']
  #allocation8 [shape = 'f32[12,256]{1,0:T(8,128)}', space=vmem, size = 0x4000, scoped, tag = 'scratch operand']
  #allocation9 [shape = 'bf16[10,768]{1,0:T(8,128)(2,1)}', space=vmem, size = 0x6000, scoped, tag = 'scratch operand']
  #allocation10 [shape = 'f32[8,256]{1,0:T(8,128)}', space=vmem, size = 0x2000, scoped, tag = 'scratch operand']
  #allocation11 [shape = 'bf16[6,768]{1,0:T(8,128)(2,1)}', space=vmem, size = 0x3000, scoped, tag = 'scratch operand']
  #allocation12 [shape = 'f32[8,256]{1,0:T(8,128)}', space=vmem, size = 0x2000, scoped, tag = 'scratch operand']
  #allocation13 [shape = 'bf16[6,768]{1,0:T(8,128)(2,1)}', space=vmem, size = 0x3000, scoped, tag = 'scratch operand']
  #allocation14 [shape = 'f32[6,256]{1,0:T(8,128)}', space=vmem, size = 0x2000, scoped, tag = 'scratch operand']
  #allocation15 [shape = 'bf16[4,768]{1,0:T(4,128)(2,1)}', space=vmem, size = 0x1800, scoped, tag = 'scratch operand']
  #allocation16 [shape = 'f32[6,256]{1,0:T(8,128)}', space=vmem, size = 0x2000, scoped, tag = 'scratch operand']
  #allocation17 [shape = 'bf16[4,768]{1,0:T(4,128)(2,1)}', space=vmem, size = 0x1800, scoped, tag = 'scratch operand']
  %s0 = inlined_call_operand.smem [shape: u32[30], index: -1, kind: input, shape index: {}]
  %s1 = sld [smem:[%s0]]
  %s2 = scalar_lea.smem %s0, 1
  %s3 = sld [smem:[%s2]]
  %s4 = scalar_lea.smem %s0, 2
  %s5 = sld [smem:[%s4]]
  %s6 = scalar_lea.smem %s0, 3
  %s7 = sld [smem:[%s6]]
  %s8 = scalar_lea.smem %s0, 4
  %s9 = sld [smem:[%s8]]
  %s10 = scalar_lea.smem %s0, 5
  %s11 = sld [smem:[%s10]]
  %s12 = scalar_lea.smem %s0, 6
  %s13 = sld [smem:[%s12]]
  %s14 = scalar_lea.smem %s0, 7
  %s15 = sld [smem:[%s14]]
  %s16 = scalar_lea.smem %s0, 8
  %s17 = sld [smem:[%s16]]
  %s18 = scalar_lea.smem %s0, 9
  %s19 = sld [smem:[%s18]]
  %s20 = scalar_lea.smem %s0, 10
  %s21 = sld [smem:[%s20]]
  %s22 = scalar_lea.smem %s0, 11
  %s23 = sld [smem:[%s22]]
  %s24 = scalar_lea.smem %s0, 12
  %s25 = sld [smem:[%s24]]
  %s26 = scalar_lea.smem %s0, 13
  %s27 = sld [smem:[%s26]]
  %s28 = scalar_lea.smem %s0, 14
  %s29 = sld [smem:[%s28]]
  %s30 = scalar_lea.smem %s0, 15
  %s31 = sld [smem:[%s30]]
  %s32 = scalar_lea.smem %s0, 16
  %s33 = sld [smem:[%s32]]
  %s34 = scalar_lea.smem %s0, 17
  %s35 = sld [smem:[%s34]]
  %s36 = scalar_lea.smem %s0, 18
  %s37 = sld [smem:[%s36]]
  %s38 = scalar_lea.smem %s0, 19
  %s39 = sld [smem:[%s38]]
  %s40 = scalar_lea.smem %s0, 20
  %s41 = sld [smem:[%s40]]
  %s42 = scalar_lea.smem %s0, 21
  %s43 = sld [smem:[%s42]]
  %s44 = scalar_lea.smem %s0, 22
  %s45 = sld [smem:[%s44]]
  %s46 = scalar_lea.smem %s0, 23
  %s47 = sld [smem:[%s46]]
  %s48 = scalar_lea.smem %s0, 24
  %s49 = sld [smem:[%s48]]
  %s50 = scalar_lea.smem %s0, 25
  %s51 = sld [smem:[%s50]]
  %s52 = scalar_lea.smem %s0, 26
  %s53 = sld [smem:[%s52]]
  %s54 = scalar_lea.smem %s0, 27
  %s55 = sld [smem:[%s54]]
  %s56 = scalar_lea.smem %s0, 28
  %s57 = sld [smem:[%s56]]
  %s58 = scalar_lea.smem %s0, 29
  %s59 = sld [smem:[%s58]]
  %s60 = sld [smem:[#allocation0]]
  $region158: #{_lambda_.1} parent=0
    _
  %s62 = ssub.s32 1, %s60
  %s63 = scalar_select 0, %s62, %s60
  $region1: #{_lambda_.1} parent=0
    #allocation18 [shape = 'u8[786432]{0}', space=vmem, size = 0xc0000, scoped, tag = 'input window, operand 4, single buffered']
    #allocation19 [shape = 's32[1]{0}', space=sflag, size = 0x4, scoped, tag = 'scoped memory for _lambda_.1']
    #allocation20 [shape = 'u8[393216]{0}', space=vmem, size = 0x60000, scoped, tag = 'input window, operand 10, single buffered']
    #allocation21 [shape = 's32[1]{0}', space=sflag, size = 0x4, scoped, tag = 'scoped memory for _lambda_.1']
    #allocation22 [shape = 'u8[393216]{0}', space=vmem, size = 0x60000, scoped, tag = 'input window, operand 12, single buffered']
    #allocation23 [shape = 'u8[393216]{0}', space=vmem, size = 0x60000, scoped, tag = 'input window, operand 16, single buffered']
    #allocation24 [shape = 's32[1]{0}', space=sflag, size = 0x4, scoped, tag = 'scoped memory for _lambda_.1']
    #allocation25 [shape = 'u8[393216]{0}', space=vmem, size = 0x60000, scoped, tag = 'input window, operand 18, single buffered']
    #allocation26 [shape = 'u8[393216]{0}', space=vmem, size = 0x60000, scoped, tag = 'input window, operand 22, single buffered']
    #allocation27 [shape = 's32[1]{0}', space=sflag, size = 0x4, scoped, tag = 'scoped memory for _lambda_.1']
    #allocation28 [shape = 'u8[393216]{0}', space=vmem, size = 0x60000, scoped, tag = 'input window, operand 24, single buffered']
    %64 = vsyncpa [#allocation19], 0
    %65 = vsyncpa [#allocation21], 0
    %66 = vsyncpa [#allocation24], 0
    %67 = vsyncpa [#allocation27], 0
    // Predicated region
    $region2: #{_lambda_.1} parent=1 // pred_check
      _
    $region3: #{_lambda_.1} parent=1 // pred_check_branch
      %69 = sbr.rel (0) target = $region5
    $region4: #{_lambda_.1} parent=1 // pred_region
      _
    $region5: #{_lambda_.1} parent=1 // pred_fallthru
      _
    // Predicated region
    $region6: #{_lambda_.1} parent=1 // pred_check
      _
    $region7: #{_lambda_.1} parent=1 // pred_check_branch
      %71 = sbr.rel (0) target = $region9
    $region8: #{_lambda_.1} parent=1 // pred_region
      _
    $region9: #{_lambda_.1} parent=1 // pred_fallthru
      _
    // Predicated region
    $region10: #{_lambda_.1} parent=1 // pred_check
      _
    $region11: #{_lambda_.1} parent=1 // pred_check_branch
      %73 = sbr.rel (0) target = $region13
    $region12: #{_lambda_.1} parent=1 // pred_region
      _
    $region13: #{_lambda_.1} parent=1 // pred_fallthru
      _
    // Predicated region
    $region14: #{_lambda_.1} parent=1 // pred_check
      _
    $region15: #{_lambda_.1} parent=1 // pred_check_branch
      %75 = sbr.rel (0) target = $region17
    $region16: #{_lambda_.1} parent=1 // pred_region
      _
    $region17: #{_lambda_.1} parent=1 // pred_fallthru
      _
    // Predicated region
    $region18: #{_lambda_.1} parent=1 // pred_check
      _
    $region19: #{_lambda_.1} parent=1 // pred_check_branch
      %77 = sbr.rel (0) target = $region21
    $region20: #{_lambda_.1} parent=1 // pred_region
      %s79 = ssub.s32 24576, 24576
      %80 = vsyncadd [#allocation19], %s79
      %s81 = sshll.u32 [#allocation18], 4
      %s82 = int_to_ptr.vmem [resolvable:$true] %s81
      %87 = dma.hbm_to_vmem [thread:$0]  %s9, 24576, %s82, [#allocation19], 128, 128, 8
    $region21: #{_lambda_.1} parent=1 // pred_fallthru
      _
    // Predicated region
    $region22: #{_lambda_.1} parent=1 // pred_check
      _
    $region23: #{_lambda_.1} parent=1 // pred_check_branch
      %89 = sbr.rel (0) target = $region25
    $region24: #{_lambda_.1} parent=1 // pred_region
      _
    $region25: #{_lambda_.1} parent=1 // pred_fallthru
      _
    // Predicated region
    $region26: #{_lambda_.1} parent=1 // pred_check
      _
    $region27: #{_lambda_.1} parent=1 // pred_check_branch
      %91 = sbr.rel (0) target = $region29
    $region28: #{_lambda_.1} parent=1 // pred_region
      _
    $region29: #{_lambda_.1} parent=1 // pred_fallthru
      _
    // Predicated region
    $region30: #{_lambda_.1} parent=1 // pred_check
      _
    $region31: #{_lambda_.1} parent=1 // pred_check_branch
      %93 = sbr.rel (0) target = $region33
    $region32: #{_lambda_.1} parent=1 // pred_region
      _
    $region33: #{_lambda_.1} parent=1 // pred_fallthru
      _
    // Predicated region
    $region34: #{_lambda_.1} parent=1 // pred_check
      _
    $region35: #{_lambda_.1} parent=1 // pred_check_branch
      %95 = sbr.rel (0) target = $region37
    $region36: #{_lambda_.1} parent=1 // pred_region
      _
    $region37: #{_lambda_.1} parent=1 // pred_fallthru
      _
    // Predicated region
    $region38: #{_lambda_.1} parent=1 // pred_check
      _
    $region39: #{_lambda_.1} parent=1 // pred_check_branch
      %97 = sbr.rel (0) target = $region41
    $region40: #{_lambda_.1} parent=1 // pred_region
      _
    $region41: #{_lambda_.1} parent=1 // pred_fallthru
      _
    // Predicated region
    $region42: #{_lambda_.1} parent=1 // pred_check
      _
    $region43: #{_lambda_.1} parent=1 // pred_check_branch
      %99 = sbr.rel (0) target = $region45
    $region44: #{_lambda_.1} parent=1 // pred_region
      %s101 = ssub.s32 12288, 12288
      %102 = vsyncadd [#allocation21], %s101
      %s103 = sshll.u32 [#allocation20], 4
      %s104 = int_to_ptr.vmem [resolvable:$true] %s103
      %109 = dma.hbm_to_vmem [thread:$0]  %s21, 12288, %s104, [#allocation21], 128, 128, 8
    $region45: #{_lambda_.1} parent=1 // pred_fallthru
      _
    // Predicated region
    $region46: #{_lambda_.1} parent=1 // pred_check
      _
    $region47: #{_lambda_.1} parent=1 // pred_check_branch
      %111 = sbr.rel (0) target = $region49
    $region48: #{_lambda_.1} parent=1 // pred_region
      _
    $region49: #{_lambda_.1} parent=1 // pred_fallthru
      _
    // Predicated region
    $region50: #{_lambda_.1} parent=1 // pred_check
      _
    $region51: #{_lambda_.1} parent=1 // pred_check_branch
      %113 = sbr.rel (0) target = $region53
    $region52: #{_lambda_.1} parent=1 // pred_region
      %s115 = ssub.s32 12288, 12288
      %116 = vsyncadd [#allocation21], %s115
      %s117 = sshll.u32 [#allocation22], 4
      %s118 = int_to_ptr.vmem [resolvable:$true] %s117
      %123 = dma.hbm_to_vmem [thread:$0]  %s25, 12288, %s118, [#allocation21], 128, 128, 8
    $region53: #{_lambda_.1} parent=1 // pred_fallthru
      _
    // Predicated region
    $region54: #{_lambda_.1} parent=1 // pred_check
      _
    $region55: #{_lambda_.1} parent=1 // pred_check_branch
      %125 = sbr.rel (0) target = $region57
    $region56: #{_lambda_.1} parent=1 // pred_region
      _
    $region57: #{_lambda_.1} parent=1 // pred_fallthru
      _
    // Predicated region
    $region58: #{_lambda_.1} parent=1 // pred_check
      _
    $region59: #{_lambda_.1} parent=1 // pred_check_branch
      %127 = sbr.rel (0) target = $region61
    $region60: #{_lambda_.1} parent=1 // pred_region
      _
    $region61: #{_lambda_.1} parent=1 // pred_fallthru
      _
    // Predicated region
    $region62: #{_lambda_.1} parent=1 // pred_check
      _
    $region63: #{_lambda_.1} parent=1 // pred_check_branch
      %129 = sbr.rel (0) target = $region65
    $region64: #{_lambda_.1} parent=1 // pred_region
      _
    $region65: #{_lambda_.1} parent=1 // pred_fallthru
      _
    // Predicated region
    $region66: #{_lambda_.1} parent=1 // pred_check
      _
    $region67: #{_lambda_.1} parent=1 // pred_check_branch
      %131 = sbr.rel (0) target = $region69
    $region68: #{_lambda_.1} parent=1 // pred_region
      %s133 = ssub.s32 12288, 12288
      %134 = vsyncadd [#allocation24], %s133
      %s135 = sshll.u32 [#allocation23], 4
      %s136 = int_to_ptr.vmem [resolvable:$true] %s135
      %141 = dma.hbm_to_vmem [thread:$0]  %s33, 12288, %s136, [#allocation24], 128, 128, 8
    $region69: #{_lambda_.1} parent=1 // pred_fallthru
      _
    // Predicated region
    $region70: #{_lambda_.1} parent=1 // pred_check
      _
    $region71: #{_lambda_.1} parent=1 // pred_check_branch
      %143 = sbr.rel (0) target = $region73
    $region72: #{_lambda_.1} parent=1 // pred_region
      _
    $region73: #{_lambda_.1} parent=1 // pred_fallthru
      _
    // Predicated region
    $region74: #{_lambda_.1} parent=1 // pred_check
      _
    $region75: #{_lambda_.1} parent=1 // pred_check_branch
      %145 = sbr.rel (0) target = $region77
    $region76: #{_lambda_.1} parent=1 // pred_region
      %s147 = ssub.s32 12288, 12288
      %148 = vsyncadd [#allocation24], %s147
      %s149 = sshll.u32 [#allocation25], 4
      %s150 = int_to_ptr.vmem [resolvable:$true] %s149
      %155 = dma.hbm_to_vmem [thread:$0]  %s37, 12288, %s150, [#allocation24], 128, 128, 8
    $region77: #{_lambda_.1} parent=1 // pred_fallthru
      _
    // Predicated region
    $region78: #{_lambda_.1} parent=1 // pred_check
      _
    $region79: #{_lambda_.1} parent=1 // pred_check_branch
      %157 = sbr.rel (0) target = $region81
    $region80: #{_lambda_.1} parent=1 // pred_region
      _
    $region81: #{_lambda_.1} parent=1 // pred_fallthru
      _
    // Predicated region
    $region82: #{_lambda_.1} parent=1 // pred_check
      _
    $region83: #{_lambda_.1} parent=1 // pred_check_branch
      %159 = sbr.rel (0) target = $region85
    $region84: #{_lambda_.1} parent=1 // pred_region
      _
    $region85: #{_lambda_.1} parent=1 // pred_fallthru
      _
    // Predicated region
    $region86: #{_lambda_.1} parent=1 // pred_check
      _
    $region87: #{_lambda_.1} parent=1 // pred_check_branch
      %161 = sbr.rel (0) target = $region89
    $region88: #{_lambda_.1} parent=1 // pred_region
      _
    $region89: #{_lambda_.1} parent=1 // pred_fallthru
      _
    // Predicated region
    $region90: #{_lambda_.1} parent=1 // pred_check
      _
    $region91: #{_lambda_.1} parent=1 // pred_check_branch
      %163 = sbr.rel (0) target = $region93
    $region92: #{_lambda_.1} parent=1 // pred_region
      %s165 = ssub.s32 12288, 12288
      %166 = vsyncadd [#allocation27], %s165
      %s167 = sshll.u32 [#allocation26], 4
      %s168 = int_to_ptr.vmem [resolvable:$true] %s167
      %173 = dma.hbm_to_vmem [thread:$0]  %s45, 12288, %s168, [#allocation27], 128, 128, 8
    $region93: #{_lambda_.1} parent=1 // pred_fallthru
      _
    // Predicated region
    $region94: #{_lambda_.1} parent=1 // pred_check
      _
    $region95: #{_lambda_.1} parent=1 // pred_check_branch
      %175 = sbr.rel (0) target = $region97
    $region96: #{_lambda_.1} parent=1 // pred_region
      _
    $region97: #{_lambda_.1} parent=1 // pred_fallthru
      _
    // Predicated region
    $region98: #{_lambda_.1} parent=1 // pred_check
      _
    $region99: #{_lambda_.1} parent=1 // pred_check_branch
      %177 = sbr.rel (0) target = $region101
    $region100: #{_lambda_.1} parent=1 // pred_region
      %s179 = ssub.s32 12288, 12288
      %180 = vsyncadd [#allocation27], %s179
      %s181 = sshll.u32 [#allocation28], 4
      %s182 = int_to_ptr.vmem [resolvable:$true] %s181
      %187 = dma.hbm_to_vmem [thread:$0]  %s49, 12288, %s182, [#allocation27], 128, 128, 8
    $region101: #{_lambda_.1} parent=1 // pred_fallthru
      _
    // Predicated region
    $region102: #{_lambda_.1} parent=1 // pred_check
      _
    $region103: #{_lambda_.1} parent=1 // pred_check_branch
      %189 = sbr.rel (0) target = $region105
    $region104: #{_lambda_.1} parent=1 // pred_region
      _
    $region105: #{_lambda_.1} parent=1 // pred_fallthru
      _
    // Predicated region
    $region106: #{_lambda_.1} parent=1 // pred_check
      _
    $region107: #{_lambda_.1} parent=1 // pred_check_branch
      %191 = sbr.rel (0) target = $region109
    $region108: #{_lambda_.1} parent=1 // pred_region
      _
    $region109: #{_lambda_.1} parent=1 // pred_fallthru
      _
    // Predicated region
    $region110: #{_lambda_.1} parent=1 // pred_check
      _
    $region111: #{_lambda_.1} parent=1 // pred_check_branch
      %193 = sbr.rel (0) target = $region113
    $region112: #{_lambda_.1} parent=1 // pred_region
      _
    $region113: #{_lambda_.1} parent=1 // pred_fallthru
      _
    // Predicated region
    $region114: #{_lambda_.1} parent=1 // pred_check
      _
    $region115: #{_lambda_.1} parent=1 // pred_check_branch
      %195 = sbr.rel (0) target = $region117
    $region116: #{_lambda_.1} parent=1 // pred_region
      _
    $region117: #{_lambda_.1} parent=1 // pred_fallthru
      _
    // Predicated region
    $region118: #{_lambda_.1} parent=1 // pred_check
      _
    $region119: #{_lambda_.1} parent=1 // pred_check_branch
      %197 = sbr.rel (0) target = $region121
    $region120: #{_lambda_.1} parent=1 // pred_region
      %198 = dma.done [#allocation19], 24576
    $region121: #{_lambda_.1} parent=1 // pred_fallthru
      _
    // Predicated region
    $region122: #{_lambda_.1} parent=1 // pred_check
      _
    $region123: #{_lambda_.1} parent=1 // pred_check_branch
      %200 = sbr.rel (0) target = $region125
    $region124: #{_lambda_.1} parent=1 // pred_region
      %201 = dma.done [#allocation21], 12288
    $region125: #{_lambda_.1} parent=1 // pred_fallthru
      _
    // Predicated region
    $region126: #{_lambda_.1} parent=1 // pred_check
      _
    $region127: #{_lambda_.1} parent=1 // pred_check_branch
      %203 = sbr.rel (0) target = $region129
    $region128: #{_lambda_.1} parent=1 // pred_region
      %204 = dma.done [#allocation21], 12288
    $region129: #{_lambda_.1} parent=1 // pred_fallthru
      _
    // Predicated region
    $region130: #{_lambda_.1} parent=1 // pred_check
      _
    $region131: #{_lambda_.1} parent=1 // pred_check_branch
      %206 = sbr.rel (0) target = $region133
    $region132: #{_lambda_.1} parent=1 // pred_region
      %207 = dma.done [#allocation24], 12288
    $region133: #{_lambda_.1} parent=1 // pred_fallthru
      _
    // Predicated region
    $region134: #{_lambda_.1} parent=1 // pred_check
      _
    $region135: #{_lambda_.1} parent=1 // pred_check_branch
      %209 = sbr.rel (0) target = $region137
    $region136: #{_lambda_.1} parent=1 // pred_region
      %210 = dma.done [#allocation24], 12288
    $region137: #{_lambda_.1} parent=1 // pred_fallthru
      _
    // Predicated region
    $region138: #{_lambda_.1} parent=1 // pred_check
      _
    $region139: #{_lambda_.1} parent=1 // pred_check_branch
      %212 = sbr.rel (0) target = $region141
    $region140: #{_lambda_.1} parent=1 // pred_region
      %213 = dma.done [#allocation27], 12288
    $region141: #{_lambda_.1} parent=1 // pred_fallthru
      _
    // Predicated region
    $region142: #{_lambda_.1} parent=1 // pred_check
      _
    $region143: #{_lambda_.1} parent=1 // pred_check_branch
      %215 = sbr.rel (0) target = $region145
    $region144: #{_lambda_.1} parent=1 // pred_region
      %216 = dma.done [#allocation27], 12288
    $region145: #{_lambda_.1} parent=1 // pred_fallthru
      _
    %p218 = scmp.eq.s32.totalorder 0, 0
    // Predicated region
    $region146: #{_lambda_.1} parent=1 // pred_check
      %p219 = pneg %p218
    $region147: #{_lambda_.1} parent=1 // pred_check_branch
      %221 = sbr.rel (%p219) target = $region149
    $region148: #{_lambda_.1} parent=1 // pred_region
      %222 = vst [vmem:[#allocation4] sm:$0xff] 0.0
      %223 = vst [vmem:[#allocation4 + $0x8] sm:$0xff] 0.0
      %224 = vst [vmem:[#allocation4 + $0x10] sm:$0xff] 0.0
      %225 = vst [vmem:[#allocation4 + $0x18] sm:$0xff] 0.0
      %226 = vst [vmem:[#allocation4 + $0x20] sm:$0xf] 0.0
      %227 = vst [vmem:[#allocation4 + $0x28] sm:$0xf] 0.0
      %228 = vst [vmem:[#allocation8] sm:$0xff] 0.0
      %229 = vst [vmem:[#allocation8 + $0x8] sm:$0xff] 0.0
      %230 = vst [vmem:[#allocation8 + $0x10] sm:$0xf] 0.0
      %231 = vst [vmem:[#allocation8 + $0x18] sm:$0xf] 0.0
      %232 = vst [vmem:[#allocation12] sm:$0xff] 0.0
      %233 = vst [vmem:[#allocation12 + $0x8] sm:$0xff] 0.0
      %234 = vst [vmem:[#allocation16] sm:$0x3f] 0.0
      %235 = vst [vmem:[#allocation16 + $0x8] sm:$0x3f] 0.0
    $region149: #{_lambda_.1} parent=1 // pred_fallthru
      _
    %v236 = vld [vmem:[%s1] sm:$0xff]
    %v237 = vld [vmem:[%s1 + $0x8] sm:$0xff]
    %v238 = vld [vmem:[%s1 + $0x10] sm:$0xff]
    %v239 = vld [vmem:[%s1 + $0x18] sm:$0xff]
    %v240 = vld [vmem:[%s1 + $0x20] sm:$0xff]
    %v241 = vld [vmem:[%s1 + $0x28] sm:$0xff]
    %v242 = vld [vmem:[%s1 + $0x30] sm:$0xff]
    %v243 = vld [vmem:[%s1 + $0x38] sm:$0xff]
    %v244 = vld [vmem:[%s1 + $0x40] sm:$0xff]
    %v245 = vld [vmem:[%s1 + $0x48] sm:$0xff]
    %v246 = vld [vmem:[%s1 + $0x50] sm:$0xff]
    %v247 = vld [vmem:[%s1 + $0x58] sm:$0xff]
    %v248 = vld [vmem:[%s1 + $0x60] sm:$0xff]
    %v249 = vld [vmem:[%s1 + $0x68] sm:$0xff]
    %v250 = vld [vmem:[%s1 + $0x70] sm:$0xff]
    %v251 = vld [vmem:[%s1 + $0x78] sm:$0xff]
    %v252 = vld [vmem:[%s1 + $0x80] sm:$0xf]
    %v253 = vld [vmem:[%s1 + $0x88] sm:$0xf]
    %v254 = vpack.c.bf16 %v238, %v236
    %v255 = vpack.c.bf16 %v239, %v237
    %v256 = vpack.c.bf16 %v242, %v240
    %v257 = vpack.c.bf16 %v243, %v241
    %v258 = vpack.c.bf16 %v246, %v244
    %v259 = vpack.c.bf16 %v247, %v245
    %v260 = vpack.c.bf16 %v250, %v248
    %v261 = vpack.c.bf16 %v251, %v249
    %v262 = vpack.c.bf16 %v252, %v252
    %v263 = vpack.c.bf16 %v253, %v253
    %v264 = vld [vmem:[%s3] sm:$0xff]
    %v265 = vld [vmem:[%s3 + $0x8] sm:$0xff]
    %v266 = vld [vmem:[%s3 + $0x10] sm:$0xff]
    %v267 = vld [vmem:[%s3 + $0x18] sm:$0xff]
    %v268 = vld [vmem:[%s3 + $0x20] sm:$0xff]
    %v269 = vld [vmem:[%s3 + $0x28] sm:$0xff]
    %v270 = vld [vmem:[%s3 + $0x30] sm:$0xff]
    %v271 = vld [vmem:[%s3 + $0x38] sm:$0xff]
    %v272 = vld [vmem:[%s3 + $0x40] sm:$0xff]
    %v273 = vld [vmem:[%s3 + $0x48] sm:$0xff]
    %v274 = vld [vmem:[%s3 + $0x50] sm:$0xff]
    %v275 = vld [vmem:[%s3 + $0x58] sm:$0xff]
    %v276 = vld [vmem:[%s3 + $0x60] sm:$0xff]
    %v277 = vld [vmem:[%s3 + $0x68] sm:$0xff]
    %v278 = vld [vmem:[%s3 + $0x70] sm:$0xff]
    %v279 = vld [vmem:[%s3 + $0x78] sm:$0xff]
    %v280 = vld [vmem:[%s3 + $0x80] sm:$0xff]
    %v281 = vld [vmem:[%s3 + $0x88] sm:$0xff]
    %v282 = vld [vmem:[%s3 + $0x90] sm:$0xff]
    %v283 = vld [vmem:[%s3 + $0x98] sm:$0xff]
    %v284 = vld [vmem:[%s3 + $0xa0] sm:$0xff]
    %v285 = vld [vmem:[%s3 + $0xa8] sm:$0xff]
    %v286 = vld [vmem:[%s3 + $0xb0] sm:$0xff]
    %v287 = vld [vmem:[%s3 + $0xb8] sm:$0xff]
    %v288 = vld [vmem:[%s3 + $0xc0] sm:$0xff]
    %v289 = vld [vmem:[%s3 + $0xc8] sm:$0xff]
    %v290 = vld [vmem:[%s3 + $0xd0] sm:$0xff]
    %v291 = vld [vmem:[%s3 + $0xd8] sm:$0xff]
    %v292 = vld [vmem:[%s3 + $0xe0] sm:$0xff]
    %v293 = vld [vmem:[%s3 + $0xe8] sm:$0xff]
    %v294 = vld [vmem:[%s3 + $0xf0] sm:$0xff]
    %v295 = vld [vmem:[%s3 + $0xf8] sm:$0xff]
    %v296 = vld [vmem:[%s3 + $0x100] sm:$0xff]
    %v297 = vld [vmem:[%s3 + $0x108] sm:$0xff]
    %v298 = vld [vmem:[%s3 + $0x110] sm:$0xff]
    %v299 = vld [vmem:[%s3 + $0x118] sm:$0xff]
    %v300 = vld [vmem:[%s3 + $0x120] sm:$0xff]
    %v301 = vld [vmem:[%s3 + $0x128] sm:$0xff]
    %v302 = vld [vmem:[%s3 + $0x130] sm:$0xff]
    %v303 = vld [vmem:[%s3 + $0x138] sm:$0xff]
    %v304 = vld [vmem:[%s3 + $0x140] sm:$0xff]
    %v305 = vld [vmem:[%s3 + $0x148] sm:$0xff]
    %v306 = vld [vmem:[%s3 + $0x150] sm:$0xff]
    %v307 = vld [vmem:[%s3 + $0x158] sm:$0xff]
    %v308 = vld [vmem:[%s3 + $0x160] sm:$0xff]
    %v309 = vld [vmem:[%s3 + $0x168] sm:$0xff]
    %v310 = vld [vmem:[%s3 + $0x170] sm:$0xff]
    %v311 = vld [vmem:[%s3 + $0x178] sm:$0xff]
    %v312 = vld [vmem:[%s1] sm:$0xfe]
    %v313 = vld [vmem:[%s1 + $0x8] sm:$0xfe]
    %v314 = vld [vmem:[%s1 + $0x80] sm:$0x1f]
    %v315 = vld [vmem:[%s1 + $0x88] sm:$0x1f]
    %v316 = vpack.c.bf16 %v238, %v312
    %v317 = vpack.c.bf16 %v239, %v313
    %v318 = vpack.c.bf16 %v314, %v314
    %v319 = vpack.c.bf16 %v315, %v315
    %s320 = scalar_lea.vmem %s3, 384
    %v321 = vld [vmem:[%s320] sm:$0xff]
    %v322 = vld [vmem:[%s320 + $0x8] sm:$0xff]
    %v323 = vld [vmem:[%s320 + $0x10] sm:$0xff]
    %v324 = vld [vmem:[%s320 + $0x18] sm:$0xff]
    %v325 = vld [vmem:[%s320 + $0x20] sm:$0xff]
    %v326 = vld [vmem:[%s320 + $0x28] sm:$0xff]
    %v327 = vld [vmem:[%s320 + $0x30] sm:$0xff]
    %v328 = vld [vmem:[%s320 + $0x38] sm:$0xff]
    %v329 = vld [vmem:[%s320 + $0x40] sm:$0xff]
    %v330 = vld [vmem:[%s320 + $0x48] sm:$0xff]
    %v331 = vld [vmem:[%s320 + $0x50] sm:$0xff]
    %v332 = vld [vmem:[%s320 + $0x58] sm:$0xff]
    %v333 = vld [vmem:[%s320 + $0x60] sm:$0xff]
    %v334 = vld [vmem:[%s320 + $0x68] sm:$0xff]
    %v335 = vld [vmem:[%s320 + $0x70] sm:$0xff]
    %v336 = vld [vmem:[%s320 + $0x78] sm:$0xff]
    %v337 = vld [vmem:[%s320 + $0x80] sm:$0xff]
    %v338 = vld [vmem:[%s320 + $0x88] sm:$0xff]
    %v339 = vld [vmem:[%s320 + $0x90] sm:$0xff]
    %v340 = vld [vmem:[%s320 + $0x98] sm:$0xff]
    %v341 = vld [vmem:[%s320 + $0xa0] sm:$0xff]
    %v342 = vld [vmem:[%s320 + $0xa8] sm:$0xff]
    %v343 = vld [vmem:[%s320 + $0xb0] sm:$0xff]
    %v344 = vld [vmem:[%s320 + $0xb8] sm:$0xff]
    %v345 = vld [vmem:[%s320 + $0xc0] sm:$0xff]
    %v346 = vld [vmem:[%s320 + $0xc8] sm:$0xff]
    %v347 = vld [vmem:[%s320 + $0xd0] sm:$0xff]
    %v348 = vld [vmem:[%s320 + $0xd8] sm:$0xff]
    %v349 = vld [vmem:[%s320 + $0xe0] sm:$0xff]
    %v350 = vld [vmem:[%s320 + $0xe8] sm:$0xff]
    %v351 = vld [vmem:[%s320 + $0xf0] sm:$0xff]
    %v352 = vld [vmem:[%s320 + $0xf8] sm:$0xff]
    %v353 = vld [vmem:[%s320 + $0x100] sm:$0xff]
    %v354 = vld [vmem:[%s320 + $0x108] sm:$0xff]
    %v355 = vld [vmem:[%s320 + $0x110] sm:$0xff]
    %v356 = vld [vmem:[%s320 + $0x118] sm:$0xff]
    %v357 = vld [vmem:[%s320 + $0x120] sm:$0xff]
    %v358 = vld [vmem:[%s320 + $0x128] sm:$0xff]
    %v359 = vld [vmem:[%s320 + $0x130] sm:$0xff]
    %v360 = vld [vmem:[%s320 + $0x138] sm:$0xff]
    %v361 = vld [vmem:[%s320 + $0x140] sm:$0xff]
    %v362 = vld [vmem:[%s320 + $0x148] sm:$0xff]
    %v363 = vld [vmem:[%s320 + $0x150] sm:$0xff]
    %v364 = vld [vmem:[%s320 + $0x158] sm:$0xff]
    %v365 = vld [vmem:[%s320 + $0x160] sm:$0xff]
    %v366 = vld [vmem:[%s320 + $0x168] sm:$0xff]
    %v367 = vld [vmem:[%s320 + $0x170] sm:$0xff]
    %v368 = vld [vmem:[%s320 + $0x178] sm:$0xff]
    %vm369 = vsmask.f32 7424
    %v371 = vshrl.u32 %v316, 16
    %v373 = vshll.u32 %v316, 16
    %v375 = vrot.slane %v373, 1
    %v376 = vor.u32 %v371, %v375
    %v378 = vshll.u32 %v256, 16
    %v380 = vrot.slane %v378, 1
    %v381 = vsel %vm369, %v376, %v380
    %v383 = vshrl.u32 %v317, 16
    %v385 = vshll.u32 %v317, 16
    %v387 = vrot.slane %v385, 1
    %v388 = vor.u32 %v383, %v387
    %v390 = vshll.u32 %v257, 16
    %v392 = vrot.slane %v390, 1
    %v393 = vsel %vm369, %v388, %v392
    %v394 = vshrl.u32 %v256, 16
    %v396 = vor.u32 %v394, %v380
    %v398 = vshll.u32 %v258, 16
    %v400 = vrot.slane %v398, 1
    %v401 = vsel %vm369, %v396, %v400
    %v402 = vshrl.u32 %v257, 16
    %v404 = vor.u32 %v402, %v392
    %v406 = vshll.u32 %v259, 16
    %v408 = vrot.slane %v406, 1
    %v409 = vsel %vm369, %v404, %v408
    %v410 = vshrl.u32 %v258, 16
    %v412 = vor.u32 %v410, %v400
    %v414 = vshll.u32 %v260, 16
    %v416 = vrot.slane %v414, 1
    %v417 = vsel %vm369, %v412, %v416
    %v418 = vshrl.u32 %v259, 16
    %v420 = vor.u32 %v418, %v408
    %v422 = vshll.u32 %v261, 16
    %v424 = vrot.slane %v422, 1
    %v425 = vsel %vm369, %v420, %v424
    %v426 = vshrl.u32 %v260, 16
    %v428 = vor.u32 %v426, %v416
    %v430 = vshll.u32 %v318, 16
    %v432 = vrot.slane %v430, 1
    %v433 = vsel %vm369, %v428, %v432
    %v434 = vshrl.u32 %v261, 16
    %v436 = vor.u32 %v434, %v424
    %v438 = vshll.u32 %v319, 16
    %v440 = vrot.slane %v438, 1
    %v441 = vsel %vm369, %v436, %v440
    %v442 = vshrl.u32 %v318, 16
    %v444 = vor.u32 %v442, %v432
    %v445 = vshrl.u32 %v319, 16
    %v447 = vor.u32 %v445, %v440
    %v501 = vunpack.c.l.b16 %v321
    %v502 = vunpack.c.h.b16 %v321
    %v503 = vunpack.c.l.b16 %v322
    %v504 = vunpack.c.h.b16 %v322
    %v505 = vunpack.c.l.b16 %v323
    %v506 = vunpack.c.h.b16 %v323
    %v507 = vunpack.c.l.b16 %v324
    %v508 = vunpack.c.h.b16 %v324
    %v509 = vunpack.c.l.b16 %v325
    %v510 = vunpack.c.h.b16 %v325
    %v511 = vunpack.c.l.b16 %v326
    %v512 = vunpack.c.h.b16 %v326
    %v513 = vunpack.c.l.b16 %v327
    %v514 = vunpack.c.h.b16 %v327
    %v515 = vunpack.c.l.b16 %v328
    %v516 = vunpack.c.h.b16 %v328
    %v517 = vunpack.c.l.b16 %v329
    %v518 = vunpack.c.h.b16 %v329
    %v519 = vunpack.c.l.b16 %v330
    %v520 = vunpack.c.h.b16 %v330
    %v521 = vunpack.c.l.b16 %v331
    %v522 = vunpack.c.h.b16 %v331
    %v523 = vunpack.c.l.b16 %v332
    %v524 = vunpack.c.h.b16 %v332
    %v525 = vunpack.c.l.b16 %v333
    %v526 = vunpack.c.h.b16 %v333
    %v527 = vunpack.c.l.b16 %v334
    %v528 = vunpack.c.h.b16 %v334
    %v529 = vunpack.c.l.b16 %v335
    %v530 = vunpack.c.h.b16 %v335
    %v531 = vunpack.c.l.b16 %v336
    %v532 = vunpack.c.h.b16 %v336
    %v533 = vunpack.c.l.b16 %v337
    %v534 = vunpack.c.h.b16 %v337
    %v535 = vunpack.c.l.b16 %v338
    %v536 = vunpack.c.h.b16 %v338
    %v537 = vunpack.c.l.b16 %v339
    %v538 = vunpack.c.h.b16 %v339
    %v539 = vunpack.c.l.b16 %v340
    %v540 = vunpack.c.h.b16 %v340
    %v541 = vunpack.c.l.b16 %v341
    %v542 = vunpack.c.h.b16 %v341
    %v543 = vunpack.c.l.b16 %v342
    %v544 = vunpack.c.h.b16 %v342
    %v545 = vunpack.c.l.b16 %v343
    %v546 = vunpack.c.h.b16 %v343
    %v547 = vunpack.c.l.b16 %v344
    %v548 = vunpack.c.h.b16 %v344
    %v549 = vunpack.c.l.b16 %v345
    %v550 = vunpack.c.h.b16 %v345
    %v551 = vunpack.c.l.b16 %v346
    %v552 = vunpack.c.h.b16 %v346
    %v553 = vunpack.c.l.b16 %v347
    %v554 = vunpack.c.h.b16 %v347
    %v555 = vunpack.c.l.b16 %v348
    %v556 = vunpack.c.h.b16 %v348
    %v557 = vunpack.c.l.b16 %v349
    %v558 = vunpack.c.h.b16 %v349
    %v559 = vunpack.c.l.b16 %v350
    %v560 = vunpack.c.h.b16 %v350
    %v561 = vunpack.c.l.b16 %v351
    %v562 = vunpack.c.h.b16 %v351
    %v563 = vunpack.c.l.b16 %v352
    %v564 = vunpack.c.h.b16 %v352
    %v565 = vunpack.c.l.b16 %v353
    %v566 = vunpack.c.h.b16 %v353
    %v567 = vunpack.c.l.b16 %v354
    %v568 = vunpack.c.h.b16 %v354
    %v569 = vunpack.c.l.b16 %v355
    %v570 = vunpack.c.h.b16 %v355
    %v571 = vunpack.c.l.b16 %v356
    %v572 = vunpack.c.h.b16 %v356
    %v573 = vunpack.c.l.b16 %v357
    %v574 = vunpack.c.h.b16 %v357
    %v575 = vunpack.c.l.b16 %v358
    %v576 = vunpack.c.h.b16 %v358
    %v577 = vunpack.c.l.b16 %v359
    %v578 = vunpack.c.h.b16 %v359
    %v579 = vunpack.c.l.b16 %v360
    %v580 = vunpack.c.h.b16 %v360
    %v581 = vunpack.c.l.b16 %v361
    %v582 = vunpack.c.h.b16 %v361
    %v583 = vunpack.c.l.b16 %v362
    %v584 = vunpack.c.h.b16 %v362
    %v585 = vunpack.c.l.b16 %v363
    %v586 = vunpack.c.h.b16 %v363
    %v587 = vunpack.c.l.b16 %v364
    %v588 = vunpack.c.h.b16 %v364
    %v589 = vunpack.c.l.b16 %v365
    %v590 = vunpack.c.h.b16 %v365
    %v591 = vunpack.c.l.b16 %v366
    %v592 = vunpack.c.h.b16 %v366
    %v593 = vunpack.c.l.b16 %v367
    %v594 = vunpack.c.h.b16 %v367
    %v595 = vunpack.c.l.b16 %v368
    %v596 = vunpack.c.h.b16 %v368
    %v597 = vpack.c.b16 %v505, %v501
    %v598 = vpack.c.b16 %v506, %v502
    %v599 = vpack.c.b16 %v507, %v503
    %v600 = vpack.c.b16 %v508, %v504
    %v601 = vpack.c.b16 %v513, %v509
    %v602 = vpack.c.b16 %v514, %v510
    %v603 = vpack.c.b16 %v515, %v511
    %v604 = vpack.c.b16 %v516, %v512
    %v605 = vpack.c.b16 %v521, %v517
    %v606 = vpack.c.b16 %v522, %v518
    %v607 = vpack.c.b16 %v523, %v519
    %v608 = vpack.c.b16 %v524, %v520
    %v609 = vpack.c.b16 %v529, %v525
    %v610 = vpack.c.b16 %v530, %v526
    %v611 = vpack.c.b16 %v531, %v527
    %v612 = vpack.c.b16 %v532, %v528
    %v613 = vpack.c.b16 %v537, %v533
    %v614 = vpack.c.b16 %v538, %v534
    %v615 = vpack.c.b16 %v539, %v535
    %v616 = vpack.c.b16 %v540, %v536
    %v617 = vpack.c.b16 %v545, %v541
    %v618 = vpack.c.b16 %v546, %v542
    %v619 = vpack.c.b16 %v547, %v543
    %v620 = vpack.c.b16 %v548, %v544
    %v621 = vpack.c.b16 %v553, %v549
    %v622 = vpack.c.b16 %v554, %v550
    %v623 = vpack.c.b16 %v555, %v551
    %v624 = vpack.c.b16 %v556, %v552
    %v625 = vpack.c.b16 %v561, %v557
    %v626 = vpack.c.b16 %v562, %v558
    %v627 = vpack.c.b16 %v563, %v559
    %v628 = vpack.c.b16 %v564, %v560
    %v629 = vpack.c.b16 %v569, %v565
    %v630 = vpack.c.b16 %v570, %v566
    %v631 = vpack.c.b16 %v571, %v567
    %v632 = vpack.c.b16 %v572, %v568
    %v633 = vpack.c.b16 %v577, %v573
    %v634 = vpack.c.b16 %v578, %v574
    %v635 = vpack.c.b16 %v579, %v575
    %v636 = vpack.c.b16 %v580, %v576
    %v637 = vpack.c.b16 %v585, %v581
    %v638 = vpack.c.b16 %v586, %v582
    %v639 = vpack.c.b16 %v587, %v583
    %v640 = vpack.c.b16 %v588, %v584
    %v641 = vpack.c.b16 %v593, %v589
    %v642 = vpack.c.b16 %v594, %v590
    %v643 = vpack.c.b16 %v595, %v591
    %v644 = vpack.c.b16 %v596, %v592
    %vm693 = vcmask 523264
    %v695 = vsel %vm693, %v393, 0
    %v698 = vsel %vm693, %v409, 0
    %v701 = vsel %vm693, %v425, 0
    %v704 = vsel %vm693, %v441, 0
    %v707 = vsel %vm693, %v447, 0
    %709 = vmatprep.subr.bf16.mxu0 %v626
    %710 = vmatpush1.bf16.msra.mxu0 %v625
    %711 = vmatprep.subr.bf16.mxu0 %v622
    %712 = vmatpush1.bf16.msra.mxu0 %v621
    %713 = vmatprep.subr.bf16.mxu0 %v618
    %714 = vmatpush1.bf16.msra.mxu0 %v617
    %715 = vmatprep.subr.bf16.mxu0 %v614
    %716 = vmatpush1.bf16.msra.mxu0 %v613
    %717 = vmatprep.subr.bf16.mxu0 %v610
    %718 = vmatpush1.bf16.msra.mxu0 %v609
    %719 = vmatprep.subr.bf16.mxu0 %v606
    %720 = vmatpush1.bf16.msra.mxu0 %v605
    %721 = vmatprep.subr.bf16.mxu0 %v602
    %722 = vmatpush1.bf16.msra.mxu0 %v601
    %723 = vmatprep.subr.bf16.mxu0 %v598
    %724 = vmatpush1.bf16.msra.mxu0 %v597
    %725 = vmatprep.subr.bf16.mxu0 0
    %726 = vmatpush2.bf16.msra.mxu0 0
    %727 = vmatprep.subr.bf16.mxu0 0
    %728 = vmatpush2.bf16.msra.mxu0 0
    %729 = vmatprep.subr.bf16.mxu0 0
    %730 = vmatpush2.bf16.msra.mxu0 0
    %731 = vmatprep.subr.bf16.mxu0 0
    %732 = vmatpush2.bf16.msra.mxu0 0
    %733 = vmatprep.subr.bf16.mxu0 %v642
    %734 = vmatpush2.bf16.msra.mxu0 %v641
    %735 = vmatprep.subr.bf16.mxu0 %v638
    %736 = vmatpush2.bf16.msra.mxu0 %v637
    %737 = vmatprep.subr.bf16.mxu0 %v634
    %738 = vmatpush2.bf16.msra.mxu0 %v633
    %739 = vmatprep.subr.bf16.mxu0 %v630
    %740 = vmatpush2.bf16.msra.mxu0 %v629
    %741 = vmatprep.mubr.bf16.mxu0 %v695
    %742 = vmatmul.mubr.bf16.gmra.mxu0 %v381
    %v743 = vpop.f32.mrf.mxu0
    %v744 = vadd.f32 0.0, %v743
    %v745 = vpop.f32.mrf.mxu0
    %v746 = vadd.f32 0.0, %v745
    %v747 = vpop.f32.mrf.mxu0
    %v748 = vadd.f32 0.0, %v747
    %v749 = vpop.f32.mrf.mxu0
    %v750 = vadd.f32 0.0, %v749
    %751 = vmatprep.mubr.bf16.mxu0 %v698
    %752 = vmatmul.mubr.bf16.gmra.mxu0 %v401
    %v753 = vpop.f32.mrf.mxu0
    %v754 = vadd.f32 0.0, %v753
    %v755 = vpop.f32.mrf.mxu0
    %v756 = vadd.f32 0.0, %v755
    %v757 = vpop.f32.mrf.mxu0
    %v758 = vadd.f32 0.0, %v757
    %v759 = vpop.f32.mrf.mxu0
    %v760 = vadd.f32 0.0, %v759
    %761 = vmatprep.mubr.bf16.mxu0 %v701
    %762 = vmatmul.mubr.bf16.gmra.mxu0 %v417
    %v763 = vpop.f32.mrf.mxu0
    %v764 = vadd.f32 0.0, %v763
    %v765 = vpop.f32.mrf.mxu0
    %v766 = vadd.f32 0.0, %v765
    %v767 = vpop.f32.mrf.mxu0
    %v768 = vadd.f32 0.0, %v767
    %v769 = vpop.f32.mrf.mxu0
    %v770 = vadd.f32 0.0, %v769
    %771 = vmatprep.mubr.bf16.mxu0 %v704
    %772 = vmatmul.mubr.bf16.gmra.mxu0 %v433
    %v773 = vpop.f32.mrf.mxu0
    %v774 = vadd.f32 0.0, %v773
    %v775 = vpop.f32.mrf.mxu0
    %v776 = vadd.f32 0.0, %v775
    %v777 = vpop.f32.mrf.mxu0
    %v778 = vadd.f32 0.0, %v777
    %v779 = vpop.f32.mrf.mxu0
    %v780 = vadd.f32 0.0, %v779
    %781 = vmatprep.mubr.bf16.mxu0 %v707
    %782 = vmatmul.mubr.bf16.gmra.mxu0 %v444
    %v783 = vpop.f32.mrf.mxu0
    %v784 = vadd.f32 0.0, %v783
    %v785 = vpop.f32.mrf.mxu0
    %v786 = vadd.f32 0.0, %v785
    %v787 = vpop.f32.mrf.mxu0
    %v788 = vpop.f32.mrf.mxu0
    %789 = vdwg.mxu0
    %790 = vmatprep.subr.bf16.mxu0 %v628
    %791 = vmatpush1.bf16.msra.mxu0 %v627
    %792 = vmatprep.subr.bf16.mxu0 %v624
    %793 = vmatpush1.bf16.msra.mxu0 %v623
    %794 = vmatprep.subr.bf16.mxu0 %v620
    %795 = vmatpush1.bf16.msra.mxu0 %v619
    %796 = vmatprep.subr.bf16.mxu0 %v616
    %797 = vmatpush1.bf16.msra.mxu0 %v615
    %798 = vmatprep.subr.bf16.mxu0 %v612
    %799 = vmatpush1.bf16.msra.mxu0 %v611
    %800 = vmatprep.subr.bf16.mxu0 %v608
    %801 = vmatpush1.bf16.msra.mxu0 %v607
    %802 = vmatprep.subr.bf16.mxu0 %v604
    %803 = vmatpush1.bf16.msra.mxu0 %v603
    %804 = vmatprep.subr.bf16.mxu0 %v600
    %805 = vmatpush1.bf16.msra.mxu0 %v599
    %806 = vmatprep.subr.bf16.mxu0 0
    %807 = vmatpush2.bf16.msra.mxu0 0
    %808 = vmatprep.subr.bf16.mxu0 0
    %809 = vmatpush2.bf16.msra.mxu0 0
    %810 = vmatprep.subr.bf16.mxu0 0
    %811 = vmatpush2.bf16.msra.mxu0 0
    %812 = vmatprep.subr.bf16.mxu0 0
    %813 = vmatpush2.bf16.msra.mxu0 0
    %814 = vmatprep.subr.bf16.mxu0 %v644
    %815 = vmatpush2.bf16.msra.mxu0 %v643
    %816 = vmatprep.subr.bf16.mxu0 %v640
    %817 = vmatpush2.bf16.msra.mxu0 %v639
    %818 = vmatprep.subr.bf16.mxu0 %v636
    %819 = vmatpush2.bf16.msra.mxu0 %v635
    %820 = vmatprep.subr.bf16.mxu0 %v632
    %821 = vmatpush2.bf16.msra.mxu0 %v631
    %822 = vmatprep.mubr.bf16.mxu0 %v695
    %823 = vmatmul.mubr.bf16.gmra.mxu0 %v381
    %v824 = vpop.f32.mrf.mxu0
    %v825 = vadd.f32 0.0, %v824
    %v826 = vpop.f32.mrf.mxu0
    %v827 = vadd.f32 0.0, %v826
    %v828 = vpop.f32.mrf.mxu0
    %v829 = vadd.f32 0.0, %v828
    %v830 = vpop.f32.mrf.mxu0
    %v831 = vadd.f32 0.0, %v830
    %832 = vmatprep.mubr.bf16.mxu0 %v698
    %833 = vmatmul.mubr.bf16.gmra.mxu0 %v401
    %v834 = vpop.f32.mrf.mxu0
    %v835 = vadd.f32 0.0, %v834
    %v836 = vpop.f32.mrf.mxu0
    %v837 = vadd.f32 0.0, %v836
    %v838 = vpop.f32.mrf.mxu0
    %v839 = vadd.f32 0.0, %v838
    %v840 = vpop.f32.mrf.mxu0
    %v841 = vadd.f32 0.0, %v840
    %842 = vmatprep.mubr.bf16.mxu0 %v701
    %843 = vmatmul.mubr.bf16.gmra.mxu0 %v417
    %v844 = vpop.f32.mrf.mxu0
    %v845 = vadd.f32 0.0, %v844
    %v846 = vpop.f32.mrf.mxu0
    %v847 = vadd.f32 0.0, %v846
    %v848 = vpop.f32.mrf.mxu0
    %v849 = vadd.f32 0.0, %v848
    %v850 = vpop.f32.mrf.mxu0
    %v851 = vadd.f32 0.0, %v850
    %852 = vmatprep.mubr.bf16.mxu0 %v704
    %853 = vmatmul.mubr.bf16.gmra.mxu0 %v433
    %v854 = vpop.f32.mrf.mxu0
    %v855 = vadd.f32 0.0, %v854
    %v856 = vpop.f32.mrf.mxu0
    %v857 = vadd.f32 0.0, %v856
    %v858 = vpop.f32.mrf.mxu0
    %v859 = vadd.f32 0.0, %v858
    %v860 = vpop.f32.mrf.mxu0
    %v861 = vadd.f32 0.0, %v860
    %862 = vmatprep.mubr.bf16.mxu0 %v707
    %863 = vmatmul.mubr.bf16.gmra.mxu0 %v444
    %v864 = vpop.f32.mrf.mxu0
    %v865 = vadd.f32 0.0, %v864
    %v866 = vpop.f32.mrf.mxu0
    %v867 = vadd.f32 0.0, %v866
    %v868 = vpop.f32.mrf.mxu0
    %v869 = vpop.f32.mrf.mxu0
    %870 = vdwg.mxu0
    %v919 = vunpack.c.l.b16 %v264
    %v920 = vunpack.c.h.b16 %v264
    %v921 = vunpack.c.l.b16 %v265
    %v922 = vunpack.c.h.b16 %v265
    %v923 = vunpack.c.l.b16 %v266
    %v924 = vunpack.c.h.b16 %v266
    %v925 = vunpack.c.l.b16 %v267
    %v926 = vunpack.c.h.b16 %v267
    %v927 = vunpack.c.l.b16 %v268
    %v928 = vunpack.c.h.b16 %v268
    %v929 = vunpack.c.l.b16 %v269
    %v930 = vunpack.c.h.b16 %v269
    %v931 = vunpack.c.l.b16 %v270
    %v932 = vunpack.c.h.b16 %v270
    %v933 = vunpack.c.l.b16 %v271
    %v934 = vunpack.c.h.b16 %v271
    %v935 = vunpack.c.l.b16 %v272
    %v936 = vunpack.c.h.b16 %v272
    %v937 = vunpack.c.l.b16 %v273
    %v938 = vunpack.c.h.b16 %v273
    %v939 = vunpack.c.l.b16 %v274
    %v940 = vunpack.c.h.b16 %v274
    %v941 = vunpack.c.l.b16 %v275
    %v942 = vunpack.c.h.b16 %v275
    %v943 = vunpack.c.l.b16 %v276
    %v944 = vunpack.c.h.b16 %v276
    %v945 = vunpack.c.l.b16 %v277
    %v946 = vunpack.c.h.b16 %v277
    %v947 = vunpack.c.l.b16 %v278
    %v948 = vunpack.c.h.b16 %v278
    %v949 = vunpack.c.l.b16 %v279
    %v950 = vunpack.c.h.b16 %v279
    %v951 = vunpack.c.l.b16 %v280
    %v952 = vunpack.c.h.b16 %v280
    %v953 = vunpack.c.l.b16 %v281
    %v954 = vunpack.c.h.b16 %v281
    %v955 = vunpack.c.l.b16 %v282
    %v956 = vunpack.c.h.b16 %v282
    %v957 = vunpack.c.l.b16 %v283
    %v958 = vunpack.c.h.b16 %v283
    %v959 = vunpack.c.l.b16 %v284
    %v960 = vunpack.c.h.b16 %v284
    %v961 = vunpack.c.l.b16 %v285
    %v962 = vunpack.c.h.b16 %v285
    %v963 = vunpack.c.l.b16 %v286
    %v964 = vunpack.c.h.b16 %v286
    %v965 = vunpack.c.l.b16 %v287
    %v966 = vunpack.c.h.b16 %v287
    %v967 = vunpack.c.l.b16 %v288
    %v968 = vunpack.c.h.b16 %v288
    %v969 = vunpack.c.l.b16 %v289
    %v970 = vunpack.c.h.b16 %v289
    %v971 = vunpack.c.l.b16 %v290
    %v972 = vunpack.c.h.b16 %v290
    %v973 = vunpack.c.l.b16 %v291
    %v974 = vunpack.c.h.b16 %v291
    %v975 = vunpack.c.l.b16 %v292
    %v976 = vunpack.c.h.b16 %v292
    %v977 = vunpack.c.l.b16 %v293
    %v978 = vunpack.c.h.b16 %v293
    %v979 = vunpack.c.l.b16 %v294
    %v980 = vunpack.c.h.b16 %v294
    %v981 = vunpack.c.l.b16 %v295
    %v982 = vunpack.c.h.b16 %v295
    %v983 = vunpack.c.l.b16 %v296
    %v984 = vunpack.c.h.b16 %v296
    %v985 = vunpack.c.l.b16 %v297
    %v986 = vunpack.c.h.b16 %v297
    %v987 = vunpack.c.l.b16 %v298
    %v988 = vunpack.c.h.b16 %v298
    %v989 = vunpack.c.l.b16 %v299
    %v990 = vunpack.c.h.b16 %v299
    %v991 = vunpack.c.l.b16 %v300
    %v992 = vunpack.c.h.b16 %v300
    %v993 = vunpack.c.l.b16 %v301
    %v994 = vunpack.c.h.b16 %v301
    %v995 = vunpack.c.l.b16 %v302
    %v996 = vunpack.c.h.b16 %v302
    %v997 = vunpack.c.l.b16 %v303
    %v998 = vunpack.c.h.b16 %v303
    %v999 = vunpack.c.l.b16 %v304
    %v1000 = vunpack.c.h.b16 %v304
    %v1001 = vunpack.c.l.b16 %v305
    %v1002 = vunpack.c.h.b16 %v305
    %v1003 = vunpack.c.l.b16 %v306
    %v1004 = vunpack.c.h.b16 %v306
    %v1005 = vunpack.c.l.b16 %v307
    %v1006 = vunpack.c.h.b16 %v307
    %v1007 = vunpack.c.l.b16 %v308
    %v1008 = vunpack.c.h.b16 %v308
    %v1009 = vunpack.c.l.b16 %v309
    %v1010 = vunpack.c.h.b16 %v309
    %v1011 = vunpack.c.l.b16 %v310
    %v1012 = vunpack.c.h.b16 %v310
    %v1013 = vunpack.c.l.b16 %v311
    %v1014 = vunpack.c.h.b16 %v311
    %v1015 = vpack.c.b16 %v923, %v919
    %v1016 = vpack.c.b16 %v924, %v920
    %v1017 = vpack.c.b16 %v925, %v921
    %v1018 = vpack.c.b16 %v926, %v922
    %v1019 = vpack.c.b16 %v931, %v927
    %v1020 = vpack.c.b16 %v932, %v928
    %v1021 = vpack.c.b16 %v933, %v929
    %v1022 = vpack.c.b16 %v934, %v930
    %v1023 = vpack.c.b16 %v939, %v935
    %v1024 = vpack.c.b16 %v940, %v936
    %v1025 = vpack.c.b16 %v941, %v937
    %v1026 = vpack.c.b16 %v942, %v938
    %v1027 = vpack.c.b16 %v947, %v943
    %v1028 = vpack.c.b16 %v948, %v944
    %v1029 = vpack.c.b16 %v949, %v945
    %v1030 = vpack.c.b16 %v950, %v946
    %v1031 = vpack.c.b16 %v955, %v951
    %v1032 = vpack.c.b16 %v956, %v952
    %v1033 = vpack.c.b16 %v957, %v953
    %v1034 = vpack.c.b16 %v958, %v954
    %v1035 = vpack.c.b16 %v963, %v959
    %v1036 = vpack.c.b16 %v964, %v960
    %v1037 = vpack.c.b16 %v965, %v961
    %v1038 = vpack.c.b16 %v966, %v962
    %v1039 = vpack.c.b16 %v971, %v967
    %v1040 = vpack.c.b16 %v972, %v968
    %v1041 = vpack.c.b16 %v973, %v969
    %v1042 = vpack.c.b16 %v974, %v970
    %v1043 = vpack.c.b16 %v979, %v975
    %v1044 = vpack.c.b16 %v980, %v976
    %v1045 = vpack.c.b16 %v981, %v977
    %v1046 = vpack.c.b16 %v982, %v978
    %v1047 = vpack.c.b16 %v987, %v983
    %v1048 = vpack.c.b16 %v988, %v984
    %v1049 = vpack.c.b16 %v989, %v985
    %v1050 = vpack.c.b16 %v990, %v986
    %v1051 = vpack.c.b16 %v995, %v991
    %v1052 = vpack.c.b16 %v996, %v992
    %v1053 = vpack.c.b16 %v997, %v993
    %v1054 = vpack.c.b16 %v998, %v994
    %v1055 = vpack.c.b16 %v1003, %v999
    %v1056 = vpack.c.b16 %v1004, %v1000
    %v1057 = vpack.c.b16 %v1005, %v1001
    %v1058 = vpack.c.b16 %v1006, %v1002
    %v1059 = vpack.c.b16 %v1011, %v1007
    %v1060 = vpack.c.b16 %v1012, %v1008
    %v1061 = vpack.c.b16 %v1013, %v1009
    %v1062 = vpack.c.b16 %v1014, %v1010
    %v1112 = vsel %vm693, %v255, 0
    %v1114 = vsel %vm693, %v257, 0
    %v1116 = vsel %vm693, %v259, 0
    %v1118 = vsel %vm693, %v261, 0
    %v1121 = vsel %vm693, %v263, 0
    %1123 = vmatprep.subr.bf16.mxu0 %v1044
    %1124 = vmatpush1.bf16.msra.mxu0 %v1043
    %1125 = vmatprep.subr.bf16.mxu0 %v1040
    %1126 = vmatpush1.bf16.msra.mxu0 %v1039
    %1127 = vmatprep.subr.bf16.mxu0 %v1036
    %1128 = vmatpush1.bf16.msra.mxu0 %v1035
    %1129 = vmatprep.subr.bf16.mxu0 %v1032
    %1130 = vmatpush1.bf16.msra.mxu0 %v1031
    %1131 = vmatprep.subr.bf16.mxu0 %v1028
    %1132 = vmatpush1.bf16.msra.mxu0 %v1027
    %1133 = vmatprep.subr.bf16.mxu0 %v1024
    %1134 = vmatpush1.bf16.msra.mxu0 %v1023
    %1135 = vmatprep.subr.bf16.mxu0 %v1020
    %1136 = vmatpush1.bf16.msra.mxu0 %v1019
    %1137 = vmatprep.subr.bf16.mxu0 %v1016
    %1138 = vmatpush1.bf16.msra.mxu0 %v1015
    %1139 = vmatprep.subr.bf16.mxu0 0
    %1140 = vmatpush2.bf16.msra.mxu0 0
    %1141 = vmatprep.subr.bf16.mxu0 0
    %1142 = vmatpush2.bf16.msra.mxu0 0
    %1143 = vmatprep.subr.bf16.mxu0 0
    %1144 = vmatpush2.bf16.msra.mxu0 0
    %1145 = vmatprep.subr.bf16.mxu0 0
    %1146 = vmatpush2.bf16.msra.mxu0 0
    %1147 = vmatprep.subr.bf16.mxu0 %v1060
    %1148 = vmatpush2.bf16.msra.mxu0 %v1059
    %1149 = vmatprep.subr.bf16.mxu0 %v1056
    %1150 = vmatpush2.bf16.msra.mxu0 %v1055
    %1151 = vmatprep.subr.bf16.mxu0 %v1052
    %1152 = vmatpush2.bf16.msra.mxu0 %v1051
    %1153 = vmatprep.subr.bf16.mxu0 %v1048
    %1154 = vmatpush2.bf16.msra.mxu0 %v1047
    %1155 = vmatprep.mubr.bf16.mxu0 %v1112
    %1156 = vmatmul.mubr.bf16.gmra.mxu0 %v254
    %v1157 = vpop.f32.mrf.mxu0
    %v1158 = vadd.f32 %v744, %v1157
    %v1159 = vpop.f32.mrf.mxu0
    %v1160 = vadd.f32 %v746, %v1159
    %v1161 = vpop.f32.mrf.mxu0
    %v1162 = vadd.f32 %v748, %v1161
    %v1163 = vpop.f32.mrf.mxu0
    %v1164 = vadd.f32 %v750, %v1163
    %1165 = vmatprep.mubr.bf16.mxu0 %v1114
    %1166 = vmatmul.mubr.bf16.gmra.mxu0 %v256
    %v1167 = vpop.f32.mrf.mxu0
    %v1168 = vadd.f32 %v754, %v1167
    %v1169 = vpop.f32.mrf.mxu0
    %v1170 = vadd.f32 %v756, %v1169
    %v1171 = vpop.f32.mrf.mxu0
    %v1172 = vadd.f32 %v758, %v1171
    %v1173 = vpop.f32.mrf.mxu0
    %v1174 = vadd.f32 %v760, %v1173
    %1175 = vmatprep.mubr.bf16.mxu0 %v1116
    %1176 = vmatmul.mubr.bf16.gmra.mxu0 %v258
    %v1177 = vpop.f32.mrf.mxu0
    %v1178 = vadd.f32 %v764, %v1177
    %v1179 = vpop.f32.mrf.mxu0
    %v1180 = vadd.f32 %v766, %v1179
    %v1181 = vpop.f32.mrf.mxu0
    %v1182 = vadd.f32 %v768, %v1181
    %v1183 = vpop.f32.mrf.mxu0
    %v1184 = vadd.f32 %v770, %v1183
    %1185 = vmatprep.mubr.bf16.mxu0 %v1118
    %1186 = vmatmul.mubr.bf16.gmra.mxu0 %v260
    %v1187 = vpop.f32.mrf.mxu0
    %v1188 = vadd.f32 %v774, %v1187
    %v1189 = vpop.f32.mrf.mxu0
    %v1190 = vadd.f32 %v776, %v1189
    %v1191 = vpop.f32.mrf.mxu0
    %v1192 = vadd.f32 %v778, %v1191
    %v1193 = vpop.f32.mrf.mxu0
    %v1194 = vadd.f32 %v780, %v1193
    %1195 = vmatprep.mubr.bf16.mxu0 %v1121
    %1196 = vmatmul.mubr.bf16.gmra.mxu0 %v262
    %v1197 = vpop.f32.mrf.mxu0
    %v1198 = vadd.f32 %v784, %v1197
    %v1199 = vpop.f32.mrf.mxu0
    %v1200 = vadd.f32 %v786, %v1199
    %v1201 = vpop.f32.mrf.mxu0
    %v1202 = vpop.f32.mrf.mxu0
    %1203 = vdwg.mxu0
    %1204 = vmatprep.subr.bf16.mxu0 %v1046
    %1205 = vmatpush1.bf16.msra.mxu0 %v1045
    %1206 = vmatprep.subr.bf16.mxu0 %v1042
    %1207 = vmatpush1.bf16.msra.mxu0 %v1041
    %1208 = vmatprep.subr.bf16.mxu0 %v1038
    %1209 = vmatpush1.bf16.msra.mxu0 %v1037
    %1210 = vmatprep.subr.bf16.mxu0 %v1034
    %1211 = vmatpush1.bf16.msra.mxu0 %v1033
    %1212 = vmatprep.subr.bf16.mxu0 %v1030
    %1213 = vmatpush1.bf16.msra.mxu0 %v1029
    %1214 = vmatprep.subr.bf16.mxu0 %v1026
    %1215 = vmatpush1.bf16.msra.mxu0 %v1025
    %1216 = vmatprep.subr.bf16.mxu0 %v1022
    %1217 = vmatpush1.bf16.msra.mxu0 %v1021
    %1218 = vmatprep.subr.bf16.mxu0 %v1018
    %1219 = vmatpush1.bf16.msra.mxu0 %v1017
    %1220 = vmatprep.subr.bf16.mxu0 0
    %1221 = vmatpush2.bf16.msra.mxu0 0
    %1222 = vmatprep.subr.bf16.mxu0 0
    %1223 = vmatpush2.bf16.msra.mxu0 0
    %1224 = vmatprep.subr.bf16.mxu0 0
    %1225 = vmatpush2.bf16.msra.mxu0 0
    %1226 = vmatprep.subr.bf16.mxu0 0
    %1227 = vmatpush2.bf16.msra.mxu0 0
    %1228 = vmatprep.subr.bf16.mxu0 %v1062
    %1229 = vmatpush2.bf16.msra.mxu0 %v1061
    %1230 = vmatprep.subr.bf16.mxu0 %v1058
    %1231 = vmatpush2.bf16.msra.mxu0 %v1057
    %1232 = vmatprep.subr.bf16.mxu0 %v1054
    %1233 = vmatpush2.bf16.msra.mxu0 %v1053
    %1234 = vmatprep.subr.bf16.mxu0 %v1050
    %1235 = vmatpush2.bf16.msra.mxu0 %v1049
    %1236 = vmatprep.mubr.bf16.mxu0 %v1112
    %1237 = vmatmul.mubr.bf16.gmra.mxu0 %v254
    %v1238 = vpop.f32.mrf.mxu0
    %v1239 = vadd.f32 %v825, %v1238
    %v1240 = vpop.f32.mrf.mxu0
    %v1241 = vadd.f32 %v827, %v1240
    %v1242 = vpop.f32.mrf.mxu0
    %v1243 = vadd.f32 %v829, %v1242
    %v1244 = vpop.f32.mrf.mxu0
    %v1245 = vadd.f32 %v831, %v1244
    %1246 = vmatprep.mubr.bf16.mxu0 %v1114
    %1247 = vmatmul.mubr.bf16.gmra.mxu0 %v256
    %v1248 = vpop.f32.mrf.mxu0
    %v1249 = vadd.f32 %v835, %v1248
    %v1250 = vpop.f32.mrf.mxu0
    %v1251 = vadd.f32 %v837, %v1250
    %v1252 = vpop.f32.mrf.mxu0
    %v1253 = vadd.f32 %v839, %v1252
    %v1254 = vpop.f32.mrf.mxu0
    %v1255 = vadd.f32 %v841, %v1254
    %1256 = vmatprep.mubr.bf16.mxu0 %v1116
    %1257 = vmatmul.mubr.bf16.gmra.mxu0 %v258
    %v1258 = vpop.f32.mrf.mxu0
    %v1259 = vadd.f32 %v845, %v1258
    %v1260 = vpop.f32.mrf.mxu0
    %v1261 = vadd.f32 %v847, %v1260
    %v1262 = vpop.f32.mrf.mxu0
    %v1263 = vadd.f32 %v849, %v1262
    %v1264 = vpop.f32.mrf.mxu0
    %v1265 = vadd.f32 %v851, %v1264
    %1266 = vmatprep.mubr.bf16.mxu0 %v1118
    %1267 = vmatmul.mubr.bf16.gmra.mxu0 %v260
    %v1268 = vpop.f32.mrf.mxu0
    %v1269 = vadd.f32 %v855, %v1268
    %v1270 = vpop.f32.mrf.mxu0
    %v1271 = vadd.f32 %v857, %v1270
    %v1272 = vpop.f32.mrf.mxu0
    %v1273 = vadd.f32 %v859, %v1272
    %v1274 = vpop.f32.mrf.mxu0
    %v1275 = vadd.f32 %v861, %v1274
    %1276 = vmatprep.mubr.bf16.mxu0 %v1121
    %1277 = vmatmul.mubr.bf16.gmra.mxu0 %v262
    %v1278 = vpop.f32.mrf.mxu0
    %v1279 = vadd.f32 %v865, %v1278
    %v1280 = vpop.f32.mrf.mxu0
    %v1281 = vadd.f32 %v867, %v1280
    %v1282 = vpop.f32.mrf.mxu0
    %v1283 = vpop.f32.mrf.mxu0
    %1284 = vdwg.mxu0
    %v1285 = vld [vmem:[%s1] sm:$0xfc]
    %v1286 = vld [vmem:[%s1 + $0x8] sm:$0xfc]
    %v1287 = vld [vmem:[%s1 + $0x80] sm:$0x3f]
    %v1288 = vld [vmem:[%s1 + $0x88] sm:$0x3f]
    %v1289 = vpack.c.bf16 %v238, %v1285
    %v1290 = vpack.c.bf16 %v239, %v1286
    %v1291 = vpack.c.bf16 %v1287, %v1287
    %v1292 = vpack.c.bf16 %v1288, %v1288
    %s1293 = scalar_lea.vmem %s3, 768
    %v1294 = vld [vmem:[%s1293] sm:$0xff]
    %v1295 = vld [vmem:[%s1293 + $0x8] sm:$0xff]
    %v1296 = vld [vmem:[%s1293 + $0x10] sm:$0xff]
    %v1297 = vld [vmem:[%s1293 + $0x18] sm:$0xff]
    %v1298 = vld [vmem:[%s1293 + $0x20] sm:$0xff]
    %v1299 = vld [vmem:[%s1293 + $0x28] sm:$0xff]
    %v1300 = vld [vmem:[%s1293 + $0x30] sm:$0xff]
    %v1301 = vld [vmem:[%s1293 + $0x38] sm:$0xff]
    %v1302 = vld [vmem:[%s1293 + $0x40] sm:$0xff]
    %v1303 = vld [vmem:[%s1293 + $0x48] sm:$0xff]
    %v1304 = vld [vmem:[%s1293 + $0x50] sm:$0xff]
    %v1305 = vld [vmem:[%s1293 + $0x58] sm:$0xff]
    %v1306 = vld [vmem:[%s1293 + $0x60] sm:$0xff]
    %v1307 = vld [vmem:[%s1293 + $0x68] sm:$0xff]
    %v1308 = vld [vmem:[%s1293 + $0x70] sm:$0xff]
    %v1309 = vld [vmem:[%s1293 + $0x78] sm:$0xff]
    %v1310 = vld [vmem:[%s1293 + $0x80] sm:$0xff]
    %v1311 = vld [vmem:[%s1293 + $0x88] sm:$0xff]
    %v1312 = vld [vmem:[%s1293 + $0x90] sm:$0xff]
    %v1313 = vld [vmem:[%s1293 + $0x98] sm:$0xff]
    %v1314 = vld [vmem:[%s1293 + $0xa0] sm:$0xff]
    %v1315 = vld [vmem:[%s1293 + $0xa8] sm:$0xff]
    %v1316 = vld [vmem:[%s1293 + $0xb0] sm:$0xff]
    %v1317 = vld [vmem:[%s1293 + $0xb8] sm:$0xff]
    %v1318 = vld [vmem:[%s1293 + $0xc0] sm:$0xff]
    %v1319 = vld [vmem:[%s1293 + $0xc8] sm:$0xff]
    %v1320 = vld [vmem:[%s1293 + $0xd0] sm:$0xff]
    %v1321 = vld [vmem:[%s1293 + $0xd8] sm:$0xff]
    %v1322 = vld [vmem:[%s1293 + $0xe0] sm:$0xff]
    %v1323 = vld [vmem:[%s1293 + $0xe8] sm:$0xff]
    %v1324 = vld [vmem:[%s1293 + $0xf0] sm:$0xff]
    %v1325 = vld [vmem:[%s1293 + $0xf8] sm:$0xff]
    %v1326 = vld [vmem:[%s1293 + $0x100] sm:$0xff]
    %v1327 = vld [vmem:[%s1293 + $0x108] sm:$0xff]
    %v1328 = vld [vmem:[%s1293 + $0x110] sm:$0xff]
    %v1329 = vld [vmem:[%s1293 + $0x118] sm:$0xff]
    %v1330 = vld [vmem:[%s1293 + $0x120] sm:$0xff]
    %v1331 = vld [vmem:[%s1293 + $0x128] sm:$0xff]
    %v1332 = vld [vmem:[%s1293 + $0x130] sm:$0xff]
    %v1333 = vld [vmem:[%s1293 + $0x138] sm:$0xff]
    %v1334 = vld [vmem:[%s1293 + $0x140] sm:$0xff]
    %v1335 = vld [vmem:[%s1293 + $0x148] sm:$0xff]
    %v1336 = vld [vmem:[%s1293 + $0x150] sm:$0xff]
    %v1337 = vld [vmem:[%s1293 + $0x158] sm:$0xff]
    %v1338 = vld [vmem:[%s1293 + $0x160] sm:$0xff]
    %v1339 = vld [vmem:[%s1293 + $0x168] sm:$0xff]
    %v1340 = vld [vmem:[%s1293 + $0x170] sm:$0xff]
    %v1341 = vld [vmem:[%s1293 + $0x178] sm:$0xff]
    %vm1352 = vcmask 1046528
    %v1353 = vrot.slane %v1289, 1
    %v1354 = vrot.slane %v256, 1
    %v1355 = vsel %vm1352, %v1353, %v1354
    %v1356 = vrot.slane %v1290, 1
    %v1357 = vrot.slane %v257, 1
    %v1358 = vsel %vm1352, %v1356, %v1357
    %v1359 = vrot.slane %v258, 1
    %v1360 = vsel %vm1352, %v1354, %v1359
    %v1361 = vrot.slane %v259, 1
    %v1362 = vsel %vm1352, %v1357, %v1361
    %v1363 = vrot.slane %v260, 1
    %v1364 = vsel %vm1352, %v1359, %v1363
    %v1365 = vrot.slane %v261, 1
    %v1366 = vsel %vm1352, %v1361, %v1365
    %v1367 = vrot.slane %v1291, 1
    %v1368 = vsel %vm1352, %v1363, %v1367
    %v1369 = vrot.slane %v1292, 1
    %v1370 = vsel %vm1352, %v1365, %v1369
    %v1424 = vunpack.c.l.b16 %v1294
    %v1425 = vunpack.c.h.b16 %v1294
    %v1426 = vunpack.c.l.b16 %v1295
    %v1427 = vunpack.c.h.b16 %v1295
    %v1428 = vunpack.c.l.b16 %v1296
    %v1429 = vunpack.c.h.b16 %v1296
    %v1430 = vunpack.c.l.b16 %v1297
    %v1431 = vunpack.c.h.b16 %v1297
    %v1432 = vunpack.c.l.b16 %v1298
    %v1433 = vunpack.c.h.b16 %v1298
    %v1434 = vunpack.c.l.b16 %v1299
    %v1435 = vunpack.c.h.b16 %v1299
    %v1436 = vunpack.c.l.b16 %v1300
    %v1437 = vunpack.c.h.b16 %v1300
    %v1438 = vunpack.c.l.b16 %v1301
    %v1439 = vunpack.c.h.b16 %v1301
    %v1440 = vunpack.c.l.b16 %v1302
    %v1441 = vunpack.c.h.b16 %v1302
    %v1442 = vunpack.c.l.b16 %v1303
    %v1443 = vunpack.c.h.b16 %v1303
    %v1444 = vunpack.c.l.b16 %v1304
    %v1445 = vunpack.c.h.b16 %v1304
    %v1446 = vunpack.c.l.b16 %v1305
    %v1447 = vunpack.c.h.b16 %v1305
    %v1448 = vunpack.c.l.b16 %v1306
    %v1449 = vunpack.c.h.b16 %v1306
    %v1450 = vunpack.c.l.b16 %v1307
    %v1451 = vunpack.c.h.b16 %v1307
    %v1452 = vunpack.c.l.b16 %v1308
    %v1453 = vunpack.c.h.b16 %v1308
    %v1454 = vunpack.c.l.b16 %v1309
    %v1455 = vunpack.c.h.b16 %v1309
    %v1456 = vunpack.c.l.b16 %v1310
    %v1457 = vunpack.c.h.b16 %v1310
    %v1458 = vunpack.c.l.b16 %v1311
    %v1459 = vunpack.c.h.b16 %v1311
    %v1460 = vunpack.c.l.b16 %v1312
    %v1461 = vunpack.c.h.b16 %v1312
    %v1462 = vunpack.c.l.b16 %v1313
    %v1463 = vunpack.c.h.b16 %v1313
    %v1464 = vunpack.c.l.b16 %v1314
    %v1465 = vunpack.c.h.b16 %v1314
    %v1466 = vunpack.c.l.b16 %v1315
    %v1467 = vunpack.c.h.b16 %v1315
    %v1468 = vunpack.c.l.b16 %v1316
    %v1469 = vunpack.c.h.b16 %v1316
    %v1470 = vunpack.c.l.b16 %v1317
    %v1471 = vunpack.c.h.b16 %v1317
    %v1472 = vunpack.c.l.b16 %v1318
    %v1473 = vunpack.c.h.b16 %v1318
    %v1474 = vunpack.c.l.b16 %v1319
    %v1475 = vunpack.c.h.b16 %v1319
    %v1476 = vunpack.c.l.b16 %v1320
    %v1477 = vunpack.c.h.b16 %v1320
    %v1478 = vunpack.c.l.b16 %v1321
    %v1479 = vunpack.c.h.b16 %v1321
    %v1480 = vunpack.c.l.b16 %v1322
    %v1481 = vunpack.c.h.b16 %v1322
    %v1482 = vunpack.c.l.b16 %v1323
    %v1483 = vunpack.c.h.b16 %v1323
    %v1484 = vunpack.c.l.b16 %v1324
    %v1485 = vunpack.c.h.b16 %v1324
    %v1486 = vunpack.c.l.b16 %v1325
    %v1487 = vunpack.c.h.b16 %v1325
    %v1488 = vunpack.c.l.b16 %v1326
    %v1489 = vunpack.c.h.b16 %v1326
    %v1490 = vunpack.c.l.b16 %v1327
    %v1491 = vunpack.c.h.b16 %v1327
    %v1492 = vunpack.c.l.b16 %v1328
    %v1493 = vunpack.c.h.b16 %v1328
    %v1494 = vunpack.c.l.b16 %v1329
    %v1495 = vunpack.c.h.b16 %v1329
    %v1496 = vunpack.c.l.b16 %v1330
    %v1497 = vunpack.c.h.b16 %v1330
    %v1498 = vunpack.c.l.b16 %v1331
    %v1499 = vunpack.c.h.b16 %v1331
    %v1500 = vunpack.c.l.b16 %v1332
    %v1501 = vunpack.c.h.b16 %v1332
    %v1502 = vunpack.c.l.b16 %v1333
    %v1503 = vunpack.c.h.b16 %v1333
    %v1504 = vunpack.c.l.b16 %v1334
    %v1505 = vunpack.c.h.b16 %v1334
    %v1506 = vunpack.c.l.b16 %v1335
    %v1507 = vunpack.c.h.b16 %v1335
    %v1508 = vunpack.c.l.b16 %v1336
    %v1509 = vunpack.c.h.b16 %v1336
    %v1510 = vunpack.c.l.b16 %v1337
    %v1511 = vunpack.c.h.b16 %v1337
    %v1512 = vunpack.c.l.b16 %v1338
    %v1513 = vunpack.c.h.b16 %v1338
    %v1514 = vunpack.c.l.b16 %v1339
    %v1515 = vunpack.c.h.b16 %v1339
    %v1516 = vunpack.c.l.b16 %v1340
    %v1517 = vunpack.c.h.b16 %v1340
    %v1518 = vunpack.c.l.b16 %v1341
    %v1519 = vunpack.c.h.b16 %v1341
    %v1520 = vpack.c.b16 %v1428, %v1424
    %v1521 = vpack.c.b16 %v1429, %v1425
    %v1522 = vpack.c.b16 %v1430, %v1426
    %v1523 = vpack.c.b16 %v1431, %v1427
    %v1524 = vpack.c.b16 %v1436, %v1432
    %v1525 = vpack.c.b16 %v1437, %v1433
    %v1526 = vpack.c.b16 %v1438, %v1434
    %v1527 = vpack.c.b16 %v1439, %v1435
    %v1528 = vpack.c.b16 %v1444, %v1440
    %v1529 = vpack.c.b16 %v1445, %v1441
    %v1530 = vpack.c.b16 %v1446, %v1442
    %v1531 = vpack.c.b16 %v1447, %v1443
    %v1532 = vpack.c.b16 %v1452, %v1448
    %v1533 = vpack.c.b16 %v1453, %v1449
    %v1534 = vpack.c.b16 %v1454, %v1450
    %v1535 = vpack.c.b16 %v1455, %v1451
    %v1536 = vpack.c.b16 %v1460, %v1456
    %v1537 = vpack.c.b16 %v1461, %v1457
    %v1538 = vpack.c.b16 %v1462, %v1458
    %v1539 = vpack.c.b16 %v1463, %v1459
    %v1540 = vpack.c.b16 %v1468, %v1464
    %v1541 = vpack.c.b16 %v1469, %v1465
    %v1542 = vpack.c.b16 %v1470, %v1466
    %v1543 = vpack.c.b16 %v1471, %v1467
    %v1544 = vpack.c.b16 %v1476, %v1472
    %v1545 = vpack.c.b16 %v1477, %v1473
    %v1546 = vpack.c.b16 %v1478, %v1474
    %v1547 = vpack.c.b16 %v1479, %v1475
    %v1548 = vpack.c.b16 %v1484, %v1480
    %v1549 = vpack.c.b16 %v1485, %v1481
    %v1550 = vpack.c.b16 %v1486, %v1482
    %v1551 = vpack.c.b16 %v1487, %v1483
    %v1552 = vpack.c.b16 %v1492, %v1488
    %v1553 = vpack.c.b16 %v1493, %v1489
    %v1554 = vpack.c.b16 %v1494, %v1490
    %v1555 = vpack.c.b16 %v1495, %v1491
    %v1556 = vpack.c.b16 %v1500, %v1496
    %v1557 = vpack.c.b16 %v1501, %v1497
    %v1558 = vpack.c.b16 %v1502, %v1498
    %v1559 = vpack.c.b16 %v1503, %v1499
    %v1560 = vpack.c.b16 %v1508, %v1504
    %v1561 = vpack.c.b16 %v1509, %v1505
    %v1562 = vpack.c.b16 %v1510, %v1506
    %v1563 = vpack.c.b16 %v1511, %v1507
    %v1564 = vpack.c.b16 %v1516, %v1512
    %v1565 = vpack.c.b16 %v1517, %v1513
    %v1566 = vpack.c.b16 %v1518, %v1514
    %v1567 = vpack.c.b16 %v1519, %v1515
    %v1617 = vsel %vm693, %v1358, 0
    %v1620 = vsel %vm693, %v1362, 0
    %v1623 = vsel %vm693, %v1366, 0
    %v1626 = vsel %vm693, %v1370, 0
    %v1629 = vsel %vm693, %v1369, 0
    %1631 = vmatprep.subr.bf16.mxu0 %v1549
    %1632 = vmatpush1.bf16.msra.mxu0 %v1548
    %1633 = vmatprep.subr.bf16.mxu0 %v1545
    %1634 = vmatpush1.bf16.msra.mxu0 %v1544
    %1635 = vmatprep.subr.bf16.mxu0 %v1541
    %1636 = vmatpush1.bf16.msra.mxu0 %v1540
    %1637 = vmatprep.subr.bf16.mxu0 %v1537
    %1638 = vmatpush1.bf16.msra.mxu0 %v1536
    %1639 = vmatprep.subr.bf16.mxu0 %v1533
    %1640 = vmatpush1.bf16.msra.mxu0 %v1532
    %1641 = vmatprep.subr.bf16.mxu0 %v1529
    %1642 = vmatpush1.bf16.msra.mxu0 %v1528
    %1643 = vmatprep.subr.bf16.mxu0 %v1525
    %1644 = vmatpush1.bf16.msra.mxu0 %v1524
    %1645 = vmatprep.subr.bf16.mxu0 %v1521
    %1646 = vmatpush1.bf16.msra.mxu0 %v1520
    %1647 = vmatprep.subr.bf16.mxu0 0
    %1648 = vmatpush2.bf16.msra.mxu0 0
    %1649 = vmatprep.subr.bf16.mxu0 0
    %1650 = vmatpush2.bf16.msra.mxu0 0
    %1651 = vmatprep.subr.bf16.mxu0 0
    %1652 = vmatpush2.bf16.msra.mxu0 0
    %1653 = vmatprep.subr.bf16.mxu0 0
    %1654 = vmatpush2.bf16.msra.mxu0 0
    %1655 = vmatprep.subr.bf16.mxu0 %v1565
    %1656 = vmatpush2.bf16.msra.mxu0 %v1564
    %1657 = vmatprep.subr.bf16.mxu0 %v1561
    %1658 = vmatpush2.bf16.msra.mxu0 %v1560
    %1659 = vmatprep.subr.bf16.mxu0 %v1557
    %1660 = vmatpush2.bf16.msra.mxu0 %v1556
    %1661 = vmatprep.subr.bf16.mxu0 %v1553
    %1662 = vmatpush2.bf16.msra.mxu0 %v1552
    %1663 = vmatprep.mubr.bf16.mxu0 %v1617
    %1664 = vmatmul.mubr.bf16.gmra.mxu0 %v1355
    %v1665 = vpop.f32.mrf.mxu0
    %v1666 = vadd.f32 0.0, %v1665
    %v1667 = vpop.f32.mrf.mxu0
    %v1668 = vadd.f32 0.0, %v1667
    %v1669 = vpop.f32.mrf.mxu0
    %v1670 = vadd.f32 0.0, %v1669
    %v1671 = vpop.f32.mrf.mxu0
    %v1672 = vadd.f32 0.0, %v1671
    %1673 = vmatprep.mubr.bf16.mxu0 %v1620
    %1674 = vmatmul.mubr.bf16.gmra.mxu0 %v1360
    %v1675 = vpop.f32.mrf.mxu0
    %v1676 = vadd.f32 0.0, %v1675
    %v1677 = vpop.f32.mrf.mxu0
    %v1678 = vadd.f32 0.0, %v1677
    %v1679 = vpop.f32.mrf.mxu0
    %v1680 = vadd.f32 0.0, %v1679
    %v1681 = vpop.f32.mrf.mxu0
    %v1682 = vadd.f32 0.0, %v1681
    %1683 = vmatprep.mubr.bf16.mxu0 %v1623
    %1684 = vmatmul.mubr.bf16.gmra.mxu0 %v1364
    %v1685 = vpop.f32.mrf.mxu0
    %v1686 = vadd.f32 0.0, %v1685
    %v1687 = vpop.f32.mrf.mxu0
    %v1688 = vadd.f32 0.0, %v1687
    %v1689 = vpop.f32.mrf.mxu0
    %v1690 = vadd.f32 0.0, %v1689
    %v1691 = vpop.f32.mrf.mxu0
    %v1692 = vadd.f32 0.0, %v1691
    %1693 = vmatprep.mubr.bf16.mxu0 %v1626
    %1694 = vmatmul.mubr.bf16.gmra.mxu0 %v1368
    %v1695 = vpop.f32.mrf.mxu0
    %v1696 = vadd.f32 0.0, %v1695
    %v1697 = vpop.f32.mrf.mxu0
    %v1698 = vadd.f32 0.0, %v1697
    %v1699 = vpop.f32.mrf.mxu0
    %v1700 = vadd.f32 0.0, %v1699
    %v1701 = vpop.f32.mrf.mxu0
    %v1702 = vadd.f32 0.0, %v1701
    %1703 = vmatprep.mubr.bf16.mxu0 %v1629
    %1704 = vmatmul.mubr.bf16.gmra.mxu0 %v1367
    %v1705 = vpop.f32.mrf.mxu0
    %v1706 = vadd.f32 0.0, %v1705
    %v1707 = vpop.f32.mrf.mxu0
    %v1708 = vadd.f32 0.0, %v1707
    %v1709 = vpop.f32.mrf.mxu0
    %v1710 = vpop.f32.mrf.mxu0
    %1711 = vdwg.mxu0
    %1712 = vmatprep.subr.bf16.mxu0 %v1551
    %1713 = vmatpush1.bf16.msra.mxu0 %v1550
    %1714 = vmatprep.subr.bf16.mxu0 %v1547
    %1715 = vmatpush1.bf16.msra.mxu0 %v1546
    %1716 = vmatprep.subr.bf16.mxu0 %v1543
    %1717 = vmatpush1.bf16.msra.mxu0 %v1542
    %1718 = vmatprep.subr.bf16.mxu0 %v1539
    %1719 = vmatpush1.bf16.msra.mxu0 %v1538
    %1720 = vmatprep.subr.bf16.mxu0 %v1535
    %1721 = vmatpush1.bf16.msra.mxu0 %v1534
    %1722 = vmatprep.subr.bf16.mxu0 %v1531
    %1723 = vmatpush1.bf16.msra.mxu0 %v1530
    %1724 = vmatprep.subr.bf16.mxu0 %v1527
    %1725 = vmatpush1.bf16.msra.mxu0 %v1526
    %1726 = vmatprep.subr.bf16.mxu0 %v1523
    %1727 = vmatpush1.bf16.msra.mxu0 %v1522
    %1728 = vmatprep.subr.bf16.mxu0 0
    %1729 = vmatpush2.bf16.msra.mxu0 0
    %1730 = vmatprep.subr.bf16.mxu0 0
    %1731 = vmatpush2.bf16.msra.mxu0 0
    %1732 = vmatprep.subr.bf16.mxu0 0
    %1733 = vmatpush2.bf16.msra.mxu0 0
    %1734 = vmatprep.subr.bf16.mxu0 0
    %1735 = vmatpush2.bf16.msra.mxu0 0
    %1736 = vmatprep.subr.bf16.mxu0 %v1567
    %1737 = vmatpush2.bf16.msra.mxu0 %v1566
    %1738 = vmatprep.subr.bf16.mxu0 %v1563
    %1739 = vmatpush2.bf16.msra.mxu0 %v1562
    %1740 = vmatprep.subr.bf16.mxu0 %v1559
    %1741 = vmatpush2.bf16.msra.mxu0 %v1558
    %1742 = vmatprep.subr.bf16.mxu0 %v1555
    %1743 = vmatpush2.bf16.msra.mxu0 %v1554
    %1744 = vmatprep.mubr.bf16.mxu0 %v1617
    %1745 = vmatmul.mubr.bf16.gmra.mxu0 %v1355
    %v1746 = vpop.f32.mrf.mxu0
    %v1747 = vadd.f32 0.0, %v1746
    %v1748 = vpop.f32.mrf.mxu0
    %v1749 = vadd.f32 0.0, %v1748
    %v1750 = vpop.f32.mrf.mxu0
    %v1751 = vadd.f32 0.0, %v1750
    %v1752 = vpop.f32.mrf.mxu0
    %v1753 = vadd.f32 0.0, %v1752
    %1754 = vmatprep.mubr.bf16.mxu0 %v1620
    %1755 = vmatmul.mubr.bf16.gmra.mxu0 %v1360
    %v1756 = vpop.f32.mrf.mxu0
    %v1757 = vadd.f32 0.0, %v1756
    %v1758 = vpop.f32.mrf.mxu0
    %v1759 = vadd.f32 0.0, %v1758
    %v1760 = vpop.f32.mrf.mxu0
    %v1761 = vadd.f32 0.0, %v1760
    %v1762 = vpop.f32.mrf.mxu0
    %v1763 = vadd.f32 0.0, %v1762
    %1764 = vmatprep.mubr.bf16.mxu0 %v1623
    %1765 = vmatmul.mubr.bf16.gmra.mxu0 %v1364
    %v1766 = vpop.f32.mrf.mxu0
    %v1767 = vadd.f32 0.0, %v1766
    %v1768 = vpop.f32.mrf.mxu0
    %v1769 = vadd.f32 0.0, %v1768
    %v1770 = vpop.f32.mrf.mxu0
    %v1771 = vadd.f32 0.0, %v1770
    %v1772 = vpop.f32.mrf.mxu0
    %v1773 = vadd.f32 0.0, %v1772
    %1774 = vmatprep.mubr.bf16.mxu0 %v1626
    %1775 = vmatmul.mubr.bf16.gmra.mxu0 %v1368
    %v1776 = vpop.f32.mrf.mxu0
    %v1777 = vadd.f32 0.0, %v1776
    %v1778 = vpop.f32.mrf.mxu0
    %v1779 = vadd.f32 0.0, %v1778
    %v1780 = vpop.f32.mrf.mxu0
    %v1781 = vadd.f32 0.0, %v1780
    %v1782 = vpop.f32.mrf.mxu0
    %v1783 = vadd.f32 0.0, %v1782
    %1784 = vmatprep.mubr.bf16.mxu0 %v1629
    %1785 = vmatmul.mubr.bf16.gmra.mxu0 %v1367
    %v1786 = vpop.f32.mrf.mxu0
    %v1787 = vadd.f32 0.0, %v1786
    %v1788 = vpop.f32.mrf.mxu0
    %v1789 = vadd.f32 0.0, %v1788
    %v1790 = vpop.f32.mrf.mxu0
    %v1791 = vpop.f32.mrf.mxu0
    %1792 = vdwg.mxu0
    %v1793 = vadd.f32 %v1158, %v1666
    %v1794 = vadd.f32 %v1160, %v1668
    %v1795 = vadd.f32 %v1239, %v1747
    %v1796 = vadd.f32 %v1241, %v1749
    %v1797 = vadd.f32 %v1162, %v1670
    %v1798 = vadd.f32 %v1164, %v1672
    %v1799 = vadd.f32 %v1243, %v1751
    %v1800 = vadd.f32 %v1245, %v1753
    %v1801 = vadd.f32 %v1168, %v1676
    %v1802 = vadd.f32 %v1170, %v1678
    %v1803 = vadd.f32 %v1249, %v1757
    %v1804 = vadd.f32 %v1251, %v1759
    %v1805 = vadd.f32 %v1172, %v1680
    %v1806 = vadd.f32 %v1174, %v1682
    %v1807 = vadd.f32 %v1253, %v1761
    %v1808 = vadd.f32 %v1255, %v1763
    %v1809 = vadd.f32 %v1178, %v1686
    %v1810 = vadd.f32 %v1180, %v1688
    %v1811 = vadd.f32 %v1259, %v1767
    %v1812 = vadd.f32 %v1261, %v1769
    %v1813 = vadd.f32 %v1182, %v1690
    %v1814 = vadd.f32 %v1184, %v1692
    %v1815 = vadd.f32 %v1263, %v1771
    %v1816 = vadd.f32 %v1265, %v1773
    %v1817 = vadd.f32 %v1188, %v1696
    %v1818 = vadd.f32 %v1190, %v1698
    %v1819 = vadd.f32 %v1269, %v1777
    %v1820 = vadd.f32 %v1271, %v1779
    %v1821 = vadd.f32 %v1192, %v1700
    %v1822 = vadd.f32 %v1194, %v1702
    %v1823 = vadd.f32 %v1273, %v1781
    %v1824 = vadd.f32 %v1275, %v1783
    %v1825 = vadd.f32 %v1198, %v1706
    %v1826 = vadd.f32 %v1200, %v1708
    %v1827 = vadd.f32 %v1279, %v1787
    %v1828 = vadd.f32 %v1281, %v1789
    %v1829 = vld [vmem:[%s1] sm:$0xf8]
    %v1830 = vld [vmem:[%s1 + $0x8] sm:$0xf8]
    %v1831 = vld [vmem:[%s1 + $0x80] sm:$0x7f]
    %v1832 = vld [vmem:[%s1 + $0x88] sm:$0x7f]
    %v1833 = vpack.c.bf16 %v238, %v1829
    %v1834 = vpack.c.bf16 %v239, %v1830
    %v1835 = vpack.c.bf16 %v1831, %v1831
    %v1836 = vpack.c.bf16 %v1832, %v1832
    %s1837 = scalar_lea.vmem %s3, 1152
    %v1838 = vld [vmem:[%s1837] sm:$0xff]
    %v1839 = vld [vmem:[%s1837 + $0x8] sm:$0xff]
    %v1840 = vld [vmem:[%s1837 + $0x10] sm:$0xff]
    %v1841 = vld [vmem:[%s1837 + $0x18] sm:$0xff]
    %v1842 = vld [vmem:[%s1837 + $0x20] sm:$0xff]
    %v1843 = vld [vmem:[%s1837 + $0x28] sm:$0xff]
    %v1844 = vld [vmem:[%s1837 + $0x30] sm:$0xff]
    %v1845 = vld [vmem:[%s1837 + $0x38] sm:$0xff]
    %v1846 = vld [vmem:[%s1837 + $0x40] sm:$0xff]
    %v1847 = vld [vmem:[%s1837 + $0x48] sm:$0xff]
    %v1848 = vld [vmem:[%s1837 + $0x50] sm:$0xff]
    %v1849 = vld [vmem:[%s1837 + $0x58] sm:$0xff]
    %v1850 = vld [vmem:[%s1837 + $0x60] sm:$0xff]
    %v1851 = vld [vmem:[%s1837 + $0x68] sm:$0xff]
    %v1852 = vld [vmem:[%s1837 + $0x70] sm:$0xff]
    %v1853 = vld [vmem:[%s1837 + $0x78] sm:$0xff]
    %v1854 = vld [vmem:[%s1837 + $0x80] sm:$0xff]
    %v1855 = vld [vmem:[%s1837 + $0x88] sm:$0xff]
    %v1856 = vld [vmem:[%s1837 + $0x90] sm:$0xff]
    %v1857 = vld [vmem:[%s1837 + $0x98] sm:$0xff]
    %v1858 = vld [vmem:[%s1837 + $0xa0] sm:$0xff]
    %v1859 = vld [vmem:[%s1837 + $0xa8] sm:$0xff]
    %v1860 = vld [vmem:[%s1837 + $0xb0] sm:$0xff]
    %v1861 = vld [vmem:[%s1837 + $0xb8] sm:$0xff]
    %v1862 = vld [vmem:[%s1837 + $0xc0] sm:$0xff]
    %v1863 = vld [vmem:[%s1837 + $0xc8] sm:$0xff]
    %v1864 = vld [vmem:[%s1837 + $0xd0] sm:$0xff]
    %v1865 = vld [vmem:[%s1837 + $0xd8] sm:$0xff]
    %v1866 = vld [vmem:[%s1837 + $0xe0] sm:$0xff]
    %v1867 = vld [vmem:[%s1837 + $0xe8] sm:$0xff]
    %v1868 = vld [vmem:[%s1837 + $0xf0] sm:$0xff]
    %v1869 = vld [vmem:[%s1837 + $0xf8] sm:$0xff]
    %v1870 = vld [vmem:[%s1837 + $0x100] sm:$0xff]
    %v1871 = vld [vmem:[%s1837 + $0x108] sm:$0xff]
    %v1872 = vld [vmem:[%s1837 + $0x110] sm:$0xff]
    %v1873 = vld [vmem:[%s1837 + $0x118] sm:$0xff]
    %v1874 = vld [vmem:[%s1837 + $0x120] sm:$0xff]
    %v1875 = vld [vmem:[%s1837 + $0x128] sm:$0xff]
    %v1876 = vld [vmem:[%s1837 + $0x130] sm:$0xff]
    %v1877 = vld [vmem:[%s1837 + $0x138] sm:$0xff]
    %v1878 = vld [vmem:[%s1837 + $0x140] sm:$0xff]
    %v1879 = vld [vmem:[%s1837 + $0x148] sm:$0xff]
    %v1880 = vld [vmem:[%s1837 + $0x150] sm:$0xff]
    %v1881 = vld [vmem:[%s1837 + $0x158] sm:$0xff]
    %v1882 = vld [vmem:[%s1837 + $0x160] sm:$0xff]
    %v1883 = vld [vmem:[%s1837 + $0x168] sm:$0xff]
    %v1884 = vld [vmem:[%s1837 + $0x170] sm:$0xff]
    %v1885 = vld [vmem:[%s1837 + $0x178] sm:$0xff]
    %vm1886 = vsmask.f32 6400
    %v1888 = vshrl.u32 %v1833, 16
    %v1890 = vrot.slane %v1888, 1
    %v1891 = vshll.u32 %v1833, 16
    %v1893 = vrot.slane %v1891, 2
    %v1894 = vor.u32 %v1890, %v1893
    %v1895 = vrot.slane %v394, 1
    %v1896 = vrot.slane %v378, 2
    %v1897 = vor.u32 %v1895, %v1896
    %v1898 = vsel %vm1886, %v1894, %v1897
    %v1900 = vshrl.u32 %v1834, 16
    %v1902 = vrot.slane %v1900, 1
    %v1903 = vshll.u32 %v1834, 16
    %v1905 = vrot.slane %v1903, 2
    %v1906 = vor.u32 %v1902, %v1905
    %v1907 = vrot.slane %v402, 1
    %v1908 = vrot.slane %v390, 2
    %v1909 = vor.u32 %v1907, %v1908
    %v1910 = vsel %vm1886, %v1906, %v1909
    %v1911 = vrot.slane %v410, 1
    %v1912 = vrot.slane %v398, 2
    %v1913 = vor.u32 %v1911, %v1912
    %v1914 = vsel %vm1886, %v1897, %v1913
    %v1915 = vrot.slane %v418, 1
    %v1916 = vrot.slane %v406, 2
    %v1917 = vor.u32 %v1915, %v1916
    %v1918 = vsel %vm1886, %v1909, %v1917
    %v1919 = vrot.slane %v426, 1
    %v1920 = vrot.slane %v414, 2
    %v1921 = vor.u32 %v1919, %v1920
    %v1922 = vsel %vm1886, %v1913, %v1921
    %v1923 = vrot.slane %v434, 1
    %v1924 = vrot.slane %v422, 2
    %v1925 = vor.u32 %v1923, %v1924
    %v1926 = vsel %vm1886, %v1917, %v1925
    %v1928 = vshrl.u32 %v1835, 16
    %v1930 = vrot.slane %v1928, 1
    %v1931 = vshll.u32 %v1835, 16
    %v1933 = vrot.slane %v1931, 2
    %v1934 = vor.u32 %v1930, %v1933
    %v1935 = vsel %vm1886, %v1921, %v1934
    %v1937 = vshrl.u32 %v1836, 16
    %v1939 = vrot.slane %v1937, 1
    %v1940 = vshll.u32 %v1836, 16
    %v1942 = vrot.slane %v1940, 2
    %v1943 = vor.u32 %v1939, %v1942
    %v1944 = vsel %vm1886, %v1925, %v1943
    %v1998 = vunpack.c.l.b16 %v1838
    %v1999 = vunpack.c.h.b16 %v1838
    %v2000 = vunpack.c.l.b16 %v1839
    %v2001 = vunpack.c.h.b16 %v1839
    %v2002 = vunpack.c.l.b16 %v1840
    %v2003 = vunpack.c.h.b16 %v1840
    %v2004 = vunpack.c.l.b16 %v1841
    %v2005 = vunpack.c.h.b16 %v1841
    %v2006 = vunpack.c.l.b16 %v1842
    %v2007 = vunpack.c.h.b16 %v1842
    %v2008 = vunpack.c.l.b16 %v1843
    %v2009 = vunpack.c.h.b16 %v1843
    %v2010 = vunpack.c.l.b16 %v1844
    %v2011 = vunpack.c.h.b16 %v1844
    %v2012 = vunpack.c.l.b16 %v1845
    %v2013 = vunpack.c.h.b16 %v1845
    %v2014 = vunpack.c.l.b16 %v1846
    %v2015 = vunpack.c.h.b16 %v1846
    %v2016 = vunpack.c.l.b16 %v1847
    %v2017 = vunpack.c.h.b16 %v1847
    %v2018 = vunpack.c.l.b16 %v1848
    %v2019 = vunpack.c.h.b16 %v1848
    %v2020 = vunpack.c.l.b16 %v1849
    %v2021 = vunpack.c.h.b16 %v1849
    %v2022 = vunpack.c.l.b16 %v1850
    %v2023 = vunpack.c.h.b16 %v1850
    %v2024 = vunpack.c.l.b16 %v1851
    %v2025 = vunpack.c.h.b16 %v1851
    %v2026 = vunpack.c.l.b16 %v1852
    %v2027 = vunpack.c.h.b16 %v1852
    %v2028 = vunpack.c.l.b16 %v1853
    %v2029 = vunpack.c.h.b16 %v1853
    %v2030 = vunpack.c.l.b16 %v1854
    %v2031 = vunpack.c.h.b16 %v1854
    %v2032 = vunpack.c.l.b16 %v1855
    %v2033 = vunpack.c.h.b16 %v1855
    %v2034 = vunpack.c.l.b16 %v1856
    %v2035 = vunpack.c.h.b16 %v1856
    %v2036 = vunpack.c.l.b16 %v1857
    %v2037 = vunpack.c.h.b16 %v1857
    %v2038 = vunpack.c.l.b16 %v1858
    %v2039 = vunpack.c.h.b16 %v1858
    %v2040 = vunpack.c.l.b16 %v1859
    %v2041 = vunpack.c.h.b16 %v1859
    %v2042 = vunpack.c.l.b16 %v1860
    %v2043 = vunpack.c.h.b16 %v1860
    %v2044 = vunpack.c.l.b16 %v1861
    %v2045 = vunpack.c.h.b16 %v1861
    %v2046 = vunpack.c.l.b16 %v1862
    %v2047 = vunpack.c.h.b16 %v1862
    %v2048 = vunpack.c.l.b16 %v1863
    %v2049 = vunpack.c.h.b16 %v1863
    %v2050 = vunpack.c.l.b16 %v1864
    %v2051 = vunpack.c.h.b16 %v1864
    %v2052 = vunpack.c.l.b16 %v1865
    %v2053 = vunpack.c.h.b16 %v1865
    %v2054 = vunpack.c.l.b16 %v1866
    %v2055 = vunpack.c.h.b16 %v1866
    %v2056 = vunpack.c.l.b16 %v1867
    %v2057 = vunpack.c.h.b16 %v1867
    %v2058 = vunpack.c.l.b16 %v1868
    %v2059 = vunpack.c.h.b16 %v1868
    %v2060 = vunpack.c.l.b16 %v1869
    %v2061 = vunpack.c.h.b16 %v1869
    %v2062 = vunpack.c.l.b16 %v1870
    %v2063 = vunpack.c.h.b16 %v1870
    %v2064 = vunpack.c.l.b16 %v1871
    %v2065 = vunpack.c.h.b16 %v1871
    %v2066 = vunpack.c.l.b16 %v1872
    %v2067 = vunpack.c.h.b16 %v1872
    %v2068 = vunpack.c.l.b16 %v1873
    %v2069 = vunpack.c.h.b16 %v1873
    %v2070 = vunpack.c.l.b16 %v1874
    %v2071 = vunpack.c.h.b16 %v1874
    %v2072 = vunpack.c.l.b16 %v1875
    %v2073 = vunpack.c.h.b16 %v1875
    %v2074 = vunpack.c.l.b16 %v1876
    %v2075 = vunpack.c.h.b16 %v1876
    %v2076 = vunpack.c.l.b16 %v1877
    %v2077 = vunpack.c.h.b16 %v1877
    %v2078 = vunpack.c.l.b16 %v1878
    %v2079 = vunpack.c.h.b16 %v1878
    %v2080 = vunpack.c.l.b16 %v1879
    %v2081 = vunpack.c.h.b16 %v1879
    %v2082 = vunpack.c.l.b16 %v1880
    %v2083 = vunpack.c.h.b16 %v1880
    %v2084 = vunpack.c.l.b16 %v1881
    %v2085 = vunpack.c.h.b16 %v1881
    %v2086 = vunpack.c.l.b16 %v1882
    %v2087 = vunpack.c.h.b16 %v1882
    %v2088 = vunpack.c.l.b16 %v1883
    %v2089 = vunpack.c.h.b16 %v1883
    %v2090 = vunpack.c.l.b16 %v1884
    %v2091 = vunpack.c.h.b16 %v1884
    %v2092 = vunpack.c.l.b16 %v1885
    %v2093 = vunpack.c.h.b16 %v1885
    %v2094 = vpack.c.b16 %v2002, %v1998
    %v2095 = vpack.c.b16 %v2003, %v1999
    %v2096 = vpack.c.b16 %v2004, %v2000
    %v2097 = vpack.c.b16 %v2005, %v2001
    %v2098 = vpack.c.b16 %v2010, %v2006
    %v2099 = vpack.c.b16 %v2011, %v2007
    %v2100 = vpack.c.b16 %v2012, %v2008
    %v2101 = vpack.c.b16 %v2013, %v2009
    %v2102 = vpack.c.b16 %v2018, %v2014
    %v2103 = vpack.c.b16 %v2019, %v2015
    %v2104 = vpack.c.b16 %v2020, %v2016
    %v2105 = vpack.c.b16 %v2021, %v2017
    %v2106 = vpack.c.b16 %v2026, %v2022
    %v2107 = vpack.c.b16 %v2027, %v2023
    %v2108 = vpack.c.b16 %v2028, %v2024
    %v2109 = vpack.c.b16 %v2029, %v2025
    %v2110 = vpack.c.b16 %v2034, %v2030
    %v2111 = vpack.c.b16 %v2035, %v2031
    %v2112 = vpack.c.b16 %v2036, %v2032
    %v2113 = vpack.c.b16 %v2037, %v2033
    %v2114 = vpack.c.b16 %v2042, %v2038
    %v2115 = vpack.c.b16 %v2043, %v2039
    %v2116 = vpack.c.b16 %v2044, %v2040
    %v2117 = vpack.c.b16 %v2045, %v2041
    %v2118 = vpack.c.b16 %v2050, %v2046
    %v2119 = vpack.c.b16 %v2051, %v2047
    %v2120 = vpack.c.b16 %v2052, %v2048
    %v2121 = vpack.c.b16 %v2053, %v2049
    %v2122 = vpack.c.b16 %v2058, %v2054
    %v2123 = vpack.c.b16 %v2059, %v2055
    %v2124 = vpack.c.b16 %v2060, %v2056
    %v2125 = vpack.c.b16 %v2061, %v2057
    %v2126 = vpack.c.b16 %v2066, %v2062
    %v2127 = vpack.c.b16 %v2067, %v2063
    %v2128 = vpack.c.b16 %v2068, %v2064
    %v2129 = vpack.c.b16 %v2069, %v2065
    %v2130 = vpack.c.b16 %v2074, %v2070
    %v2131 = vpack.c.b16 %v2075, %v2071
    %v2132 = vpack.c.b16 %v2076, %v2072
    %v2133 = vpack.c.b16 %v2077, %v2073
    %v2134 = vpack.c.b16 %v2082, %v2078
    %v2135 = vpack.c.b16 %v2083, %v2079
    %v2136 = vpack.c.b16 %v2084, %v2080
    %v2137 = vpack.c.b16 %v2085, %v2081
    %v2138 = vpack.c.b16 %v2090, %v2086
    %v2139 = vpack.c.b16 %v2091, %v2087
    %v2140 = vpack.c.b16 %v2092, %v2088
    %v2141 = vpack.c.b16 %v2093, %v2089
    %v2191 = vsel %vm693, %v1910, 0
    %v2194 = vsel %vm693, %v1918, 0
    %v2197 = vsel %vm693, %v1926, 0
    %v2200 = vsel %vm693, %v1944, 0
    %v2203 = vsel %vm693, %v1943, 0
    %2205 = vmatprep.subr.bf16.mxu0 %v2123
    %2206 = vmatpush1.bf16.msra.mxu0 %v2122
    %2207 = vmatprep.subr.bf16.mxu0 %v2119
    %2208 = vmatpush1.bf16.msra.mxu0 %v2118
    %2209 = vmatprep.subr.bf16.mxu0 %v2115
    %2210 = vmatpush1.bf16.msra.mxu0 %v2114
    %2211 = vmatprep.subr.bf16.mxu0 %v2111
    %2212 = vmatpush1.bf16.msra.mxu0 %v2110
    %2213 = vmatprep.subr.bf16.mxu0 %v2107
    %2214 = vmatpush1.bf16.msra.mxu0 %v2106
    %2215 = vmatprep.subr.bf16.mxu0 %v2103
    %2216 = vmatpush1.bf16.msra.mxu0 %v2102
    %2217 = vmatprep.subr.bf16.mxu0 %v2099
    %2218 = vmatpush1.bf16.msra.mxu0 %v2098
    %2219 = vmatprep.subr.bf16.mxu0 %v2095
    %2220 = vmatpush1.bf16.msra.mxu0 %v2094
    %2221 = vmatprep.subr.bf16.mxu0 0
    %2222 = vmatpush2.bf16.msra.mxu0 0
    %2223 = vmatprep.subr.bf16.mxu0 0
    %2224 = vmatpush2.bf16.msra.mxu0 0
    %2225 = vmatprep.subr.bf16.mxu0 0
    %2226 = vmatpush2.bf16.msra.mxu0 0
    %2227 = vmatprep.subr.bf16.mxu0 0
    %2228 = vmatpush2.bf16.msra.mxu0 0
    %2229 = vmatprep.subr.bf16.mxu0 %v2139
    %2230 = vmatpush2.bf16.msra.mxu0 %v2138
    %2231 = vmatprep.subr.bf16.mxu0 %v2135
    %2232 = vmatpush2.bf16.msra.mxu0 %v2134
    %2233 = vmatprep.subr.bf16.mxu0 %v2131
    %2234 = vmatpush2.bf16.msra.mxu0 %v2130
    %2235 = vmatprep.subr.bf16.mxu0 %v2127
    %2236 = vmatpush2.bf16.msra.mxu0 %v2126
    %2237 = vmatprep.mubr.bf16.mxu0 %v2191
    %2238 = vmatmul.mubr.bf16.gmra.mxu0 %v1898
    %v2239 = vpop.f32.mrf.mxu0
    %v2240 = vadd.f32 0.0, %v2239
    %v2241 = vpop.f32.mrf.mxu0
    %v2242 = vadd.f32 0.0, %v2241
    %v2243 = vpop.f32.mrf.mxu0
    %v2244 = vadd.f32 0.0, %v2243
    %v2245 = vpop.f32.mrf.mxu0
    %v2246 = vadd.f32 0.0, %v2245
    %2247 = vmatprep.mubr.bf16.mxu0 %v2194
    %2248 = vmatmul.mubr.bf16.gmra.mxu0 %v1914
    %v2249 = vpop.f32.mrf.mxu0
    %v2250 = vadd.f32 0.0, %v2249
    %v2251 = vpop.f32.mrf.mxu0
    %v2252 = vadd.f32 0.0, %v2251
    %v2253 = vpop.f32.mrf.mxu0
    %v2254 = vadd.f32 0.0, %v2253
    %v2255 = vpop.f32.mrf.mxu0
    %v2256 = vadd.f32 0.0, %v2255
    %2257 = vmatprep.mubr.bf16.mxu0 %v2197
    %2258 = vmatmul.mubr.bf16.gmra.mxu0 %v1922
    %v2259 = vpop.f32.mrf.mxu0
    %v2260 = vadd.f32 0.0, %v2259
    %v2261 = vpop.f32.mrf.mxu0
    %v2262 = vadd.f32 0.0, %v2261
    %v2263 = vpop.f32.mrf.mxu0
    %v2264 = vadd.f32 0.0, %v2263
    %v2265 = vpop.f32.mrf.mxu0
    %v2266 = vadd.f32 0.0, %v2265
    %2267 = vmatprep.mubr.bf16.mxu0 %v2200
    %2268 = vmatmul.mubr.bf16.gmra.mxu0 %v1935
    %v2269 = vpop.f32.mrf.mxu0
    %v2270 = vadd.f32 0.0, %v2269
    %v2271 = vpop.f32.mrf.mxu0
    %v2272 = vadd.f32 0.0, %v2271
    %v2273 = vpop.f32.mrf.mxu0
    %v2274 = vadd.f32 0.0, %v2273
    %v2275 = vpop.f32.mrf.mxu0
    %v2276 = vadd.f32 0.0, %v2275
    %2277 = vmatprep.mubr.bf16.mxu0 %v2203
    %2278 = vmatmul.mubr.bf16.gmra.mxu0 %v1934
    %v2279 = vpop.f32.mrf.mxu0
    %v2280 = vadd.f32 0.0, %v2279
    %v2281 = vpop.f32.mrf.mxu0
    %v2282 = vadd.f32 0.0, %v2281
    %v2283 = vpop.f32.mrf.mxu0
    %v2284 = vpop.f32.mrf.mxu0
    %2285 = vdwg.mxu0
    %2286 = vmatprep.subr.bf16.mxu0 %v2125
    %2287 = vmatpush1.bf16.msra.mxu0 %v2124
    %2288 = vmatprep.subr.bf16.mxu0 %v2121
    %2289 = vmatpush1.bf16.msra.mxu0 %v2120
    %2290 = vmatprep.subr.bf16.mxu0 %v2117
    %2291 = vmatpush1.bf16.msra.mxu0 %v2116
    %2292 = vmatprep.subr.bf16.mxu0 %v2113
    %2293 = vmatpush1.bf16.msra.mxu0 %v2112
    %2294 = vmatprep.subr.bf16.mxu0 %v2109
    %2295 = vmatpush1.bf16.msra.mxu0 %v2108
    %2296 = vmatprep.subr.bf16.mxu0 %v2105
    %2297 = vmatpush1.bf16.msra.mxu0 %v2104
    %2298 = vmatprep.subr.bf16.mxu0 %v2101
    %2299 = vmatpush1.bf16.msra.mxu0 %v2100
    %2300 = vmatprep.subr.bf16.mxu0 %v2097
    %2301 = vmatpush1.bf16.msra.mxu0 %v2096
    %2302 = vmatprep.subr.bf16.mxu0 0
    %2303 = vmatpush2.bf16.msra.mxu0 0
    %2304 = vmatprep.subr.bf16.mxu0 0
    %2305 = vmatpush2.bf16.msra.mxu0 0
    %2306 = vmatprep.subr.bf16.mxu0 0
    %2307 = vmatpush2.bf16.msra.mxu0 0
    %2308 = vmatprep.subr.bf16.mxu0 0
    %2309 = vmatpush2.bf16.msra.mxu0 0
    %2310 = vmatprep.subr.bf16.mxu0 %v2141
    %2311 = vmatpush2.bf16.msra.mxu0 %v2140
    %2312 = vmatprep.subr.bf16.mxu0 %v2137
    %2313 = vmatpush2.bf16.msra.mxu0 %v2136
    %2314 = vmatprep.subr.bf16.mxu0 %v2133
    %2315 = vmatpush2.bf16.msra.mxu0 %v2132
    %2316 = vmatprep.subr.bf16.mxu0 %v2129
    %2317 = vmatpush2.bf16.msra.mxu0 %v2128
    %2318 = vmatprep.mubr.bf16.mxu0 %v2191
    %2319 = vmatmul.mubr.bf16.gmra.mxu0 %v1898
    %v2320 = vpop.f32.mrf.mxu0
    %v2321 = vadd.f32 0.0, %v2320
    %v2322 = vpop.f32.mrf.mxu0
    %v2323 = vadd.f32 0.0, %v2322
    %v2324 = vpop.f32.mrf.mxu0
    %v2325 = vadd.f32 0.0, %v2324
    %v2326 = vpop.f32.mrf.mxu0
    %v2327 = vadd.f32 0.0, %v2326
    %2328 = vmatprep.mubr.bf16.mxu0 %v2194
    %2329 = vmatmul.mubr.bf16.gmra.mxu0 %v1914
    %v2330 = vpop.f32.mrf.mxu0
    %v2331 = vadd.f32 0.0, %v2330
    %v2332 = vpop.f32.mrf.mxu0
    %v2333 = vadd.f32 0.0, %v2332
    %v2334 = vpop.f32.mrf.mxu0
    %v2335 = vadd.f32 0.0, %v2334
    %v2336 = vpop.f32.mrf.mxu0
    %v2337 = vadd.f32 0.0, %v2336
    %2338 = vmatprep.mubr.bf16.mxu0 %v2197
    %2339 = vmatmul.mubr.bf16.gmra.mxu0 %v1922
    %v2340 = vpop.f32.mrf.mxu0
    %v2341 = vadd.f32 0.0, %v2340
    %v2342 = vpop.f32.mrf.mxu0
    %v2343 = vadd.f32 0.0, %v2342
    %v2344 = vpop.f32.mrf.mxu0
    %v2345 = vadd.f32 0.0, %v2344
    %v2346 = vpop.f32.mrf.mxu0
    %v2347 = vadd.f32 0.0, %v2346
    %2348 = vmatprep.mubr.bf16.mxu0 %v2200
    %2349 = vmatmul.mubr.bf16.gmra.mxu0 %v1935
    %v2350 = vpop.f32.mrf.mxu0
    %v2351 = vadd.f32 0.0, %v2350
    %v2352 = vpop.f32.mrf.mxu0
    %v2353 = vadd.f32 0.0, %v2352
    %v2354 = vpop.f32.mrf.mxu0
    %v2355 = vadd.f32 0.0, %v2354
    %v2356 = vpop.f32.mrf.mxu0
    %v2357 = vadd.f32 0.0, %v2356
    %2358 = vmatprep.mubr.bf16.mxu0 %v2203
    %2359 = vmatmul.mubr.bf16.gmra.mxu0 %v1934
    %v2360 = vpop.f32.mrf.mxu0
    %v2361 = vadd.f32 0.0, %v2360
    %v2362 = vpop.f32.mrf.mxu0
    %v2363 = vadd.f32 0.0, %v2362
    %v2364 = vpop.f32.mrf.mxu0
    %v2365 = vpop.f32.mrf.mxu0
    %2366 = vdwg.mxu0
    %v2367 = vadd.f32 %v1793, %v2240
    %v2368 = vadd.f32 %v1794, %v2242
    %v2369 = vadd.f32 %v1795, %v2321
    %v2370 = vadd.f32 %v1796, %v2323
    %v2371 = vadd.f32 %v1797, %v2244
    %v2372 = vadd.f32 %v1798, %v2246
    %v2373 = vadd.f32 %v1799, %v2325
    %v2374 = vadd.f32 %v1800, %v2327
    %v2375 = vadd.f32 %v1801, %v2250
    %v2376 = vadd.f32 %v1802, %v2252
    %v2377 = vadd.f32 %v1803, %v2331
    %v2378 = vadd.f32 %v1804, %v2333
    %v2379 = vadd.f32 %v1805, %v2254
    %v2380 = vadd.f32 %v1806, %v2256
    %v2381 = vadd.f32 %v1807, %v2335
    %v2382 = vadd.f32 %v1808, %v2337
    %v2383 = vadd.f32 %v1809, %v2260
    %v2384 = vadd.f32 %v1810, %v2262
    %v2385 = vadd.f32 %v1811, %v2341
    %v2386 = vadd.f32 %v1812, %v2343
    %v2387 = vadd.f32 %v1813, %v2264
    %v2388 = vadd.f32 %v1814, %v2266
    %v2389 = vadd.f32 %v1815, %v2345
    %v2390 = vadd.f32 %v1816, %v2347
    %v2391 = vadd.f32 %v1817, %v2270
    %v2392 = vadd.f32 %v1818, %v2272
    %v2393 = vadd.f32 %v1819, %v2351
    %v2394 = vadd.f32 %v1820, %v2353
    %v2395 = vadd.f32 %v1821, %v2274
    %v2396 = vadd.f32 %v1822, %v2276
    %v2397 = vadd.f32 %v1823, %v2355
    %v2398 = vadd.f32 %v1824, %v2357
    %v2399 = vadd.f32 %v1825, %v2280
    %v2400 = vadd.f32 %v1826, %v2282
    %v2401 = vadd.f32 %v1827, %v2361
    %v2402 = vadd.f32 %v1828, %v2363
    %v2403 = vld [vmem:[%s1] sm:$0xf0]
    %v2404 = vld [vmem:[%s1 + $0x8] sm:$0xf0]
    %v2405 = vld [vmem:[%s1 + $0x80] sm:$0xff]
    %v2406 = vld [vmem:[%s1 + $0x88] sm:$0xff]
    %v2407 = vpack.c.bf16 %v238, %v2403
    %v2408 = vpack.c.bf16 %v239, %v2404
    %v2409 = vpack.c.bf16 %v2405, %v2405
    %v2410 = vpack.c.bf16 %v2406, %v2406
    %s2411 = scalar_lea.vmem %s3, 1536
    %v2412 = vld [vmem:[%s2411] sm:$0xff]
    %v2413 = vld [vmem:[%s2411 + $0x8] sm:$0xff]
    %v2414 = vld [vmem:[%s2411 + $0x10] sm:$0xff]
    %v2415 = vld [vmem:[%s2411 + $0x18] sm:$0xff]
    %v2416 = vld [vmem:[%s2411 + $0x20] sm:$0xff]
    %v2417 = vld [vmem:[%s2411 + $0x28] sm:$0xff]
    %v2418 = vld [vmem:[%s2411 + $0x30] sm:$0xff]
    %v2419 = vld [vmem:[%s2411 + $0x38] sm:$0xff]
    %v2420 = vld [vmem:[%s2411 + $0x40] sm:$0xff]
    %v2421 = vld [vmem:[%s2411 + $0x48] sm:$0xff]
    %v2422 = vld [vmem:[%s2411 + $0x50] sm:$0xff]
    %v2423 = vld [vmem:[%s2411 + $0x58] sm:$0xff]
    %v2424 = vld [vmem:[%s2411 + $0x60] sm:$0xff]
    %v2425 = vld [vmem:[%s2411 + $0x68] sm:$0xff]
    %v2426 = vld [vmem:[%s2411 + $0x70] sm:$0xff]
    %v2427 = vld [vmem:[%s2411 + $0x78] sm:$0xff]
    %v2428 = vld [vmem:[%s2411 + $0x80] sm:$0xff]
    %v2429 = vld [vmem:[%s2411 + $0x88] sm:$0xff]
    %v2430 = vld [vmem:[%s2411 + $0x90] sm:$0xff]
    %v2431 = vld [vmem:[%s2411 + $0x98] sm:$0xff]
    %v2432 = vld [vmem:[%s2411 + $0xa0] sm:$0xff]
    %v2433 = vld [vmem:[%s2411 + $0xa8] sm:$0xff]
    %v2434 = vld [vmem:[%s2411 + $0xb0] sm:$0xff]
    %v2435 = vld [vmem:[%s2411 + $0xb8] sm:$0xff]
    %v2436 = vld [vmem:[%s2411 + $0xc0] sm:$0xff]
    %v2437 = vld [vmem:[%s2411 + $0xc8] sm:$0xff]
    %v2438 = vld [vmem:[%s2411 + $0xd0] sm:$0xff]
    %v2439 = vld [vmem:[%s2411 + $0xd8] sm:$0xff]
    %v2440 = vld [vmem:[%s2411 + $0xe0] sm:$0xff]
    %v2441 = vld [vmem:[%s2411 + $0xe8] sm:$0xff]
    %v2442 = vld [vmem:[%s2411 + $0xf0] sm:$0xff]
    %v2443 = vld [vmem:[%s2411 + $0xf8] sm:$0xff]
    %v2444 = vld [vmem:[%s2411 + $0x100] sm:$0xff]
    %v2445 = vld [vmem:[%s2411 + $0x108] sm:$0xff]
    %v2446 = vld [vmem:[%s2411 + $0x110] sm:$0xff]
    %v2447 = vld [vmem:[%s2411 + $0x118] sm:$0xff]
    %v2448 = vld [vmem:[%s2411 + $0x120] sm:$0xff]
    %v2449 = vld [vmem:[%s2411 + $0x128] sm:$0xff]
    %v2450 = vld [vmem:[%s2411 + $0x130] sm:$0xff]
    %v2451 = vld [vmem:[%s2411 + $0x138] sm:$0xff]
    %v2452 = vld [vmem:[%s2411 + $0x140] sm:$0xff]
    %v2453 = vld [vmem:[%s2411 + $0x148] sm:$0xff]
    %v2454 = vld [vmem:[%s2411 + $0x150] sm:$0xff]
    %v2455 = vld [vmem:[%s2411 + $0x158] sm:$0xff]
    %v2456 = vld [vmem:[%s2411 + $0x160] sm:$0xff]
    %v2457 = vld [vmem:[%s2411 + $0x168] sm:$0xff]
    %v2458 = vld [vmem:[%s2411 + $0x170] sm:$0xff]
    %v2459 = vld [vmem:[%s2411 + $0x178] sm:$0xff]
    %vm2464 = vcmask 1045504
    %v2465 = vrot.slane %v2407, 2
    %v2466 = vrot.slane %v256, 2
    %v2467 = vsel %vm2464, %v2465, %v2466
    %v2468 = vrot.slane %v2408, 2
    %v2469 = vrot.slane %v257, 2
    %v2470 = vsel %vm2464, %v2468, %v2469
    %v2471 = vrot.slane %v258, 2
    %v2472 = vsel %vm2464, %v2466, %v2471
    %v2473 = vrot.slane %v259, 2
    %v2474 = vsel %vm2464, %v2469, %v2473
    %v2475 = vrot.slane %v260, 2
    %v2476 = vsel %vm2464, %v2471, %v2475
    %v2477 = vrot.slane %v261, 2
    %v2478 = vsel %vm2464, %v2473, %v2477
    %v2479 = vrot.slane %v2409, 2
    %v2480 = vsel %vm2464, %v2475, %v2479
    %v2481 = vrot.slane %v2410, 2
    %v2482 = vsel %vm2464, %v2477, %v2481
    %v2536 = vunpack.c.l.b16 %v2412
    %v2537 = vunpack.c.h.b16 %v2412
    %v2538 = vunpack.c.l.b16 %v2413
    %v2539 = vunpack.c.h.b16 %v2413
    %v2540 = vunpack.c.l.b16 %v2414
    %v2541 = vunpack.c.h.b16 %v2414
    %v2542 = vunpack.c.l.b16 %v2415
    %v2543 = vunpack.c.h.b16 %v2415
    %v2544 = vunpack.c.l.b16 %v2416
    %v2545 = vunpack.c.h.b16 %v2416
    %v2546 = vunpack.c.l.b16 %v2417
    %v2547 = vunpack.c.h.b16 %v2417
    %v2548 = vunpack.c.l.b16 %v2418
    %v2549 = vunpack.c.h.b16 %v2418
    %v2550 = vunpack.c.l.b16 %v2419
    %v2551 = vunpack.c.h.b16 %v2419
    %v2552 = vunpack.c.l.b16 %v2420
    %v2553 = vunpack.c.h.b16 %v2420
    %v2554 = vunpack.c.l.b16 %v2421
    %v2555 = vunpack.c.h.b16 %v2421
    %v2556 = vunpack.c.l.b16 %v2422
    %v2557 = vunpack.c.h.b16 %v2422
    %v2558 = vunpack.c.l.b16 %v2423
    %v2559 = vunpack.c.h.b16 %v2423
    %v2560 = vunpack.c.l.b16 %v2424
    %v2561 = vunpack.c.h.b16 %v2424
    %v2562 = vunpack.c.l.b16 %v2425
    %v2563 = vunpack.c.h.b16 %v2425
    %v2564 = vunpack.c.l.b16 %v2426
    %v2565 = vunpack.c.h.b16 %v2426
    %v2566 = vunpack.c.l.b16 %v2427
    %v2567 = vunpack.c.h.b16 %v2427
    %v2568 = vunpack.c.l.b16 %v2428
    %v2569 = vunpack.c.h.b16 %v2428
    %v2570 = vunpack.c.l.b16 %v2429
    %v2571 = vunpack.c.h.b16 %v2429
    %v2572 = vunpack.c.l.b16 %v2430
    %v2573 = vunpack.c.h.b16 %v2430
    %v2574 = vunpack.c.l.b16 %v2431
    %v2575 = vunpack.c.h.b16 %v2431
    %v2576 = vunpack.c.l.b16 %v2432
    %v2577 = vunpack.c.h.b16 %v2432
    %v2578 = vunpack.c.l.b16 %v2433
    %v2579 = vunpack.c.h.b16 %v2433
    %v2580 = vunpack.c.l.b16 %v2434
    %v2581 = vunpack.c.h.b16 %v2434
    %v2582 = vunpack.c.l.b16 %v2435
    %v2583 = vunpack.c.h.b16 %v2435
    %v2584 = vunpack.c.l.b16 %v2436
    %v2585 = vunpack.c.h.b16 %v2436
    %v2586 = vunpack.c.l.b16 %v2437
    %v2587 = vunpack.c.h.b16 %v2437
    %v2588 = vunpack.c.l.b16 %v2438
    %v2589 = vunpack.c.h.b16 %v2438
    %v2590 = vunpack.c.l.b16 %v2439
    %v2591 = vunpack.c.h.b16 %v2439
    %v2592 = vunpack.c.l.b16 %v2440
    %v2593 = vunpack.c.h.b16 %v2440
    %v2594 = vunpack.c.l.b16 %v2441
    %v2595 = vunpack.c.h.b16 %v2441
    %v2596 = vunpack.c.l.b16 %v2442
    %v2597 = vunpack.c.h.b16 %v2442
    %v2598 = vunpack.c.l.b16 %v2443
    %v2599 = vunpack.c.h.b16 %v2443
    %v2600 = vunpack.c.l.b16 %v2444
    %v2601 = vunpack.c.h.b16 %v2444
    %v2602 = vunpack.c.l.b16 %v2445
    %v2603 = vunpack.c.h.b16 %v2445
    %v2604 = vunpack.c.l.b16 %v2446
    %v2605 = vunpack.c.h.b16 %v2446
    %v2606 = vunpack.c.l.b16 %v2447
    %v2607 = vunpack.c.h.b16 %v2447
    %v2608 = vunpack.c.l.b16 %v2448
    %v2609 = vunpack.c.h.b16 %v2448
    %v2610 = vunpack.c.l.b16 %v2449
    %v2611 = vunpack.c.h.b16 %v2449
    %v2612 = vunpack.c.l.b16 %v2450
    %v2613 = vunpack.c.h.b16 %v2450
    %v2614 = vunpack.c.l.b16 %v2451
    %v2615 = vunpack.c.h.b16 %v2451
    %v2616 = vunpack.c.l.b16 %v2452
    %v2617 = vunpack.c.h.b16 %v2452
    %v2618 = vunpack.c.l.b16 %v2453
    %v2619 = vunpack.c.h.b16 %v2453
    %v2620 = vunpack.c.l.b16 %v2454
    %v2621 = vunpack.c.h.b16 %v2454
    %v2622 = vunpack.c.l.b16 %v2455
    %v2623 = vunpack.c.h.b16 %v2455
    %v2624 = vunpack.c.l.b16 %v2456
    %v2625 = vunpack.c.h.b16 %v2456
    %v2626 = vunpack.c.l.b16 %v2457
    %v2627 = vunpack.c.h.b16 %v2457
    %v2628 = vunpack.c.l.b16 %v2458
    %v2629 = vunpack.c.h.b16 %v2458
    %v2630 = vunpack.c.l.b16 %v2459
    %v2631 = vunpack.c.h.b16 %v2459
    %v2632 = vpack.c.b16 %v2540, %v2536
    %v2633 = vpack.c.b16 %v2541, %v2537
    %v2634 = vpack.c.b16 %v2542, %v2538
    %v2635 = vpack.c.b16 %v2543, %v2539
    %v2636 = vpack.c.b16 %v2548, %v2544
    %v2637 = vpack.c.b16 %v2549, %v2545
    %v2638 = vpack.c.b16 %v2550, %v2546
    %v2639 = vpack.c.b16 %v2551, %v2547
    %v2640 = vpack.c.b16 %v2556, %v2552
    %v2641 = vpack.c.b16 %v2557, %v2553
    %v2642 = vpack.c.b16 %v2558, %v2554
    %v2643 = vpack.c.b16 %v2559, %v2555
    %v2644 = vpack.c.b16 %v2564, %v2560
    %v2645 = vpack.c.b16 %v2565, %v2561
    %v2646 = vpack.c.b16 %v2566, %v2562
    %v2647 = vpack.c.b16 %v2567, %v2563
    %v2648 = vpack.c.b16 %v2572, %v2568
    %v2649 = vpack.c.b16 %v2573, %v2569
    %v2650 = vpack.c.b16 %v2574, %v2570
    %v2651 = vpack.c.b16 %v2575, %v2571
    %v2652 = vpack.c.b16 %v2580, %v2576
    %v2653 = vpack.c.b16 %v2581, %v2577
    %v2654 = vpack.c.b16 %v2582, %v2578
    %v2655 = vpack.c.b16 %v2583, %v2579
    %v2656 = vpack.c.b16 %v2588, %v2584
    %v2657 = vpack.c.b16 %v2589, %v2585
    %v2658 = vpack.c.b16 %v2590, %v2586
    %v2659 = vpack.c.b16 %v2591, %v2587
    %v2660 = vpack.c.b16 %v2596, %v2592
    %v2661 = vpack.c.b16 %v2597, %v2593
    %v2662 = vpack.c.b16 %v2598, %v2594
    %v2663 = vpack.c.b16 %v2599, %v2595
    %v2664 = vpack.c.b16 %v2604, %v2600
    %v2665 = vpack.c.b16 %v2605, %v2601
    %v2666 = vpack.c.b16 %v2606, %v2602
    %v2667 = vpack.c.b16 %v2607, %v2603
    %v2668 = vpack.c.b16 %v2612, %v2608
    %v2669 = vpack.c.b16 %v2613, %v2609
    %v2670 = vpack.c.b16 %v2614, %v2610
    %v2671 = vpack.c.b16 %v2615, %v2611
    %v2672 = vpack.c.b16 %v2620, %v2616
    %v2673 = vpack.c.b16 %v2621, %v2617
    %v2674 = vpack.c.b16 %v2622, %v2618
    %v2675 = vpack.c.b16 %v2623, %v2619
    %v2676 = vpack.c.b16 %v2628, %v2624
    %v2677 = vpack.c.b16 %v2629, %v2625
    %v2678 = vpack.c.b16 %v2630, %v2626
    %v2679 = vpack.c.b16 %v2631, %v2627
    %v2729 = vsel %vm693, %v2470, 0
    %v2732 = vsel %vm693, %v2474, 0
    %v2735 = vsel %vm693, %v2478, 0
    %v2738 = vsel %vm693, %v2482, 0
    %v2741 = vsel %vm693, %v2481, 0
    %2743 = vmatprep.subr.bf16.mxu0 %v2661
    %2744 = vmatpush1.bf16.msra.mxu0 %v2660
    %2745 = vmatprep.subr.bf16.mxu0 %v2657
    %2746 = vmatpush1.bf16.msra.mxu0 %v2656
    %2747 = vmatprep.subr.bf16.mxu0 %v2653
    %2748 = vmatpush1.bf16.msra.mxu0 %v2652
    %2749 = vmatprep.subr.bf16.mxu0 %v2649
    %2750 = vmatpush1.bf16.msra.mxu0 %v2648
    %2751 = vmatprep.subr.bf16.mxu0 %v2645
    %2752 = vmatpush1.bf16.msra.mxu0 %v2644
    %2753 = vmatprep.subr.bf16.mxu0 %v2641
    %2754 = vmatpush1.bf16.msra.mxu0 %v2640
    %2755 = vmatprep.subr.bf16.mxu0 %v2637
    %2756 = vmatpush1.bf16.msra.mxu0 %v2636
    %2757 = vmatprep.subr.bf16.mxu0 %v2633
    %2758 = vmatpush1.bf16.msra.mxu0 %v2632
    %2759 = vmatprep.subr.bf16.mxu0 0
    %2760 = vmatpush2.bf16.msra.mxu0 0
    %2761 = vmatprep.subr.bf16.mxu0 0
    %2762 = vmatpush2.bf16.msra.mxu0 0
    %2763 = vmatprep.subr.bf16.mxu0 0
    %2764 = vmatpush2.bf16.msra.mxu0 0
    %2765 = vmatprep.subr.bf16.mxu0 0
    %2766 = vmatpush2.bf16.msra.mxu0 0
    %2767 = vmatprep.subr.bf16.mxu0 %v2677
    %2768 = vmatpush2.bf16.msra.mxu0 %v2676
    %2769 = vmatprep.subr.bf16.mxu0 %v2673
    %2770 = vmatpush2.bf16.msra.mxu0 %v2672
    %2771 = vmatprep.subr.bf16.mxu0 %v2669
    %2772 = vmatpush2.bf16.msra.mxu0 %v2668
    %2773 = vmatprep.subr.bf16.mxu0 %v2665
    %2774 = vmatpush2.bf16.msra.mxu0 %v2664
    %2775 = vmatprep.mubr.bf16.mxu0 %v2729
    %2776 = vmatmul.mubr.bf16.gmra.mxu0 %v2467
    %v2777 = vpop.f32.mrf.mxu0
    %v2778 = vadd.f32 0.0, %v2777
    %v2779 = vpop.f32.mrf.mxu0
    %v2780 = vadd.f32 0.0, %v2779
    %v2781 = vpop.f32.mrf.mxu0
    %v2782 = vadd.f32 0.0, %v2781
    %v2783 = vpop.f32.mrf.mxu0
    %v2784 = vadd.f32 0.0, %v2783
    %2785 = vmatprep.mubr.bf16.mxu0 %v2732
    %2786 = vmatmul.mubr.bf16.gmra.mxu0 %v2472
    %v2787 = vpop.f32.mrf.mxu0
    %v2788 = vadd.f32 0.0, %v2787
    %v2789 = vpop.f32.mrf.mxu0
    %v2790 = vadd.f32 0.0, %v2789
    %v2791 = vpop.f32.mrf.mxu0
    %v2792 = vadd.f32 0.0, %v2791
    %v2793 = vpop.f32.mrf.mxu0
    %v2794 = vadd.f32 0.0, %v2793
    %2795 = vmatprep.mubr.bf16.mxu0 %v2735
    %2796 = vmatmul.mubr.bf16.gmra.mxu0 %v2476
    %v2797 = vpop.f32.mrf.mxu0
    %v2798 = vadd.f32 0.0, %v2797
    %v2799 = vpop.f32.mrf.mxu0
    %v2800 = vadd.f32 0.0, %v2799
    %v2801 = vpop.f32.mrf.mxu0
    %v2802 = vadd.f32 0.0, %v2801
    %v2803 = vpop.f32.mrf.mxu0
    %v2804 = vadd.f32 0.0, %v2803
    %2805 = vmatprep.mubr.bf16.mxu0 %v2738
    %2806 = vmatmul.mubr.bf16.gmra.mxu0 %v2480
    %v2807 = vpop.f32.mrf.mxu0
    %v2808 = vadd.f32 0.0, %v2807
    %v2809 = vpop.f32.mrf.mxu0
    %v2810 = vadd.f32 0.0, %v2809
    %v2811 = vpop.f32.mrf.mxu0
    %v2812 = vadd.f32 0.0, %v2811
    %v2813 = vpop.f32.mrf.mxu0
    %v2814 = vadd.f32 0.0, %v2813
    %2815 = vmatprep.mubr.bf16.mxu0 %v2741
    %2816 = vmatmul.mubr.bf16.gmra.mxu0 %v2479
    %v2817 = vpop.f32.mrf.mxu0
    %v2818 = vadd.f32 0.0, %v2817
    %v2819 = vpop.f32.mrf.mxu0
    %v2820 = vadd.f32 0.0, %v2819
    %v2821 = vpop.f32.mrf.mxu0
    %v2822 = vpop.f32.mrf.mxu0
    %2823 = vdwg.mxu0
    %2824 = vmatprep.subr.bf16.mxu0 %v2663
    %2825 = vmatpush1.bf16.msra.mxu0 %v2662
    %2826 = vmatprep.subr.bf16.mxu0 %v2659
    %2827 = vmatpush1.bf16.msra.mxu0 %v2658
    %2828 = vmatprep.subr.bf16.mxu0 %v2655
    %2829 = vmatpush1.bf16.msra.mxu0 %v2654
    %2830 = vmatprep.subr.bf16.mxu0 %v2651
    %2831 = vmatpush1.bf16.msra.mxu0 %v2650
    %2832 = vmatprep.subr.bf16.mxu0 %v2647
    %2833 = vmatpush1.bf16.msra.mxu0 %v2646
    %2834 = vmatprep.subr.bf16.mxu0 %v2643
    %2835 = vmatpush1.bf16.msra.mxu0 %v2642
    %2836 = vmatprep.subr.bf16.mxu0 %v2639
    %2837 = vmatpush1.bf16.msra.mxu0 %v2638
    %2838 = vmatprep.subr.bf16.mxu0 %v2635
    %2839 = vmatpush1.bf16.msra.mxu0 %v2634
    %2840 = vmatprep.subr.bf16.mxu0 0
    %2841 = vmatpush2.bf16.msra.mxu0 0
    %2842 = vmatprep.subr.bf16.mxu0 0
    %2843 = vmatpush2.bf16.msra.mxu0 0
    %2844 = vmatprep.subr.bf16.mxu0 0
    %2845 = vmatpush2.bf16.msra.mxu0 0
    %2846 = vmatprep.subr.bf16.mxu0 0
    %2847 = vmatpush2.bf16.msra.mxu0 0
    %2848 = vmatprep.subr.bf16.mxu0 %v2679
    %2849 = vmatpush2.bf16.msra.mxu0 %v2678
    %2850 = vmatprep.subr.bf16.mxu0 %v2675
    %2851 = vmatpush2.bf16.msra.mxu0 %v2674
    %2852 = vmatprep.subr.bf16.mxu0 %v2671
    %2853 = vmatpush2.bf16.msra.mxu0 %v2670
    %2854 = vmatprep.subr.bf16.mxu0 %v2667
    %2855 = vmatpush2.bf16.msra.mxu0 %v2666
    %2856 = vmatprep.mubr.bf16.mxu0 %v2729
    %2857 = vmatmul.mubr.bf16.gmra.mxu0 %v2467
    %v2858 = vpop.f32.mrf.mxu0
    %v2859 = vadd.f32 0.0, %v2858
    %v2860 = vpop.f32.mrf.mxu0
    %v2861 = vadd.f32 0.0, %v2860
    %v2862 = vpop.f32.mrf.mxu0
    %v2863 = vadd.f32 0.0, %v2862
    %v2864 = vpop.f32.mrf.mxu0
    %v2865 = vadd.f32 0.0, %v2864
    %2866 = vmatprep.mubr.bf16.mxu0 %v2732
    %2867 = vmatmul.mubr.bf16.gmra.mxu0 %v2472
    %v2868 = vpop.f32.mrf.mxu0
    %v2869 = vadd.f32 0.0, %v2868
    %v2870 = vpop.f32.mrf.mxu0
    %v2871 = vadd.f32 0.0, %v2870
    %v2872 = vpop.f32.mrf.mxu0
    %v2873 = vadd.f32 0.0, %v2872
    %v2874 = vpop.f32.mrf.mxu0
    %v2875 = vadd.f32 0.0, %v2874
    %2876 = vmatprep.mubr.bf16.mxu0 %v2735
    %2877 = vmatmul.mubr.bf16.gmra.mxu0 %v2476
    %v2878 = vpop.f32.mrf.mxu0
    %v2879 = vadd.f32 0.0, %v2878
    %v2880 = vpop.f32.mrf.mxu0
    %v2881 = vadd.f32 0.0, %v2880
    %v2882 = vpop.f32.mrf.mxu0
    %v2883 = vadd.f32 0.0, %v2882
    %v2884 = vpop.f32.mrf.mxu0
    %v2885 = vadd.f32 0.0, %v2884
    %2886 = vmatprep.mubr.bf16.mxu0 %v2738
    %2887 = vmatmul.mubr.bf16.gmra.mxu0 %v2480
    %v2888 = vpop.f32.mrf.mxu0
    %v2889 = vadd.f32 0.0, %v2888
    %v2890 = vpop.f32.mrf.mxu0
    %v2891 = vadd.f32 0.0, %v2890
    %v2892 = vpop.f32.mrf.mxu0
    %v2893 = vadd.f32 0.0, %v2892
    %v2894 = vpop.f32.mrf.mxu0
    %v2895 = vadd.f32 0.0, %v2894
    %2896 = vmatprep.mubr.bf16.mxu0 %v2741
    %2897 = vmatmul.mubr.bf16.gmra.mxu0 %v2479
    %v2898 = vpop.f32.mrf.mxu0
    %v2899 = vadd.f32 0.0, %v2898
    %v2900 = vpop.f32.mrf.mxu0
    %v2901 = vadd.f32 0.0, %v2900
    %v2902 = vpop.f32.mrf.mxu0
    %v2903 = vpop.f32.mrf.mxu0
    %2904 = vdwg.mxu0
    %v2905 = vadd.f32 %v2367, %v2778
    %v2906 = vadd.f32 %v2368, %v2780
    %v2907 = vadd.f32 %v2369, %v2859
    %v2908 = vadd.f32 %v2370, %v2861
    %v2909 = vadd.f32 %v2371, %v2782
    %v2910 = vadd.f32 %v2372, %v2784
    %v2911 = vadd.f32 %v2373, %v2863
    %v2912 = vadd.f32 %v2374, %v2865
    %v2913 = vadd.f32 %v2375, %v2788
    %v2914 = vadd.f32 %v2376, %v2790
    %v2915 = vadd.f32 %v2377, %v2869
    %v2916 = vadd.f32 %v2378, %v2871
    %v2917 = vadd.f32 %v2379, %v2792
    %v2918 = vadd.f32 %v2380, %v2794
    %v2919 = vadd.f32 %v2381, %v2873
    %v2920 = vadd.f32 %v2382, %v2875
    %v2921 = vadd.f32 %v2383, %v2798
    %v2922 = vadd.f32 %v2384, %v2800
    %v2923 = vadd.f32 %v2385, %v2879
    %v2924 = vadd.f32 %v2386, %v2881
    %v2925 = vadd.f32 %v2387, %v2802
    %v2926 = vadd.f32 %v2388, %v2804
    %v2927 = vadd.f32 %v2389, %v2883
    %v2928 = vadd.f32 %v2390, %v2885
    %v2929 = vadd.f32 %v2391, %v2808
    %v2930 = vadd.f32 %v2392, %v2810
    %v2931 = vadd.f32 %v2393, %v2889
    %v2932 = vadd.f32 %v2394, %v2891
    %v2933 = vadd.f32 %v2395, %v2812
    %v2934 = vadd.f32 %v2396, %v2814
    %v2935 = vadd.f32 %v2397, %v2893
    %v2936 = vadd.f32 %v2398, %v2895
    %v2937 = vadd.f32 %v2399, %v2818
    %v2938 = vadd.f32 %v2400, %v2820
    %v2939 = vadd.f32 %v2401, %v2899
    %v2940 = vadd.f32 %v2402, %v2901
    %v2941 = vld [vmem:[%s5] sm:$0xf]
    %v2943 = vlaneseq
    %v2944 = vshrl.u32 %v2943, 7
    %v2945 = vsub.s32 0, %v2944
    %v2946 = vrot.slane %v2941, %v2945
    %v2947 = vlaneseq
    %v2948 = vshrl.u32 %v2947, 7
    %v2949 = vsub.s32 1, %v2948
    %v2950 = vrot.slane %v2941, %v2949
    %v2951 = vlaneseq
    %v2952 = vshrl.u32 %v2951, 7
    %v2953 = vsub.s32 2, %v2952
    %v2954 = vrot.slane %v2941, %v2953
    %v2955 = vlaneseq
    %v2956 = vshrl.u32 %v2955, 7
    %v2957 = vsub.s32 3, %v2956
    %v2958 = vrot.slane %v2941, %v2957
    %v2963 = vadd.f32 %v2905, %v2946
    %v2964 = vadd.f32 %v2906, %v2950
    %v2965 = vadd.f32 %v2907, %v2954
    %v2966 = vadd.f32 %v2908, %v2958
    %v2967 = vadd.f32 %v2909, %v2946
    %v2968 = vadd.f32 %v2910, %v2950
    %v2969 = vadd.f32 %v2911, %v2954
    %v2970 = vadd.f32 %v2912, %v2958
    %v2971 = vadd.f32 %v2913, %v2946
    %v2972 = vadd.f32 %v2914, %v2950
    %v2973 = vadd.f32 %v2915, %v2954
    %v2974 = vadd.f32 %v2916, %v2958
    %v2975 = vadd.f32 %v2917, %v2946
    %v2976 = vadd.f32 %v2918, %v2950
    %v2977 = vadd.f32 %v2919, %v2954
    %v2978 = vadd.f32 %v2920, %v2958
    %v2979 = vadd.f32 %v2921, %v2946
    %v2980 = vadd.f32 %v2922, %v2950
    %v2981 = vadd.f32 %v2923, %v2954
    %v2982 = vadd.f32 %v2924, %v2958
    %v2983 = vadd.f32 %v2925, %v2946
    %v2984 = vadd.f32 %v2926, %v2950
    %v2985 = vadd.f32 %v2927, %v2954
    %v2986 = vadd.f32 %v2928, %v2958
    %v2987 = vadd.f32 %v2929, %v2946
    %v2988 = vadd.f32 %v2930, %v2950
    %v2989 = vadd.f32 %v2931, %v2954
    %v2990 = vadd.f32 %v2932, %v2958
    %v2991 = vadd.f32 %v2933, %v2946
    %v2992 = vadd.f32 %v2934, %v2950
    %v2993 = vadd.f32 %v2935, %v2954
    %v2994 = vadd.f32 %v2936, %v2958
    %v2995 = vadd.f32 %v2937, %v2946
    %v2996 = vadd.f32 %v2938, %v2950
    %v2997 = vadd.f32 %v2939, %v2954
    %v2998 = vadd.f32 %v2940, %v2958
    %v2999 = vmul.f32 %v2963, 0.2
    %v3000 = vmul.f32 %v2964, 0.2
    %v3001 = vmul.f32 %v2965, 0.2
    %v3002 = vmul.f32 %v2966, 0.2
    %v3003 = vmul.f32 %v2967, 0.2
    %v3004 = vmul.f32 %v2968, 0.2
    %v3005 = vmul.f32 %v2969, 0.2
    %v3006 = vmul.f32 %v2970, 0.2
    %v3007 = vmul.f32 %v2971, 0.2
    %v3008 = vmul.f32 %v2972, 0.2
    %v3009 = vmul.f32 %v2973, 0.2
    %v3010 = vmul.f32 %v2974, 0.2
    %v3011 = vmul.f32 %v2975, 0.2
    %v3012 = vmul.f32 %v2976, 0.2
    %v3013 = vmul.f32 %v2977, 0.2
    %v3014 = vmul.f32 %v2978, 0.2
    %v3015 = vmul.f32 %v2979, 0.2
    %v3016 = vmul.f32 %v2980, 0.2
    %v3017 = vmul.f32 %v2981, 0.2
    %v3018 = vmul.f32 %v2982, 0.2
    %v3019 = vmul.f32 %v2983, 0.2
    %v3020 = vmul.f32 %v2984, 0.2
    %v3021 = vmul.f32 %v2985, 0.2
    %v3022 = vmul.f32 %v2986, 0.2
    %v3023 = vmul.f32 %v2987, 0.2
    %v3024 = vmul.f32 %v2988, 0.2
    %v3025 = vmul.f32 %v2989, 0.2
    %v3026 = vmul.f32 %v2990, 0.2
    %v3027 = vmul.f32 %v2991, 0.2
    %v3028 = vmul.f32 %v2992, 0.2
    %v3029 = vmul.f32 %v2993, 0.2
    %v3030 = vmul.f32 %v2994, 0.2
    %v3031 = vmul.f32 %v2995, 0.2
    %v3032 = vmul.f32 %v2996, 0.2
    %v3033 = vmul.f32 %v2997, 0.2
    %v3034 = vmul.f32 %v2998, 0.2
    %v3035 = vmax.f32 %v2963, %v2999
    %v3036 = vmax.f32 %v2964, %v3000
    %v3037 = vmax.f32 %v2965, %v3001
    %v3038 = vmax.f32 %v2966, %v3002
    %v3039 = vmax.f32 %v2967, %v3003
    %v3040 = vmax.f32 %v2968, %v3004
    %v3041 = vmax.f32 %v2969, %v3005
    %v3042 = vmax.f32 %v2970, %v3006
    %v3043 = vmax.f32 %v2971, %v3007
    %v3044 = vmax.f32 %v2972, %v3008
    %v3045 = vmax.f32 %v2973, %v3009
    %v3046 = vmax.f32 %v2974, %v3010
    %v3047 = vmax.f32 %v2975, %v3011
    %v3048 = vmax.f32 %v2976, %v3012
    %v3049 = vmax.f32 %v2977, %v3013
    %v3050 = vmax.f32 %v2978, %v3014
    %v3051 = vmax.f32 %v2979, %v3015
    %v3052 = vmax.f32 %v2980, %v3016
    %v3053 = vmax.f32 %v2981, %v3017
    %v3054 = vmax.f32 %v2982, %v3018
    %v3055 = vmax.f32 %v2983, %v3019
    %v3056 = vmax.f32 %v2984, %v3020
    %v3057 = vmax.f32 %v2985, %v3021
    %v3058 = vmax.f32 %v2986, %v3022
    %v3059 = vmax.f32 %v2987, %v3023
    %v3060 = vmax.f32 %v2988, %v3024
    %v3061 = vmax.f32 %v2989, %v3025
    %v3062 = vmax.f32 %v2990, %v3026
    %v3063 = vmax.f32 %v2991, %v3027
    %v3064 = vmax.f32 %v2992, %v3028
    %v3065 = vmax.f32 %v2993, %v3029
    %v3066 = vmax.f32 %v2994, %v3030
    %v3067 = vmax.f32 %v2995, %v3031
    %v3068 = vmax.f32 %v2996, %v3032
    %v3069 = vmax.f32 %v2997, %v3033
    %v3070 = vmax.f32 %v2998, %v3034
    %v3071 = vld [vmem:[%s7] sm:$0xff]
    %v3072 = vld [vmem:[%s7 + $0x8] sm:$0xff]
    %v3073 = vld [vmem:[%s7 + $0x10] sm:$0xf]
    %vm3074 = vcmask 556032
    %v3076 = vsel %vm3074, %v3071, 0
    %v3079 = vsel %vm3074, %v3072, 0
    %v3082 = vsel %vm3074, %v3073, 0
    %vm3084 = vcmask 1043456
    %v3086 = vsel %vm3084, %v3067, 0
    %v3089 = vsel %vm3084, %v3068, 0
    %v3092 = vsel %vm3084, %v3069, 0
    %v3095 = vsel %vm3084, %v3070, 0
    %3097 = vmatprep.subr.mxu0 0.0
    %3098 = vmatpush1.msra.mxu0 0.0
    %3099 = vmatprep.subr.mxu0 0.0
    %3100 = vmatpush1.msra.mxu0 0.0
    %3101 = vmatprep.subr.mxu0 0.0
    %3102 = vmatpush1.msra.mxu0 0.0
    %3103 = vmatprep.subr.mxu0 0.0
    %3104 = vmatpush1.msra.mxu0 0.0
    %3105 = vmatprep.subr.mxu0 0.0
    %3106 = vmatpush1.msra.mxu0 0.0
    %3107 = vmatprep.subr.mxu0 0.0
    %3108 = vmatpush1.msra.mxu0 0.0
    %3109 = vmatprep.subr.mxu0 0.0
    %3110 = vmatpush1.msra.mxu0 0.0
    %3111 = vmatprep.subr.mxu0 %v3089
    %3112 = vmatpush1.msra.mxu0 %v3086
    %3113 = vmatprep.subr.mxu0 %v3064
    %3114 = vmatpush1.msra.mxu0 %v3063
    %3115 = vmatprep.subr.mxu0 %v3060
    %3116 = vmatpush1.msra.mxu0 %v3059
    %3117 = vmatprep.subr.mxu0 %v3056
    %3118 = vmatpush1.msra.mxu0 %v3055
    %3119 = vmatprep.subr.mxu0 %v3052
    %3120 = vmatpush1.msra.mxu0 %v3051
    %3121 = vmatprep.subr.mxu0 %v3048
    %3122 = vmatpush1.msra.mxu0 %v3047
    %3123 = vmatprep.subr.mxu0 %v3044
    %3124 = vmatpush1.msra.mxu0 %v3043
    %3125 = vmatprep.subr.mxu0 %v3040
    %3126 = vmatpush1.msra.mxu0 %v3039
    %3127 = vmatprep.subr.mxu0 %v3036
    %3128 = vmatpush1.msra.mxu0 %v3035
    %3129 = vmatprep.subr.mxu0 0.0
    %3130 = vmatpush2.msra.mxu0 0.0
    %3131 = vmatprep.subr.mxu0 0.0
    %3132 = vmatpush2.msra.mxu0 0.0
    %3133 = vmatprep.subr.mxu0 0.0
    %3134 = vmatpush2.msra.mxu0 0.0
    %3135 = vmatprep.subr.mxu0 0.0
    %3136 = vmatpush2.msra.mxu0 0.0
    %3137 = vmatprep.subr.mxu0 0.0
    %3138 = vmatpush2.msra.mxu0 0.0
    %3139 = vmatprep.subr.mxu0 0.0
    %3140 = vmatpush2.msra.mxu0 0.0
    %3141 = vmatprep.subr.mxu0 0.0
    %3142 = vmatpush2.msra.mxu0 0.0
    %3143 = vmatprep.subr.mxu0 0.0
    %3144 = vmatpush2.msra.mxu0 0.0
    %3145 = vmatprep.subr.mxu0 0.0
    %3146 = vmatpush2.msra.mxu0 0.0
    %3147 = vmatprep.subr.mxu0 0.0
    %3148 = vmatpush2.msra.mxu0 0.0
    %3149 = vmatprep.subr.mxu0 0.0
    %3150 = vmatpush2.msra.mxu0 0.0
    %3151 = vmatprep.subr.mxu0 0.0
    %3152 = vmatpush2.msra.mxu0 0.0
    %3153 = vmatprep.subr.mxu0 0.0
    %3154 = vmatpush2.msra.mxu0 0.0
    %3155 = vmatprep.subr.mxu0 0.0
    %3156 = vmatpush2.msra.mxu0 0.0
    %3157 = vmatprep.subr.mxu0 0.0
    %3158 = vmatpush2.msra.mxu0 0.0
    %3159 = vmatprep.subr.mxu0 0.0
    %3160 = vmatpush2.msra.mxu0 0.0
    %3161 = vmatprep.mubr.f32.mxu0 0.0
    %3162 = vmatmul.mubr.f32.gmra.mxu0 %v3076
    %v3163 = vpop.f32.mrf.mxu0
    %v3164 = vadd.f32 0.0, %v3163
    %v3165 = vpop.f32.mrf.mxu0
    %v3166 = vadd.f32 0.0, %v3165
    %3167 = vmatprep.mubr.f32.mxu0 0.0
    %3168 = vmatmul.mubr.f32.gmra.mxu0 %v3079
    %v3169 = vpop.f32.mrf.mxu0
    %v3170 = vadd.f32 0.0, %v3169
    %v3171 = vpop.f32.mrf.mxu0
    %v3172 = vadd.f32 0.0, %v3171
    %3173 = vmatprep.mubr.f32.mxu0 0.0
    %3174 = vmatmul.mubr.f32.gmra.mxu0 %v3082
    %v3175 = vpop.f32.mrf.mxu0
    %v3176 = vadd.f32 0.0, %v3175
    %v3177 = vpop.f32.mrf.mxu0
    %v3178 = vadd.f32 0.0, %v3177
    %3179 = vdwg.mxu0
    %3180 = vmatprep.subr.mxu0 0.0
    %3181 = vmatpush1.msra.mxu0 0.0
    %3182 = vmatprep.subr.mxu0 0.0
    %3183 = vmatpush1.msra.mxu0 0.0
    %3184 = vmatprep.subr.mxu0 0.0
    %3185 = vmatpush1.msra.mxu0 0.0
    %3186 = vmatprep.subr.mxu0 0.0
    %3187 = vmatpush1.msra.mxu0 0.0
    %3188 = vmatprep.subr.mxu0 0.0
    %3189 = vmatpush1.msra.mxu0 0.0
    %3190 = vmatprep.subr.mxu0 0.0
    %3191 = vmatpush1.msra.mxu0 0.0
    %3192 = vmatprep.subr.mxu0 0.0
    %3193 = vmatpush1.msra.mxu0 0.0
    %3194 = vmatprep.subr.mxu0 %v3095
    %3195 = vmatpush1.msra.mxu0 %v3092
    %3196 = vmatprep.subr.mxu0 %v3066
    %3197 = vmatpush1.msra.mxu0 %v3065
    %3198 = vmatprep.subr.mxu0 %v3062
    %3199 = vmatpush1.msra.mxu0 %v3061
    %3200 = vmatprep.subr.mxu0 %v3058
    %3201 = vmatpush1.msra.mxu0 %v3057
    %3202 = vmatprep.subr.mxu0 %v3054
    %3203 = vmatpush1.msra.mxu0 %v3053
    %3204 = vmatprep.subr.mxu0 %v3050
    %3205 = vmatpush1.msra.mxu0 %v3049
    %3206 = vmatprep.subr.mxu0 %v3046
    %3207 = vmatpush1.msra.mxu0 %v3045
    %3208 = vmatprep.subr.mxu0 %v3042
    %3209 = vmatpush1.msra.mxu0 %v3041
    %3210 = vmatprep.subr.mxu0 %v3038
    %3211 = vmatpush1.msra.mxu0 %v3037
    %3212 = vmatprep.subr.mxu0 0.0
    %3213 = vmatpush2.msra.mxu0 0.0
    %3214 = vmatprep.subr.mxu0 0.0
    %3215 = vmatpush2.msra.mxu0 0.0
    %3216 = vmatprep.subr.mxu0 0.0
    %3217 = vmatpush2.msra.mxu0 0.0
    %3218 = vmatprep.subr.mxu0 0.0
    %3219 = vmatpush2.msra.mxu0 0.0
    %3220 = vmatprep.subr.mxu0 0.0
    %3221 = vmatpush2.msra.mxu0 0.0
    %3222 = vmatprep.subr.mxu0 0.0
    %3223 = vmatpush2.msra.mxu0 0.0
    %3224 = vmatprep.subr.mxu0 0.0
    %3225 = vmatpush2.msra.mxu0 0.0
    %3226 = vmatprep.subr.mxu0 0.0
    %3227 = vmatpush2.msra.mxu0 0.0
    %3228 = vmatprep.subr.mxu0 0.0
    %3229 = vmatpush2.msra.mxu0 0.0
    %3230 = vmatprep.subr.mxu0 0.0
    %3231 = vmatpush2.msra.mxu0 0.0
    %3232 = vmatprep.subr.mxu0 0.0
    %3233 = vmatpush2.msra.mxu0 0.0
    %3234 = vmatprep.subr.mxu0 0.0
    %3235 = vmatpush2.msra.mxu0 0.0
    %3236 = vmatprep.subr.mxu0 0.0
    %3237 = vmatpush2.msra.mxu0 0.0
    %3238 = vmatprep.subr.mxu0 0.0
    %3239 = vmatpush2.msra.mxu0 0.0
    %3240 = vmatprep.subr.mxu0 0.0
    %3241 = vmatpush2.msra.mxu0 0.0
    %3242 = vmatprep.subr.mxu0 0.0
    %3243 = vmatpush2.msra.mxu0 0.0
    %3244 = vmatprep.mubr.f32.mxu0 0.0
    %3245 = vmatmul.mubr.f32.gmra.mxu0 %v3076
    %v3246 = vpop.f32.mrf.mxu0
    %v3247 = vadd.f32 0.0, %v3246
    %v3248 = vpop.f32.mrf.mxu0
    %v3249 = vadd.f32 0.0, %v3248
    %3250 = vmatprep.mubr.f32.mxu0 0.0
    %3251 = vmatmul.mubr.f32.gmra.mxu0 %v3079
    %v3252 = vpop.f32.mrf.mxu0
    %v3253 = vadd.f32 0.0, %v3252
    %v3254 = vpop.f32.mrf.mxu0
    %v3255 = vadd.f32 0.0, %v3254
    %3256 = vmatprep.mubr.f32.mxu0 0.0
    %3257 = vmatmul.mubr.f32.gmra.mxu0 %v3082
    %v3258 = vpop.f32.mrf.mxu0
    %v3259 = vadd.f32 0.0, %v3258
    %v3260 = vpop.f32.mrf.mxu0
    %v3261 = vadd.f32 0.0, %v3260
    %3262 = vdwg.mxu0
    %3263 = vst [vmem:[#allocation2] sm:$0xff] %v3164
    %3264 = vst [vmem:[#allocation2 + $0x8] sm:$0xff] %v3166
    %3265 = vst [vmem:[#allocation2 + $0x10] sm:$0xff] %v3247
    %3266 = vst [vmem:[#allocation2 + $0x18] sm:$0xff] %v3249
    %3267 = vst [vmem:[#allocation2 + $0x20] sm:$0xff] %v3170
    %3268 = vst [vmem:[#allocation2 + $0x28] sm:$0xff] %v3172
    %3269 = vst [vmem:[#allocation2 + $0x30] sm:$0xff] %v3253
    %3270 = vst [vmem:[#allocation2 + $0x38] sm:$0xff] %v3255
    %3271 = vst [vmem:[#allocation2 + $0x40] sm:$0xf] %v3176
    %3272 = vst [vmem:[#allocation2 + $0x48] sm:$0xf] %v3178
    %3273 = vst [vmem:[#allocation2 + $0x50] sm:$0xf] %v3259
    %3274 = vst [vmem:[#allocation2 + $0x58] sm:$0xf] %v3261
    %v3275 = vld [vmem:[#allocation2] sm:$0xff]
    %v3276 = vld [vmem:[#allocation2 + $0x8] sm:$0xff]
    %v3277 = vld [vmem:[#allocation2 + $0x10] sm:$0xff]
    %v3278 = vld [vmem:[#allocation2 + $0x18] sm:$0xff]
    %v3279 = vld [vmem:[#allocation2 + $0x20] sm:$0xff]
    %v3280 = vld [vmem:[#allocation2 + $0x28] sm:$0xff]
    %v3281 = vld [vmem:[#allocation2 + $0x30] sm:$0xff]
    %v3282 = vld [vmem:[#allocation2 + $0x38] sm:$0xff]
    %v3283 = vld [vmem:[#allocation2 + $0x40] sm:$0x3]
    %v3284 = vld [vmem:[#allocation2 + $0x48] sm:$0x3]
    %v3285 = vld [vmem:[#allocation2 + $0x50] sm:$0x3]
    %v3286 = vld [vmem:[#allocation2 + $0x58] sm:$0x3]
    %v3287 = vpack.c.bf16 %v3279, %v3275
    %v3288 = vpack.c.bf16 %v3280, %v3276
    %v3289 = vpack.c.bf16 %v3281, %v3277
    %v3290 = vpack.c.bf16 %v3282, %v3278
    %v3291 = vpack.c.bf16 %v3283, %v3283
    %v3292 = vpack.c.bf16 %v3284, %v3284
    %v3293 = vpack.c.bf16 %v3285, %v3285
    %v3294 = vpack.c.bf16 %v3286, %v3286
    %v3303 = vunpack.c.l.b16 %v3287
    %v3304 = vunpack.c.l.b16 %v3288
    %v3305 = vunpack.c.l.b16 %v3289
    %v3306 = vunpack.c.l.b16 %v3290
    %v3307 = vunpack.c.h.b16 %v3287
    %v3308 = vunpack.c.h.b16 %v3288
    %v3309 = vunpack.c.h.b16 %v3289
    %v3310 = vunpack.c.h.b16 %v3290
    %v3311 = vunpack.c.l.b16 %v3291
    %v3312 = vunpack.c.l.b16 %v3292
    %v3313 = vunpack.c.l.b16 %v3293
    %v3314 = vunpack.c.l.b16 %v3294
    %v3315 = vpack.c.b16 %v3304, %v3303
    %v3316 = vpack.c.b16 %v3306, %v3305
    %v3317 = vpack.c.b16 %v3308, %v3307
    %v3318 = vpack.c.b16 %v3310, %v3309
    %v3319 = vpack.c.b16 %v3312, %v3311
    %v3320 = vpack.c.b16 %v3314, %v3313
    %3327 = vst [vmem:[#allocation3] sm:$0xff] %v3315
    %3328 = vst [vmem:[#allocation3 + $0x8] sm:$0xff] %v3316
    %3329 = vst [vmem:[#allocation3 + $0x30] sm:$0xff] %v3317
    %3330 = vst [vmem:[#allocation3 + $0x38] sm:$0xff] %v3318
    %3331 = vst [vmem:[#allocation3 + $0x60] sm:$0x11] %v3319
    %3332 = vst [vmem:[#allocation3 + $0x68] sm:$0x11] %v3320
    %v3333 = vld [vmem:[#allocation2] sm:$0xfe]
    %v3334 = vld [vmem:[#allocation2 + $0x8] sm:$0xfe]
    %v3335 = vld [vmem:[#allocation2 + $0x10] sm:$0xfe]
    %v3336 = vld [vmem:[#allocation2 + $0x18] sm:$0xfe]
    %v3337 = vld [vmem:[#allocation2 + $0x20] sm:$0xff]
    %v3338 = vld [vmem:[#allocation2 + $0x28] sm:$0xff]
    %v3339 = vld [vmem:[#allocation2 + $0x30] sm:$0xff]
    %v3340 = vld [vmem:[#allocation2 + $0x38] sm:$0xff]
    %v3341 = vld [vmem:[#allocation2 + $0x40] sm:$0x7]
    %v3342 = vld [vmem:[#allocation2 + $0x48] sm:$0x7]
    %v3343 = vld [vmem:[#allocation2 + $0x50] sm:$0x7]
    %v3344 = vld [vmem:[#allocation2 + $0x58] sm:$0x7]
    %v3345 = vpack.c.bf16 %v3337, %v3333
    %v3346 = vpack.c.bf16 %v3338, %v3334
    %v3347 = vpack.c.bf16 %v3339, %v3335
    %v3348 = vpack.c.bf16 %v3340, %v3336
    %v3349 = vpack.c.bf16 %v3341, %v3341
    %v3350 = vpack.c.bf16 %v3342, %v3342
    %v3351 = vpack.c.bf16 %v3343, %v3343
    %v3352 = vpack.c.bf16 %v3344, %v3344
    %v3361 = vunpack.c.l.b16 %v3345
    %v3362 = vunpack.c.l.b16 %v3346
    %v3363 = vunpack.c.l.b16 %v3347
    %v3364 = vunpack.c.l.b16 %v3348
    %v3365 = vunpack.c.h.b16 %v3345
    %v3366 = vunpack.c.h.b16 %v3346
    %v3367 = vunpack.c.h.b16 %v3347
    %v3368 = vunpack.c.h.b16 %v3348
    %v3369 = vunpack.c.l.b16 %v3349
    %v3370 = vunpack.c.l.b16 %v3350
    %v3371 = vunpack.c.l.b16 %v3351
    %v3372 = vunpack.c.l.b16 %v3352
    %v3373 = vpack.c.b16 %v3362, %v3361
    %v3374 = vpack.c.b16 %v3364, %v3363
    %v3375 = vpack.c.b16 %v3366, %v3365
    %v3376 = vpack.c.b16 %v3368, %v3367
    %v3377 = vpack.c.b16 %v3370, %v3369
    %v3378 = vpack.c.b16 %v3372, %v3371
    %vm3379 = vsmask.f32 3328
    %vm3380 = vsmask.f32 7440
    %vm3381 = vmor %vm3379, %vm3380
    %v3383 = vshrl.u32 %v3373, 16
    %v3385 = vrot.slane %v3383, 4
    %v3386 = vshll.u32 %v3373, 16
    %v3388 = vrot.slane %v3386, 5
    %v3389 = vor.u32 %v3385, %v3388
    %v3390 = vrot.slane %v3389, 4
    %v3392 = vshll.u32 %v3375, 16
    %v3394 = vrot.slane %v3392, 5
    %v3395 = vsel %vm3381, %v3390, %v3394
    %v3397 = vshrl.u32 %v3374, 16
    %v3399 = vrot.slane %v3397, 4
    %v3400 = vshll.u32 %v3374, 16
    %v3402 = vrot.slane %v3400, 5
    %v3403 = vor.u32 %v3399, %v3402
    %v3404 = vrot.slane %v3403, 4
    %v3406 = vshll.u32 %v3376, 16
    %v3408 = vrot.slane %v3406, 5
    %v3409 = vsel %vm3381, %v3404, %v3408
    %v3410 = vshrl.u32 %v3375, 16
    %v3412 = vrot.slane %v3410, 4
    %v3413 = vor.u32 %v3412, %v3394
    %v3414 = vrot.slane %v3413, 4
    %v3416 = vshll.u32 %v3377, 16
    %v3418 = vrot.slane %v3416, 5
    %v3419 = vsel %vm3381, %v3414, %v3418
    %v3420 = vshrl.u32 %v3376, 16
    %v3422 = vrot.slane %v3420, 4
    %v3423 = vor.u32 %v3422, %v3408
    %v3424 = vrot.slane %v3423, 4
    %v3426 = vshll.u32 %v3378, 16
    %v3428 = vrot.slane %v3426, 5
    %v3429 = vsel %vm3381, %v3424, %v3428
    %v3430 = vshrl.u32 %v3377, 16
    %v3432 = vrot.slane %v3430, 4
    %v3433 = vor.u32 %v3432, %v3418
    %v3434 = vrot.slane %v3433, 4
    %v3435 = vshrl.u32 %v3378, 16
    %v3437 = vrot.slane %v3435, 4
    %v3438 = vor.u32 %v3437, %v3428
    %v3439 = vrot.slane %v3438, 4
    %3446 = vst [vmem:[#allocation3 + $0x10] sm:$0xff] %v3395
    %3447 = vst [vmem:[#allocation3 + $0x18] sm:$0xff] %v3409
    %3448 = vst [vmem:[#allocation3 + $0x40] sm:$0xff] %v3419
    %3449 = vst [vmem:[#allocation3 + $0x48] sm:$0xff] %v3429
    %3450 = vst [vmem:[#allocation3 + $0x70] sm:$0x11] %v3434
    %3451 = vst [vmem:[#allocation3 + $0x78] sm:$0x11] %v3439
    %v3452 = vld [vmem:[#allocation2] sm:$0xfc]
    %v3453 = vld [vmem:[#allocation2 + $0x8] sm:$0xfc]
    %v3454 = vld [vmem:[#allocation2 + $0x10] sm:$0xfc]
    %v3455 = vld [vmem:[#allocation2 + $0x18] sm:$0xfc]
    %v3456 = vld [vmem:[#allocation2 + $0x20] sm:$0xff]
    %v3457 = vld [vmem:[#allocation2 + $0x28] sm:$0xff]
    %v3458 = vld [vmem:[#allocation2 + $0x30] sm:$0xff]
    %v3459 = vld [vmem:[#allocation2 + $0x38] sm:$0xff]
    %v3460 = vld [vmem:[#allocation2 + $0x40] sm:$0xf]
    %v3461 = vld [vmem:[#allocation2 + $0x48] sm:$0xf]
    %v3462 = vld [vmem:[#allocation2 + $0x50] sm:$0xf]
    %v3463 = vld [vmem:[#allocation2 + $0x58] sm:$0xf]
    %v3464 = vpack.c.bf16 %v3456, %v3452
    %v3465 = vpack.c.bf16 %v3457, %v3453
    %v3466 = vpack.c.bf16 %v3458, %v3454
    %v3467 = vpack.c.bf16 %v3459, %v3455
    %v3468 = vpack.c.bf16 %v3460, %v3460
    %v3469 = vpack.c.bf16 %v3461, %v3461
    %v3470 = vpack.c.bf16 %v3462, %v3462
    %v3471 = vpack.c.bf16 %v3463, %v3463
    %v3480 = vunpack.c.l.b16 %v3464
    %v3481 = vunpack.c.l.b16 %v3465
    %v3482 = vunpack.c.l.b16 %v3466
    %v3483 = vunpack.c.l.b16 %v3467
    %v3484 = vunpack.c.h.b16 %v3464
    %v3485 = vunpack.c.h.b16 %v3465
    %v3486 = vunpack.c.h.b16 %v3466
    %v3487 = vunpack.c.h.b16 %v3467
    %v3488 = vunpack.c.l.b16 %v3468
    %v3489 = vunpack.c.l.b16 %v3469
    %v3490 = vunpack.c.l.b16 %v3470
    %v3491 = vunpack.c.l.b16 %v3471
    %v3492 = vpack.c.b16 %v3481, %v3480
    %v3493 = vpack.c.b16 %v3483, %v3482
    %v3494 = vpack.c.b16 %v3485, %v3484
    %v3495 = vpack.c.b16 %v3487, %v3486
    %v3496 = vpack.c.b16 %v3489, %v3488
    %v3497 = vpack.c.b16 %v3491, %v3490
    %vm3498 = vcmask 1042432
    %vm3499 = vcmask 1046532
    %vm3500 = vmor %vm3498, %vm3499
    %v3501 = vrot.slane %v3492, 5
    %v3502 = vrot.slane %v3501, 4
    %v3503 = vrot.slane %v3494, 5
    %v3504 = vsel %vm3500, %v3502, %v3503
    %v3505 = vrot.slane %v3493, 5
    %v3506 = vrot.slane %v3505, 4
    %v3507 = vrot.slane %v3495, 5
    %v3508 = vsel %vm3500, %v3506, %v3507
    %v3509 = vrot.slane %v3503, 4
    %v3510 = vrot.slane %v3496, 5
    %v3511 = vsel %vm3500, %v3509, %v3510
    %v3512 = vrot.slane %v3507, 4
    %v3513 = vrot.slane %v3497, 5
    %v3514 = vsel %vm3500, %v3512, %v3513
    %v3515 = vrot.slane %v3510, 4
    %v3516 = vrot.slane %v3513, 4
    %3523 = vst [vmem:[#allocation3 + $0x20] sm:$0xff] %v3504
    %3524 = vst [vmem:[#allocation3 + $0x28] sm:$0xff] %v3508
    %3525 = vst [vmem:[#allocation3 + $0x50] sm:$0xff] %v3511
    %3526 = vst [vmem:[#allocation3 + $0x58] sm:$0xff] %v3514
    %3527 = vst [vmem:[#allocation3 + $0x80] sm:$0x11] %v3515
    %3528 = vst [vmem:[#allocation3 + $0x88] sm:$0x11] %v3516
    %v3529 = vld [vmem:[#allocation3] sm:$0xff]
    %v3530 = vld [vmem:[#allocation3 + $0x8] sm:$0xff]
    %v3531 = vld [vmem:[#allocation3 + $0x10] sm:$0xff]
    %v3532 = vld [vmem:[#allocation3 + $0x18] sm:$0xff]
    %v3533 = vld [vmem:[#allocation3 + $0x20] sm:$0xff]
    %v3534 = vld [vmem:[#allocation3 + $0x28] sm:$0xff]
    %v3535 = vld [vmem:[#allocation3 + $0x30] sm:$0xff]
    %v3536 = vld [vmem:[#allocation3 + $0x38] sm:$0xff]
    %v3537 = vld [vmem:[#allocation3 + $0x40] sm:$0xff]
    %v3538 = vld [vmem:[#allocation3 + $0x48] sm:$0xff]
    %v3539 = vld [vmem:[#allocation3 + $0x50] sm:$0xff]
    %v3540 = vld [vmem:[#allocation3 + $0x58] sm:$0xff]
    %v3541 = vld [vmem:[#allocation3 + $0x60] sm:$0x11]
    %v3542 = vld [vmem:[#allocation3 + $0x68] sm:$0x11]
    %v3543 = vld [vmem:[#allocation3 + $0x70] sm:$0x11]
    %v3544 = vld [vmem:[#allocation3 + $0x78] sm:$0x11]
    %v3545 = vld [vmem:[#allocation3 + $0x80] sm:$0x11]
    %v3546 = vld [vmem:[#allocation3 + $0x88] sm:$0x11]
    %v3547 = vld [vmem:[#allocation18] sm:$0xff]
    %v3548 = vld [vmem:[#allocation18 + $0x8] sm:$0xff]
    %v3549 = vld [vmem:[#allocation18 + $0x10] sm:$0xff]
    %v3550 = vld [vmem:[#allocation18 + $0x18] sm:$0xff]
    %v3551 = vld [vmem:[#allocation18 + $0x20] sm:$0xff]
    %v3552 = vld [vmem:[#allocation18 + $0x28] sm:$0xff]
    %v3553 = vld [vmem:[#allocation18 + $0x30] sm:$0xff]
    %v3554 = vld [vmem:[#allocation18 + $0x38] sm:$0xff]
    %v3555 = vld [vmem:[#allocation18 + $0x40] sm:$0xff]
    %v3556 = vld [vmem:[#allocation18 + $0x48] sm:$0xff]
    %v3557 = vld [vmem:[#allocation18 + $0x50] sm:$0xff]
    %v3558 = vld [vmem:[#allocation18 + $0x58] sm:$0xff]
    %v3559 = vld [vmem:[#allocation18 + $0x60] sm:$0xff]
    %v3560 = vld [vmem:[#allocation18 + $0x68] sm:$0xff]
    %v3561 = vld [vmem:[#allocation18 + $0x70] sm:$0xff]
    %v3562 = vld [vmem:[#allocation18 + $0x78] sm:$0xff]
    %v3563 = vld [vmem:[#allocation18 + $0x80] sm:$0xff]
    %v3564 = vld [vmem:[#allocation18 + $0x88] sm:$0xff]
    %v3565 = vld [vmem:[#allocation18 + $0x90] sm:$0xff]
    %v3566 = vld [vmem:[#allocation18 + $0x98] sm:$0xff]
    %v3567 = vld [vmem:[#allocation18 + $0xa0] sm:$0xff]
    %v3568 = vld [vmem:[#allocation18 + $0xa8] sm:$0xff]
    %v3569 = vld [vmem:[#allocation18 + $0xb0] sm:$0xff]
    %v3570 = vld [vmem:[#allocation18 + $0xb8] sm:$0xff]
    %v3571 = vld [vmem:[#allocation18 + $0xc0] sm:$0xff]
    %v3572 = vld [vmem:[#allocation18 + $0xc8] sm:$0xff]
    %v3573 = vld [vmem:[#allocation18 + $0xd0] sm:$0xff]
    %v3574 = vld [vmem:[#allocation18 + $0xd8] sm:$0xff]
    %v3575 = vld [vmem:[#allocation18 + $0xe0] sm:$0xff]
    %v3576 = vld [vmem:[#allocation18 + $0xe8] sm:$0xff]
    %v3577 = vld [vmem:[#allocation18 + $0xf0] sm:$0xff]
    %v3578 = vld [vmem:[#allocation18 + $0xf8] sm:$0xff]
    %v3579 = vld [vmem:[#allocation18 + $0x100] sm:$0xff]
    %v3580 = vld [vmem:[#allocation18 + $0x108] sm:$0xff]
    %v3581 = vld [vmem:[#allocation18 + $0x110] sm:$0xff]
    %v3582 = vld [vmem:[#allocation18 + $0x118] sm:$0xff]
    %v3583 = vld [vmem:[#allocation18 + $0x120] sm:$0xff]
    %v3584 = vld [vmem:[#allocation18 + $0x128] sm:$0xff]
    %v3585 = vld [vmem:[#allocation18 + $0x130] sm:$0xff]
    %v3586 = vld [vmem:[#allocation18 + $0x138] sm:$0xff]
    %v3587 = vld [vmem:[#allocation18 + $0x140] sm:$0xff]
    %v3588 = vld [vmem:[#allocation18 + $0x148] sm:$0xff]
    %v3589 = vld [vmem:[#allocation18 + $0x150] sm:$0xff]
    %v3590 = vld [vmem:[#allocation18 + $0x158] sm:$0xff]
    %v3591 = vld [vmem:[#allocation18 + $0x160] sm:$0xff]
    %v3592 = vld [vmem:[#allocation18 + $0x168] sm:$0xff]
    %v3593 = vld [vmem:[#allocation18 + $0x170] sm:$0xff]
    %v3594 = vld [vmem:[#allocation18 + $0x178] sm:$0xff]
    %v3595 = vld [vmem:[#allocation18 + $0x180] sm:$0xff]
    %v3596 = vld [vmem:[#allocation18 + $0x188] sm:$0xff]
    %v3597 = vld [vmem:[#allocation18 + $0x190] sm:$0xff]
    %v3598 = vld [vmem:[#allocation18 + $0x198] sm:$0xff]
    %v3599 = vld [vmem:[#allocation18 + $0x1a0] sm:$0xff]
    %v3600 = vld [vmem:[#allocation18 + $0x1a8] sm:$0xff]
    %v3601 = vld [vmem:[#allocation18 + $0x1b0] sm:$0xff]
    %v3602 = vld [vmem:[#allocation18 + $0x1b8] sm:$0xff]
    %v3603 = vld [vmem:[#allocation18 + $0x1c0] sm:$0xff]
    %v3604 = vld [vmem:[#allocation18 + $0x1c8] sm:$0xff]
    %v3605 = vld [vmem:[#allocation18 + $0x1d0] sm:$0xff]
    %v3606 = vld [vmem:[#allocation18 + $0x1d8] sm:$0xff]
    %v3607 = vld [vmem:[#allocation18 + $0x1e0] sm:$0xff]
    %v3608 = vld [vmem:[#allocation18 + $0x1e8] sm:$0xff]
    %v3609 = vld [vmem:[#allocation18 + $0x1f0] sm:$0xff]
    %v3610 = vld [vmem:[#allocation18 + $0x1f8] sm:$0xff]
    %v3611 = vld [vmem:[#allocation18 + $0x200] sm:$0xff]
    %v3612 = vld [vmem:[#allocation18 + $0x208] sm:$0xff]
    %v3613 = vld [vmem:[#allocation18 + $0x210] sm:$0xff]
    %v3614 = vld [vmem:[#allocation18 + $0x218] sm:$0xff]
    %v3615 = vld [vmem:[#allocation18 + $0x220] sm:$0xff]
    %v3616 = vld [vmem:[#allocation18 + $0x228] sm:$0xff]
    %v3617 = vld [vmem:[#allocation18 + $0x230] sm:$0xff]
    %v3618 = vld [vmem:[#allocation18 + $0x238] sm:$0xff]
    %v3619 = vld [vmem:[#allocation18 + $0x240] sm:$0xff]
    %v3620 = vld [vmem:[#allocation18 + $0x248] sm:$0xff]
    %v3621 = vld [vmem:[#allocation18 + $0x250] sm:$0xff]
    %v3622 = vld [vmem:[#allocation18 + $0x258] sm:$0xff]
    %v3623 = vld [vmem:[#allocation18 + $0x260] sm:$0xff]
    %v3624 = vld [vmem:[#allocation18 + $0x268] sm:$0xff]
    %v3625 = vld [vmem:[#allocation18 + $0x270] sm:$0xff]
    %v3626 = vld [vmem:[#allocation18 + $0x278] sm:$0xff]
    %v3627 = vld [vmem:[#allocation18 + $0x280] sm:$0xff]
    %v3628 = vld [vmem:[#allocation18 + $0x288] sm:$0xff]
    %v3629 = vld [vmem:[#allocation18 + $0x290] sm:$0xff]
    %v3630 = vld [vmem:[#allocation18 + $0x298] sm:$0xff]
    %v3631 = vld [vmem:[#allocation18 + $0x2a0] sm:$0xff]
    %v3632 = vld [vmem:[#allocation18 + $0x2a8] sm:$0xff]
    %v3633 = vld [vmem:[#allocation18 + $0x2b0] sm:$0xff]
    %v3634 = vld [vmem:[#allocation18 + $0x2b8] sm:$0xff]
    %v3635 = vld [vmem:[#allocation18 + $0x2c0] sm:$0xff]
    %v3636 = vld [vmem:[#allocation18 + $0x2c8] sm:$0xff]
    %v3637 = vld [vmem:[#allocation18 + $0x2d0] sm:$0xff]
    %v3638 = vld [vmem:[#allocation18 + $0x2d8] sm:$0xff]
    %v3639 = vld [vmem:[#allocation18 + $0x2e0] sm:$0xff]
    %v3640 = vld [vmem:[#allocation18 + $0x2e8] sm:$0xff]
    %v3641 = vld [vmem:[#allocation18 + $0x2f0] sm:$0xff]
    %v3642 = vld [vmem:[#allocation18 + $0x2f8] sm:$0xff]
    %v3643 = vld [vmem:[#allocation18 + $0x300] sm:$0xff]
    %v3644 = vld [vmem:[#allocation18 + $0x308] sm:$0xff]
    %v3645 = vld [vmem:[#allocation18 + $0x310] sm:$0xff]
    %v3646 = vld [vmem:[#allocation18 + $0x318] sm:$0xff]
    %v3647 = vld [vmem:[#allocation18 + $0x320] sm:$0xff]
    %v3648 = vld [vmem:[#allocation18 + $0x328] sm:$0xff]
    %v3649 = vld [vmem:[#allocation18 + $0x330] sm:$0xff]
    %v3650 = vld [vmem:[#allocation18 + $0x338] sm:$0xff]
    %v3651 = vld [vmem:[#allocation18 + $0x340] sm:$0xff]
    %v3652 = vld [vmem:[#allocation18 + $0x348] sm:$0xff]
    %v3653 = vld [vmem:[#allocation18 + $0x350] sm:$0xff]
    %v3654 = vld [vmem:[#allocation18 + $0x358] sm:$0xff]
    %v3655 = vld [vmem:[#allocation18 + $0x360] sm:$0xff]
    %v3656 = vld [vmem:[#allocation18 + $0x368] sm:$0xff]
    %v3657 = vld [vmem:[#allocation18 + $0x370] sm:$0xff]
    %v3658 = vld [vmem:[#allocation18 + $0x378] sm:$0xff]
    %v3659 = vld [vmem:[#allocation18 + $0x380] sm:$0xff]
    %v3660 = vld [vmem:[#allocation18 + $0x388] sm:$0xff]
    %v3661 = vld [vmem:[#allocation18 + $0x390] sm:$0xff]
    %v3662 = vld [vmem:[#allocation18 + $0x398] sm:$0xff]
    %v3663 = vld [vmem:[#allocation18 + $0x3a0] sm:$0xff]
    %v3664 = vld [vmem:[#allocation18 + $0x3a8] sm:$0xff]
    %v3665 = vld [vmem:[#allocation18 + $0x3b0] sm:$0xff]
    %v3666 = vld [vmem:[#allocation18 + $0x3b8] sm:$0xff]
    %v3667 = vld [vmem:[#allocation18 + $0x3c0] sm:$0xff]
    %v3668 = vld [vmem:[#allocation18 + $0x3c8] sm:$0xff]
    %v3669 = vld [vmem:[#allocation18 + $0x3d0] sm:$0xff]
    %v3670 = vld [vmem:[#allocation18 + $0x3d8] sm:$0xff]
    %v3671 = vld [vmem:[#allocation18 + $0x3e0] sm:$0xff]
    %v3672 = vld [vmem:[#allocation18 + $0x3e8] sm:$0xff]
    %v3673 = vld [vmem:[#allocation18 + $0x3f0] sm:$0xff]
    %v3674 = vld [vmem:[#allocation18 + $0x3f8] sm:$0xff]
    %v3675 = vld [vmem:[#allocation18 + $0x400] sm:$0xff]
    %v3676 = vld [vmem:[#allocation18 + $0x408] sm:$0xff]
    %v3677 = vld [vmem:[#allocation18 + $0x410] sm:$0xff]
    %v3678 = vld [vmem:[#allocation18 + $0x418] sm:$0xff]
    %v3679 = vld [vmem:[#allocation18 + $0x420] sm:$0xff]
    %v3680 = vld [vmem:[#allocation18 + $0x428] sm:$0xff]
    %v3681 = vld [vmem:[#allocation18 + $0x430] sm:$0xff]
    %v3682 = vld [vmem:[#allocation18 + $0x438] sm:$0xff]
    %v3683 = vld [vmem:[#allocation18 + $0x440] sm:$0xff]
    %v3684 = vld [vmem:[#allocation18 + $0x448] sm:$0xff]
    %v3685 = vld [vmem:[#allocation18 + $0x450] sm:$0xff]
    %v3686 = vld [vmem:[#allocation18 + $0x458] sm:$0xff]
    %v3687 = vld [vmem:[#allocation18 + $0x460] sm:$0xff]
    %v3688 = vld [vmem:[#allocation18 + $0x468] sm:$0xff]
    %v3689 = vld [vmem:[#allocation18 + $0x470] sm:$0xff]
    %v3690 = vld [vmem:[#allocation18 + $0x478] sm:$0xff]
    %v3691 = vld [vmem:[#allocation18 + $0x480] sm:$0xff]
    %v3692 = vld [vmem:[#allocation18 + $0x488] sm:$0xff]
    %v3693 = vld [vmem:[#allocation18 + $0x490] sm:$0xff]
    %v3694 = vld [vmem:[#allocation18 + $0x498] sm:$0xff]
    %v3695 = vld [vmem:[#allocation18 + $0x4a0] sm:$0xff]
    %v3696 = vld [vmem:[#allocation18 + $0x4a8] sm:$0xff]
    %v3697 = vld [vmem:[#allocation18 + $0x4b0] sm:$0xff]
    %v3698 = vld [vmem:[#allocation18 + $0x4b8] sm:$0xff]
    %v3699 = vld [vmem:[#allocation18 + $0x4c0] sm:$0xff]
    %v3700 = vld [vmem:[#allocation18 + $0x4c8] sm:$0xff]
    %v3701 = vld [vmem:[#allocation18 + $0x4d0] sm:$0xff]
    %v3702 = vld [vmem:[#allocation18 + $0x4d8] sm:$0xff]
    %v3703 = vld [vmem:[#allocation18 + $0x4e0] sm:$0xff]
    %v3704 = vld [vmem:[#allocation18 + $0x4e8] sm:$0xff]
    %v3705 = vld [vmem:[#allocation18 + $0x4f0] sm:$0xff]
    %v3706 = vld [vmem:[#allocation18 + $0x4f8] sm:$0xff]
    %v3707 = vld [vmem:[#allocation18 + $0x500] sm:$0xff]
    %v3708 = vld [vmem:[#allocation18 + $0x508] sm:$0xff]
    %v3709 = vld [vmem:[#allocation18 + $0x510] sm:$0xff]
    %v3710 = vld [vmem:[#allocation18 + $0x518] sm:$0xff]
    %v3711 = vld [vmem:[#allocation18 + $0x520] sm:$0xff]
    %v3712 = vld [vmem:[#allocation18 + $0x528] sm:$0xff]
    %v3713 = vld [vmem:[#allocation18 + $0x530] sm:$0xff]
    %v3714 = vld [vmem:[#allocation18 + $0x538] sm:$0xff]
    %v3715 = vld [vmem:[#allocation18 + $0x540] sm:$0xff]
    %v3716 = vld [vmem:[#allocation18 + $0x548] sm:$0xff]
    %v3717 = vld [vmem:[#allocation18 + $0x550] sm:$0xff]
    %v3718 = vld [vmem:[#allocation18 + $0x558] sm:$0xff]
    %v3719 = vld [vmem:[#allocation18 + $0x560] sm:$0xff]
    %v3720 = vld [vmem:[#allocation18 + $0x568] sm:$0xff]
    %v3721 = vld [vmem:[#allocation18 + $0x570] sm:$0xff]
    %v3722 = vld [vmem:[#allocation18 + $0x578] sm:$0xff]
    %v3723 = vld [vmem:[#allocation18 + $0x580] sm:$0xff]
    %v3724 = vld [vmem:[#allocation18 + $0x588] sm:$0xff]
    %v3725 = vld [vmem:[#allocation18 + $0x590] sm:$0xff]
    %v3726 = vld [vmem:[#allocation18 + $0x598] sm:$0xff]
    %v3727 = vld [vmem:[#allocation18 + $0x5a0] sm:$0xff]
    %v3728 = vld [vmem:[#allocation18 + $0x5a8] sm:$0xff]
    %v3729 = vld [vmem:[#allocation18 + $0x5b0] sm:$0xff]
    %v3730 = vld [vmem:[#allocation18 + $0x5b8] sm:$0xff]
    %v3731 = vld [vmem:[#allocation18 + $0x5c0] sm:$0xff]
    %v3732 = vld [vmem:[#allocation18 + $0x5c8] sm:$0xff]
    %v3733 = vld [vmem:[#allocation18 + $0x5d0] sm:$0xff]
    %v3734 = vld [vmem:[#allocation18 + $0x5d8] sm:$0xff]
    %v3735 = vld [vmem:[#allocation18 + $0x5e0] sm:$0xff]
    %v3736 = vld [vmem:[#allocation18 + $0x5e8] sm:$0xff]
    %v3737 = vld [vmem:[#allocation18 + $0x5f0] sm:$0xff]
    %v3738 = vld [vmem:[#allocation18 + $0x5f8] sm:$0xff]
    %v3739 = vld [vmem:[%s11] sm:$0x3]
    %v3741 = vlaneseq
    %v3742 = vshrl.u32 %v3741, 7
    %v3743 = vsub.s32 0, %v3742
    %v3744 = vrot.slane %v3739, %v3743
    %v3745 = vlaneseq
    %v3746 = vshrl.u32 %v3745, 7
    %v3747 = vsub.s32 1, %v3746
    %v3748 = vrot.slane %v3739, %v3747
    %v3769 = vunpack.c.l.b16 %v3529
    %v3770 = vunpack.c.h.b16 %v3529
    %v3771 = vunpack.c.l.b16 %v3530
    %v3772 = vunpack.c.h.b16 %v3530
    %v3773 = vunpack.c.l.b16 %v3531
    %v3774 = vunpack.c.h.b16 %v3531
    %v3775 = vunpack.c.l.b16 %v3532
    %v3776 = vunpack.c.h.b16 %v3532
    %v3777 = vunpack.c.l.b16 %v3533
    %v3778 = vunpack.c.h.b16 %v3533
    %v3779 = vunpack.c.l.b16 %v3534
    %v3780 = vunpack.c.h.b16 %v3534
    %v3781 = vunpack.c.l.b16 %v3535
    %v3782 = vunpack.c.h.b16 %v3535
    %v3783 = vunpack.c.l.b16 %v3536
    %v3784 = vunpack.c.h.b16 %v3536
    %v3785 = vunpack.c.l.b16 %v3537
    %v3786 = vunpack.c.h.b16 %v3537
    %v3787 = vunpack.c.l.b16 %v3538
    %v3788 = vunpack.c.h.b16 %v3538
    %v3789 = vunpack.c.l.b16 %v3539
    %v3790 = vunpack.c.h.b16 %v3539
    %v3791 = vunpack.c.l.b16 %v3540
    %v3792 = vunpack.c.h.b16 %v3540
    %v3793 = vunpack.c.l.b16 %v3541
    %v3794 = vunpack.c.h.b16 %v3541
    %v3795 = vunpack.c.l.b16 %v3542
    %v3796 = vunpack.c.h.b16 %v3542
    %v3797 = vunpack.c.l.b16 %v3543
    %v3798 = vunpack.c.h.b16 %v3543
    %v3799 = vunpack.c.l.b16 %v3544
    %v3800 = vunpack.c.h.b16 %v3544
    %v3801 = vunpack.c.l.b16 %v3545
    %v3802 = vunpack.c.h.b16 %v3545
    %v3803 = vunpack.c.l.b16 %v3546
    %v3804 = vunpack.c.h.b16 %v3546
    %v3805 = vpack.c.b16 %v3781, %v3769
    %v3806 = vpack.c.b16 %v3782, %v3770
    %v3807 = vpack.c.b16 %v3783, %v3771
    %v3808 = vpack.c.b16 %v3784, %v3772
    %v3809 = vpack.c.b16 %v3785, %v3773
    %v3810 = vpack.c.b16 %v3786, %v3774
    %v3811 = vpack.c.b16 %v3787, %v3775
    %v3812 = vpack.c.b16 %v3788, %v3776
    %v3813 = vpack.c.b16 %v3789, %v3777
    %v3814 = vpack.c.b16 %v3790, %v3778
    %v3815 = vpack.c.b16 %v3791, %v3779
    %v3816 = vpack.c.b16 %v3792, %v3780
    %v3817 = vpack.c.b16 %v3793, %v3793
    %v3818 = vpack.c.b16 %v3794, %v3794
    %v3819 = vpack.c.b16 %v3795, %v3795
    %v3820 = vpack.c.b16 %v3796, %v3796
    %v3821 = vpack.c.b16 %v3797, %v3797
    %v3822 = vpack.c.b16 %v3798, %v3798
    %v3823 = vpack.c.b16 %v3799, %v3799
    %v3824 = vpack.c.b16 %v3800, %v3800
    %v3825 = vpack.c.b16 %v3801, %v3801
    %v3826 = vpack.c.b16 %v3802, %v3802
    %v3827 = vpack.c.b16 %v3803, %v3803
    %v3828 = vpack.c.b16 %v3804, %v3804
    %v4045 = vunpack.c.l.b16 %v3547
    %v4046 = vunpack.c.h.b16 %v3547
    %v4047 = vunpack.c.l.b16 %v3548
    %v4048 = vunpack.c.h.b16 %v3548
    %v4049 = vunpack.c.l.b16 %v3549
    %v4050 = vunpack.c.h.b16 %v3549
    %v4051 = vunpack.c.l.b16 %v3550
    %v4052 = vunpack.c.h.b16 %v3550
    %v4053 = vunpack.c.l.b16 %v3551
    %v4054 = vunpack.c.h.b16 %v3551
    %v4055 = vunpack.c.l.b16 %v3552
    %v4056 = vunpack.c.h.b16 %v3552
    %v4057 = vunpack.c.l.b16 %v3553
    %v4058 = vunpack.c.h.b16 %v3553
    %v4059 = vunpack.c.l.b16 %v3554
    %v4060 = vunpack.c.h.b16 %v3554
    %v4061 = vunpack.c.l.b16 %v3555
    %v4062 = vunpack.c.h.b16 %v3555
    %v4063 = vunpack.c.l.b16 %v3556
    %v4064 = vunpack.c.h.b16 %v3556
    %v4065 = vunpack.c.l.b16 %v3557
    %v4066 = vunpack.c.h.b16 %v3557
    %v4067 = vunpack.c.l.b16 %v3558
    %v4068 = vunpack.c.h.b16 %v3558
    %v4069 = vunpack.c.l.b16 %v3559
    %v4070 = vunpack.c.h.b16 %v3559
    %v4071 = vunpack.c.l.b16 %v3560
    %v4072 = vunpack.c.h.b16 %v3560
    %v4073 = vunpack.c.l.b16 %v3561
    %v4074 = vunpack.c.h.b16 %v3561
    %v4075 = vunpack.c.l.b16 %v3562
    %v4076 = vunpack.c.h.b16 %v3562
    %v4077 = vunpack.c.l.b16 %v3563
    %v4078 = vunpack.c.h.b16 %v3563
    %v4079 = vunpack.c.l.b16 %v3564
    %v4080 = vunpack.c.h.b16 %v3564
    %v4081 = vunpack.c.l.b16 %v3565
    %v4082 = vunpack.c.h.b16 %v3565
    %v4083 = vunpack.c.l.b16 %v3566
    %v4084 = vunpack.c.h.b16 %v3566
    %v4085 = vunpack.c.l.b16 %v3567
    %v4086 = vunpack.c.h.b16 %v3567
    %v4087 = vunpack.c.l.b16 %v3568
    %v4088 = vunpack.c.h.b16 %v3568
    %v4089 = vunpack.c.l.b16 %v3569
    %v4090 = vunpack.c.h.b16 %v3569
    %v4091 = vunpack.c.l.b16 %v3570
    %v4092 = vunpack.c.h.b16 %v3570
    %v4093 = vunpack.c.l.b16 %v3571
    %v4094 = vunpack.c.h.b16 %v3571
    %v4095 = vunpack.c.l.b16 %v3572
    %v4096 = vunpack.c.h.b16 %v3572
    %v4097 = vunpack.c.l.b16 %v3573
    %v4098 = vunpack.c.h.b16 %v3573
    %v4099 = vunpack.c.l.b16 %v3574
    %v4100 = vunpack.c.h.b16 %v3574
    %v4101 = vunpack.c.l.b16 %v3575
    %v4102 = vunpack.c.h.b16 %v3575
    %v4103 = vunpack.c.l.b16 %v3576
    %v4104 = vunpack.c.h.b16 %v3576
    %v4105 = vunpack.c.l.b16 %v3577
    %v4106 = vunpack.c.h.b16 %v3577
    %v4107 = vunpack.c.l.b16 %v3578
    %v4108 = vunpack.c.h.b16 %v3578
    %v4109 = vunpack.c.l.b16 %v3579
    %v4110 = vunpack.c.h.b16 %v3579
    %v4111 = vunpack.c.l.b16 %v3580
    %v4112 = vunpack.c.h.b16 %v3580
    %v4113 = vunpack.c.l.b16 %v3581
    %v4114 = vunpack.c.h.b16 %v3581
    %v4115 = vunpack.c.l.b16 %v3582
    %v4116 = vunpack.c.h.b16 %v3582
    %v4117 = vunpack.c.l.b16 %v3583
    %v4118 = vunpack.c.h.b16 %v3583
    %v4119 = vunpack.c.l.b16 %v3584
    %v4120 = vunpack.c.h.b16 %v3584
    %v4121 = vunpack.c.l.b16 %v3585
    %v4122 = vunpack.c.h.b16 %v3585
    %v4123 = vunpack.c.l.b16 %v3586
    %v4124 = vunpack.c.h.b16 %v3586
    %v4125 = vunpack.c.l.b16 %v3587
    %v4126 = vunpack.c.h.b16 %v3587
    %v4127 = vunpack.c.l.b16 %v3588
    %v4128 = vunpack.c.h.b16 %v3588
    %v4129 = vunpack.c.l.b16 %v3589
    %v4130 = vunpack.c.h.b16 %v3589
    %v4131 = vunpack.c.l.b16 %v3590
    %v4132 = vunpack.c.h.b16 %v3590
    %v4133 = vunpack.c.l.b16 %v3591
    %v4134 = vunpack.c.h.b16 %v3591
    %v4135 = vunpack.c.l.b16 %v3592
    %v4136 = vunpack.c.h.b16 %v3592
    %v4137 = vunpack.c.l.b16 %v3593
    %v4138 = vunpack.c.h.b16 %v3593
    %v4139 = vunpack.c.l.b16 %v3594
    %v4140 = vunpack.c.h.b16 %v3594
    %v4141 = vunpack.c.l.b16 %v3595
    %v4142 = vunpack.c.h.b16 %v3595
    %v4143 = vunpack.c.l.b16 %v3596
    %v4144 = vunpack.c.h.b16 %v3596
    %v4145 = vunpack.c.l.b16 %v3597
    %v4146 = vunpack.c.h.b16 %v3597
    %v4147 = vunpack.c.l.b16 %v3598
    %v4148 = vunpack.c.h.b16 %v3598
    %v4149 = vunpack.c.l.b16 %v3599
    %v4150 = vunpack.c.h.b16 %v3599
    %v4151 = vunpack.c.l.b16 %v3600
    %v4152 = vunpack.c.h.b16 %v3600
    %v4153 = vunpack.c.l.b16 %v3601
    %v4154 = vunpack.c.h.b16 %v3601
    %v4155 = vunpack.c.l.b16 %v3602
    %v4156 = vunpack.c.h.b16 %v3602
    %v4157 = vunpack.c.l.b16 %v3603
    %v4158 = vunpack.c.h.b16 %v3603
    %v4159 = vunpack.c.l.b16 %v3604
    %v4160 = vunpack.c.h.b16 %v3604
    %v4161 = vunpack.c.l.b16 %v3605
    %v4162 = vunpack.c.h.b16 %v3605
    %v4163 = vunpack.c.l.b16 %v3606
    %v4164 = vunpack.c.h.b16 %v3606
    %v4165 = vunpack.c.l.b16 %v3607
    %v4166 = vunpack.c.h.b16 %v3607
    %v4167 = vunpack.c.l.b16 %v3608
    %v4168 = vunpack.c.h.b16 %v3608
    %v4169 = vunpack.c.l.b16 %v3609
    %v4170 = vunpack.c.h.b16 %v3609
    %v4171 = vunpack.c.l.b16 %v3610
    %v4172 = vunpack.c.h.b16 %v3610
    %v4173 = vunpack.c.l.b16 %v3611
    %v4174 = vunpack.c.h.b16 %v3611
    %v4175 = vunpack.c.l.b16 %v3612
    %v4176 = vunpack.c.h.b16 %v3612
    %v4177 = vunpack.c.l.b16 %v3613
    %v4178 = vunpack.c.h.b16 %v3613
    %v4179 = vunpack.c.l.b16 %v3614
    %v4180 = vunpack.c.h.b16 %v3614
    %v4181 = vunpack.c.l.b16 %v3615
    %v4182 = vunpack.c.h.b16 %v3615
    %v4183 = vunpack.c.l.b16 %v3616
    %v4184 = vunpack.c.h.b16 %v3616
    %v4185 = vunpack.c.l.b16 %v3617
    %v4186 = vunpack.c.h.b16 %v3617
    %v4187 = vunpack.c.l.b16 %v3618
    %v4188 = vunpack.c.h.b16 %v3618
    %v4189 = vunpack.c.l.b16 %v3619
    %v4190 = vunpack.c.h.b16 %v3619
    %v4191 = vunpack.c.l.b16 %v3620
    %v4192 = vunpack.c.h.b16 %v3620
    %v4193 = vunpack.c.l.b16 %v3621
    %v4194 = vunpack.c.h.b16 %v3621
    %v4195 = vunpack.c.l.b16 %v3622
    %v4196 = vunpack.c.h.b16 %v3622
    %v4197 = vunpack.c.l.b16 %v3623
    %v4198 = vunpack.c.h.b16 %v3623
    %v4199 = vunpack.c.l.b16 %v3624
    %v4200 = vunpack.c.h.b16 %v3624
    %v4201 = vunpack.c.l.b16 %v3625
    %v4202 = vunpack.c.h.b16 %v3625
    %v4203 = vunpack.c.l.b16 %v3626
    %v4204 = vunpack.c.h.b16 %v3626
    %v4205 = vunpack.c.l.b16 %v3627
    %v4206 = vunpack.c.h.b16 %v3627
    %v4207 = vunpack.c.l.b16 %v3628
    %v4208 = vunpack.c.h.b16 %v3628
    %v4209 = vunpack.c.l.b16 %v3629
    %v4210 = vunpack.c.h.b16 %v3629
    %v4211 = vunpack.c.l.b16 %v3630
    %v4212 = vunpack.c.h.b16 %v3630
    %v4213 = vunpack.c.l.b16 %v3631
    %v4214 = vunpack.c.h.b16 %v3631
    %v4215 = vunpack.c.l.b16 %v3632
    %v4216 = vunpack.c.h.b16 %v3632
    %v4217 = vunpack.c.l.b16 %v3633
    %v4218 = vunpack.c.h.b16 %v3633
    %v4219 = vunpack.c.l.b16 %v3634
    %v4220 = vunpack.c.h.b16 %v3634
    %v4221 = vunpack.c.l.b16 %v3635
    %v4222 = vunpack.c.h.b16 %v3635
    %v4223 = vunpack.c.l.b16 %v3636
    %v4224 = vunpack.c.h.b16 %v3636
    %v4225 = vunpack.c.l.b16 %v3637
    %v4226 = vunpack.c.h.b16 %v3637
    %v4227 = vunpack.c.l.b16 %v3638
    %v4228 = vunpack.c.h.b16 %v3638
    %v4229 = vunpack.c.l.b16 %v3639
    %v4230 = vunpack.c.h.b16 %v3639
    %v4231 = vunpack.c.l.b16 %v3640
    %v4232 = vunpack.c.h.b16 %v3640
    %v4233 = vunpack.c.l.b16 %v3641
    %v4234 = vunpack.c.h.b16 %v3641
    %v4235 = vunpack.c.l.b16 %v3642
    %v4236 = vunpack.c.h.b16 %v3642
    %v4237 = vunpack.c.l.b16 %v3643
    %v4238 = vunpack.c.h.b16 %v3643
    %v4239 = vunpack.c.l.b16 %v3644
    %v4240 = vunpack.c.h.b16 %v3644
    %v4241 = vunpack.c.l.b16 %v3645
    %v4242 = vunpack.c.h.b16 %v3645
    %v4243 = vunpack.c.l.b16 %v3646
    %v4244 = vunpack.c.h.b16 %v3646
    %v4245 = vunpack.c.l.b16 %v3647
    %v4246 = vunpack.c.h.b16 %v3647
    %v4247 = vunpack.c.l.b16 %v3648
    %v4248 = vunpack.c.h.b16 %v3648
    %v4249 = vunpack.c.l.b16 %v3649
    %v4250 = vunpack.c.h.b16 %v3649
    %v4251 = vunpack.c.l.b16 %v3650
    %v4252 = vunpack.c.h.b16 %v3650
    %v4253 = vunpack.c.l.b16 %v3651
    %v4254 = vunpack.c.h.b16 %v3651
    %v4255 = vunpack.c.l.b16 %v3652
    %v4256 = vunpack.c.h.b16 %v3652
    %v4257 = vunpack.c.l.b16 %v3653
    %v4258 = vunpack.c.h.b16 %v3653
    %v4259 = vunpack.c.l.b16 %v3654
    %v4260 = vunpack.c.h.b16 %v3654
    %v4261 = vunpack.c.l.b16 %v3655
    %v4262 = vunpack.c.h.b16 %v3655
    %v4263 = vunpack.c.l.b16 %v3656
    %v4264 = vunpack.c.h.b16 %v3656
    %v4265 = vunpack.c.l.b16 %v3657
    %v4266 = vunpack.c.h.b16 %v3657
    %v4267 = vunpack.c.l.b16 %v3658
    %v4268 = vunpack.c.h.b16 %v3658
    %v4269 = vunpack.c.l.b16 %v3659
    %v4270 = vunpack.c.h.b16 %v3659
    %v4271 = vunpack.c.l.b16 %v3660
    %v4272 = vunpack.c.h.b16 %v3660
    %v4273 = vunpack.c.l.b16 %v3661
    %v4274 = vunpack.c.h.b16 %v3661
    %v4275 = vunpack.c.l.b16 %v3662
    %v4276 = vunpack.c.h.b16 %v3662
    %v4277 = vunpack.c.l.b16 %v3663
    %v4278 = vunpack.c.h.b16 %v3663
    %v4279 = vunpack.c.l.b16 %v3664
    %v4280 = vunpack.c.h.b16 %v3664
    %v4281 = vunpack.c.l.b16 %v3665
    %v4282 = vunpack.c.h.b16 %v3665
    %v4283 = vunpack.c.l.b16 %v3666
    %v4284 = vunpack.c.h.b16 %v3666
    %v4285 = vunpack.c.l.b16 %v3667
    %v4286 = vunpack.c.h.b16 %v3667
    %v4287 = vunpack.c.l.b16 %v3668
    %v4288 = vunpack.c.h.b16 %v3668
    %v4289 = vunpack.c.l.b16 %v3669
    %v4290 = vunpack.c.h.b16 %v3669
    %v4291 = vunpack.c.l.b16 %v3670
    %v4292 = vunpack.c.h.b16 %v3670
    %v4293 = vunpack.c.l.b16 %v3671
    %v4294 = vunpack.c.h.b16 %v3671
    %v4295 = vunpack.c.l.b16 %v3672
    %v4296 = vunpack.c.h.b16 %v3672
    %v4297 = vunpack.c.l.b16 %v3673
    %v4298 = vunpack.c.h.b16 %v3673
    %v4299 = vunpack.c.l.b16 %v3674
    %v4300 = vunpack.c.h.b16 %v3674
    %v4301 = vunpack.c.l.b16 %v3675
    %v4302 = vunpack.c.h.b16 %v3675
    %v4303 = vunpack.c.l.b16 %v3676
    %v4304 = vunpack.c.h.b16 %v3676
    %v4305 = vunpack.c.l.b16 %v3677
    %v4306 = vunpack.c.h.b16 %v3677
    %v4307 = vunpack.c.l.b16 %v3678
    %v4308 = vunpack.c.h.b16 %v3678
    %v4309 = vunpack.c.l.b16 %v3679
    %v4310 = vunpack.c.h.b16 %v3679
    %v4311 = vunpack.c.l.b16 %v3680
    %v4312 = vunpack.c.h.b16 %v3680
    %v4313 = vunpack.c.l.b16 %v3681
    %v4314 = vunpack.c.h.b16 %v3681
    %v4315 = vunpack.c.l.b16 %v3682
    %v4316 = vunpack.c.h.b16 %v3682
    %v4317 = vunpack.c.l.b16 %v3683
    %v4318 = vunpack.c.h.b16 %v3683
    %v4319 = vunpack.c.l.b16 %v3684
    %v4320 = vunpack.c.h.b16 %v3684
    %v4321 = vunpack.c.l.b16 %v3685
    %v4322 = vunpack.c.h.b16 %v3685
    %v4323 = vunpack.c.l.b16 %v3686
    %v4324 = vunpack.c.h.b16 %v3686
    %v4325 = vunpack.c.l.b16 %v3687
    %v4326 = vunpack.c.h.b16 %v3687
    %v4327 = vunpack.c.l.b16 %v3688
    %v4328 = vunpack.c.h.b16 %v3688
    %v4329 = vunpack.c.l.b16 %v3689
    %v4330 = vunpack.c.h.b16 %v3689
    %v4331 = vunpack.c.l.b16 %v3690
    %v4332 = vunpack.c.h.b16 %v3690
    %v4333 = vunpack.c.l.b16 %v3691
    %v4334 = vunpack.c.h.b16 %v3691
    %v4335 = vunpack.c.l.b16 %v3692
    %v4336 = vunpack.c.h.b16 %v3692
    %v4337 = vunpack.c.l.b16 %v3693
    %v4338 = vunpack.c.h.b16 %v3693
    %v4339 = vunpack.c.l.b16 %v3694
    %v4340 = vunpack.c.h.b16 %v3694
    %v4341 = vunpack.c.l.b16 %v3695
    %v4342 = vunpack.c.h.b16 %v3695
    %v4343 = vunpack.c.l.b16 %v3696
    %v4344 = vunpack.c.h.b16 %v3696
    %v4345 = vunpack.c.l.b16 %v3697
    %v4346 = vunpack.c.h.b16 %v3697
    %v4347 = vunpack.c.l.b16 %v3698
    %v4348 = vunpack.c.h.b16 %v3698
    %v4349 = vunpack.c.l.b16 %v3699
    %v4350 = vunpack.c.h.b16 %v3699
    %v4351 = vunpack.c.l.b16 %v3700
    %v4352 = vunpack.c.h.b16 %v3700
    %v4353 = vunpack.c.l.b16 %v3701
    %v4354 = vunpack.c.h.b16 %v3701
    %v4355 = vunpack.c.l.b16 %v3702
    %v4356 = vunpack.c.h.b16 %v3702
    %v4357 = vunpack.c.l.b16 %v3703
    %v4358 = vunpack.c.h.b16 %v3703
    %v4359 = vunpack.c.l.b16 %v3704
    %v4360 = vunpack.c.h.b16 %v3704
    %v4361 = vunpack.c.l.b16 %v3705
    %v4362 = vunpack.c.h.b16 %v3705
    %v4363 = vunpack.c.l.b16 %v3706
    %v4364 = vunpack.c.h.b16 %v3706
    %v4365 = vunpack.c.l.b16 %v3707
    %v4366 = vunpack.c.h.b16 %v3707
    %v4367 = vunpack.c.l.b16 %v3708
    %v4368 = vunpack.c.h.b16 %v3708
    %v4369 = vunpack.c.l.b16 %v3709
    %v4370 = vunpack.c.h.b16 %v3709
    %v4371 = vunpack.c.l.b16 %v3710
    %v4372 = vunpack.c.h.b16 %v3710
    %v4373 = vunpack.c.l.b16 %v3711
    %v4374 = vunpack.c.h.b16 %v3711
    %v4375 = vunpack.c.l.b16 %v3712
    %v4376 = vunpack.c.h.b16 %v3712
    %v4377 = vunpack.c.l.b16 %v3713
    %v4378 = vunpack.c.h.b16 %v3713
    %v4379 = vunpack.c.l.b16 %v3714
    %v4380 = vunpack.c.h.b16 %v3714
    %v4381 = vunpack.c.l.b16 %v3715
    %v4382 = vunpack.c.h.b16 %v3715
    %v4383 = vunpack.c.l.b16 %v3716
    %v4384 = vunpack.c.h.b16 %v3716
    %v4385 = vunpack.c.l.b16 %v3717
    %v4386 = vunpack.c.h.b16 %v3717
    %v4387 = vunpack.c.l.b16 %v3718
    %v4388 = vunpack.c.h.b16 %v3718
    %v4389 = vunpack.c.l.b16 %v3719
    %v4390 = vunpack.c.h.b16 %v3719
    %v4391 = vunpack.c.l.b16 %v3720
    %v4392 = vunpack.c.h.b16 %v3720
    %v4393 = vunpack.c.l.b16 %v3721
    %v4394 = vunpack.c.h.b16 %v3721
    %v4395 = vunpack.c.l.b16 %v3722
    %v4396 = vunpack.c.h.b16 %v3722
    %v4397 = vunpack.c.l.b16 %v3723
    %v4398 = vunpack.c.h.b16 %v3723
    %v4399 = vunpack.c.l.b16 %v3724
    %v4400 = vunpack.c.h.b16 %v3724
    %v4401 = vunpack.c.l.b16 %v3725
    %v4402 = vunpack.c.h.b16 %v3725
    %v4403 = vunpack.c.l.b16 %v3726
    %v4404 = vunpack.c.h.b16 %v3726
    %v4405 = vunpack.c.l.b16 %v3727
    %v4406 = vunpack.c.h.b16 %v3727
    %v4407 = vunpack.c.l.b16 %v3728
    %v4408 = vunpack.c.h.b16 %v3728
    %v4409 = vunpack.c.l.b16 %v3729
    %v4410 = vunpack.c.h.b16 %v3729
    %v4411 = vunpack.c.l.b16 %v3730
    %v4412 = vunpack.c.h.b16 %v3730
    %v4413 = vunpack.c.l.b16 %v3731
    %v4414 = vunpack.c.h.b16 %v3731
    %v4415 = vunpack.c.l.b16 %v3732
    %v4416 = vunpack.c.h.b16 %v3732
    %v4417 = vunpack.c.l.b16 %v3733
    %v4418 = vunpack.c.h.b16 %v3733
    %v4419 = vunpack.c.l.b16 %v3734
    %v4420 = vunpack.c.h.b16 %v3734
    %v4421 = vunpack.c.l.b16 %v3735
    %v4422 = vunpack.c.h.b16 %v3735
    %v4423 = vunpack.c.l.b16 %v3736
    %v4424 = vunpack.c.h.b16 %v3736
    %v4425 = vunpack.c.l.b16 %v3737
    %v4426 = vunpack.c.h.b16 %v3737
    %v4427 = vunpack.c.l.b16 %v3738
    %v4428 = vunpack.c.h.b16 %v3738
    %v4429 = vpack.c.b16 %v4047, %v4045
    %v4430 = vpack.c.b16 %v4048, %v4046
    %v4431 = vpack.c.b16 %v4051, %v4049
    %v4432 = vpack.c.b16 %v4052, %v4050
    %v4433 = vpack.c.b16 %v4055, %v4053
    %v4434 = vpack.c.b16 %v4056, %v4054
    %v4435 = vpack.c.b16 %v4059, %v4057
    %v4436 = vpack.c.b16 %v4060, %v4058
    %v4437 = vpack.c.b16 %v4063, %v4061
    %v4438 = vpack.c.b16 %v4064, %v4062
    %v4439 = vpack.c.b16 %v4067, %v4065
    %v4440 = vpack.c.b16 %v4068, %v4066
    %v4441 = vpack.c.b16 %v4071, %v4069
    %v4442 = vpack.c.b16 %v4072, %v4070
    %v4443 = vpack.c.b16 %v4075, %v4073
    %v4444 = vpack.c.b16 %v4076, %v4074
    %v4445 = vpack.c.b16 %v4079, %v4077
    %v4446 = vpack.c.b16 %v4080, %v4078
    %v4447 = vpack.c.b16 %v4083, %v4081
    %v4448 = vpack.c.b16 %v4084, %v4082
    %v4449 = vpack.c.b16 %v4087, %v4085
    %v4450 = vpack.c.b16 %v4088, %v4086
    %v4451 = vpack.c.b16 %v4091, %v4089
    %v4452 = vpack.c.b16 %v4092, %v4090
    %v4453 = vpack.c.b16 %v4095, %v4093
    %v4454 = vpack.c.b16 %v4096, %v4094
    %v4455 = vpack.c.b16 %v4099, %v4097
    %v4456 = vpack.c.b16 %v4100, %v4098
    %v4457 = vpack.c.b16 %v4103, %v4101
    %v4458 = vpack.c.b16 %v4104, %v4102
    %v4459 = vpack.c.b16 %v4107, %v4105
    %v4460 = vpack.c.b16 %v4108, %v4106
    %v4461 = vpack.c.b16 %v4111, %v4109
    %v4462 = vpack.c.b16 %v4112, %v4110
    %v4463 = vpack.c.b16 %v4115, %v4113
    %v4464 = vpack.c.b16 %v4116, %v4114
    %v4465 = vpack.c.b16 %v4119, %v4117
    %v4466 = vpack.c.b16 %v4120, %v4118
    %v4467 = vpack.c.b16 %v4123, %v4121
    %v4468 = vpack.c.b16 %v4124, %v4122
    %v4469 = vpack.c.b16 %v4127, %v4125
    %v4470 = vpack.c.b16 %v4128, %v4126
    %v4471 = vpack.c.b16 %v4131, %v4129
    %v4472 = vpack.c.b16 %v4132, %v4130
    %v4473 = vpack.c.b16 %v4135, %v4133
    %v4474 = vpack.c.b16 %v4136, %v4134
    %v4475 = vpack.c.b16 %v4139, %v4137
    %v4476 = vpack.c.b16 %v4140, %v4138
    %v4477 = vpack.c.b16 %v4143, %v4141
    %v4478 = vpack.c.b16 %v4144, %v4142
    %v4479 = vpack.c.b16 %v4147, %v4145
    %v4480 = vpack.c.b16 %v4148, %v4146
    %v4481 = vpack.c.b16 %v4151, %v4149
    %v4482 = vpack.c.b16 %v4152, %v4150
    %v4483 = vpack.c.b16 %v4155, %v4153
    %v4484 = vpack.c.b16 %v4156, %v4154
    %v4485 = vpack.c.b16 %v4159, %v4157
    %v4486 = vpack.c.b16 %v4160, %v4158
    %v4487 = vpack.c.b16 %v4163, %v4161
    %v4488 = vpack.c.b16 %v4164, %v4162
    %v4489 = vpack.c.b16 %v4167, %v4165
    %v4490 = vpack.c.b16 %v4168, %v4166
    %v4491 = vpack.c.b16 %v4171, %v4169
    %v4492 = vpack.c.b16 %v4172, %v4170
    %v4493 = vpack.c.b16 %v4175, %v4173
    %v4494 = vpack.c.b16 %v4176, %v4174
    %v4495 = vpack.c.b16 %v4179, %v4177
    %v4496 = vpack.c.b16 %v4180, %v4178
    %v4497 = vpack.c.b16 %v4183, %v4181
    %v4498 = vpack.c.b16 %v4184, %v4182
    %v4499 = vpack.c.b16 %v4187, %v4185
    %v4500 = vpack.c.b16 %v4188, %v4186
    %v4501 = vpack.c.b16 %v4191, %v4189
    %v4502 = vpack.c.b16 %v4192, %v4190
    %v4503 = vpack.c.b16 %v4195, %v4193
    %v4504 = vpack.c.b16 %v4196, %v4194
    %v4505 = vpack.c.b16 %v4199, %v4197
    %v4506 = vpack.c.b16 %v4200, %v4198
    %v4507 = vpack.c.b16 %v4203, %v4201
    %v4508 = vpack.c.b16 %v4204, %v4202
    %v4509 = vpack.c.b16 %v4207, %v4205
    %v4510 = vpack.c.b16 %v4208, %v4206
    %v4511 = vpack.c.b16 %v4211, %v4209
    %v4512 = vpack.c.b16 %v4212, %v4210
    %v4513 = vpack.c.b16 %v4215, %v4213
    %v4514 = vpack.c.b16 %v4216, %v4214
    %v4515 = vpack.c.b16 %v4219, %v4217
    %v4516 = vpack.c.b16 %v4220, %v4218
    %v4517 = vpack.c.b16 %v4223, %v4221
    %v4518 = vpack.c.b16 %v4224, %v4222
    %v4519 = vpack.c.b16 %v4227, %v4225
    %v4520 = vpack.c.b16 %v4228, %v4226
    %v4521 = vpack.c.b16 %v4231, %v4229
    %v4522 = vpack.c.b16 %v4232, %v4230
    %v4523 = vpack.c.b16 %v4235, %v4233
    %v4524 = vpack.c.b16 %v4236, %v4234
    %v4525 = vpack.c.b16 %v4239, %v4237
    %v4526 = vpack.c.b16 %v4240, %v4238
    %v4527 = vpack.c.b16 %v4243, %v4241
    %v4528 = vpack.c.b16 %v4244, %v4242
    %v4529 = vpack.c.b16 %v4247, %v4245
    %v4530 = vpack.c.b16 %v4248, %v4246
    %v4531 = vpack.c.b16 %v4251, %v4249
    %v4532 = vpack.c.b16 %v4252, %v4250
    %v4533 = vpack.c.b16 %v4255, %v4253
    %v4534 = vpack.c.b16 %v4256, %v4254
    %v4535 = vpack.c.b16 %v4259, %v4257
    %v4536 = vpack.c.b16 %v4260, %v4258
    %v4537 = vpack.c.b16 %v4263, %v4261
    %v4538 = vpack.c.b16 %v4264, %v4262
    %v4539 = vpack.c.b16 %v4267, %v4265
    %v4540 = vpack.c.b16 %v4268, %v4266
    %v4541 = vpack.c.b16 %v4271, %v4269
    %v4542 = vpack.c.b16 %v4272, %v4270
    %v4543 = vpack.c.b16 %v4275, %v4273
    %v4544 = vpack.c.b16 %v4276, %v4274
    %v4545 = vpack.c.b16 %v4279, %v4277
    %v4546 = vpack.c.b16 %v4280, %v4278
    %v4547 = vpack.c.b16 %v4283, %v4281
    %v4548 = vpack.c.b16 %v4284, %v4282
    %v4549 = vpack.c.b16 %v4287, %v4285
    %v4550 = vpack.c.b16 %v4288, %v4286
    %v4551 = vpack.c.b16 %v4291, %v4289
    %v4552 = vpack.c.b16 %v4292, %v4290
    %v4553 = vpack.c.b16 %v4295, %v4293
    %v4554 = vpack.c.b16 %v4296, %v4294
    %v4555 = vpack.c.b16 %v4299, %v4297
    %v4556 = vpack.c.b16 %v4300, %v4298
    %v4557 = vpack.c.b16 %v4303, %v4301
    %v4558 = vpack.c.b16 %v4304, %v4302
    %v4559 = vpack.c.b16 %v4307, %v4305
    %v4560 = vpack.c.b16 %v4308, %v4306
    %v4561 = vpack.c.b16 %v4311, %v4309
    %v4562 = vpack.c.b16 %v4312, %v4310
    %v4563 = vpack.c.b16 %v4315, %v4313
    %v4564 = vpack.c.b16 %v4316, %v4314
    %v4565 = vpack.c.b16 %v4319, %v4317
    %v4566 = vpack.c.b16 %v4320, %v4318
    %v4567 = vpack.c.b16 %v4323, %v4321
    %v4568 = vpack.c.b16 %v4324, %v4322
    %v4569 = vpack.c.b16 %v4327, %v4325
    %v4570 = vpack.c.b16 %v4328, %v4326
    %v4571 = vpack.c.b16 %v4331, %v4329
    %v4572 = vpack.c.b16 %v4332, %v4330
    %v4573 = vpack.c.b16 %v4335, %v4333
    %v4574 = vpack.c.b16 %v4336, %v4334
    %v4575 = vpack.c.b16 %v4339, %v4337
    %v4576 = vpack.c.b16 %v4340, %v4338
    %v4577 = vpack.c.b16 %v4343, %v4341
    %v4578 = vpack.c.b16 %v4344, %v4342
    %v4579 = vpack.c.b16 %v4347, %v4345
    %v4580 = vpack.c.b16 %v4348, %v4346
    %v4581 = vpack.c.b16 %v4351, %v4349
    %v4582 = vpack.c.b16 %v4352, %v4350
    %v4583 = vpack.c.b16 %v4355, %v4353
    %v4584 = vpack.c.b16 %v4356, %v4354
    %v4585 = vpack.c.b16 %v4359, %v4357
    %v4586 = vpack.c.b16 %v4360, %v4358
    %v4587 = vpack.c.b16 %v4363, %v4361
    %v4588 = vpack.c.b16 %v4364, %v4362
    %v4589 = vpack.c.b16 %v4367, %v4365
    %v4590 = vpack.c.b16 %v4368, %v4366
    %v4591 = vpack.c.b16 %v4371, %v4369
    %v4592 = vpack.c.b16 %v4372, %v4370
    %v4593 = vpack.c.b16 %v4375, %v4373
    %v4594 = vpack.c.b16 %v4376, %v4374
    %v4595 = vpack.c.b16 %v4379, %v4377
    %v4596 = vpack.c.b16 %v4380, %v4378
    %v4597 = vpack.c.b16 %v4383, %v4381
    %v4598 = vpack.c.b16 %v4384, %v4382
    %v4599 = vpack.c.b16 %v4387, %v4385
    %v4600 = vpack.c.b16 %v4388, %v4386
    %v4601 = vpack.c.b16 %v4391, %v4389
    %v4602 = vpack.c.b16 %v4392, %v4390
    %v4603 = vpack.c.b16 %v4395, %v4393
    %v4604 = vpack.c.b16 %v4396, %v4394
    %v4605 = vpack.c.b16 %v4399, %v4397
    %v4606 = vpack.c.b16 %v4400, %v4398
    %v4607 = vpack.c.b16 %v4403, %v4401
    %v4608 = vpack.c.b16 %v4404, %v4402
    %v4609 = vpack.c.b16 %v4407, %v4405
    %v4610 = vpack.c.b16 %v4408, %v4406
    %v4611 = vpack.c.b16 %v4411, %v4409
    %v4612 = vpack.c.b16 %v4412, %v4410
    %v4613 = vpack.c.b16 %v4415, %v4413
    %v4614 = vpack.c.b16 %v4416, %v4414
    %v4615 = vpack.c.b16 %v4419, %v4417
    %v4616 = vpack.c.b16 %v4420, %v4418
    %v4617 = vpack.c.b16 %v4423, %v4421
    %v4618 = vpack.c.b16 %v4424, %v4422
    %v4619 = vpack.c.b16 %v4427, %v4425
    %v4620 = vpack.c.b16 %v4428, %v4426
    %4813 = vmatprep.subr.bf16.mxu0 %v4444
    %4814 = vmatpush1.bf16.msra.mxu0 %v4443
    %4815 = vmatprep.subr.bf16.mxu0 %v4442
    %4816 = vmatpush1.bf16.msra.mxu0 %v4441
    %4817 = vmatprep.subr.bf16.mxu0 %v4440
    %4818 = vmatpush1.bf16.msra.mxu0 %v4439
    %4819 = vmatprep.subr.bf16.mxu0 %v4438
    %4820 = vmatpush1.bf16.msra.mxu0 %v4437
    %4821 = vmatprep.subr.bf16.mxu0 %v4436
    %4822 = vmatpush1.bf16.msra.mxu0 %v4435
    %4823 = vmatprep.subr.bf16.mxu0 %v4434
    %4824 = vmatpush1.bf16.msra.mxu0 %v4433
    %4825 = vmatprep.subr.bf16.mxu0 %v4432
    %4826 = vmatpush1.bf16.msra.mxu0 %v4431
    %4827 = vmatprep.subr.bf16.mxu0 %v4430
    %4828 = vmatpush1.bf16.msra.mxu0 %v4429
    %4829 = vmatprep.subr.bf16.mxu0 %v4460
    %4830 = vmatpush2.bf16.msra.mxu0 %v4459
    %4831 = vmatprep.subr.bf16.mxu0 %v4458
    %4832 = vmatpush2.bf16.msra.mxu0 %v4457
    %4833 = vmatprep.subr.bf16.mxu0 %v4456
    %4834 = vmatpush2.bf16.msra.mxu0 %v4455
    %4835 = vmatprep.subr.bf16.mxu0 %v4454
    %4836 = vmatpush2.bf16.msra.mxu0 %v4453
    %4837 = vmatprep.subr.bf16.mxu0 %v4452
    %4838 = vmatpush2.bf16.msra.mxu0 %v4451
    %4839 = vmatprep.subr.bf16.mxu0 %v4450
    %4840 = vmatpush2.bf16.msra.mxu0 %v4449
    %4841 = vmatprep.subr.bf16.mxu0 %v4448
    %4842 = vmatpush2.bf16.msra.mxu0 %v4447
    %4843 = vmatprep.subr.bf16.mxu0 %v4446
    %4844 = vmatpush2.bf16.msra.mxu0 %v4445
    %4845 = vmatprep.mubr.bf16.mxu0 %v3806
    %4846 = vmatmul.mubr.bf16.gmra.mxu0 %v3805
    %v4847 = vpop.f32.mrf.mxu0
    %v4848 = vadd.f32 %v3744, %v4847
    %v4849 = vpop.f32.mrf.mxu0
    %v4850 = vadd.f32 %v3748, %v4849
    %v4851 = vpop.f32.mrf.mxu0
    %v4852 = vadd.f32 %v3744, %v4851
    %v4853 = vpop.f32.mrf.mxu0
    %v4854 = vadd.f32 %v3748, %v4853
    %4855 = vmatprep.mubr.bf16.mxu0 %v3818
    %4856 = vmatmul.mubr.bf16.gmra.mxu0 %v3817
    %v4857 = vpop.f32.mrf.mxu0
    %v4858 = vadd.f32 %v3744, %v4857
    %v4859 = vpop.f32.mrf.mxu0
    %v4860 = vadd.f32 %v3748, %v4859
    %v4861 = vpop.f32.mrf.mxu0
    %v4862 = vpop.f32.mrf.mxu0
    %4863 = vdwg.mxu0
    %4864 = vmatprep.subr.bf16.mxu0 %v4476
    %4865 = vmatpush1.bf16.msra.mxu0 %v4475
    %4866 = vmatprep.subr.bf16.mxu0 %v4474
    %4867 = vmatpush1.bf16.msra.mxu0 %v4473
    %4868 = vmatprep.subr.bf16.mxu0 %v4472
    %4869 = vmatpush1.bf16.msra.mxu0 %v4471
    %4870 = vmatprep.subr.bf16.mxu0 %v4470
    %4871 = vmatpush1.bf16.msra.mxu0 %v4469
    %4872 = vmatprep.subr.bf16.mxu0 %v4468
    %4873 = vmatpush1.bf16.msra.mxu0 %v4467
    %4874 = vmatprep.subr.bf16.mxu0 %v4466
    %4875 = vmatpush1.bf16.msra.mxu0 %v4465
    %4876 = vmatprep.subr.bf16.mxu0 %v4464
    %4877 = vmatpush1.bf16.msra.mxu0 %v4463
    %4878 = vmatprep.subr.bf16.mxu0 %v4462
    %4879 = vmatpush1.bf16.msra.mxu0 %v4461
    %4880 = vmatprep.subr.bf16.mxu0 %v4492
    %4881 = vmatpush2.bf16.msra.mxu0 %v4491
    %4882 = vmatprep.subr.bf16.mxu0 %v4490
    %4883 = vmatpush2.bf16.msra.mxu0 %v4489
    %4884 = vmatprep.subr.bf16.mxu0 %v4488
    %4885 = vmatpush2.bf16.msra.mxu0 %v4487
    %4886 = vmatprep.subr.bf16.mxu0 %v4486
    %4887 = vmatpush2.bf16.msra.mxu0 %v4485
    %4888 = vmatprep.subr.bf16.mxu0 %v4484
    %4889 = vmatpush2.bf16.msra.mxu0 %v4483
    %4890 = vmatprep.subr.bf16.mxu0 %v4482
    %4891 = vmatpush2.bf16.msra.mxu0 %v4481
    %4892 = vmatprep.subr.bf16.mxu0 %v4480
    %4893 = vmatpush2.bf16.msra.mxu0 %v4479
    %4894 = vmatprep.subr.bf16.mxu0 %v4478
    %4895 = vmatpush2.bf16.msra.mxu0 %v4477
    %4896 = vmatprep.mubr.bf16.mxu0 %v3808
    %4897 = vmatmul.mubr.bf16.gmra.mxu0 %v3807
    %v4898 = vpop.f32.mrf.mxu0
    %v4899 = vadd.f32 %v4848, %v4898
    %v4900 = vpop.f32.mrf.mxu0
    %v4901 = vadd.f32 %v4850, %v4900
    %v4902 = vpop.f32.mrf.mxu0
    %v4903 = vadd.f32 %v4852, %v4902
    %v4904 = vpop.f32.mrf.mxu0
    %v4905 = vadd.f32 %v4854, %v4904
    %4906 = vmatprep.mubr.bf16.mxu0 %v3820
    %4907 = vmatmul.mubr.bf16.gmra.mxu0 %v3819
    %v4908 = vpop.f32.mrf.mxu0
    %v4909 = vadd.f32 %v4858, %v4908
    %v4910 = vpop.f32.mrf.mxu0
    %v4911 = vadd.f32 %v4860, %v4910
    %v4912 = vpop.f32.mrf.mxu0
    %v4913 = vpop.f32.mrf.mxu0
    %4914 = vdwg.mxu0
    %4915 = vmatprep.subr.bf16.mxu0 %v4508
    %4916 = vmatpush1.bf16.msra.mxu0 %v4507
    %4917 = vmatprep.subr.bf16.mxu0 %v4506
    %4918 = vmatpush1.bf16.msra.mxu0 %v4505
    %4919 = vmatprep.subr.bf16.mxu0 %v4504
    %4920 = vmatpush1.bf16.msra.mxu0 %v4503
    %4921 = vmatprep.subr.bf16.mxu0 %v4502
    %4922 = vmatpush1.bf16.msra.mxu0 %v4501
    %4923 = vmatprep.subr.bf16.mxu0 %v4500
    %4924 = vmatpush1.bf16.msra.mxu0 %v4499
    %4925 = vmatprep.subr.bf16.mxu0 %v4498
    %4926 = vmatpush1.bf16.msra.mxu0 %v4497
    %4927 = vmatprep.subr.bf16.mxu0 %v4496
    %4928 = vmatpush1.bf16.msra.mxu0 %v4495
    %4929 = vmatprep.subr.bf16.mxu0 %v4494
    %4930 = vmatpush1.bf16.msra.mxu0 %v4493
    %4931 = vmatprep.subr.bf16.mxu0 %v4524
    %4932 = vmatpush2.bf16.msra.mxu0 %v4523
    %4933 = vmatprep.subr.bf16.mxu0 %v4522
    %4934 = vmatpush2.bf16.msra.mxu0 %v4521
    %4935 = vmatprep.subr.bf16.mxu0 %v4520
    %4936 = vmatpush2.bf16.msra.mxu0 %v4519
    %4937 = vmatprep.subr.bf16.mxu0 %v4518
    %4938 = vmatpush2.bf16.msra.mxu0 %v4517
    %4939 = vmatprep.subr.bf16.mxu0 %v4516
    %4940 = vmatpush2.bf16.msra.mxu0 %v4515
    %4941 = vmatprep.subr.bf16.mxu0 %v4514
    %4942 = vmatpush2.bf16.msra.mxu0 %v4513
    %4943 = vmatprep.subr.bf16.mxu0 %v4512
    %4944 = vmatpush2.bf16.msra.mxu0 %v4511
    %4945 = vmatprep.subr.bf16.mxu0 %v4510
    %4946 = vmatpush2.bf16.msra.mxu0 %v4509
    %4947 = vmatprep.mubr.bf16.mxu0 %v3810
    %4948 = vmatmul.mubr.bf16.gmra.mxu0 %v3809
    %v4949 = vpop.f32.mrf.mxu0
    %v4950 = vadd.f32 %v4899, %v4949
    %v4951 = vpop.f32.mrf.mxu0
    %v4952 = vadd.f32 %v4901, %v4951
    %v4953 = vpop.f32.mrf.mxu0
    %v4954 = vadd.f32 %v4903, %v4953
    %v4955 = vpop.f32.mrf.mxu0
    %v4956 = vadd.f32 %v4905, %v4955
    %4957 = vmatprep.mubr.bf16.mxu0 %v3822
    %4958 = vmatmul.mubr.bf16.gmra.mxu0 %v3821
    %v4959 = vpop.f32.mrf.mxu0
    %v4960 = vadd.f32 %v4909, %v4959
    %v4961 = vpop.f32.mrf.mxu0
    %v4962 = vadd.f32 %v4911, %v4961
    %v4963 = vpop.f32.mrf.mxu0
    %v4964 = vpop.f32.mrf.mxu0
    %4965 = vdwg.mxu0
    %4966 = vmatprep.subr.bf16.mxu0 %v4540
    %4967 = vmatpush1.bf16.msra.mxu0 %v4539
    %4968 = vmatprep.subr.bf16.mxu0 %v4538
    %4969 = vmatpush1.bf16.msra.mxu0 %v4537
    %4970 = vmatprep.subr.bf16.mxu0 %v4536
    %4971 = vmatpush1.bf16.msra.mxu0 %v4535
    %4972 = vmatprep.subr.bf16.mxu0 %v4534
    %4973 = vmatpush1.bf16.msra.mxu0 %v4533
    %4974 = vmatprep.subr.bf16.mxu0 %v4532
    %4975 = vmatpush1.bf16.msra.mxu0 %v4531
    %4976 = vmatprep.subr.bf16.mxu0 %v4530
    %4977 = vmatpush1.bf16.msra.mxu0 %v4529
    %4978 = vmatprep.subr.bf16.mxu0 %v4528
    %4979 = vmatpush1.bf16.msra.mxu0 %v4527
    %4980 = vmatprep.subr.bf16.mxu0 %v4526
    %4981 = vmatpush1.bf16.msra.mxu0 %v4525
    %4982 = vmatprep.subr.bf16.mxu0 %v4556
    %4983 = vmatpush2.bf16.msra.mxu0 %v4555
    %4984 = vmatprep.subr.bf16.mxu0 %v4554
    %4985 = vmatpush2.bf16.msra.mxu0 %v4553
    %4986 = vmatprep.subr.bf16.mxu0 %v4552
    %4987 = vmatpush2.bf16.msra.mxu0 %v4551
    %4988 = vmatprep.subr.bf16.mxu0 %v4550
    %4989 = vmatpush2.bf16.msra.mxu0 %v4549
    %4990 = vmatprep.subr.bf16.mxu0 %v4548
    %4991 = vmatpush2.bf16.msra.mxu0 %v4547
    %4992 = vmatprep.subr.bf16.mxu0 %v4546
    %4993 = vmatpush2.bf16.msra.mxu0 %v4545
    %4994 = vmatprep.subr.bf16.mxu0 %v4544
    %4995 = vmatpush2.bf16.msra.mxu0 %v4543
    %4996 = vmatprep.subr.bf16.mxu0 %v4542
    %4997 = vmatpush2.bf16.msra.mxu0 %v4541
    %4998 = vmatprep.mubr.bf16.mxu0 %v3812
    %4999 = vmatmul.mubr.bf16.gmra.mxu0 %v3811
    %v5000 = vpop.f32.mrf.mxu0
    %v5001 = vadd.f32 %v4950, %v5000
    %v5002 = vpop.f32.mrf.mxu0
    %v5003 = vadd.f32 %v4952, %v5002
    %v5004 = vpop.f32.mrf.mxu0
    %v5005 = vadd.f32 %v4954, %v5004
    %v5006 = vpop.f32.mrf.mxu0
    %v5007 = vadd.f32 %v4956, %v5006
    %5008 = vmatprep.mubr.bf16.mxu0 %v3824
    %5009 = vmatmul.mubr.bf16.gmra.mxu0 %v3823
    %v5010 = vpop.f32.mrf.mxu0
    %v5011 = vadd.f32 %v4960, %v5010
    %v5012 = vpop.f32.mrf.mxu0
    %v5013 = vadd.f32 %v4962, %v5012
    %v5014 = vpop.f32.mrf.mxu0
    %v5015 = vpop.f32.mrf.mxu0
    %5016 = vdwg.mxu0
    %5017 = vmatprep.subr.bf16.mxu0 %v4572
    %5018 = vmatpush1.bf16.msra.mxu0 %v4571
    %5019 = vmatprep.subr.bf16.mxu0 %v4570
    %5020 = vmatpush1.bf16.msra.mxu0 %v4569
    %5021 = vmatprep.subr.bf16.mxu0 %v4568
    %5022 = vmatpush1.bf16.msra.mxu0 %v4567
    %5023 = vmatprep.subr.bf16.mxu0 %v4566
    %5024 = vmatpush1.bf16.msra.mxu0 %v4565
    %5025 = vmatprep.subr.bf16.mxu0 %v4564
    %5026 = vmatpush1.bf16.msra.mxu0 %v4563
    %5027 = vmatprep.subr.bf16.mxu0 %v4562
    %5028 = vmatpush1.bf16.msra.mxu0 %v4561
    %5029 = vmatprep.subr.bf16.mxu0 %v4560
    %5030 = vmatpush1.bf16.msra.mxu0 %v4559
    %5031 = vmatprep.subr.bf16.mxu0 %v4558
    %5032 = vmatpush1.bf16.msra.mxu0 %v4557
    %5033 = vmatprep.subr.bf16.mxu0 %v4588
    %5034 = vmatpush2.bf16.msra.mxu0 %v4587
    %5035 = vmatprep.subr.bf16.mxu0 %v4586
    %5036 = vmatpush2.bf16.msra.mxu0 %v4585
    %5037 = vmatprep.subr.bf16.mxu0 %v4584
    %5038 = vmatpush2.bf16.msra.mxu0 %v4583
    %5039 = vmatprep.subr.bf16.mxu0 %v4582
    %5040 = vmatpush2.bf16.msra.mxu0 %v4581
    %5041 = vmatprep.subr.bf16.mxu0 %v4580
    %5042 = vmatpush2.bf16.msra.mxu0 %v4579
    %5043 = vmatprep.subr.bf16.mxu0 %v4578
    %5044 = vmatpush2.bf16.msra.mxu0 %v4577
    %5045 = vmatprep.subr.bf16.mxu0 %v4576
    %5046 = vmatpush2.bf16.msra.mxu0 %v4575
    %5047 = vmatprep.subr.bf16.mxu0 %v4574
    %5048 = vmatpush2.bf16.msra.mxu0 %v4573
    %5049 = vmatprep.mubr.bf16.mxu0 %v3814
    %5050 = vmatmul.mubr.bf16.gmra.mxu0 %v3813
    %v5051 = vpop.f32.mrf.mxu0
    %v5052 = vadd.f32 %v5001, %v5051
    %v5053 = vpop.f32.mrf.mxu0
    %v5054 = vadd.f32 %v5003, %v5053
    %v5055 = vpop.f32.mrf.mxu0
    %v5056 = vadd.f32 %v5005, %v5055
    %v5057 = vpop.f32.mrf.mxu0
    %v5058 = vadd.f32 %v5007, %v5057
    %5059 = vmatprep.mubr.bf16.mxu0 %v3826
    %5060 = vmatmul.mubr.bf16.gmra.mxu0 %v3825
    %v5061 = vpop.f32.mrf.mxu0
    %v5062 = vadd.f32 %v5011, %v5061
    %v5063 = vpop.f32.mrf.mxu0
    %v5064 = vadd.f32 %v5013, %v5063
    %v5065 = vpop.f32.mrf.mxu0
    %v5066 = vpop.f32.mrf.mxu0
    %5067 = vdwg.mxu0
    %5068 = vmatprep.subr.bf16.mxu0 %v4604
    %5069 = vmatpush1.bf16.msra.mxu0 %v4603
    %5070 = vmatprep.subr.bf16.mxu0 %v4602
    %5071 = vmatpush1.bf16.msra.mxu0 %v4601
    %5072 = vmatprep.subr.bf16.mxu0 %v4600
    %5073 = vmatpush1.bf16.msra.mxu0 %v4599
    %5074 = vmatprep.subr.bf16.mxu0 %v4598
    %5075 = vmatpush1.bf16.msra.mxu0 %v4597
    %5076 = vmatprep.subr.bf16.mxu0 %v4596
    %5077 = vmatpush1.bf16.msra.mxu0 %v4595
    %5078 = vmatprep.subr.bf16.mxu0 %v4594
    %5079 = vmatpush1.bf16.msra.mxu0 %v4593
    %5080 = vmatprep.subr.bf16.mxu0 %v4592
    %5081 = vmatpush1.bf16.msra.mxu0 %v4591
    %5082 = vmatprep.subr.bf16.mxu0 %v4590
    %5083 = vmatpush1.bf16.msra.mxu0 %v4589
    %5084 = vmatprep.subr.bf16.mxu0 %v4620
    %5085 = vmatpush2.bf16.msra.mxu0 %v4619
    %5086 = vmatprep.subr.bf16.mxu0 %v4618
    %5087 = vmatpush2.bf16.msra.mxu0 %v4617
    %5088 = vmatprep.subr.bf16.mxu0 %v4616
    %5089 = vmatpush2.bf16.msra.mxu0 %v4615
    %5090 = vmatprep.subr.bf16.mxu0 %v4614
    %5091 = vmatpush2.bf16.msra.mxu0 %v4613
    %5092 = vmatprep.subr.bf16.mxu0 %v4612
    %5093 = vmatpush2.bf16.msra.mxu0 %v4611
    %5094 = vmatprep.subr.bf16.mxu0 %v4610
    %5095 = vmatpush2.bf16.msra.mxu0 %v4609
    %5096 = vmatprep.subr.bf16.mxu0 %v4608
    %5097 = vmatpush2.bf16.msra.mxu0 %v4607
    %5098 = vmatprep.subr.bf16.mxu0 %v4606
    %5099 = vmatpush2.bf16.msra.mxu0 %v4605
    %5100 = vmatprep.mubr.bf16.mxu0 %v3816
    %5101 = vmatmul.mubr.bf16.gmra.mxu0 %v3815
    %v5102 = vpop.f32.mrf.mxu0
    %v5103 = vadd.f32 %v5052, %v5102
    %v5104 = vpop.f32.mrf.mxu0
    %v5105 = vadd.f32 %v5054, %v5104
    %v5106 = vpop.f32.mrf.mxu0
    %v5107 = vadd.f32 %v5056, %v5106
    %v5108 = vpop.f32.mrf.mxu0
    %v5109 = vadd.f32 %v5058, %v5108
    %5110 = vmatprep.mubr.bf16.mxu0 %v3828
    %5111 = vmatmul.mubr.bf16.gmra.mxu0 %v3827
    %v5112 = vpop.f32.mrf.mxu0
    %v5113 = vadd.f32 %v5062, %v5112
    %v5114 = vpop.f32.mrf.mxu0
    %v5115 = vadd.f32 %v5064, %v5114
    %v5116 = vpop.f32.mrf.mxu0
    %v5117 = vpop.f32.mrf.mxu0
    %5118 = vdwg.mxu0
    %v5119 = vmul.f32 %v5103, 0.2
    %v5120 = vmul.f32 %v5105, 0.2
    %v5121 = vmul.f32 %v5107, 0.2
    %v5122 = vmul.f32 %v5109, 0.2
    %v5123 = vmul.f32 %v5113, 0.2
    %v5124 = vmul.f32 %v5115, 0.2
    %v5125 = vmax.f32 %v5103, %v5119
    %v5126 = vmax.f32 %v5105, %v5120
    %v5127 = vmax.f32 %v5107, %v5121
    %v5128 = vmax.f32 %v5109, %v5122
    %v5129 = vmax.f32 %v5113, %v5123
    %v5130 = vmax.f32 %v5115, %v5124
    %v5131 = vld [vmem:[%s17] sm:$0xff]
    %v5132 = vld [vmem:[%s17 + $0x8] sm:$0xff]
    %v5133 = vld [vmem:[%s17 + $0x10] sm:$0x3]
    %5135 = vset.pattern.permute.xlu0 0
    %5136 = vperm.xlu0 %5135, %v5131
    %v5137 = vpop.permute.xlu0 %5136
    %5140 = vset.pattern.permute.xlu0 0
    %5141 = vperm.xlu0 %5140, %v5132
    %v5142 = vpop.permute.xlu0 %5141
    %5145 = vset.pattern.permute.xlu0 0
    %5146 = vperm.xlu0 %5145, %v5133
    %v5147 = vpop.permute.xlu0 %5146
    %v5149 = vmul.f32 %v5125, %v5137
    %v5150 = vmul.f32 %v5126, %v5137
    %v5151 = vmul.f32 %v5127, %v5142
    %v5152 = vmul.f32 %v5128, %v5142
    %v5153 = vmul.f32 %v5129, %v5147
    %v5154 = vmul.f32 %v5130, %v5147
    %vm5161 = vcmask 1040384
    %v5162 = vrot.slane %v5149, 7
    %v5163 = vrot.slane %v5150, 7
    %v5164 = vrot.slane %v5151, 7
    %v5165 = vsel %vm5161, %v5162, %v5164
    %v5166 = vrot.slane %v5152, 7
    %v5167 = vsel %vm5161, %v5163, %v5166
    %v5168 = vrot.slane %v5153, 7
    %v5169 = vsel %vm5161, %v5164, %v5168
    %v5170 = vrot.slane %v5154, 7
    %v5171 = vsel %vm5161, %v5166, %v5170
    %5178 = vst [vmem:[#allocation4] sm:$0xfe] %v5162
    %5179 = vst [vmem:[#allocation4 + $0x8] sm:$0xfe] %v5163
    %5180 = vst [vmem:[#allocation4 + $0x10] sm:$0xff] %v5165
    %5181 = vst [vmem:[#allocation4 + $0x18] sm:$0xff] %v5167
    %5182 = vst [vmem:[#allocation4 + $0x20] sm:$0x7] %v5169
    %5183 = vst [vmem:[#allocation4 + $0x28] sm:$0x7] %v5171
    %v5184 = vld [vmem:[#allocation4] sm:$0xff]
    %v5185 = vld [vmem:[#allocation4 + $0x8] sm:$0xff]
    %v5186 = vld [vmem:[#allocation4 + $0x10] sm:$0xff]
    %v5187 = vld [vmem:[#allocation4 + $0x18] sm:$0xff]
    %v5188 = vld [vmem:[#allocation4 + $0x20] sm:$0x3]
    %v5189 = vld [vmem:[#allocation4 + $0x28] sm:$0x3]
    %v5190 = vpack.c.bf16 %v5186, %v5184
    %v5191 = vpack.c.bf16 %v5187, %v5185
    %v5192 = vpack.c.bf16 %v5188, %v5188
    %v5193 = vpack.c.bf16 %v5189, %v5189
    %v5198 = vunpack.c.l.b16 %v5190
    %v5199 = vunpack.c.l.b16 %v5191
    %v5200 = vunpack.c.h.b16 %v5190
    %v5201 = vunpack.c.h.b16 %v5191
    %v5202 = vunpack.c.l.b16 %v5192
    %v5203 = vunpack.c.l.b16 %v5193
    %v5204 = vpack.c.b16 %v5199, %v5198
    %v5205 = vpack.c.b16 %v5201, %v5200
    %v5206 = vpack.c.b16 %v5203, %v5202
    %5210 = vst [vmem:[#allocation5] sm:$0xff] %v5204
    %5211 = vst [vmem:[#allocation5 + $0x18] sm:$0xff] %v5205
    %5212 = vst [vmem:[#allocation5 + $0x30] sm:$0x11] %v5206
    %v5213 = vld [vmem:[#allocation4] sm:$0xfe]
    %v5214 = vld [vmem:[#allocation4 + $0x8] sm:$0xfe]
    %v5215 = vld [vmem:[#allocation4 + $0x10] sm:$0xff]
    %v5216 = vld [vmem:[#allocation4 + $0x18] sm:$0xff]
    %v5217 = vld [vmem:[#allocation4 + $0x20] sm:$0x7]
    %v5218 = vld [vmem:[#allocation4 + $0x28] sm:$0x7]
    %v5219 = vpack.c.bf16 %v5215, %v5213
    %v5220 = vpack.c.bf16 %v5216, %v5214
    %v5221 = vpack.c.bf16 %v5217, %v5217
    %v5222 = vpack.c.bf16 %v5218, %v5218
    %v5227 = vunpack.c.l.b16 %v5219
    %v5228 = vunpack.c.l.b16 %v5220
    %v5229 = vunpack.c.h.b16 %v5219
    %v5230 = vunpack.c.h.b16 %v5220
    %v5231 = vunpack.c.l.b16 %v5221
    %v5232 = vunpack.c.l.b16 %v5222
    %v5233 = vpack.c.b16 %v5228, %v5227
    %v5234 = vpack.c.b16 %v5230, %v5229
    %v5235 = vpack.c.b16 %v5232, %v5231
    %v5237 = vshrl.u32 %v5233, 16
    %v5239 = vrot.slane %v5237, 4
    %v5240 = vshll.u32 %v5233, 16
    %v5242 = vrot.slane %v5240, 5
    %v5243 = vor.u32 %v5239, %v5242
    %v5244 = vrot.slane %v5243, 4
    %v5246 = vshll.u32 %v5234, 16
    %v5248 = vrot.slane %v5246, 5
    %v5249 = vsel %vm3381, %v5244, %v5248
    %v5250 = vshrl.u32 %v5234, 16
    %v5252 = vrot.slane %v5250, 4
    %v5253 = vor.u32 %v5252, %v5248
    %v5254 = vrot.slane %v5253, 4
    %v5256 = vshll.u32 %v5235, 16
    %v5258 = vrot.slane %v5256, 5
    %v5259 = vsel %vm3381, %v5254, %v5258
    %v5260 = vshrl.u32 %v5235, 16
    %v5262 = vrot.slane %v5260, 4
    %v5263 = vor.u32 %v5262, %v5258
    %v5264 = vrot.slane %v5263, 4
    %5268 = vst [vmem:[#allocation5 + $0x8] sm:$0xff] %v5249
    %5269 = vst [vmem:[#allocation5 + $0x20] sm:$0xff] %v5259
    %5270 = vst [vmem:[#allocation5 + $0x38] sm:$0x11] %v5264
    %v5271 = vld [vmem:[#allocation4] sm:$0xfc]
    %v5272 = vld [vmem:[#allocation4 + $0x8] sm:$0xfc]
    %v5273 = vld [vmem:[#allocation4 + $0x10] sm:$0xff]
    %v5274 = vld [vmem:[#allocation4 + $0x18] sm:$0xff]
    %v5275 = vld [vmem:[#allocation4 + $0x20] sm:$0xf]
    %v5276 = vld [vmem:[#allocation4 + $0x28] sm:$0xf]
    %v5277 = vpack.c.bf16 %v5273, %v5271
    %v5278 = vpack.c.bf16 %v5274, %v5272
    %v5279 = vpack.c.bf16 %v5275, %v5275
    %v5280 = vpack.c.bf16 %v5276, %v5276
    %v5285 = vunpack.c.l.b16 %v5277
    %v5286 = vunpack.c.l.b16 %v5278
    %v5287 = vunpack.c.h.b16 %v5277
    %v5288 = vunpack.c.h.b16 %v5278
    %v5289 = vunpack.c.l.b16 %v5279
    %v5290 = vunpack.c.l.b16 %v5280
    %v5291 = vpack.c.b16 %v5286, %v5285
    %v5292 = vpack.c.b16 %v5288, %v5287
    %v5293 = vpack.c.b16 %v5290, %v5289
    %v5294 = vrot.slane %v5291, 5
    %v5295 = vrot.slane %v5294, 4
    %v5296 = vrot.slane %v5292, 5
    %v5297 = vsel %vm3500, %v5295, %v5296
    %v5298 = vrot.slane %v5296, 4
    %v5299 = vrot.slane %v5293, 5
    %v5300 = vsel %vm3500, %v5298, %v5299
    %v5301 = vrot.slane %v5299, 4
    %5305 = vst [vmem:[#allocation5 + $0x10] sm:$0xff] %v5297
    %5306 = vst [vmem:[#allocation5 + $0x28] sm:$0xff] %v5300
    %5307 = vst [vmem:[#allocation5 + $0x40] sm:$0x11] %v5301
    %v5308 = vld [vmem:[#allocation5] sm:$0xff]
    %v5309 = vld [vmem:[#allocation5 + $0x8] sm:$0xff]
    %v5310 = vld [vmem:[#allocation5 + $0x10] sm:$0xff]
    %v5311 = vld [vmem:[#allocation5 + $0x18] sm:$0xff]
    %v5312 = vld [vmem:[#allocation5 + $0x20] sm:$0xff]
    %v5313 = vld [vmem:[#allocation5 + $0x28] sm:$0xff]
    %v5314 = vld [vmem:[#allocation5 + $0x30] sm:$0x11]
    %v5315 = vld [vmem:[#allocation5 + $0x38] sm:$0x11]
    %v5316 = vld [vmem:[#allocation5 + $0x40] sm:$0x11]
    %v5317 = vld [vmem:[%s13] sm:$0xff]
    %v5318 = vld [vmem:[%s13 + $0x8] sm:$0xff]
    %v5319 = vld [vmem:[%s13 + $0x10] sm:$0xff]
    %v5320 = vld [vmem:[%s13 + $0x18] sm:$0xff]
    %v5321 = vld [vmem:[%s13 + $0x20] sm:$0xff]
    %v5322 = vld [vmem:[%s13 + $0x28] sm:$0xff]
    %v5323 = vld [vmem:[%s13 + $0x30] sm:$0xff]
    %v5324 = vld [vmem:[%s13 + $0x38] sm:$0xff]
    %v5325 = vld [vmem:[%s13 + $0x40] sm:$0xff]
    %v5326 = vld [vmem:[%s13 + $0x48] sm:$0xff]
    %v5327 = vld [vmem:[%s13 + $0x50] sm:$0xff]
    %v5328 = vld [vmem:[%s13 + $0x58] sm:$0xff]
    %v5329 = vld [vmem:[%s13 + $0x60] sm:$0xff]
    %v5330 = vld [vmem:[%s13 + $0x68] sm:$0xff]
    %v5331 = vld [vmem:[%s13 + $0x70] sm:$0xff]
    %v5332 = vld [vmem:[%s13 + $0x78] sm:$0xff]
    %v5333 = vld [vmem:[%s13 + $0x80] sm:$0xff]
    %v5334 = vld [vmem:[%s13 + $0x88] sm:$0xff]
    %v5335 = vld [vmem:[%s13 + $0x90] sm:$0xff]
    %v5336 = vld [vmem:[%s13 + $0x98] sm:$0xff]
    %v5337 = vld [vmem:[%s13 + $0xa0] sm:$0xff]
    %v5338 = vld [vmem:[%s13 + $0xa8] sm:$0xff]
    %v5339 = vld [vmem:[%s13 + $0xb0] sm:$0xff]
    %v5340 = vld [vmem:[%s13 + $0xb8] sm:$0xff]
    %v5341 = vld [vmem:[%s13 + $0xc0] sm:$0xff]
    %v5342 = vld [vmem:[%s13 + $0xc8] sm:$0xff]
    %v5343 = vld [vmem:[%s13 + $0xd0] sm:$0xff]
    %v5344 = vld [vmem:[%s13 + $0xd8] sm:$0xff]
    %v5345 = vld [vmem:[%s13 + $0xe0] sm:$0xff]
    %v5346 = vld [vmem:[%s13 + $0xe8] sm:$0xff]
    %v5347 = vld [vmem:[%s13 + $0xf0] sm:$0xff]
    %v5348 = vld [vmem:[%s13 + $0xf8] sm:$0xff]
    %v5349 = vld [vmem:[%s13 + $0x100] sm:$0xff]
    %v5350 = vld [vmem:[%s13 + $0x108] sm:$0xff]
    %v5351 = vld [vmem:[%s13 + $0x110] sm:$0xff]
    %v5352 = vld [vmem:[%s13 + $0x118] sm:$0xff]
    %v5353 = vld [vmem:[%s13 + $0x120] sm:$0xff]
    %v5354 = vld [vmem:[%s13 + $0x128] sm:$0xff]
    %v5355 = vld [vmem:[%s13 + $0x130] sm:$0xff]
    %v5356 = vld [vmem:[%s13 + $0x138] sm:$0xff]
    %v5357 = vld [vmem:[%s13 + $0x140] sm:$0xff]
    %v5358 = vld [vmem:[%s13 + $0x148] sm:$0xff]
    %v5359 = vld [vmem:[%s13 + $0x150] sm:$0xff]
    %v5360 = vld [vmem:[%s13 + $0x158] sm:$0xff]
    %v5361 = vld [vmem:[%s13 + $0x160] sm:$0xff]
    %v5362 = vld [vmem:[%s13 + $0x168] sm:$0xff]
    %v5363 = vld [vmem:[%s13 + $0x170] sm:$0xff]
    %v5364 = vld [vmem:[%s13 + $0x178] sm:$0xff]
    %v5365 = vld [vmem:[%s13 + $0x180] sm:$0xff]
    %v5366 = vld [vmem:[%s13 + $0x188] sm:$0xff]
    %v5367 = vld [vmem:[%s13 + $0x190] sm:$0xff]
    %v5368 = vld [vmem:[%s13 + $0x198] sm:$0xff]
    %v5369 = vld [vmem:[%s13 + $0x1a0] sm:$0xff]
    %v5370 = vld [vmem:[%s13 + $0x1a8] sm:$0xff]
    %v5371 = vld [vmem:[%s13 + $0x1b0] sm:$0xff]
    %v5372 = vld [vmem:[%s13 + $0x1b8] sm:$0xff]
    %v5373 = vld [vmem:[%s13 + $0x1c0] sm:$0xff]
    %v5374 = vld [vmem:[%s13 + $0x1c8] sm:$0xff]
    %v5375 = vld [vmem:[%s13 + $0x1d0] sm:$0xff]
    %v5376 = vld [vmem:[%s13 + $0x1d8] sm:$0xff]
    %v5377 = vld [vmem:[%s13 + $0x1e0] sm:$0xff]
    %v5378 = vld [vmem:[%s13 + $0x1e8] sm:$0xff]
    %v5379 = vld [vmem:[%s13 + $0x1f0] sm:$0xff]
    %v5380 = vld [vmem:[%s13 + $0x1f8] sm:$0xff]
    %v5381 = vld [vmem:[%s13 + $0x200] sm:$0xff]
    %v5382 = vld [vmem:[%s13 + $0x208] sm:$0xff]
    %v5383 = vld [vmem:[%s13 + $0x210] sm:$0xff]
    %v5384 = vld [vmem:[%s13 + $0x218] sm:$0xff]
    %v5385 = vld [vmem:[%s13 + $0x220] sm:$0xff]
    %v5386 = vld [vmem:[%s13 + $0x228] sm:$0xff]
    %v5387 = vld [vmem:[%s13 + $0x230] sm:$0xff]
    %v5388 = vld [vmem:[%s13 + $0x238] sm:$0xff]
    %v5389 = vld [vmem:[%s13 + $0x240] sm:$0xff]
    %v5390 = vld [vmem:[%s13 + $0x248] sm:$0xff]
    %v5391 = vld [vmem:[%s13 + $0x250] sm:$0xff]
    %v5392 = vld [vmem:[%s13 + $0x258] sm:$0xff]
    %v5393 = vld [vmem:[%s13 + $0x260] sm:$0xff]
    %v5394 = vld [vmem:[%s13 + $0x268] sm:$0xff]
    %v5395 = vld [vmem:[%s13 + $0x270] sm:$0xff]
    %v5396 = vld [vmem:[%s13 + $0x278] sm:$0xff]
    %v5397 = vld [vmem:[%s13 + $0x280] sm:$0xff]
    %v5398 = vld [vmem:[%s13 + $0x288] sm:$0xff]
    %v5399 = vld [vmem:[%s13 + $0x290] sm:$0xff]
    %v5400 = vld [vmem:[%s13 + $0x298] sm:$0xff]
    %v5401 = vld [vmem:[%s13 + $0x2a0] sm:$0xff]
    %v5402 = vld [vmem:[%s13 + $0x2a8] sm:$0xff]
    %v5403 = vld [vmem:[%s13 + $0x2b0] sm:$0xff]
    %v5404 = vld [vmem:[%s13 + $0x2b8] sm:$0xff]
    %v5405 = vld [vmem:[%s13 + $0x2c0] sm:$0xff]
    %v5406 = vld [vmem:[%s13 + $0x2c8] sm:$0xff]
    %v5407 = vld [vmem:[%s13 + $0x2d0] sm:$0xff]
    %v5408 = vld [vmem:[%s13 + $0x2d8] sm:$0xff]
    %v5409 = vld [vmem:[%s13 + $0x2e0] sm:$0xff]
    %v5410 = vld [vmem:[%s13 + $0x2e8] sm:$0xff]
    %v5411 = vld [vmem:[%s13 + $0x2f0] sm:$0xff]
    %v5412 = vld [vmem:[%s13 + $0x2f8] sm:$0xff]
    %v5413 = vld [vmem:[%s15] sm:$0x3]
    %v5415 = vlaneseq
    %v5416 = vshrl.u32 %v5415, 7
    %v5417 = vsub.s32 0, %v5416
    %v5418 = vrot.slane %v5413, %v5417
    %v5419 = vlaneseq
    %v5420 = vshrl.u32 %v5419, 7
    %v5421 = vsub.s32 1, %v5420
    %v5422 = vrot.slane %v5413, %v5421
    %v5434 = vunpack.c.l.b16 %v5308
    %v5435 = vunpack.c.h.b16 %v5308
    %v5436 = vunpack.c.l.b16 %v5309
    %v5437 = vunpack.c.h.b16 %v5309
    %v5438 = vunpack.c.l.b16 %v5310
    %v5439 = vunpack.c.h.b16 %v5310
    %v5440 = vunpack.c.l.b16 %v5311
    %v5441 = vunpack.c.h.b16 %v5311
    %v5442 = vunpack.c.l.b16 %v5312
    %v5443 = vunpack.c.h.b16 %v5312
    %v5444 = vunpack.c.l.b16 %v5313
    %v5445 = vunpack.c.h.b16 %v5313
    %v5446 = vunpack.c.l.b16 %v5314
    %v5447 = vunpack.c.h.b16 %v5314
    %v5448 = vunpack.c.l.b16 %v5315
    %v5449 = vunpack.c.h.b16 %v5315
    %v5450 = vunpack.c.l.b16 %v5316
    %v5451 = vunpack.c.h.b16 %v5316
    %v5452 = vpack.c.b16 %v5440, %v5434
    %v5453 = vpack.c.b16 %v5441, %v5435
    %v5454 = vpack.c.b16 %v5442, %v5436
    %v5455 = vpack.c.b16 %v5443, %v5437
    %v5456 = vpack.c.b16 %v5444, %v5438
    %v5457 = vpack.c.b16 %v5445, %v5439
    %v5458 = vpack.c.b16 %v5446, %v5446
    %v5459 = vpack.c.b16 %v5447, %v5447
    %v5460 = vpack.c.b16 %v5448, %v5448
    %v5461 = vpack.c.b16 %v5449, %v5449
    %v5462 = vpack.c.b16 %v5450, %v5450
    %v5463 = vpack.c.b16 %v5451, %v5451
    %v5572 = vunpack.c.l.b16 %v5317
    %v5573 = vunpack.c.h.b16 %v5317
    %v5574 = vunpack.c.l.b16 %v5318
    %v5575 = vunpack.c.h.b16 %v5318
    %v5576 = vunpack.c.l.b16 %v5319
    %v5577 = vunpack.c.h.b16 %v5319
    %v5578 = vunpack.c.l.b16 %v5320
    %v5579 = vunpack.c.h.b16 %v5320
    %v5580 = vunpack.c.l.b16 %v5321
    %v5581 = vunpack.c.h.b16 %v5321
    %v5582 = vunpack.c.l.b16 %v5322
    %v5583 = vunpack.c.h.b16 %v5322
    %v5584 = vunpack.c.l.b16 %v5323
    %v5585 = vunpack.c.h.b16 %v5323
    %v5586 = vunpack.c.l.b16 %v5324
    %v5587 = vunpack.c.h.b16 %v5324
    %v5588 = vunpack.c.l.b16 %v5325
    %v5589 = vunpack.c.h.b16 %v5325
    %v5590 = vunpack.c.l.b16 %v5326
    %v5591 = vunpack.c.h.b16 %v5326
    %v5592 = vunpack.c.l.b16 %v5327
    %v5593 = vunpack.c.h.b16 %v5327
    %v5594 = vunpack.c.l.b16 %v5328
    %v5595 = vunpack.c.h.b16 %v5328
    %v5596 = vunpack.c.l.b16 %v5329
    %v5597 = vunpack.c.h.b16 %v5329
    %v5598 = vunpack.c.l.b16 %v5330
    %v5599 = vunpack.c.h.b16 %v5330
    %v5600 = vunpack.c.l.b16 %v5331
    %v5601 = vunpack.c.h.b16 %v5331
    %v5602 = vunpack.c.l.b16 %v5332
    %v5603 = vunpack.c.h.b16 %v5332
    %v5604 = vunpack.c.l.b16 %v5333
    %v5605 = vunpack.c.h.b16 %v5333
    %v5606 = vunpack.c.l.b16 %v5334
    %v5607 = vunpack.c.h.b16 %v5334
    %v5608 = vunpack.c.l.b16 %v5335
    %v5609 = vunpack.c.h.b16 %v5335
    %v5610 = vunpack.c.l.b16 %v5336
    %v5611 = vunpack.c.h.b16 %v5336
    %v5612 = vunpack.c.l.b16 %v5337
    %v5613 = vunpack.c.h.b16 %v5337
    %v5614 = vunpack.c.l.b16 %v5338
    %v5615 = vunpack.c.h.b16 %v5338
    %v5616 = vunpack.c.l.b16 %v5339
    %v5617 = vunpack.c.h.b16 %v5339
    %v5618 = vunpack.c.l.b16 %v5340
    %v5619 = vunpack.c.h.b16 %v5340
    %v5620 = vunpack.c.l.b16 %v5341
    %v5621 = vunpack.c.h.b16 %v5341
    %v5622 = vunpack.c.l.b16 %v5342
    %v5623 = vunpack.c.h.b16 %v5342
    %v5624 = vunpack.c.l.b16 %v5343
    %v5625 = vunpack.c.h.b16 %v5343
    %v5626 = vunpack.c.l.b16 %v5344
    %v5627 = vunpack.c.h.b16 %v5344
    %v5628 = vunpack.c.l.b16 %v5345
    %v5629 = vunpack.c.h.b16 %v5345
    %v5630 = vunpack.c.l.b16 %v5346
    %v5631 = vunpack.c.h.b16 %v5346
    %v5632 = vunpack.c.l.b16 %v5347
    %v5633 = vunpack.c.h.b16 %v5347
    %v5634 = vunpack.c.l.b16 %v5348
    %v5635 = vunpack.c.h.b16 %v5348
    %v5636 = vunpack.c.l.b16 %v5349
    %v5637 = vunpack.c.h.b16 %v5349
    %v5638 = vunpack.c.l.b16 %v5350
    %v5639 = vunpack.c.h.b16 %v5350
    %v5640 = vunpack.c.l.b16 %v5351
    %v5641 = vunpack.c.h.b16 %v5351
    %v5642 = vunpack.c.l.b16 %v5352
    %v5643 = vunpack.c.h.b16 %v5352
    %v5644 = vunpack.c.l.b16 %v5353
    %v5645 = vunpack.c.h.b16 %v5353
    %v5646 = vunpack.c.l.b16 %v5354
    %v5647 = vunpack.c.h.b16 %v5354
    %v5648 = vunpack.c.l.b16 %v5355
    %v5649 = vunpack.c.h.b16 %v5355
    %v5650 = vunpack.c.l.b16 %v5356
    %v5651 = vunpack.c.h.b16 %v5356
    %v5652 = vunpack.c.l.b16 %v5357
    %v5653 = vunpack.c.h.b16 %v5357
    %v5654 = vunpack.c.l.b16 %v5358
    %v5655 = vunpack.c.h.b16 %v5358
    %v5656 = vunpack.c.l.b16 %v5359
    %v5657 = vunpack.c.h.b16 %v5359
    %v5658 = vunpack.c.l.b16 %v5360
    %v5659 = vunpack.c.h.b16 %v5360
    %v5660 = vunpack.c.l.b16 %v5361
    %v5661 = vunpack.c.h.b16 %v5361
    %v5662 = vunpack.c.l.b16 %v5362
    %v5663 = vunpack.c.h.b16 %v5362
    %v5664 = vunpack.c.l.b16 %v5363
    %v5665 = vunpack.c.h.b16 %v5363
    %v5666 = vunpack.c.l.b16 %v5364
    %v5667 = vunpack.c.h.b16 %v5364
    %v5668 = vunpack.c.l.b16 %v5365
    %v5669 = vunpack.c.h.b16 %v5365
    %v5670 = vunpack.c.l.b16 %v5366
    %v5671 = vunpack.c.h.b16 %v5366
    %v5672 = vunpack.c.l.b16 %v5367
    %v5673 = vunpack.c.h.b16 %v5367
    %v5674 = vunpack.c.l.b16 %v5368
    %v5675 = vunpack.c.h.b16 %v5368
    %v5676 = vunpack.c.l.b16 %v5369
    %v5677 = vunpack.c.h.b16 %v5369
    %v5678 = vunpack.c.l.b16 %v5370
    %v5679 = vunpack.c.h.b16 %v5370
    %v5680 = vunpack.c.l.b16 %v5371
    %v5681 = vunpack.c.h.b16 %v5371
    %v5682 = vunpack.c.l.b16 %v5372
    %v5683 = vunpack.c.h.b16 %v5372
    %v5684 = vunpack.c.l.b16 %v5373
    %v5685 = vunpack.c.h.b16 %v5373
    %v5686 = vunpack.c.l.b16 %v5374
    %v5687 = vunpack.c.h.b16 %v5374
    %v5688 = vunpack.c.l.b16 %v5375
    %v5689 = vunpack.c.h.b16 %v5375
    %v5690 = vunpack.c.l.b16 %v5376
    %v5691 = vunpack.c.h.b16 %v5376
    %v5692 = vunpack.c.l.b16 %v5377
    %v5693 = vunpack.c.h.b16 %v5377
    %v5694 = vunpack.c.l.b16 %v5378
    %v5695 = vunpack.c.h.b16 %v5378
    %v5696 = vunpack.c.l.b16 %v5379
    %v5697 = vunpack.c.h.b16 %v5379
    %v5698 = vunpack.c.l.b16 %v5380
    %v5699 = vunpack.c.h.b16 %v5380
    %v5700 = vunpack.c.l.b16 %v5381
    %v5701 = vunpack.c.h.b16 %v5381
    %v5702 = vunpack.c.l.b16 %v5382
    %v5703 = vunpack.c.h.b16 %v5382
    %v5704 = vunpack.c.l.b16 %v5383
    %v5705 = vunpack.c.h.b16 %v5383
    %v5706 = vunpack.c.l.b16 %v5384
    %v5707 = vunpack.c.h.b16 %v5384
    %v5708 = vunpack.c.l.b16 %v5385
    %v5709 = vunpack.c.h.b16 %v5385
    %v5710 = vunpack.c.l.b16 %v5386
    %v5711 = vunpack.c.h.b16 %v5386
    %v5712 = vunpack.c.l.b16 %v5387
    %v5713 = vunpack.c.h.b16 %v5387
    %v5714 = vunpack.c.l.b16 %v5388
    %v5715 = vunpack.c.h.b16 %v5388
    %v5716 = vunpack.c.l.b16 %v5389
    %v5717 = vunpack.c.h.b16 %v5389
    %v5718 = vunpack.c.l.b16 %v5390
    %v5719 = vunpack.c.h.b16 %v5390
    %v5720 = vunpack.c.l.b16 %v5391
    %v5721 = vunpack.c.h.b16 %v5391
    %v5722 = vunpack.c.l.b16 %v5392
    %v5723 = vunpack.c.h.b16 %v5392
    %v5724 = vunpack.c.l.b16 %v5393
    %v5725 = vunpack.c.h.b16 %v5393
    %v5726 = vunpack.c.l.b16 %v5394
    %v5727 = vunpack.c.h.b16 %v5394
    %v5728 = vunpack.c.l.b16 %v5395
    %v5729 = vunpack.c.h.b16 %v5395
    %v5730 = vunpack.c.l.b16 %v5396
    %v5731 = vunpack.c.h.b16 %v5396
    %v5732 = vunpack.c.l.b16 %v5397
    %v5733 = vunpack.c.h.b16 %v5397
    %v5734 = vunpack.c.l.b16 %v5398
    %v5735 = vunpack.c.h.b16 %v5398
    %v5736 = vunpack.c.l.b16 %v5399
    %v5737 = vunpack.c.h.b16 %v5399
    %v5738 = vunpack.c.l.b16 %v5400
    %v5739 = vunpack.c.h.b16 %v5400
    %v5740 = vunpack.c.l.b16 %v5401
    %v5741 = vunpack.c.h.b16 %v5401
    %v5742 = vunpack.c.l.b16 %v5402
    %v5743 = vunpack.c.h.b16 %v5402
    %v5744 = vunpack.c.l.b16 %v5403
    %v5745 = vunpack.c.h.b16 %v5403
    %v5746 = vunpack.c.l.b16 %v5404
    %v5747 = vunpack.c.h.b16 %v5404
    %v5748 = vunpack.c.l.b16 %v5405
    %v5749 = vunpack.c.h.b16 %v5405
    %v5750 = vunpack.c.l.b16 %v5406
    %v5751 = vunpack.c.h.b16 %v5406
    %v5752 = vunpack.c.l.b16 %v5407
    %v5753 = vunpack.c.h.b16 %v5407
    %v5754 = vunpack.c.l.b16 %v5408
    %v5755 = vunpack.c.h.b16 %v5408
    %v5756 = vunpack.c.l.b16 %v5409
    %v5757 = vunpack.c.h.b16 %v5409
    %v5758 = vunpack.c.l.b16 %v5410
    %v5759 = vunpack.c.h.b16 %v5410
    %v5760 = vunpack.c.l.b16 %v5411
    %v5761 = vunpack.c.h.b16 %v5411
    %v5762 = vunpack.c.l.b16 %v5412
    %v5763 = vunpack.c.h.b16 %v5412
    %v5764 = vpack.c.b16 %v5574, %v5572
    %v5765 = vpack.c.b16 %v5575, %v5573
    %v5766 = vpack.c.b16 %v5578, %v5576
    %v5767 = vpack.c.b16 %v5579, %v5577
    %v5768 = vpack.c.b16 %v5582, %v5580
    %v5769 = vpack.c.b16 %v5583, %v5581
    %v5770 = vpack.c.b16 %v5586, %v5584
    %v5771 = vpack.c.b16 %v5587, %v5585
    %v5772 = vpack.c.b16 %v5590, %v5588
    %v5773 = vpack.c.b16 %v5591, %v5589
    %v5774 = vpack.c.b16 %v5594, %v5592
    %v5775 = vpack.c.b16 %v5595, %v5593
    %v5776 = vpack.c.b16 %v5598, %v5596
    %v5777 = vpack.c.b16 %v5599, %v5597
    %v5778 = vpack.c.b16 %v5602, %v5600
    %v5779 = vpack.c.b16 %v5603, %v5601
    %v5780 = vpack.c.b16 %v5606, %v5604
    %v5781 = vpack.c.b16 %v5607, %v5605
    %v5782 = vpack.c.b16 %v5610, %v5608
    %v5783 = vpack.c.b16 %v5611, %v5609
    %v5784 = vpack.c.b16 %v5614, %v5612
    %v5785 = vpack.c.b16 %v5615, %v5613
    %v5786 = vpack.c.b16 %v5618, %v5616
    %v5787 = vpack.c.b16 %v5619, %v5617
    %v5788 = vpack.c.b16 %v5622, %v5620
    %v5789 = vpack.c.b16 %v5623, %v5621
    %v5790 = vpack.c.b16 %v5626, %v5624
    %v5791 = vpack.c.b16 %v5627, %v5625
    %v5792 = vpack.c.b16 %v5630, %v5628
    %v5793 = vpack.c.b16 %v5631, %v5629
    %v5794 = vpack.c.b16 %v5634, %v5632
    %v5795 = vpack.c.b16 %v5635, %v5633
    %v5796 = vpack.c.b16 %v5638, %v5636
    %v5797 = vpack.c.b16 %v5639, %v5637
    %v5798 = vpack.c.b16 %v5642, %v5640
    %v5799 = vpack.c.b16 %v5643, %v5641
    %v5800 = vpack.c.b16 %v5646, %v5644
    %v5801 = vpack.c.b16 %v5647, %v5645
    %v5802 = vpack.c.b16 %v5650, %v5648
    %v5803 = vpack.c.b16 %v5651, %v5649
    %v5804 = vpack.c.b16 %v5654, %v5652
    %v5805 = vpack.c.b16 %v5655, %v5653
    %v5806 = vpack.c.b16 %v5658, %v5656
    %v5807 = vpack.c.b16 %v5659, %v5657
    %v5808 = vpack.c.b16 %v5662, %v5660
    %v5809 = vpack.c.b16 %v5663, %v5661
    %v5810 = vpack.c.b16 %v5666, %v5664
    %v5811 = vpack.c.b16 %v5667, %v5665
    %v5812 = vpack.c.b16 %v5670, %v5668
    %v5813 = vpack.c.b16 %v5671, %v5669
    %v5814 = vpack.c.b16 %v5674, %v5672
    %v5815 = vpack.c.b16 %v5675, %v5673
    %v5816 = vpack.c.b16 %v5678, %v5676
    %v5817 = vpack.c.b16 %v5679, %v5677
    %v5818 = vpack.c.b16 %v5682, %v5680
    %v5819 = vpack.c.b16 %v5683, %v5681
    %v5820 = vpack.c.b16 %v5686, %v5684
    %v5821 = vpack.c.b16 %v5687, %v5685
    %v5822 = vpack.c.b16 %v5690, %v5688
    %v5823 = vpack.c.b16 %v5691, %v5689
    %v5824 = vpack.c.b16 %v5694, %v5692
    %v5825 = vpack.c.b16 %v5695, %v5693
    %v5826 = vpack.c.b16 %v5698, %v5696
    %v5827 = vpack.c.b16 %v5699, %v5697
    %v5828 = vpack.c.b16 %v5702, %v5700
    %v5829 = vpack.c.b16 %v5703, %v5701
    %v5830 = vpack.c.b16 %v5706, %v5704
    %v5831 = vpack.c.b16 %v5707, %v5705
    %v5832 = vpack.c.b16 %v5710, %v5708
    %v5833 = vpack.c.b16 %v5711, %v5709
    %v5834 = vpack.c.b16 %v5714, %v5712
    %v5835 = vpack.c.b16 %v5715, %v5713
    %v5836 = vpack.c.b16 %v5718, %v5716
    %v5837 = vpack.c.b16 %v5719, %v5717
    %v5838 = vpack.c.b16 %v5722, %v5720
    %v5839 = vpack.c.b16 %v5723, %v5721
    %v5840 = vpack.c.b16 %v5726, %v5724
    %v5841 = vpack.c.b16 %v5727, %v5725
    %v5842 = vpack.c.b16 %v5730, %v5728
    %v5843 = vpack.c.b16 %v5731, %v5729
    %v5844 = vpack.c.b16 %v5734, %v5732
    %v5845 = vpack.c.b16 %v5735, %v5733
    %v5846 = vpack.c.b16 %v5738, %v5736
    %v5847 = vpack.c.b16 %v5739, %v5737
    %v5848 = vpack.c.b16 %v5742, %v5740
    %v5849 = vpack.c.b16 %v5743, %v5741
    %v5850 = vpack.c.b16 %v5746, %v5744
    %v5851 = vpack.c.b16 %v5747, %v5745
    %v5852 = vpack.c.b16 %v5750, %v5748
    %v5853 = vpack.c.b16 %v5751, %v5749
    %v5854 = vpack.c.b16 %v5754, %v5752
    %v5855 = vpack.c.b16 %v5755, %v5753
    %v5856 = vpack.c.b16 %v5758, %v5756
    %v5857 = vpack.c.b16 %v5759, %v5757
    %v5858 = vpack.c.b16 %v5762, %v5760
    %v5859 = vpack.c.b16 %v5763, %v5761
    %5956 = vmatprep.subr.bf16.mxu0 %v5779
    %5957 = vmatpush1.bf16.msra.mxu0 %v5778
    %5958 = vmatprep.subr.bf16.mxu0 %v5777
    %5959 = vmatpush1.bf16.msra.mxu0 %v5776
    %5960 = vmatprep.subr.bf16.mxu0 %v5775
    %5961 = vmatpush1.bf16.msra.mxu0 %v5774
    %5962 = vmatprep.subr.bf16.mxu0 %v5773
    %5963 = vmatpush1.bf16.msra.mxu0 %v5772
    %5964 = vmatprep.subr.bf16.mxu0 %v5771
    %5965 = vmatpush1.bf16.msra.mxu0 %v5770
    %5966 = vmatprep.subr.bf16.mxu0 %v5769
    %5967 = vmatpush1.bf16.msra.mxu0 %v5768
    %5968 = vmatprep.subr.bf16.mxu0 %v5767
    %5969 = vmatpush1.bf16.msra.mxu0 %v5766
    %5970 = vmatprep.subr.bf16.mxu0 %v5765
    %5971 = vmatpush1.bf16.msra.mxu0 %v5764
    %5972 = vmatprep.subr.bf16.mxu0 %v5795
    %5973 = vmatpush2.bf16.msra.mxu0 %v5794
    %5974 = vmatprep.subr.bf16.mxu0 %v5793
    %5975 = vmatpush2.bf16.msra.mxu0 %v5792
    %5976 = vmatprep.subr.bf16.mxu0 %v5791
    %5977 = vmatpush2.bf16.msra.mxu0 %v5790
    %5978 = vmatprep.subr.bf16.mxu0 %v5789
    %5979 = vmatpush2.bf16.msra.mxu0 %v5788
    %5980 = vmatprep.subr.bf16.mxu0 %v5787
    %5981 = vmatpush2.bf16.msra.mxu0 %v5786
    %5982 = vmatprep.subr.bf16.mxu0 %v5785
    %5983 = vmatpush2.bf16.msra.mxu0 %v5784
    %5984 = vmatprep.subr.bf16.mxu0 %v5783
    %5985 = vmatpush2.bf16.msra.mxu0 %v5782
    %5986 = vmatprep.subr.bf16.mxu0 %v5781
    %5987 = vmatpush2.bf16.msra.mxu0 %v5780
    %5988 = vmatprep.mubr.bf16.mxu0 %v5453
    %5989 = vmatmul.mubr.bf16.gmra.mxu0 %v5452
    %v5990 = vpop.f32.mrf.mxu0
    %v5991 = vadd.f32 %v5418, %v5990
    %v5992 = vpop.f32.mrf.mxu0
    %v5993 = vadd.f32 %v5422, %v5992
    %v5994 = vpop.f32.mrf.mxu0
    %v5995 = vadd.f32 %v5418, %v5994
    %v5996 = vpop.f32.mrf.mxu0
    %v5997 = vadd.f32 %v5422, %v5996
    %5998 = vmatprep.mubr.bf16.mxu0 %v5459
    %5999 = vmatmul.mubr.bf16.gmra.mxu0 %v5458
    %v6000 = vpop.f32.mrf.mxu0
    %v6001 = vadd.f32 %v5418, %v6000
    %v6002 = vpop.f32.mrf.mxu0
    %v6003 = vadd.f32 %v5422, %v6002
    %v6004 = vpop.f32.mrf.mxu0
    %v6005 = vpop.f32.mrf.mxu0
    %6006 = vdwg.mxu0
    %6007 = vmatprep.subr.bf16.mxu0 %v5811
    %6008 = vmatpush1.bf16.msra.mxu0 %v5810
    %6009 = vmatprep.subr.bf16.mxu0 %v5809
    %6010 = vmatpush1.bf16.msra.mxu0 %v5808
    %6011 = vmatprep.subr.bf16.mxu0 %v5807
    %6012 = vmatpush1.bf16.msra.mxu0 %v5806
    %6013 = vmatprep.subr.bf16.mxu0 %v5805
    %6014 = vmatpush1.bf16.msra.mxu0 %v5804
    %6015 = vmatprep.subr.bf16.mxu0 %v5803
    %6016 = vmatpush1.bf16.msra.mxu0 %v5802
    %6017 = vmatprep.subr.bf16.mxu0 %v5801
    %6018 = vmatpush1.bf16.msra.mxu0 %v5800
    %6019 = vmatprep.subr.bf16.mxu0 %v5799
    %6020 = vmatpush1.bf16.msra.mxu0 %v5798
    %6021 = vmatprep.subr.bf16.mxu0 %v5797
    %6022 = vmatpush1.bf16.msra.mxu0 %v5796
    %6023 = vmatprep.subr.bf16.mxu0 %v5827
    %6024 = vmatpush2.bf16.msra.mxu0 %v5826
    %6025 = vmatprep.subr.bf16.mxu0 %v5825
    %6026 = vmatpush2.bf16.msra.mxu0 %v5824
    %6027 = vmatprep.subr.bf16.mxu0 %v5823
    %6028 = vmatpush2.bf16.msra.mxu0 %v5822
    %6029 = vmatprep.subr.bf16.mxu0 %v5821
    %6030 = vmatpush2.bf16.msra.mxu0 %v5820
    %6031 = vmatprep.subr.bf16.mxu0 %v5819
    %6032 = vmatpush2.bf16.msra.mxu0 %v5818
    %6033 = vmatprep.subr.bf16.mxu0 %v5817
    %6034 = vmatpush2.bf16.msra.mxu0 %v5816
    %6035 = vmatprep.subr.bf16.mxu0 %v5815
    %6036 = vmatpush2.bf16.msra.mxu0 %v5814
    %6037 = vmatprep.subr.bf16.mxu0 %v5813
    %6038 = vmatpush2.bf16.msra.mxu0 %v5812
    %6039 = vmatprep.mubr.bf16.mxu0 %v5455
    %6040 = vmatmul.mubr.bf16.gmra.mxu0 %v5454
    %v6041 = vpop.f32.mrf.mxu0
    %v6042 = vadd.f32 %v5991, %v6041
    %v6043 = vpop.f32.mrf.mxu0
    %v6044 = vadd.f32 %v5993, %v6043
    %v6045 = vpop.f32.mrf.mxu0
    %v6046 = vadd.f32 %v5995, %v6045
    %v6047 = vpop.f32.mrf.mxu0
    %v6048 = vadd.f32 %v5997, %v6047
    %6049 = vmatprep.mubr.bf16.mxu0 %v5461
    %6050 = vmatmul.mubr.bf16.gmra.mxu0 %v5460
    %v6051 = vpop.f32.mrf.mxu0
    %v6052 = vadd.f32 %v6001, %v6051
    %v6053 = vpop.f32.mrf.mxu0
    %v6054 = vadd.f32 %v6003, %v6053
    %v6055 = vpop.f32.mrf.mxu0
    %v6056 = vpop.f32.mrf.mxu0
    %6057 = vdwg.mxu0
    %6058 = vmatprep.subr.bf16.mxu0 %v5843
    %6059 = vmatpush1.bf16.msra.mxu0 %v5842
    %6060 = vmatprep.subr.bf16.mxu0 %v5841
    %6061 = vmatpush1.bf16.msra.mxu0 %v5840
    %6062 = vmatprep.subr.bf16.mxu0 %v5839
    %6063 = vmatpush1.bf16.msra.mxu0 %v5838
    %6064 = vmatprep.subr.bf16.mxu0 %v5837
    %6065 = vmatpush1.bf16.msra.mxu0 %v5836
    %6066 = vmatprep.subr.bf16.mxu0 %v5835
    %6067 = vmatpush1.bf16.msra.mxu0 %v5834
    %6068 = vmatprep.subr.bf16.mxu0 %v5833
    %6069 = vmatpush1.bf16.msra.mxu0 %v5832
    %6070 = vmatprep.subr.bf16.mxu0 %v5831
    %6071 = vmatpush1.bf16.msra.mxu0 %v5830
    %6072 = vmatprep.subr.bf16.mxu0 %v5829
    %6073 = vmatpush1.bf16.msra.mxu0 %v5828
    %6074 = vmatprep.subr.bf16.mxu0 %v5859
    %6075 = vmatpush2.bf16.msra.mxu0 %v5858
    %6076 = vmatprep.subr.bf16.mxu0 %v5857
    %6077 = vmatpush2.bf16.msra.mxu0 %v5856
    %6078 = vmatprep.subr.bf16.mxu0 %v5855
    %6079 = vmatpush2.bf16.msra.mxu0 %v5854
    %6080 = vmatprep.subr.bf16.mxu0 %v5853
    %6081 = vmatpush2.bf16.msra.mxu0 %v5852
    %6082 = vmatprep.subr.bf16.mxu0 %v5851
    %6083 = vmatpush2.bf16.msra.mxu0 %v5850
    %6084 = vmatprep.subr.bf16.mxu0 %v5849
    %6085 = vmatpush2.bf16.msra.mxu0 %v5848
    %6086 = vmatprep.subr.bf16.mxu0 %v5847
    %6087 = vmatpush2.bf16.msra.mxu0 %v5846
    %6088 = vmatprep.subr.bf16.mxu0 %v5845
    %6089 = vmatpush2.bf16.msra.mxu0 %v5844
    %6090 = vmatprep.mubr.bf16.mxu0 %v5457
    %6091 = vmatmul.mubr.bf16.gmra.mxu0 %v5456
    %v6092 = vpop.f32.mrf.mxu0
    %v6093 = vadd.f32 %v6042, %v6092
    %v6094 = vpop.f32.mrf.mxu0
    %v6095 = vadd.f32 %v6044, %v6094
    %v6096 = vpop.f32.mrf.mxu0
    %v6097 = vadd.f32 %v6046, %v6096
    %v6098 = vpop.f32.mrf.mxu0
    %v6099 = vadd.f32 %v6048, %v6098
    %6100 = vmatprep.mubr.bf16.mxu0 %v5463
    %6101 = vmatmul.mubr.bf16.gmra.mxu0 %v5462
    %v6102 = vpop.f32.mrf.mxu0
    %v6103 = vadd.f32 %v6052, %v6102
    %v6104 = vpop.f32.mrf.mxu0
    %v6105 = vadd.f32 %v6054, %v6104
    %v6106 = vpop.f32.mrf.mxu0
    %v6107 = vpop.f32.mrf.mxu0
    %6108 = vdwg.mxu0
    %v6109 = vmul.f32 %v6093, 0.2
    %v6110 = vmul.f32 %v6095, 0.2
    %v6111 = vmul.f32 %v6097, 0.2
    %v6112 = vmul.f32 %v6099, 0.2
    %v6113 = vmul.f32 %v6103, 0.2
    %v6114 = vmul.f32 %v6105, 0.2
    %v6115 = vmax.f32 %v6093, %v6109
    %v6116 = vmax.f32 %v6095, %v6110
    %v6117 = vmax.f32 %v6097, %v6111
    %v6118 = vmax.f32 %v6099, %v6112
    %v6119 = vmax.f32 %v6103, %v6113
    %v6120 = vmax.f32 %v6105, %v6114
    %v6121 = vld [vmem:[%s19] sm:$0xff]
    %v6122 = vld [vmem:[%s19 + $0x8] sm:$0xf]
    %vm6123 = vcmask 146432
    %v6125 = vsel %vm6123, %v6121, 0
    %v6128 = vsel %vm6123, %v6122, 0
    %vm6130 = vcmask 1041408
    %v6132 = vsel %vm6130, %v6119, 0
    %v6135 = vsel %vm6130, %v6120, 0
    %6137 = vmatprep.subr.mxu0 0.0
    %6138 = vmatpush1.msra.mxu0 0.0
    %6139 = vmatprep.subr.mxu0 0.0
    %6140 = vmatpush1.msra.mxu0 0.0
    %6141 = vmatprep.subr.mxu0 0.0
    %6142 = vmatpush1.msra.mxu0 0.0
    %6143 = vmatprep.subr.mxu0 0.0
    %6144 = vmatpush1.msra.mxu0 0.0
    %6145 = vmatprep.subr.mxu0 0.0
    %6146 = vmatpush1.msra.mxu0 0.0
    %6147 = vmatprep.subr.mxu0 0.0
    %6148 = vmatpush1.msra.mxu0 0.0
    %6149 = vmatprep.subr.mxu0 0.0
    %6150 = vmatpush1.msra.mxu0 0.0
    %6151 = vmatprep.subr.mxu0 0.0
    %6152 = vmatpush1.msra.mxu0 0.0
    %6153 = vmatprep.subr.mxu0 0.0
    %6154 = vmatpush1.msra.mxu0 0.0
    %6155 = vmatprep.subr.mxu0 0.0
    %6156 = vmatpush1.msra.mxu0 0.0
    %6157 = vmatprep.subr.mxu0 0.0
    %6158 = vmatpush1.msra.mxu0 0.0
    %6159 = vmatprep.subr.mxu0 0.0
    %6160 = vmatpush1.msra.mxu0 0.0
    %6161 = vmatprep.subr.mxu0 0.0
    %6162 = vmatpush1.msra.mxu0 0.0
    %6163 = vmatprep.subr.mxu0 %v6135
    %6164 = vmatpush1.msra.mxu0 %v6132
    %6165 = vmatprep.subr.mxu0 %v6118
    %6166 = vmatpush1.msra.mxu0 %v6117
    %6167 = vmatprep.subr.mxu0 %v6116
    %6168 = vmatpush1.msra.mxu0 %v6115
    %6169 = vmatprep.subr.mxu0 0.0
    %6170 = vmatpush2.msra.mxu0 0.0
    %6171 = vmatprep.subr.mxu0 0.0
    %6172 = vmatpush2.msra.mxu0 0.0
    %6173 = vmatprep.subr.mxu0 0.0
    %6174 = vmatpush2.msra.mxu0 0.0
    %6175 = vmatprep.subr.mxu0 0.0
    %6176 = vmatpush2.msra.mxu0 0.0
    %6177 = vmatprep.subr.mxu0 0.0
    %6178 = vmatpush2.msra.mxu0 0.0
    %6179 = vmatprep.subr.mxu0 0.0
    %6180 = vmatpush2.msra.mxu0 0.0
    %6181 = vmatprep.subr.mxu0 0.0
    %6182 = vmatpush2.msra.mxu0 0.0
    %6183 = vmatprep.subr.mxu0 0.0
    %6184 = vmatpush2.msra.mxu0 0.0
    %6185 = vmatprep.subr.mxu0 0.0
    %6186 = vmatpush2.msra.mxu0 0.0
    %6187 = vmatprep.subr.mxu0 0.0
    %6188 = vmatpush2.msra.mxu0 0.0
    %6189 = vmatprep.subr.mxu0 0.0
    %6190 = vmatpush2.msra.mxu0 0.0
    %6191 = vmatprep.subr.mxu0 0.0
    %6192 = vmatpush2.msra.mxu0 0.0
    %6193 = vmatprep.subr.mxu0 0.0
    %6194 = vmatpush2.msra.mxu0 0.0
    %6195 = vmatprep.subr.mxu0 0.0
    %6196 = vmatpush2.msra.mxu0 0.0
    %6197 = vmatprep.subr.mxu0 0.0
    %6198 = vmatpush2.msra.mxu0 0.0
    %6199 = vmatprep.subr.mxu0 0.0
    %6200 = vmatpush2.msra.mxu0 0.0
    %6201 = vmatprep.mubr.f32.mxu0 0.0
    %6202 = vmatmul.mubr.f32.gmra.mxu0 %v6125
    %v6203 = vpop.f32.mrf.mxu0
    %v6204 = vadd.f32 0.0, %v6203
    %v6205 = vpop.f32.mrf.mxu0
    %v6206 = vadd.f32 0.0, %v6205
    %6207 = vmatprep.mubr.f32.mxu0 0.0
    %6208 = vmatmul.mubr.f32.gmra.mxu0 %v6128
    %v6209 = vpop.f32.mrf.mxu0
    %v6210 = vadd.f32 0.0, %v6209
    %v6211 = vpop.f32.mrf.mxu0
    %v6212 = vadd.f32 0.0, %v6211
    %6213 = vdwg.mxu0
    %6214 = vst [vmem:[#allocation6] sm:$0xff] %v6204
    %6215 = vst [vmem:[#allocation6 + $0x8] sm:$0xff] %v6206
    %6216 = vst [vmem:[#allocation6 + $0x10] sm:$0xf] %v6210
    %6217 = vst [vmem:[#allocation6 + $0x18] sm:$0xf] %v6212
    %v6218 = vld [vmem:[#allocation6] sm:$0xff]
    %v6219 = vld [vmem:[#allocation6 + $0x8] sm:$0xff]
    %v6220 = vld [vmem:[#allocation6 + $0x10] sm:$0x3]
    %v6221 = vld [vmem:[#allocation6 + $0x18] sm:$0x3]
    %v6222 = vpack.c.bf16 %v6220, %v6218
    %v6223 = vpack.c.bf16 %v6221, %v6219
    %v6226 = vunpack.c.l.b16 %v6222
    %v6227 = vunpack.c.l.b16 %v6223
    %v6228 = vunpack.c.h.b16 %v6222
    %v6229 = vunpack.c.h.b16 %v6223
    %v6230 = vpack.c.b16 %v6227, %v6226
    %v6231 = vpack.c.b16 %v6229, %v6228
    %6234 = vst [vmem:[#allocation7] sm:$0xff] %v6230
    %6235 = vst [vmem:[#allocation7 + $0x18] sm:$0x11] %v6231
    %v6236 = vld [vmem:[#allocation6] sm:$0xfe]
    %v6237 = vld [vmem:[#allocation6 + $0x8] sm:$0xfe]
    %v6238 = vld [vmem:[#allocation6 + $0x10] sm:$0x7]
    %v6239 = vld [vmem:[#allocation6 + $0x18] sm:$0x7]
    %v6240 = vpack.c.bf16 %v6238, %v6236
    %v6241 = vpack.c.bf16 %v6239, %v6237
    %v6244 = vunpack.c.l.b16 %v6240
    %v6245 = vunpack.c.l.b16 %v6241
    %v6246 = vunpack.c.h.b16 %v6240
    %v6247 = vunpack.c.h.b16 %v6241
    %v6248 = vpack.c.b16 %v6245, %v6244
    %v6249 = vpack.c.b16 %v6247, %v6246
    %v6251 = vshrl.u32 %v6248, 16
    %v6253 = vrot.slane %v6251, 4
    %v6254 = vshll.u32 %v6248, 16
    %v6256 = vrot.slane %v6254, 5
    %v6257 = vor.u32 %v6253, %v6256
    %v6258 = vrot.slane %v6257, 4
    %v6260 = vshll.u32 %v6249, 16
    %v6262 = vrot.slane %v6260, 5
    %v6263 = vsel %vm3381, %v6258, %v6262
    %v6264 = vshrl.u32 %v6249, 16
    %v6266 = vrot.slane %v6264, 4
    %v6267 = vor.u32 %v6266, %v6262
    %v6268 = vrot.slane %v6267, 4
    %6271 = vst [vmem:[#allocation7 + $0x8] sm:$0xff] %v6263
    %6272 = vst [vmem:[#allocation7 + $0x20] sm:$0x11] %v6268
    %v6273 = vld [vmem:[#allocation6] sm:$0xfc]
    %v6274 = vld [vmem:[#allocation6 + $0x8] sm:$0xfc]
    %v6275 = vld [vmem:[#allocation6 + $0x10] sm:$0xf]
    %v6276 = vld [vmem:[#allocation6 + $0x18] sm:$0xf]
    %v6277 = vpack.c.bf16 %v6275, %v6273
    %v6278 = vpack.c.bf16 %v6276, %v6274
    %v6281 = vunpack.c.l.b16 %v6277
    %v6282 = vunpack.c.l.b16 %v6278
    %v6283 = vunpack.c.h.b16 %v6277
    %v6284 = vunpack.c.h.b16 %v6278
    %v6285 = vpack.c.b16 %v6282, %v6281
    %v6286 = vpack.c.b16 %v6284, %v6283
    %v6287 = vrot.slane %v6285, 5
    %v6288 = vrot.slane %v6287, 4
    %v6289 = vrot.slane %v6286, 5
    %v6290 = vsel %vm3500, %v6288, %v6289
    %v6291 = vrot.slane %v6289, 4
    %6294 = vst [vmem:[#allocation7 + $0x10] sm:$0xff] %v6290
    %6295 = vst [vmem:[#allocation7 + $0x28] sm:$0x11] %v6291
    %v6296 = vld [vmem:[#allocation7] sm:$0xff]
    %v6297 = vld [vmem:[#allocation7 + $0x8] sm:$0xff]
    %v6298 = vld [vmem:[#allocation7 + $0x10] sm:$0xff]
    %v6299 = vld [vmem:[#allocation7 + $0x18] sm:$0x11]
    %v6300 = vld [vmem:[#allocation7 + $0x20] sm:$0x11]
    %v6301 = vld [vmem:[#allocation7 + $0x28] sm:$0x11]
    %v6302 = vld [vmem:[#allocation20] sm:$0xff]
    %v6303 = vld [vmem:[#allocation20 + $0x8] sm:$0xff]
    %v6304 = vld [vmem:[#allocation20 + $0x10] sm:$0xff]
    %v6305 = vld [vmem:[#allocation20 + $0x18] sm:$0xff]
    %v6306 = vld [vmem:[#allocation20 + $0x20] sm:$0xff]
    %v6307 = vld [vmem:[#allocation20 + $0x28] sm:$0xff]
    %v6308 = vld [vmem:[#allocation20 + $0x30] sm:$0xff]
    %v6309 = vld [vmem:[#allocation20 + $0x38] sm:$0xff]
    %v6310 = vld [vmem:[#allocation20 + $0x40] sm:$0xff]
    %v6311 = vld [vmem:[#allocation20 + $0x48] sm:$0xff]
    %v6312 = vld [vmem:[#allocation20 + $0x50] sm:$0xff]
    %v6313 = vld [vmem:[#allocation20 + $0x58] sm:$0xff]
    %v6314 = vld [vmem:[#allocation20 + $0x60] sm:$0xff]
    %v6315 = vld [vmem:[#allocation20 + $0x68] sm:$0xff]
    %v6316 = vld [vmem:[#allocation20 + $0x70] sm:$0xff]
    %v6317 = vld [vmem:[#allocation20 + $0x78] sm:$0xff]
    %v6318 = vld [vmem:[#allocation20 + $0x80] sm:$0xff]
    %v6319 = vld [vmem:[#allocation20 + $0x88] sm:$0xff]
    %v6320 = vld [vmem:[#allocation20 + $0x90] sm:$0xff]
    %v6321 = vld [vmem:[#allocation20 + $0x98] sm:$0xff]
    %v6322 = vld [vmem:[#allocation20 + $0xa0] sm:$0xff]
    %v6323 = vld [vmem:[#allocation20 + $0xa8] sm:$0xff]
    %v6324 = vld [vmem:[#allocation20 + $0xb0] sm:$0xff]
    %v6325 = vld [vmem:[#allocation20 + $0xb8] sm:$0xff]
    %v6326 = vld [vmem:[#allocation20 + $0xc0] sm:$0xff]
    %v6327 = vld [vmem:[#allocation20 + $0xc8] sm:$0xff]
    %v6328 = vld [vmem:[#allocation20 + $0xd0] sm:$0xff]
    %v6329 = vld [vmem:[#allocation20 + $0xd8] sm:$0xff]
    %v6330 = vld [vmem:[#allocation20 + $0xe0] sm:$0xff]
    %v6331 = vld [vmem:[#allocation20 + $0xe8] sm:$0xff]
    %v6332 = vld [vmem:[#allocation20 + $0xf0] sm:$0xff]
    %v6333 = vld [vmem:[#allocation20 + $0xf8] sm:$0xff]
    %v6334 = vld [vmem:[#allocation20 + $0x100] sm:$0xff]
    %v6335 = vld [vmem:[#allocation20 + $0x108] sm:$0xff]
    %v6336 = vld [vmem:[#allocation20 + $0x110] sm:$0xff]
    %v6337 = vld [vmem:[#allocation20 + $0x118] sm:$0xff]
    %v6338 = vld [vmem:[#allocation20 + $0x120] sm:$0xff]
    %v6339 = vld [vmem:[#allocation20 + $0x128] sm:$0xff]
    %v6340 = vld [vmem:[#allocation20 + $0x130] sm:$0xff]
    %v6341 = vld [vmem:[#allocation20 + $0x138] sm:$0xff]
    %v6342 = vld [vmem:[#allocation20 + $0x140] sm:$0xff]
    %v6343 = vld [vmem:[#allocation20 + $0x148] sm:$0xff]
    %v6344 = vld [vmem:[#allocation20 + $0x150] sm:$0xff]
    %v6345 = vld [vmem:[#allocation20 + $0x158] sm:$0xff]
    %v6346 = vld [vmem:[#allocation20 + $0x160] sm:$0xff]
    %v6347 = vld [vmem:[#allocation20 + $0x168] sm:$0xff]
    %v6348 = vld [vmem:[#allocation20 + $0x170] sm:$0xff]
    %v6349 = vld [vmem:[#allocation20 + $0x178] sm:$0xff]
    %v6350 = vld [vmem:[#allocation20 + $0x180] sm:$0xff]
    %v6351 = vld [vmem:[#allocation20 + $0x188] sm:$0xff]
    %v6352 = vld [vmem:[#allocation20 + $0x190] sm:$0xff]
    %v6353 = vld [vmem:[#allocation20 + $0x198] sm:$0xff]
    %v6354 = vld [vmem:[#allocation20 + $0x1a0] sm:$0xff]
    %v6355 = vld [vmem:[#allocation20 + $0x1a8] sm:$0xff]
    %v6356 = vld [vmem:[#allocation20 + $0x1b0] sm:$0xff]
    %v6357 = vld [vmem:[#allocation20 + $0x1b8] sm:$0xff]
    %v6358 = vld [vmem:[#allocation20 + $0x1c0] sm:$0xff]
    %v6359 = vld [vmem:[#allocation20 + $0x1c8] sm:$0xff]
    %v6360 = vld [vmem:[#allocation20 + $0x1d0] sm:$0xff]
    %v6361 = vld [vmem:[#allocation20 + $0x1d8] sm:$0xff]
    %v6362 = vld [vmem:[#allocation20 + $0x1e0] sm:$0xff]
    %v6363 = vld [vmem:[#allocation20 + $0x1e8] sm:$0xff]
    %v6364 = vld [vmem:[#allocation20 + $0x1f0] sm:$0xff]
    %v6365 = vld [vmem:[#allocation20 + $0x1f8] sm:$0xff]
    %v6366 = vld [vmem:[#allocation20 + $0x200] sm:$0xff]
    %v6367 = vld [vmem:[#allocation20 + $0x208] sm:$0xff]
    %v6368 = vld [vmem:[#allocation20 + $0x210] sm:$0xff]
    %v6369 = vld [vmem:[#allocation20 + $0x218] sm:$0xff]
    %v6370 = vld [vmem:[#allocation20 + $0x220] sm:$0xff]
    %v6371 = vld [vmem:[#allocation20 + $0x228] sm:$0xff]
    %v6372 = vld [vmem:[#allocation20 + $0x230] sm:$0xff]
    %v6373 = vld [vmem:[#allocation20 + $0x238] sm:$0xff]
    %v6374 = vld [vmem:[#allocation20 + $0x240] sm:$0xff]
    %v6375 = vld [vmem:[#allocation20 + $0x248] sm:$0xff]
    %v6376 = vld [vmem:[#allocation20 + $0x250] sm:$0xff]
    %v6377 = vld [vmem:[#allocation20 + $0x258] sm:$0xff]
    %v6378 = vld [vmem:[#allocation20 + $0x260] sm:$0xff]
    %v6379 = vld [vmem:[#allocation20 + $0x268] sm:$0xff]
    %v6380 = vld [vmem:[#allocation20 + $0x270] sm:$0xff]
    %v6381 = vld [vmem:[#allocation20 + $0x278] sm:$0xff]
    %v6382 = vld [vmem:[#allocation20 + $0x280] sm:$0xff]
    %v6383 = vld [vmem:[#allocation20 + $0x288] sm:$0xff]
    %v6384 = vld [vmem:[#allocation20 + $0x290] sm:$0xff]
    %v6385 = vld [vmem:[#allocation20 + $0x298] sm:$0xff]
    %v6386 = vld [vmem:[#allocation20 + $0x2a0] sm:$0xff]
    %v6387 = vld [vmem:[#allocation20 + $0x2a8] sm:$0xff]
    %v6388 = vld [vmem:[#allocation20 + $0x2b0] sm:$0xff]
    %v6389 = vld [vmem:[#allocation20 + $0x2b8] sm:$0xff]
    %v6390 = vld [vmem:[#allocation20 + $0x2c0] sm:$0xff]
    %v6391 = vld [vmem:[#allocation20 + $0x2c8] sm:$0xff]
    %v6392 = vld [vmem:[#allocation20 + $0x2d0] sm:$0xff]
    %v6393 = vld [vmem:[#allocation20 + $0x2d8] sm:$0xff]
    %v6394 = vld [vmem:[#allocation20 + $0x2e0] sm:$0xff]
    %v6395 = vld [vmem:[#allocation20 + $0x2e8] sm:$0xff]
    %v6396 = vld [vmem:[#allocation20 + $0x2f0] sm:$0xff]
    %v6397 = vld [vmem:[#allocation20 + $0x2f8] sm:$0xff]
    %v6398 = vld [vmem:[%s23] sm:$0x3]
    %v6400 = vlaneseq
    %v6401 = vshrl.u32 %v6400, 7
    %v6402 = vsub.s32 0, %v6401
    %v6403 = vrot.slane %v6398, %v6402
    %v6404 = vlaneseq
    %v6405 = vshrl.u32 %v6404, 7
    %v6406 = vsub.s32 1, %v6405
    %v6407 = vrot.slane %v6398, %v6406
    %v6416 = vunpack.c.l.b16 %v6296
    %v6417 = vunpack.c.h.b16 %v6296
    %v6418 = vunpack.c.l.b16 %v6297
    %v6419 = vunpack.c.h.b16 %v6297
    %v6420 = vunpack.c.l.b16 %v6298
    %v6421 = vunpack.c.h.b16 %v6298
    %v6422 = vunpack.c.l.b16 %v6299
    %v6423 = vunpack.c.h.b16 %v6299
    %v6424 = vunpack.c.l.b16 %v6300
    %v6425 = vunpack.c.h.b16 %v6300
    %v6426 = vunpack.c.l.b16 %v6301
    %v6427 = vunpack.c.h.b16 %v6301
    %v6428 = vpack.c.b16 %v6422, %v6416
    %v6429 = vpack.c.b16 %v6423, %v6417
    %v6430 = vpack.c.b16 %v6424, %v6418
    %v6431 = vpack.c.b16 %v6425, %v6419
    %v6432 = vpack.c.b16 %v6426, %v6420
    %v6433 = vpack.c.b16 %v6427, %v6421
    %v6536 = vunpack.c.l.b16 %v6302
    %v6537 = vunpack.c.h.b16 %v6302
    %v6538 = vunpack.c.l.b16 %v6303
    %v6539 = vunpack.c.h.b16 %v6303
    %v6540 = vunpack.c.l.b16 %v6304
    %v6541 = vunpack.c.h.b16 %v6304
    %v6542 = vunpack.c.l.b16 %v6305
    %v6543 = vunpack.c.h.b16 %v6305
    %v6544 = vunpack.c.l.b16 %v6306
    %v6545 = vunpack.c.h.b16 %v6306
    %v6546 = vunpack.c.l.b16 %v6307
    %v6547 = vunpack.c.h.b16 %v6307
    %v6548 = vunpack.c.l.b16 %v6308
    %v6549 = vunpack.c.h.b16 %v6308
    %v6550 = vunpack.c.l.b16 %v6309
    %v6551 = vunpack.c.h.b16 %v6309
    %v6552 = vunpack.c.l.b16 %v6310
    %v6553 = vunpack.c.h.b16 %v6310
    %v6554 = vunpack.c.l.b16 %v6311
    %v6555 = vunpack.c.h.b16 %v6311
    %v6556 = vunpack.c.l.b16 %v6312
    %v6557 = vunpack.c.h.b16 %v6312
    %v6558 = vunpack.c.l.b16 %v6313
    %v6559 = vunpack.c.h.b16 %v6313
    %v6560 = vunpack.c.l.b16 %v6314
    %v6561 = vunpack.c.h.b16 %v6314
    %v6562 = vunpack.c.l.b16 %v6315
    %v6563 = vunpack.c.h.b16 %v6315
    %v6564 = vunpack.c.l.b16 %v6316
    %v6565 = vunpack.c.h.b16 %v6316
    %v6566 = vunpack.c.l.b16 %v6317
    %v6567 = vunpack.c.h.b16 %v6317
    %v6568 = vunpack.c.l.b16 %v6318
    %v6569 = vunpack.c.h.b16 %v6318
    %v6570 = vunpack.c.l.b16 %v6319
    %v6571 = vunpack.c.h.b16 %v6319
    %v6572 = vunpack.c.l.b16 %v6320
    %v6573 = vunpack.c.h.b16 %v6320
    %v6574 = vunpack.c.l.b16 %v6321
    %v6575 = vunpack.c.h.b16 %v6321
    %v6576 = vunpack.c.l.b16 %v6322
    %v6577 = vunpack.c.h.b16 %v6322
    %v6578 = vunpack.c.l.b16 %v6323
    %v6579 = vunpack.c.h.b16 %v6323
    %v6580 = vunpack.c.l.b16 %v6324
    %v6581 = vunpack.c.h.b16 %v6324
    %v6582 = vunpack.c.l.b16 %v6325
    %v6583 = vunpack.c.h.b16 %v6325
    %v6584 = vunpack.c.l.b16 %v6326
    %v6585 = vunpack.c.h.b16 %v6326
    %v6586 = vunpack.c.l.b16 %v6327
    %v6587 = vunpack.c.h.b16 %v6327
    %v6588 = vunpack.c.l.b16 %v6328
    %v6589 = vunpack.c.h.b16 %v6328
    %v6590 = vunpack.c.l.b16 %v6329
    %v6591 = vunpack.c.h.b16 %v6329
    %v6592 = vunpack.c.l.b16 %v6330
    %v6593 = vunpack.c.h.b16 %v6330
    %v6594 = vunpack.c.l.b16 %v6331
    %v6595 = vunpack.c.h.b16 %v6331
    %v6596 = vunpack.c.l.b16 %v6332
    %v6597 = vunpack.c.h.b16 %v6332
    %v6598 = vunpack.c.l.b16 %v6333
    %v6599 = vunpack.c.h.b16 %v6333
    %v6600 = vunpack.c.l.b16 %v6334
    %v6601 = vunpack.c.h.b16 %v6334
    %v6602 = vunpack.c.l.b16 %v6335
    %v6603 = vunpack.c.h.b16 %v6335
    %v6604 = vunpack.c.l.b16 %v6336
    %v6605 = vunpack.c.h.b16 %v6336
    %v6606 = vunpack.c.l.b16 %v6337
    %v6607 = vunpack.c.h.b16 %v6337
    %v6608 = vunpack.c.l.b16 %v6338
    %v6609 = vunpack.c.h.b16 %v6338
    %v6610 = vunpack.c.l.b16 %v6339
    %v6611 = vunpack.c.h.b16 %v6339
    %v6612 = vunpack.c.l.b16 %v6340
    %v6613 = vunpack.c.h.b16 %v6340
    %v6614 = vunpack.c.l.b16 %v6341
    %v6615 = vunpack.c.h.b16 %v6341
    %v6616 = vunpack.c.l.b16 %v6342
    %v6617 = vunpack.c.h.b16 %v6342
    %v6618 = vunpack.c.l.b16 %v6343
    %v6619 = vunpack.c.h.b16 %v6343
    %v6620 = vunpack.c.l.b16 %v6344
    %v6621 = vunpack.c.h.b16 %v6344
    %v6622 = vunpack.c.l.b16 %v6345
    %v6623 = vunpack.c.h.b16 %v6345
    %v6624 = vunpack.c.l.b16 %v6346
    %v6625 = vunpack.c.h.b16 %v6346
    %v6626 = vunpack.c.l.b16 %v6347
    %v6627 = vunpack.c.h.b16 %v6347
    %v6628 = vunpack.c.l.b16 %v6348
    %v6629 = vunpack.c.h.b16 %v6348
    %v6630 = vunpack.c.l.b16 %v6349
    %v6631 = vunpack.c.h.b16 %v6349
    %v6632 = vunpack.c.l.b16 %v6350
    %v6633 = vunpack.c.h.b16 %v6350
    %v6634 = vunpack.c.l.b16 %v6351
    %v6635 = vunpack.c.h.b16 %v6351
    %v6636 = vunpack.c.l.b16 %v6352
    %v6637 = vunpack.c.h.b16 %v6352
    %v6638 = vunpack.c.l.b16 %v6353
    %v6639 = vunpack.c.h.b16 %v6353
    %v6640 = vunpack.c.l.b16 %v6354
    %v6641 = vunpack.c.h.b16 %v6354
    %v6642 = vunpack.c.l.b16 %v6355
    %v6643 = vunpack.c.h.b16 %v6355
    %v6644 = vunpack.c.l.b16 %v6356
    %v6645 = vunpack.c.h.b16 %v6356
    %v6646 = vunpack.c.l.b16 %v6357
    %v6647 = vunpack.c.h.b16 %v6357
    %v6648 = vunpack.c.l.b16 %v6358
    %v6649 = vunpack.c.h.b16 %v6358
    %v6650 = vunpack.c.l.b16 %v6359
    %v6651 = vunpack.c.h.b16 %v6359
    %v6652 = vunpack.c.l.b16 %v6360
    %v6653 = vunpack.c.h.b16 %v6360
    %v6654 = vunpack.c.l.b16 %v6361
    %v6655 = vunpack.c.h.b16 %v6361
    %v6656 = vunpack.c.l.b16 %v6362
    %v6657 = vunpack.c.h.b16 %v6362
    %v6658 = vunpack.c.l.b16 %v6363
    %v6659 = vunpack.c.h.b16 %v6363
    %v6660 = vunpack.c.l.b16 %v6364
    %v6661 = vunpack.c.h.b16 %v6364
    %v6662 = vunpack.c.l.b16 %v6365
    %v6663 = vunpack.c.h.b16 %v6365
    %v6664 = vunpack.c.l.b16 %v6366
    %v6665 = vunpack.c.h.b16 %v6366
    %v6666 = vunpack.c.l.b16 %v6367
    %v6667 = vunpack.c.h.b16 %v6367
    %v6668 = vunpack.c.l.b16 %v6368
    %v6669 = vunpack.c.h.b16 %v6368
    %v6670 = vunpack.c.l.b16 %v6369
    %v6671 = vunpack.c.h.b16 %v6369
    %v6672 = vunpack.c.l.b16 %v6370
    %v6673 = vunpack.c.h.b16 %v6370
    %v6674 = vunpack.c.l.b16 %v6371
    %v6675 = vunpack.c.h.b16 %v6371
    %v6676 = vunpack.c.l.b16 %v6372
    %v6677 = vunpack.c.h.b16 %v6372
    %v6678 = vunpack.c.l.b16 %v6373
    %v6679 = vunpack.c.h.b16 %v6373
    %v6680 = vunpack.c.l.b16 %v6374
    %v6681 = vunpack.c.h.b16 %v6374
    %v6682 = vunpack.c.l.b16 %v6375
    %v6683 = vunpack.c.h.b16 %v6375
    %v6684 = vunpack.c.l.b16 %v6376
    %v6685 = vunpack.c.h.b16 %v6376
    %v6686 = vunpack.c.l.b16 %v6377
    %v6687 = vunpack.c.h.b16 %v6377
    %v6688 = vunpack.c.l.b16 %v6378
    %v6689 = vunpack.c.h.b16 %v6378
    %v6690 = vunpack.c.l.b16 %v6379
    %v6691 = vunpack.c.h.b16 %v6379
    %v6692 = vunpack.c.l.b16 %v6380
    %v6693 = vunpack.c.h.b16 %v6380
    %v6694 = vunpack.c.l.b16 %v6381
    %v6695 = vunpack.c.h.b16 %v6381
    %v6696 = vunpack.c.l.b16 %v6382
    %v6697 = vunpack.c.h.b16 %v6382
    %v6698 = vunpack.c.l.b16 %v6383
    %v6699 = vunpack.c.h.b16 %v6383
    %v6700 = vunpack.c.l.b16 %v6384
    %v6701 = vunpack.c.h.b16 %v6384
    %v6702 = vunpack.c.l.b16 %v6385
    %v6703 = vunpack.c.h.b16 %v6385
    %v6704 = vunpack.c.l.b16 %v6386
    %v6705 = vunpack.c.h.b16 %v6386
    %v6706 = vunpack.c.l.b16 %v6387
    %v6707 = vunpack.c.h.b16 %v6387
    %v6708 = vunpack.c.l.b16 %v6388
    %v6709 = vunpack.c.h.b16 %v6388
    %v6710 = vunpack.c.l.b16 %v6389
    %v6711 = vunpack.c.h.b16 %v6389
    %v6712 = vunpack.c.l.b16 %v6390
    %v6713 = vunpack.c.h.b16 %v6390
    %v6714 = vunpack.c.l.b16 %v6391
    %v6715 = vunpack.c.h.b16 %v6391
    %v6716 = vunpack.c.l.b16 %v6392
    %v6717 = vunpack.c.h.b16 %v6392
    %v6718 = vunpack.c.l.b16 %v6393
    %v6719 = vunpack.c.h.b16 %v6393
    %v6720 = vunpack.c.l.b16 %v6394
    %v6721 = vunpack.c.h.b16 %v6394
    %v6722 = vunpack.c.l.b16 %v6395
    %v6723 = vunpack.c.h.b16 %v6395
    %v6724 = vunpack.c.l.b16 %v6396
    %v6725 = vunpack.c.h.b16 %v6396
    %v6726 = vunpack.c.l.b16 %v6397
    %v6727 = vunpack.c.h.b16 %v6397
    %v6728 = vpack.c.b16 %v6538, %v6536
    %v6729 = vpack.c.b16 %v6539, %v6537
    %v6730 = vpack.c.b16 %v6542, %v6540
    %v6731 = vpack.c.b16 %v6543, %v6541
    %v6732 = vpack.c.b16 %v6546, %v6544
    %v6733 = vpack.c.b16 %v6547, %v6545
    %v6734 = vpack.c.b16 %v6550, %v6548
    %v6735 = vpack.c.b16 %v6551, %v6549
    %v6736 = vpack.c.b16 %v6554, %v6552
    %v6737 = vpack.c.b16 %v6555, %v6553
    %v6738 = vpack.c.b16 %v6558, %v6556
    %v6739 = vpack.c.b16 %v6559, %v6557
    %v6740 = vpack.c.b16 %v6562, %v6560
    %v6741 = vpack.c.b16 %v6563, %v6561
    %v6742 = vpack.c.b16 %v6566, %v6564
    %v6743 = vpack.c.b16 %v6567, %v6565
    %v6744 = vpack.c.b16 %v6570, %v6568
    %v6745 = vpack.c.b16 %v6571, %v6569
    %v6746 = vpack.c.b16 %v6574, %v6572
    %v6747 = vpack.c.b16 %v6575, %v6573
    %v6748 = vpack.c.b16 %v6578, %v6576
    %v6749 = vpack.c.b16 %v6579, %v6577
    %v6750 = vpack.c.b16 %v6582, %v6580
    %v6751 = vpack.c.b16 %v6583, %v6581
    %v6752 = vpack.c.b16 %v6586, %v6584
    %v6753 = vpack.c.b16 %v6587, %v6585
    %v6754 = vpack.c.b16 %v6590, %v6588
    %v6755 = vpack.c.b16 %v6591, %v6589
    %v6756 = vpack.c.b16 %v6594, %v6592
    %v6757 = vpack.c.b16 %v6595, %v6593
    %v6758 = vpack.c.b16 %v6598, %v6596
    %v6759 = vpack.c.b16 %v6599, %v6597
    %v6760 = vpack.c.b16 %v6602, %v6600
    %v6761 = vpack.c.b16 %v6603, %v6601
    %v6762 = vpack.c.b16 %v6606, %v6604
    %v6763 = vpack.c.b16 %v6607, %v6605
    %v6764 = vpack.c.b16 %v6610, %v6608
    %v6765 = vpack.c.b16 %v6611, %v6609
    %v6766 = vpack.c.b16 %v6614, %v6612
    %v6767 = vpack.c.b16 %v6615, %v6613
    %v6768 = vpack.c.b16 %v6618, %v6616
    %v6769 = vpack.c.b16 %v6619, %v6617
    %v6770 = vpack.c.b16 %v6622, %v6620
    %v6771 = vpack.c.b16 %v6623, %v6621
    %v6772 = vpack.c.b16 %v6626, %v6624
    %v6773 = vpack.c.b16 %v6627, %v6625
    %v6774 = vpack.c.b16 %v6630, %v6628
    %v6775 = vpack.c.b16 %v6631, %v6629
    %v6776 = vpack.c.b16 %v6634, %v6632
    %v6777 = vpack.c.b16 %v6635, %v6633
    %v6778 = vpack.c.b16 %v6638, %v6636
    %v6779 = vpack.c.b16 %v6639, %v6637
    %v6780 = vpack.c.b16 %v6642, %v6640
    %v6781 = vpack.c.b16 %v6643, %v6641
    %v6782 = vpack.c.b16 %v6646, %v6644
    %v6783 = vpack.c.b16 %v6647, %v6645
    %v6784 = vpack.c.b16 %v6650, %v6648
    %v6785 = vpack.c.b16 %v6651, %v6649
    %v6786 = vpack.c.b16 %v6654, %v6652
    %v6787 = vpack.c.b16 %v6655, %v6653
    %v6788 = vpack.c.b16 %v6658, %v6656
    %v6789 = vpack.c.b16 %v6659, %v6657
    %v6790 = vpack.c.b16 %v6662, %v6660
    %v6791 = vpack.c.b16 %v6663, %v6661
    %v6792 = vpack.c.b16 %v6666, %v6664
    %v6793 = vpack.c.b16 %v6667, %v6665
    %v6794 = vpack.c.b16 %v6670, %v6668
    %v6795 = vpack.c.b16 %v6671, %v6669
    %v6796 = vpack.c.b16 %v6674, %v6672
    %v6797 = vpack.c.b16 %v6675, %v6673
    %v6798 = vpack.c.b16 %v6678, %v6676
    %v6799 = vpack.c.b16 %v6679, %v6677
    %v6800 = vpack.c.b16 %v6682, %v6680
    %v6801 = vpack.c.b16 %v6683, %v6681
    %v6802 = vpack.c.b16 %v6686, %v6684
    %v6803 = vpack.c.b16 %v6687, %v6685
    %v6804 = vpack.c.b16 %v6690, %v6688
    %v6805 = vpack.c.b16 %v6691, %v6689
    %v6806 = vpack.c.b16 %v6694, %v6692
    %v6807 = vpack.c.b16 %v6695, %v6693
    %v6808 = vpack.c.b16 %v6698, %v6696
    %v6809 = vpack.c.b16 %v6699, %v6697
    %v6810 = vpack.c.b16 %v6702, %v6700
    %v6811 = vpack.c.b16 %v6703, %v6701
    %v6812 = vpack.c.b16 %v6706, %v6704
    %v6813 = vpack.c.b16 %v6707, %v6705
    %v6814 = vpack.c.b16 %v6710, %v6708
    %v6815 = vpack.c.b16 %v6711, %v6709
    %v6816 = vpack.c.b16 %v6714, %v6712
    %v6817 = vpack.c.b16 %v6715, %v6713
    %v6818 = vpack.c.b16 %v6718, %v6716
    %v6819 = vpack.c.b16 %v6719, %v6717
    %v6820 = vpack.c.b16 %v6722, %v6720
    %v6821 = vpack.c.b16 %v6723, %v6721
    %v6822 = vpack.c.b16 %v6726, %v6724
    %v6823 = vpack.c.b16 %v6727, %v6725
    %6920 = vmatprep.subr.bf16.mxu0 %v6743
    %6921 = vmatpush1.bf16.msra.mxu0 %v6742
    %6922 = vmatprep.subr.bf16.mxu0 %v6741
    %6923 = vmatpush1.bf16.msra.mxu0 %v6740
    %6924 = vmatprep.subr.bf16.mxu0 %v6739
    %6925 = vmatpush1.bf16.msra.mxu0 %v6738
    %6926 = vmatprep.subr.bf16.mxu0 %v6737
    %6927 = vmatpush1.bf16.msra.mxu0 %v6736
    %6928 = vmatprep.subr.bf16.mxu0 %v6735
    %6929 = vmatpush1.bf16.msra.mxu0 %v6734
    %6930 = vmatprep.subr.bf16.mxu0 %v6733
    %6931 = vmatpush1.bf16.msra.mxu0 %v6732
    %6932 = vmatprep.subr.bf16.mxu0 %v6731
    %6933 = vmatpush1.bf16.msra.mxu0 %v6730
    %6934 = vmatprep.subr.bf16.mxu0 %v6729
    %6935 = vmatpush1.bf16.msra.mxu0 %v6728
    %6936 = vmatprep.subr.bf16.mxu0 %v6759
    %6937 = vmatpush2.bf16.msra.mxu0 %v6758
    %6938 = vmatprep.subr.bf16.mxu0 %v6757
    %6939 = vmatpush2.bf16.msra.mxu0 %v6756
    %6940 = vmatprep.subr.bf16.mxu0 %v6755
    %6941 = vmatpush2.bf16.msra.mxu0 %v6754
    %6942 = vmatprep.subr.bf16.mxu0 %v6753
    %6943 = vmatpush2.bf16.msra.mxu0 %v6752
    %6944 = vmatprep.subr.bf16.mxu0 %v6751
    %6945 = vmatpush2.bf16.msra.mxu0 %v6750
    %6946 = vmatprep.subr.bf16.mxu0 %v6749
    %6947 = vmatpush2.bf16.msra.mxu0 %v6748
    %6948 = vmatprep.subr.bf16.mxu0 %v6747
    %6949 = vmatpush2.bf16.msra.mxu0 %v6746
    %6950 = vmatprep.subr.bf16.mxu0 %v6745
    %6951 = vmatpush2.bf16.msra.mxu0 %v6744
    %6952 = vmatprep.mubr.bf16.mxu0 %v6429
    %6953 = vmatmul.mubr.bf16.gmra.mxu0 %v6428
    %v6954 = vpop.f32.mrf.mxu0
    %v6955 = vadd.f32 %v6403, %v6954
    %v6956 = vpop.f32.mrf.mxu0
    %v6957 = vadd.f32 %v6407, %v6956
    %v6958 = vpop.f32.mrf.mxu0
    %v6959 = vadd.f32 %v6403, %v6958
    %v6960 = vpop.f32.mrf.mxu0
    %v6961 = vadd.f32 %v6407, %v6960
    %6962 = vdwg.mxu0
    %6963 = vmatprep.subr.bf16.mxu0 %v6775
    %6964 = vmatpush1.bf16.msra.mxu0 %v6774
    %6965 = vmatprep.subr.bf16.mxu0 %v6773
    %6966 = vmatpush1.bf16.msra.mxu0 %v6772
    %6967 = vmatprep.subr.bf16.mxu0 %v6771
    %6968 = vmatpush1.bf16.msra.mxu0 %v6770
    %6969 = vmatprep.subr.bf16.mxu0 %v6769
    %6970 = vmatpush1.bf16.msra.mxu0 %v6768
    %6971 = vmatprep.subr.bf16.mxu0 %v6767
    %6972 = vmatpush1.bf16.msra.mxu0 %v6766
    %6973 = vmatprep.subr.bf16.mxu0 %v6765
    %6974 = vmatpush1.bf16.msra.mxu0 %v6764
    %6975 = vmatprep.subr.bf16.mxu0 %v6763
    %6976 = vmatpush1.bf16.msra.mxu0 %v6762
    %6977 = vmatprep.subr.bf16.mxu0 %v6761
    %6978 = vmatpush1.bf16.msra.mxu0 %v6760
    %6979 = vmatprep.subr.bf16.mxu0 %v6791
    %6980 = vmatpush2.bf16.msra.mxu0 %v6790
    %6981 = vmatprep.subr.bf16.mxu0 %v6789
    %6982 = vmatpush2.bf16.msra.mxu0 %v6788
    %6983 = vmatprep.subr.bf16.mxu0 %v6787
    %6984 = vmatpush2.bf16.msra.mxu0 %v6786
    %6985 = vmatprep.subr.bf16.mxu0 %v6785
    %6986 = vmatpush2.bf16.msra.mxu0 %v6784
    %6987 = vmatprep.subr.bf16.mxu0 %v6783
    %6988 = vmatpush2.bf16.msra.mxu0 %v6782
    %6989 = vmatprep.subr.bf16.mxu0 %v6781
    %6990 = vmatpush2.bf16.msra.mxu0 %v6780
    %6991 = vmatprep.subr.bf16.mxu0 %v6779
    %6992 = vmatpush2.bf16.msra.mxu0 %v6778
    %6993 = vmatprep.subr.bf16.mxu0 %v6777
    %6994 = vmatpush2.bf16.msra.mxu0 %v6776
    %6995 = vmatprep.mubr.bf16.mxu0 %v6431
    %6996 = vmatmul.mubr.bf16.gmra.mxu0 %v6430
    %v6997 = vpop.f32.mrf.mxu0
    %v6998 = vadd.f32 %v6955, %v6997
    %v6999 = vpop.f32.mrf.mxu0
    %v7000 = vadd.f32 %v6957, %v6999
    %v7001 = vpop.f32.mrf.mxu0
    %v7002 = vadd.f32 %v6959, %v7001
    %v7003 = vpop.f32.mrf.mxu0
    %v7004 = vadd.f32 %v6961, %v7003
    %7005 = vdwg.mxu0
    %7006 = vmatprep.subr.bf16.mxu0 %v6807
    %7007 = vmatpush1.bf16.msra.mxu0 %v6806
    %7008 = vmatprep.subr.bf16.mxu0 %v6805
    %7009 = vmatpush1.bf16.msra.mxu0 %v6804
    %7010 = vmatprep.subr.bf16.mxu0 %v6803
    %7011 = vmatpush1.bf16.msra.mxu0 %v6802
    %7012 = vmatprep.subr.bf16.mxu0 %v6801
    %7013 = vmatpush1.bf16.msra.mxu0 %v6800
    %7014 = vmatprep.subr.bf16.mxu0 %v6799
    %7015 = vmatpush1.bf16.msra.mxu0 %v6798
    %7016 = vmatprep.subr.bf16.mxu0 %v6797
    %7017 = vmatpush1.bf16.msra.mxu0 %v6796
    %7018 = vmatprep.subr.bf16.mxu0 %v6795
    %7019 = vmatpush1.bf16.msra.mxu0 %v6794
    %7020 = vmatprep.subr.bf16.mxu0 %v6793
    %7021 = vmatpush1.bf16.msra.mxu0 %v6792
    %7022 = vmatprep.subr.bf16.mxu0 %v6823
    %7023 = vmatpush2.bf16.msra.mxu0 %v6822
    %7024 = vmatprep.subr.bf16.mxu0 %v6821
    %7025 = vmatpush2.bf16.msra.mxu0 %v6820
    %7026 = vmatprep.subr.bf16.mxu0 %v6819
    %7027 = vmatpush2.bf16.msra.mxu0 %v6818
    %7028 = vmatprep.subr.bf16.mxu0 %v6817
    %7029 = vmatpush2.bf16.msra.mxu0 %v6816
    %7030 = vmatprep.subr.bf16.mxu0 %v6815
    %7031 = vmatpush2.bf16.msra.mxu0 %v6814
    %7032 = vmatprep.subr.bf16.mxu0 %v6813
    %7033 = vmatpush2.bf16.msra.mxu0 %v6812
    %7034 = vmatprep.subr.bf16.mxu0 %v6811
    %7035 = vmatpush2.bf16.msra.mxu0 %v6810
    %7036 = vmatprep.subr.bf16.mxu0 %v6809
    %7037 = vmatpush2.bf16.msra.mxu0 %v6808
    %7038 = vmatprep.mubr.bf16.mxu0 %v6433
    %7039 = vmatmul.mubr.bf16.gmra.mxu0 %v6432
    %v7040 = vpop.f32.mrf.mxu0
    %v7041 = vadd.f32 %v6998, %v7040
    %v7042 = vpop.f32.mrf.mxu0
    %v7043 = vadd.f32 %v7000, %v7042
    %v7044 = vpop.f32.mrf.mxu0
    %v7045 = vadd.f32 %v7002, %v7044
    %v7046 = vpop.f32.mrf.mxu0
    %v7047 = vadd.f32 %v7004, %v7046
    %7048 = vdwg.mxu0
    %v7049 = vmul.f32 %v7041, 0.2
    %v7050 = vmul.f32 %v7043, 0.2
    %v7051 = vmul.f32 %v7045, 0.2
    %v7052 = vmul.f32 %v7047, 0.2
    %v7053 = vmax.f32 %v7041, %v7049
    %v7054 = vmax.f32 %v7043, %v7050
    %v7055 = vmax.f32 %v7045, %v7051
    %v7056 = vmax.f32 %v7047, %v7052
    %v7057 = vld [vmem:[%s29] sm:$0xff]
    %v7058 = vld [vmem:[%s29 + $0x8] sm:$0x3]
    %7060 = vset.pattern.permute.xlu0 0
    %7061 = vperm.xlu0 %7060, %v7057
    %v7062 = vpop.permute.xlu0 %7061
    %7065 = vset.pattern.permute.xlu0 0
    %7066 = vperm.xlu0 %7065, %v7058
    %v7067 = vpop.permute.xlu0 %7066
    %v7069 = vmul.f32 %v7053, %v7062
    %v7070 = vmul.f32 %v7054, %v7062
    %v7071 = vmul.f32 %v7055, %v7067
    %v7072 = vmul.f32 %v7056, %v7067
    %v7077 = vrot.slane %v7069, 7
    %v7078 = vrot.slane %v7070, 7
    %v7079 = vrot.slane %v7071, 7
    %v7080 = vsel %vm5161, %v7077, %v7079
    %v7081 = vrot.slane %v7072, 7
    %v7082 = vsel %vm5161, %v7078, %v7081
    %7087 = vst [vmem:[#allocation8] sm:$0xfe] %v7077
    %7088 = vst [vmem:[#allocation8 + $0x8] sm:$0xfe] %v7078
    %7089 = vst [vmem:[#allocation8 + $0x10] sm:$0x7] %v7080
    %7090 = vst [vmem:[#allocation8 + $0x18] sm:$0x7] %v7082
    %v7091 = vld [vmem:[#allocation8] sm:$0xff]
    %v7092 = vld [vmem:[#allocation8 + $0x8] sm:$0xff]
    %v7093 = vld [vmem:[#allocation8 + $0x10] sm:$0x3]
    %v7094 = vld [vmem:[#allocation8 + $0x18] sm:$0x3]
    %v7095 = vpack.c.bf16 %v7093, %v7091
    %v7096 = vpack.c.bf16 %v7094, %v7092
    %v7099 = vunpack.c.l.b16 %v7095
    %v7100 = vunpack.c.l.b16 %v7096
    %v7101 = vunpack.c.h.b16 %v7095
    %v7102 = vunpack.c.h.b16 %v7096
    %v7103 = vpack.c.b16 %v7100, %v7099
    %v7104 = vpack.c.b16 %v7102, %v7101
    %7107 = vst [vmem:[#allocation9] sm:$0xff] %v7103
    %7108 = vst [vmem:[#allocation9 + $0x18] sm:$0x11] %v7104
    %v7109 = vld [vmem:[#allocation8] sm:$0xfe]
    %v7110 = vld [vmem:[#allocation8 + $0x8] sm:$0xfe]
    %v7111 = vld [vmem:[#allocation8 + $0x10] sm:$0x7]
    %v7112 = vld [vmem:[#allocation8 + $0x18] sm:$0x7]
    %v7113 = vpack.c.bf16 %v7111, %v7109
    %v7114 = vpack.c.bf16 %v7112, %v7110
    %v7117 = vunpack.c.l.b16 %v7113
    %v7118 = vunpack.c.l.b16 %v7114
    %v7119 = vunpack.c.h.b16 %v7113
    %v7120 = vunpack.c.h.b16 %v7114
    %v7121 = vpack.c.b16 %v7118, %v7117
    %v7122 = vpack.c.b16 %v7120, %v7119
    %v7124 = vshrl.u32 %v7121, 16
    %v7126 = vrot.slane %v7124, 4
    %v7127 = vshll.u32 %v7121, 16
    %v7129 = vrot.slane %v7127, 5
    %v7130 = vor.u32 %v7126, %v7129
    %v7131 = vrot.slane %v7130, 4
    %v7133 = vshll.u32 %v7122, 16
    %v7135 = vrot.slane %v7133, 5
    %v7136 = vsel %vm3381, %v7131, %v7135
    %v7137 = vshrl.u32 %v7122, 16
    %v7139 = vrot.slane %v7137, 4
    %v7140 = vor.u32 %v7139, %v7135
    %v7141 = vrot.slane %v7140, 4
    %7144 = vst [vmem:[#allocation9 + $0x8] sm:$0xff] %v7136
    %7145 = vst [vmem:[#allocation9 + $0x20] sm:$0x11] %v7141
    %v7146 = vld [vmem:[#allocation8] sm:$0xfc]
    %v7147 = vld [vmem:[#allocation8 + $0x8] sm:$0xfc]
    %v7148 = vld [vmem:[#allocation8 + $0x10] sm:$0xf]
    %v7149 = vld [vmem:[#allocation8 + $0x18] sm:$0xf]
    %v7150 = vpack.c.bf16 %v7148, %v7146
    %v7151 = vpack.c.bf16 %v7149, %v7147
    %v7154 = vunpack.c.l.b16 %v7150
    %v7155 = vunpack.c.l.b16 %v7151
    %v7156 = vunpack.c.h.b16 %v7150
    %v7157 = vunpack.c.h.b16 %v7151
    %v7158 = vpack.c.b16 %v7155, %v7154
    %v7159 = vpack.c.b16 %v7157, %v7156
    %v7160 = vrot.slane %v7158, 5
    %v7161 = vrot.slane %v7160, 4
    %v7162 = vrot.slane %v7159, 5
    %v7163 = vsel %vm3500, %v7161, %v7162
    %v7164 = vrot.slane %v7162, 4
    %7167 = vst [vmem:[#allocation9 + $0x10] sm:$0xff] %v7163
    %7168 = vst [vmem:[#allocation9 + $0x28] sm:$0x11] %v7164
    %v7169 = vld [vmem:[#allocation9] sm:$0xff]
    %v7170 = vld [vmem:[#allocation9 + $0x8] sm:$0xff]
    %v7171 = vld [vmem:[#allocation9 + $0x10] sm:$0xff]
    %v7172 = vld [vmem:[#allocation9 + $0x18] sm:$0x11]
    %v7173 = vld [vmem:[#allocation9 + $0x20] sm:$0x11]
    %v7174 = vld [vmem:[#allocation9 + $0x28] sm:$0x11]
    %v7175 = vld [vmem:[#allocation22] sm:$0xff]
    %v7176 = vld [vmem:[#allocation22 + $0x8] sm:$0xff]
    %v7177 = vld [vmem:[#allocation22 + $0x10] sm:$0xff]
    %v7178 = vld [vmem:[#allocation22 + $0x18] sm:$0xff]
    %v7179 = vld [vmem:[#allocation22 + $0x20] sm:$0xff]
    %v7180 = vld [vmem:[#allocation22 + $0x28] sm:$0xff]
    %v7181 = vld [vmem:[#allocation22 + $0x30] sm:$0xff]
    %v7182 = vld [vmem:[#allocation22 + $0x38] sm:$0xff]
    %v7183 = vld [vmem:[#allocation22 + $0x40] sm:$0xff]
    %v7184 = vld [vmem:[#allocation22 + $0x48] sm:$0xff]
    %v7185 = vld [vmem:[#allocation22 + $0x50] sm:$0xff]
    %v7186 = vld [vmem:[#allocation22 + $0x58] sm:$0xff]
    %v7187 = vld [vmem:[#allocation22 + $0x60] sm:$0xff]
    %v7188 = vld [vmem:[#allocation22 + $0x68] sm:$0xff]
    %v7189 = vld [vmem:[#allocation22 + $0x70] sm:$0xff]
    %v7190 = vld [vmem:[#allocation22 + $0x78] sm:$0xff]
    %v7191 = vld [vmem:[#allocation22 + $0x80] sm:$0xff]
    %v7192 = vld [vmem:[#allocation22 + $0x88] sm:$0xff]
    %v7193 = vld [vmem:[#allocation22 + $0x90] sm:$0xff]
    %v7194 = vld [vmem:[#allocation22 + $0x98] sm:$0xff]
    %v7195 = vld [vmem:[#allocation22 + $0xa0] sm:$0xff]
    %v7196 = vld [vmem:[#allocation22 + $0xa8] sm:$0xff]
    %v7197 = vld [vmem:[#allocation22 + $0xb0] sm:$0xff]
    %v7198 = vld [vmem:[#allocation22 + $0xb8] sm:$0xff]
    %v7199 = vld [vmem:[#allocation22 + $0xc0] sm:$0xff]
    %v7200 = vld [vmem:[#allocation22 + $0xc8] sm:$0xff]
    %v7201 = vld [vmem:[#allocation22 + $0xd0] sm:$0xff]
    %v7202 = vld [vmem:[#allocation22 + $0xd8] sm:$0xff]
    %v7203 = vld [vmem:[#allocation22 + $0xe0] sm:$0xff]
    %v7204 = vld [vmem:[#allocation22 + $0xe8] sm:$0xff]
    %v7205 = vld [vmem:[#allocation22 + $0xf0] sm:$0xff]
    %v7206 = vld [vmem:[#allocation22 + $0xf8] sm:$0xff]
    %v7207 = vld [vmem:[#allocation22 + $0x100] sm:$0xff]
    %v7208 = vld [vmem:[#allocation22 + $0x108] sm:$0xff]
    %v7209 = vld [vmem:[#allocation22 + $0x110] sm:$0xff]
    %v7210 = vld [vmem:[#allocation22 + $0x118] sm:$0xff]
    %v7211 = vld [vmem:[#allocation22 + $0x120] sm:$0xff]
    %v7212 = vld [vmem:[#allocation22 + $0x128] sm:$0xff]
    %v7213 = vld [vmem:[#allocation22 + $0x130] sm:$0xff]
    %v7214 = vld [vmem:[#allocation22 + $0x138] sm:$0xff]
    %v7215 = vld [vmem:[#allocation22 + $0x140] sm:$0xff]
    %v7216 = vld [vmem:[#allocation22 + $0x148] sm:$0xff]
    %v7217 = vld [vmem:[#allocation22 + $0x150] sm:$0xff]
    %v7218 = vld [vmem:[#allocation22 + $0x158] sm:$0xff]
    %v7219 = vld [vmem:[#allocation22 + $0x160] sm:$0xff]
    %v7220 = vld [vmem:[#allocation22 + $0x168] sm:$0xff]
    %v7221 = vld [vmem:[#allocation22 + $0x170] sm:$0xff]
    %v7222 = vld [vmem:[#allocation22 + $0x178] sm:$0xff]
    %v7223 = vld [vmem:[#allocation22 + $0x180] sm:$0xff]
    %v7224 = vld [vmem:[#allocation22 + $0x188] sm:$0xff]
    %v7225 = vld [vmem:[#allocation22 + $0x190] sm:$0xff]
    %v7226 = vld [vmem:[#allocation22 + $0x198] sm:$0xff]
    %v7227 = vld [vmem:[#allocation22 + $0x1a0] sm:$0xff]
    %v7228 = vld [vmem:[#allocation22 + $0x1a8] sm:$0xff]
    %v7229 = vld [vmem:[#allocation22 + $0x1b0] sm:$0xff]
    %v7230 = vld [vmem:[#allocation22 + $0x1b8] sm:$0xff]
    %v7231 = vld [vmem:[#allocation22 + $0x1c0] sm:$0xff]
    %v7232 = vld [vmem:[#allocation22 + $0x1c8] sm:$0xff]
    %v7233 = vld [vmem:[#allocation22 + $0x1d0] sm:$0xff]
    %v7234 = vld [vmem:[#allocation22 + $0x1d8] sm:$0xff]
    %v7235 = vld [vmem:[#allocation22 + $0x1e0] sm:$0xff]
    %v7236 = vld [vmem:[#allocation22 + $0x1e8] sm:$0xff]
    %v7237 = vld [vmem:[#allocation22 + $0x1f0] sm:$0xff]
    %v7238 = vld [vmem:[#allocation22 + $0x1f8] sm:$0xff]
    %v7239 = vld [vmem:[#allocation22 + $0x200] sm:$0xff]
    %v7240 = vld [vmem:[#allocation22 + $0x208] sm:$0xff]
    %v7241 = vld [vmem:[#allocation22 + $0x210] sm:$0xff]
    %v7242 = vld [vmem:[#allocation22 + $0x218] sm:$0xff]
    %v7243 = vld [vmem:[#allocation22 + $0x220] sm:$0xff]
    %v7244 = vld [vmem:[#allocation22 + $0x228] sm:$0xff]
    %v7245 = vld [vmem:[#allocation22 + $0x230] sm:$0xff]
    %v7246 = vld [vmem:[#allocation22 + $0x238] sm:$0xff]
    %v7247 = vld [vmem:[#allocation22 + $0x240] sm:$0xff]
    %v7248 = vld [vmem:[#allocation22 + $0x248] sm:$0xff]
    %v7249 = vld [vmem:[#allocation22 + $0x250] sm:$0xff]
    %v7250 = vld [vmem:[#allocation22 + $0x258] sm:$0xff]
    %v7251 = vld [vmem:[#allocation22 + $0x260] sm:$0xff]
    %v7252 = vld [vmem:[#allocation22 + $0x268] sm:$0xff]
    %v7253 = vld [vmem:[#allocation22 + $0x270] sm:$0xff]
    %v7254 = vld [vmem:[#allocation22 + $0x278] sm:$0xff]
    %v7255 = vld [vmem:[#allocation22 + $0x280] sm:$0xff]
    %v7256 = vld [vmem:[#allocation22 + $0x288] sm:$0xff]
    %v7257 = vld [vmem:[#allocation22 + $0x290] sm:$0xff]
    %v7258 = vld [vmem:[#allocation22 + $0x298] sm:$0xff]
    %v7259 = vld [vmem:[#allocation22 + $0x2a0] sm:$0xff]
    %v7260 = vld [vmem:[#allocation22 + $0x2a8] sm:$0xff]
    %v7261 = vld [vmem:[#allocation22 + $0x2b0] sm:$0xff]
    %v7262 = vld [vmem:[#allocation22 + $0x2b8] sm:$0xff]
    %v7263 = vld [vmem:[#allocation22 + $0x2c0] sm:$0xff]
    %v7264 = vld [vmem:[#allocation22 + $0x2c8] sm:$0xff]
    %v7265 = vld [vmem:[#allocation22 + $0x2d0] sm:$0xff]
    %v7266 = vld [vmem:[#allocation22 + $0x2d8] sm:$0xff]
    %v7267 = vld [vmem:[#allocation22 + $0x2e0] sm:$0xff]
    %v7268 = vld [vmem:[#allocation22 + $0x2e8] sm:$0xff]
    %v7269 = vld [vmem:[#allocation22 + $0x2f0] sm:$0xff]
    %v7270 = vld [vmem:[#allocation22 + $0x2f8] sm:$0xff]
    %v7271 = vld [vmem:[%s27] sm:$0x3]
    %v7273 = vlaneseq
    %v7274 = vshrl.u32 %v7273, 7
    %v7275 = vsub.s32 0, %v7274
    %v7276 = vrot.slane %v7271, %v7275
    %v7277 = vlaneseq
    %v7278 = vshrl.u32 %v7277, 7
    %v7279 = vsub.s32 1, %v7278
    %v7280 = vrot.slane %v7271, %v7279
    %v7289 = vunpack.c.l.b16 %v7169
    %v7290 = vunpack.c.h.b16 %v7169
    %v7291 = vunpack.c.l.b16 %v7170
    %v7292 = vunpack.c.h.b16 %v7170
    %v7293 = vunpack.c.l.b16 %v7171
    %v7294 = vunpack.c.h.b16 %v7171
    %v7295 = vunpack.c.l.b16 %v7172
    %v7296 = vunpack.c.h.b16 %v7172
    %v7297 = vunpack.c.l.b16 %v7173
    %v7298 = vunpack.c.h.b16 %v7173
    %v7299 = vunpack.c.l.b16 %v7174
    %v7300 = vunpack.c.h.b16 %v7174
    %v7301 = vpack.c.b16 %v7295, %v7289
    %v7302 = vpack.c.b16 %v7296, %v7290
    %v7303 = vpack.c.b16 %v7297, %v7291
    %v7304 = vpack.c.b16 %v7298, %v7292
    %v7305 = vpack.c.b16 %v7299, %v7293
    %v7306 = vpack.c.b16 %v7300, %v7294
    %v7409 = vunpack.c.l.b16 %v7175
    %v7410 = vunpack.c.h.b16 %v7175
    %v7411 = vunpack.c.l.b16 %v7176
    %v7412 = vunpack.c.h.b16 %v7176
    %v7413 = vunpack.c.l.b16 %v7177
    %v7414 = vunpack.c.h.b16 %v7177
    %v7415 = vunpack.c.l.b16 %v7178
    %v7416 = vunpack.c.h.b16 %v7178
    %v7417 = vunpack.c.l.b16 %v7179
    %v7418 = vunpack.c.h.b16 %v7179
    %v7419 = vunpack.c.l.b16 %v7180
    %v7420 = vunpack.c.h.b16 %v7180
    %v7421 = vunpack.c.l.b16 %v7181
    %v7422 = vunpack.c.h.b16 %v7181
    %v7423 = vunpack.c.l.b16 %v7182
    %v7424 = vunpack.c.h.b16 %v7182
    %v7425 = vunpack.c.l.b16 %v7183
    %v7426 = vunpack.c.h.b16 %v7183
    %v7427 = vunpack.c.l.b16 %v7184
    %v7428 = vunpack.c.h.b16 %v7184
    %v7429 = vunpack.c.l.b16 %v7185
    %v7430 = vunpack.c.h.b16 %v7185
    %v7431 = vunpack.c.l.b16 %v7186
    %v7432 = vunpack.c.h.b16 %v7186
    %v7433 = vunpack.c.l.b16 %v7187
    %v7434 = vunpack.c.h.b16 %v7187
    %v7435 = vunpack.c.l.b16 %v7188
    %v7436 = vunpack.c.h.b16 %v7188
    %v7437 = vunpack.c.l.b16 %v7189
    %v7438 = vunpack.c.h.b16 %v7189
    %v7439 = vunpack.c.l.b16 %v7190
    %v7440 = vunpack.c.h.b16 %v7190
    %v7441 = vunpack.c.l.b16 %v7191
    %v7442 = vunpack.c.h.b16 %v7191
    %v7443 = vunpack.c.l.b16 %v7192
    %v7444 = vunpack.c.h.b16 %v7192
    %v7445 = vunpack.c.l.b16 %v7193
    %v7446 = vunpack.c.h.b16 %v7193
    %v7447 = vunpack.c.l.b16 %v7194
    %v7448 = vunpack.c.h.b16 %v7194
    %v7449 = vunpack.c.l.b16 %v7195
    %v7450 = vunpack.c.h.b16 %v7195
    %v7451 = vunpack.c.l.b16 %v7196
    %v7452 = vunpack.c.h.b16 %v7196
    %v7453 = vunpack.c.l.b16 %v7197
    %v7454 = vunpack.c.h.b16 %v7197
    %v7455 = vunpack.c.l.b16 %v7198
    %v7456 = vunpack.c.h.b16 %v7198
    %v7457 = vunpack.c.l.b16 %v7199
    %v7458 = vunpack.c.h.b16 %v7199
    %v7459 = vunpack.c.l.b16 %v7200
    %v7460 = vunpack.c.h.b16 %v7200
    %v7461 = vunpack.c.l.b16 %v7201
    %v7462 = vunpack.c.h.b16 %v7201
    %v7463 = vunpack.c.l.b16 %v7202
    %v7464 = vunpack.c.h.b16 %v7202
    %v7465 = vunpack.c.l.b16 %v7203
    %v7466 = vunpack.c.h.b16 %v7203
    %v7467 = vunpack.c.l.b16 %v7204
    %v7468 = vunpack.c.h.b16 %v7204
    %v7469 = vunpack.c.l.b16 %v7205
    %v7470 = vunpack.c.h.b16 %v7205
    %v7471 = vunpack.c.l.b16 %v7206
    %v7472 = vunpack.c.h.b16 %v7206
    %v7473 = vunpack.c.l.b16 %v7207
    %v7474 = vunpack.c.h.b16 %v7207
    %v7475 = vunpack.c.l.b16 %v7208
    %v7476 = vunpack.c.h.b16 %v7208
    %v7477 = vunpack.c.l.b16 %v7209
    %v7478 = vunpack.c.h.b16 %v7209
    %v7479 = vunpack.c.l.b16 %v7210
    %v7480 = vunpack.c.h.b16 %v7210
    %v7481 = vunpack.c.l.b16 %v7211
    %v7482 = vunpack.c.h.b16 %v7211
    %v7483 = vunpack.c.l.b16 %v7212
    %v7484 = vunpack.c.h.b16 %v7212
    %v7485 = vunpack.c.l.b16 %v7213
    %v7486 = vunpack.c.h.b16 %v7213
    %v7487 = vunpack.c.l.b16 %v7214
    %v7488 = vunpack.c.h.b16 %v7214
    %v7489 = vunpack.c.l.b16 %v7215
    %v7490 = vunpack.c.h.b16 %v7215
    %v7491 = vunpack.c.l.b16 %v7216
    %v7492 = vunpack.c.h.b16 %v7216
    %v7493 = vunpack.c.l.b16 %v7217
    %v7494 = vunpack.c.h.b16 %v7217
    %v7495 = vunpack.c.l.b16 %v7218
    %v7496 = vunpack.c.h.b16 %v7218
    %v7497 = vunpack.c.l.b16 %v7219
    %v7498 = vunpack.c.h.b16 %v7219
    %v7499 = vunpack.c.l.b16 %v7220
    %v7500 = vunpack.c.h.b16 %v7220
    %v7501 = vunpack.c.l.b16 %v7221
    %v7502 = vunpack.c.h.b16 %v7221
    %v7503 = vunpack.c.l.b16 %v7222
    %v7504 = vunpack.c.h.b16 %v7222
    %v7505 = vunpack.c.l.b16 %v7223
    %v7506 = vunpack.c.h.b16 %v7223
    %v7507 = vunpack.c.l.b16 %v7224
    %v7508 = vunpack.c.h.b16 %v7224
    %v7509 = vunpack.c.l.b16 %v7225
    %v7510 = vunpack.c.h.b16 %v7225
    %v7511 = vunpack.c.l.b16 %v7226
    %v7512 = vunpack.c.h.b16 %v7226
    %v7513 = vunpack.c.l.b16 %v7227
    %v7514 = vunpack.c.h.b16 %v7227
    %v7515 = vunpack.c.l.b16 %v7228
    %v7516 = vunpack.c.h.b16 %v7228
    %v7517 = vunpack.c.l.b16 %v7229
    %v7518 = vunpack.c.h.b16 %v7229
    %v7519 = vunpack.c.l.b16 %v7230
    %v7520 = vunpack.c.h.b16 %v7230
    %v7521 = vunpack.c.l.b16 %v7231
    %v7522 = vunpack.c.h.b16 %v7231
    %v7523 = vunpack.c.l.b16 %v7232
    %v7524 = vunpack.c.h.b16 %v7232
    %v7525 = vunpack.c.l.b16 %v7233
    %v7526 = vunpack.c.h.b16 %v7233
    %v7527 = vunpack.c.l.b16 %v7234
    %v7528 = vunpack.c.h.b16 %v7234
    %v7529 = vunpack.c.l.b16 %v7235
    %v7530 = vunpack.c.h.b16 %v7235
    %v7531 = vunpack.c.l.b16 %v7236
    %v7532 = vunpack.c.h.b16 %v7236
    %v7533 = vunpack.c.l.b16 %v7237
    %v7534 = vunpack.c.h.b16 %v7237
    %v7535 = vunpack.c.l.b16 %v7238
    %v7536 = vunpack.c.h.b16 %v7238
    %v7537 = vunpack.c.l.b16 %v7239
    %v7538 = vunpack.c.h.b16 %v7239
    %v7539 = vunpack.c.l.b16 %v7240
    %v7540 = vunpack.c.h.b16 %v7240
    %v7541 = vunpack.c.l.b16 %v7241
    %v7542 = vunpack.c.h.b16 %v7241
    %v7543 = vunpack.c.l.b16 %v7242
    %v7544 = vunpack.c.h.b16 %v7242
    %v7545 = vunpack.c.l.b16 %v7243
    %v7546 = vunpack.c.h.b16 %v7243
    %v7547 = vunpack.c.l.b16 %v7244
    %v7548 = vunpack.c.h.b16 %v7244
    %v7549 = vunpack.c.l.b16 %v7245
    %v7550 = vunpack.c.h.b16 %v7245
    %v7551 = vunpack.c.l.b16 %v7246
    %v7552 = vunpack.c.h.b16 %v7246
    %v7553 = vunpack.c.l.b16 %v7247
    %v7554 = vunpack.c.h.b16 %v7247
    %v7555 = vunpack.c.l.b16 %v7248
    %v7556 = vunpack.c.h.b16 %v7248
    %v7557 = vunpack.c.l.b16 %v7249
    %v7558 = vunpack.c.h.b16 %v7249
    %v7559 = vunpack.c.l.b16 %v7250
    %v7560 = vunpack.c.h.b16 %v7250
    %v7561 = vunpack.c.l.b16 %v7251
    %v7562 = vunpack.c.h.b16 %v7251
    %v7563 = vunpack.c.l.b16 %v7252
    %v7564 = vunpack.c.h.b16 %v7252
    %v7565 = vunpack.c.l.b16 %v7253
    %v7566 = vunpack.c.h.b16 %v7253
    %v7567 = vunpack.c.l.b16 %v7254
    %v7568 = vunpack.c.h.b16 %v7254
    %v7569 = vunpack.c.l.b16 %v7255
    %v7570 = vunpack.c.h.b16 %v7255
    %v7571 = vunpack.c.l.b16 %v7256
    %v7572 = vunpack.c.h.b16 %v7256
    %v7573 = vunpack.c.l.b16 %v7257
    %v7574 = vunpack.c.h.b16 %v7257
    %v7575 = vunpack.c.l.b16 %v7258
    %v7576 = vunpack.c.h.b16 %v7258
    %v7577 = vunpack.c.l.b16 %v7259
    %v7578 = vunpack.c.h.b16 %v7259
    %v7579 = vunpack.c.l.b16 %v7260
    %v7580 = vunpack.c.h.b16 %v7260
    %v7581 = vunpack.c.l.b16 %v7261
    %v7582 = vunpack.c.h.b16 %v7261
    %v7583 = vunpack.c.l.b16 %v7262
    %v7584 = vunpack.c.h.b16 %v7262
    %v7585 = vunpack.c.l.b16 %v7263
    %v7586 = vunpack.c.h.b16 %v7263
    %v7587 = vunpack.c.l.b16 %v7264
    %v7588 = vunpack.c.h.b16 %v7264
    %v7589 = vunpack.c.l.b16 %v7265
    %v7590 = vunpack.c.h.b16 %v7265
    %v7591 = vunpack.c.l.b16 %v7266
    %v7592 = vunpack.c.h.b16 %v7266
    %v7593 = vunpack.c.l.b16 %v7267
    %v7594 = vunpack.c.h.b16 %v7267
    %v7595 = vunpack.c.l.b16 %v7268
    %v7596 = vunpack.c.h.b16 %v7268
    %v7597 = vunpack.c.l.b16 %v7269
    %v7598 = vunpack.c.h.b16 %v7269
    %v7599 = vunpack.c.l.b16 %v7270
    %v7600 = vunpack.c.h.b16 %v7270
    %v7601 = vpack.c.b16 %v7411, %v7409
    %v7602 = vpack.c.b16 %v7412, %v7410
    %v7603 = vpack.c.b16 %v7415, %v7413
    %v7604 = vpack.c.b16 %v7416, %v7414
    %v7605 = vpack.c.b16 %v7419, %v7417
    %v7606 = vpack.c.b16 %v7420, %v7418
    %v7607 = vpack.c.b16 %v7423, %v7421
    %v7608 = vpack.c.b16 %v7424, %v7422
    %v7609 = vpack.c.b16 %v7427, %v7425
    %v7610 = vpack.c.b16 %v7428, %v7426
    %v7611 = vpack.c.b16 %v7431, %v7429
    %v7612 = vpack.c.b16 %v7432, %v7430
    %v7613 = vpack.c.b16 %v7435, %v7433
    %v7614 = vpack.c.b16 %v7436, %v7434
    %v7615 = vpack.c.b16 %v7439, %v7437
    %v7616 = vpack.c.b16 %v7440, %v7438
    %v7617 = vpack.c.b16 %v7443, %v7441
    %v7618 = vpack.c.b16 %v7444, %v7442
    %v7619 = vpack.c.b16 %v7447, %v7445
    %v7620 = vpack.c.b16 %v7448, %v7446
    %v7621 = vpack.c.b16 %v7451, %v7449
    %v7622 = vpack.c.b16 %v7452, %v7450
    %v7623 = vpack.c.b16 %v7455, %v7453
    %v7624 = vpack.c.b16 %v7456, %v7454
    %v7625 = vpack.c.b16 %v7459, %v7457
    %v7626 = vpack.c.b16 %v7460, %v7458
    %v7627 = vpack.c.b16 %v7463, %v7461
    %v7628 = vpack.c.b16 %v7464, %v7462
    %v7629 = vpack.c.b16 %v7467, %v7465
    %v7630 = vpack.c.b16 %v7468, %v7466
    %v7631 = vpack.c.b16 %v7471, %v7469
    %v7632 = vpack.c.b16 %v7472, %v7470
    %v7633 = vpack.c.b16 %v7475, %v7473
    %v7634 = vpack.c.b16 %v7476, %v7474
    %v7635 = vpack.c.b16 %v7479, %v7477
    %v7636 = vpack.c.b16 %v7480, %v7478
    %v7637 = vpack.c.b16 %v7483, %v7481
    %v7638 = vpack.c.b16 %v7484, %v7482
    %v7639 = vpack.c.b16 %v7487, %v7485
    %v7640 = vpack.c.b16 %v7488, %v7486
    %v7641 = vpack.c.b16 %v7491, %v7489
    %v7642 = vpack.c.b16 %v7492, %v7490
    %v7643 = vpack.c.b16 %v7495, %v7493
    %v7644 = vpack.c.b16 %v7496, %v7494
    %v7645 = vpack.c.b16 %v7499, %v7497
    %v7646 = vpack.c.b16 %v7500, %v7498
    %v7647 = vpack.c.b16 %v7503, %v7501
    %v7648 = vpack.c.b16 %v7504, %v7502
    %v7649 = vpack.c.b16 %v7507, %v7505
    %v7650 = vpack.c.b16 %v7508, %v7506
    %v7651 = vpack.c.b16 %v7511, %v7509
    %v7652 = vpack.c.b16 %v7512, %v7510
    %v7653 = vpack.c.b16 %v7515, %v7513
    %v7654 = vpack.c.b16 %v7516, %v7514
    %v7655 = vpack.c.b16 %v7519, %v7517
    %v7656 = vpack.c.b16 %v7520, %v7518
    %v7657 = vpack.c.b16 %v7523, %v7521
    %v7658 = vpack.c.b16 %v7524, %v7522
    %v7659 = vpack.c.b16 %v7527, %v7525
    %v7660 = vpack.c.b16 %v7528, %v7526
    %v7661 = vpack.c.b16 %v7531, %v7529
    %v7662 = vpack.c.b16 %v7532, %v7530
    %v7663 = vpack.c.b16 %v7535, %v7533
    %v7664 = vpack.c.b16 %v7536, %v7534
    %v7665 = vpack.c.b16 %v7539, %v7537
    %v7666 = vpack.c.b16 %v7540, %v7538
    %v7667 = vpack.c.b16 %v7543, %v7541
    %v7668 = vpack.c.b16 %v7544, %v7542
    %v7669 = vpack.c.b16 %v7547, %v7545
    %v7670 = vpack.c.b16 %v7548, %v7546
    %v7671 = vpack.c.b16 %v7551, %v7549
    %v7672 = vpack.c.b16 %v7552, %v7550
    %v7673 = vpack.c.b16 %v7555, %v7553
    %v7674 = vpack.c.b16 %v7556, %v7554
    %v7675 = vpack.c.b16 %v7559, %v7557
    %v7676 = vpack.c.b16 %v7560, %v7558
    %v7677 = vpack.c.b16 %v7563, %v7561
    %v7678 = vpack.c.b16 %v7564, %v7562
    %v7679 = vpack.c.b16 %v7567, %v7565
    %v7680 = vpack.c.b16 %v7568, %v7566
    %v7681 = vpack.c.b16 %v7571, %v7569
    %v7682 = vpack.c.b16 %v7572, %v7570
    %v7683 = vpack.c.b16 %v7575, %v7573
    %v7684 = vpack.c.b16 %v7576, %v7574
    %v7685 = vpack.c.b16 %v7579, %v7577
    %v7686 = vpack.c.b16 %v7580, %v7578
    %v7687 = vpack.c.b16 %v7583, %v7581
    %v7688 = vpack.c.b16 %v7584, %v7582
    %v7689 = vpack.c.b16 %v7587, %v7585
    %v7690 = vpack.c.b16 %v7588, %v7586
    %v7691 = vpack.c.b16 %v7591, %v7589
    %v7692 = vpack.c.b16 %v7592, %v7590
    %v7693 = vpack.c.b16 %v7595, %v7593
    %v7694 = vpack.c.b16 %v7596, %v7594
    %v7695 = vpack.c.b16 %v7599, %v7597
    %v7696 = vpack.c.b16 %v7600, %v7598
    %7793 = vmatprep.subr.bf16.mxu0 %v7616
    %7794 = vmatpush1.bf16.msra.mxu0 %v7615
    %7795 = vmatprep.subr.bf16.mxu0 %v7614
    %7796 = vmatpush1.bf16.msra.mxu0 %v7613
    %7797 = vmatprep.subr.bf16.mxu0 %v7612
    %7798 = vmatpush1.bf16.msra.mxu0 %v7611
    %7799 = vmatprep.subr.bf16.mxu0 %v7610
    %7800 = vmatpush1.bf16.msra.mxu0 %v7609
    %7801 = vmatprep.subr.bf16.mxu0 %v7608
    %7802 = vmatpush1.bf16.msra.mxu0 %v7607
    %7803 = vmatprep.subr.bf16.mxu0 %v7606
    %7804 = vmatpush1.bf16.msra.mxu0 %v7605
    %7805 = vmatprep.subr.bf16.mxu0 %v7604
    %7806 = vmatpush1.bf16.msra.mxu0 %v7603
    %7807 = vmatprep.subr.bf16.mxu0 %v7602
    %7808 = vmatpush1.bf16.msra.mxu0 %v7601
    %7809 = vmatprep.subr.bf16.mxu0 %v7632
    %7810 = vmatpush2.bf16.msra.mxu0 %v7631
    %7811 = vmatprep.subr.bf16.mxu0 %v7630
    %7812 = vmatpush2.bf16.msra.mxu0 %v7629
    %7813 = vmatprep.subr.bf16.mxu0 %v7628
    %7814 = vmatpush2.bf16.msra.mxu0 %v7627
    %7815 = vmatprep.subr.bf16.mxu0 %v7626
    %7816 = vmatpush2.bf16.msra.mxu0 %v7625
    %7817 = vmatprep.subr.bf16.mxu0 %v7624
    %7818 = vmatpush2.bf16.msra.mxu0 %v7623
    %7819 = vmatprep.subr.bf16.mxu0 %v7622
    %7820 = vmatpush2.bf16.msra.mxu0 %v7621
    %7821 = vmatprep.subr.bf16.mxu0 %v7620
    %7822 = vmatpush2.bf16.msra.mxu0 %v7619
    %7823 = vmatprep.subr.bf16.mxu0 %v7618
    %7824 = vmatpush2.bf16.msra.mxu0 %v7617
    %7825 = vmatprep.mubr.bf16.mxu0 %v7302
    %7826 = vmatmul.mubr.bf16.gmra.mxu0 %v7301
    %v7827 = vpop.f32.mrf.mxu0
    %v7828 = vadd.f32 %v7276, %v7827
    %v7829 = vpop.f32.mrf.mxu0
    %v7830 = vadd.f32 %v7280, %v7829
    %v7831 = vpop.f32.mrf.mxu0
    %v7832 = vadd.f32 %v7276, %v7831
    %v7833 = vpop.f32.mrf.mxu0
    %v7834 = vadd.f32 %v7280, %v7833
    %7835 = vdwg.mxu0
    %7836 = vmatprep.subr.bf16.mxu0 %v7648
    %7837 = vmatpush1.bf16.msra.mxu0 %v7647
    %7838 = vmatprep.subr.bf16.mxu0 %v7646
    %7839 = vmatpush1.bf16.msra.mxu0 %v7645
    %7840 = vmatprep.subr.bf16.mxu0 %v7644
    %7841 = vmatpush1.bf16.msra.mxu0 %v7643
    %7842 = vmatprep.subr.bf16.mxu0 %v7642
    %7843 = vmatpush1.bf16.msra.mxu0 %v7641
    %7844 = vmatprep.subr.bf16.mxu0 %v7640
    %7845 = vmatpush1.bf16.msra.mxu0 %v7639
    %7846 = vmatprep.subr.bf16.mxu0 %v7638
    %7847 = vmatpush1.bf16.msra.mxu0 %v7637
    %7848 = vmatprep.subr.bf16.mxu0 %v7636
    %7849 = vmatpush1.bf16.msra.mxu0 %v7635
    %7850 = vmatprep.subr.bf16.mxu0 %v7634
    %7851 = vmatpush1.bf16.msra.mxu0 %v7633
    %7852 = vmatprep.subr.bf16.mxu0 %v7664
    %7853 = vmatpush2.bf16.msra.mxu0 %v7663
    %7854 = vmatprep.subr.bf16.mxu0 %v7662
    %7855 = vmatpush2.bf16.msra.mxu0 %v7661
    %7856 = vmatprep.subr.bf16.mxu0 %v7660
    %7857 = vmatpush2.bf16.msra.mxu0 %v7659
    %7858 = vmatprep.subr.bf16.mxu0 %v7658
    %7859 = vmatpush2.bf16.msra.mxu0 %v7657
    %7860 = vmatprep.subr.bf16.mxu0 %v7656
    %7861 = vmatpush2.bf16.msra.mxu0 %v7655
    %7862 = vmatprep.subr.bf16.mxu0 %v7654
    %7863 = vmatpush2.bf16.msra.mxu0 %v7653
    %7864 = vmatprep.subr.bf16.mxu0 %v7652
    %7865 = vmatpush2.bf16.msra.mxu0 %v7651
    %7866 = vmatprep.subr.bf16.mxu0 %v7650
    %7867 = vmatpush2.bf16.msra.mxu0 %v7649
    %7868 = vmatprep.mubr.bf16.mxu0 %v7304
    %7869 = vmatmul.mubr.bf16.gmra.mxu0 %v7303
    %v7870 = vpop.f32.mrf.mxu0
    %v7871 = vadd.f32 %v7828, %v7870
    %v7872 = vpop.f32.mrf.mxu0
    %v7873 = vadd.f32 %v7830, %v7872
    %v7874 = vpop.f32.mrf.mxu0
    %v7875 = vadd.f32 %v7832, %v7874
    %v7876 = vpop.f32.mrf.mxu0
    %v7877 = vadd.f32 %v7834, %v7876
    %7878 = vdwg.mxu0
    %7879 = vmatprep.subr.bf16.mxu0 %v7680
    %7880 = vmatpush1.bf16.msra.mxu0 %v7679
    %7881 = vmatprep.subr.bf16.mxu0 %v7678
    %7882 = vmatpush1.bf16.msra.mxu0 %v7677
    %7883 = vmatprep.subr.bf16.mxu0 %v7676
    %7884 = vmatpush1.bf16.msra.mxu0 %v7675
    %7885 = vmatprep.subr.bf16.mxu0 %v7674
    %7886 = vmatpush1.bf16.msra.mxu0 %v7673
    %7887 = vmatprep.subr.bf16.mxu0 %v7672
    %7888 = vmatpush1.bf16.msra.mxu0 %v7671
    %7889 = vmatprep.subr.bf16.mxu0 %v7670
    %7890 = vmatpush1.bf16.msra.mxu0 %v7669
    %7891 = vmatprep.subr.bf16.mxu0 %v7668
    %7892 = vmatpush1.bf16.msra.mxu0 %v7667
    %7893 = vmatprep.subr.bf16.mxu0 %v7666
    %7894 = vmatpush1.bf16.msra.mxu0 %v7665
    %7895 = vmatprep.subr.bf16.mxu0 %v7696
    %7896 = vmatpush2.bf16.msra.mxu0 %v7695
    %7897 = vmatprep.subr.bf16.mxu0 %v7694
    %7898 = vmatpush2.bf16.msra.mxu0 %v7693
    %7899 = vmatprep.subr.bf16.mxu0 %v7692
    %7900 = vmatpush2.bf16.msra.mxu0 %v7691
    %7901 = vmatprep.subr.bf16.mxu0 %v7690
    %7902 = vmatpush2.bf16.msra.mxu0 %v7689
    %7903 = vmatprep.subr.bf16.mxu0 %v7688
    %7904 = vmatpush2.bf16.msra.mxu0 %v7687
    %7905 = vmatprep.subr.bf16.mxu0 %v7686
    %7906 = vmatpush2.bf16.msra.mxu0 %v7685
    %7907 = vmatprep.subr.bf16.mxu0 %v7684
    %7908 = vmatpush2.bf16.msra.mxu0 %v7683
    %7909 = vmatprep.subr.bf16.mxu0 %v7682
    %7910 = vmatpush2.bf16.msra.mxu0 %v7681
    %7911 = vmatprep.mubr.bf16.mxu0 %v7306
    %7912 = vmatmul.mubr.bf16.gmra.mxu0 %v7305
    %v7913 = vpop.f32.mrf.mxu0
    %v7914 = vadd.f32 %v7871, %v7913
    %v7915 = vpop.f32.mrf.mxu0
    %v7916 = vadd.f32 %v7873, %v7915
    %v7917 = vpop.f32.mrf.mxu0
    %v7918 = vadd.f32 %v7875, %v7917
    %v7919 = vpop.f32.mrf.mxu0
    %v7920 = vadd.f32 %v7877, %v7919
    %7921 = vdwg.mxu0
    %v7922 = vmul.f32 %v7914, 0.2
    %v7923 = vmul.f32 %v7916, 0.2
    %v7924 = vmul.f32 %v7918, 0.2
    %v7925 = vmul.f32 %v7920, 0.2
    %v7926 = vmax.f32 %v7914, %v7922
    %v7927 = vmax.f32 %v7916, %v7923
    %v7928 = vmax.f32 %v7918, %v7924
    %v7929 = vmax.f32 %v7920, %v7925
    %v7930 = vld [vmem:[%s31] sm:$0xff]
    %vm7931 = vcmask 80896
    %v7933 = vsel %vm7931, %v7930, 0
    %v7936 = vsel %vm6130, %v7928, 0
    %v7939 = vsel %vm6130, %v7929, 0
    %7941 = vmatprep.subr.mxu0 0.0
    %7942 = vmatpush1.msra.mxu0 0.0
    %7943 = vmatprep.subr.mxu0 0.0
    %7944 = vmatpush1.msra.mxu0 0.0
    %7945 = vmatprep.subr.mxu0 0.0
    %7946 = vmatpush1.msra.mxu0 0.0
    %7947 = vmatprep.subr.mxu0 0.0
    %7948 = vmatpush1.msra.mxu0 0.0
    %7949 = vmatprep.subr.mxu0 0.0
    %7950 = vmatpush1.msra.mxu0 0.0
    %7951 = vmatprep.subr.mxu0 0.0
    %7952 = vmatpush1.msra.mxu0 0.0
    %7953 = vmatprep.subr.mxu0 0.0
    %7954 = vmatpush1.msra.mxu0 0.0
    %7955 = vmatprep.subr.mxu0 0.0
    %7956 = vmatpush1.msra.mxu0 0.0
    %7957 = vmatprep.subr.mxu0 0.0
    %7958 = vmatpush1.msra.mxu0 0.0
    %7959 = vmatprep.subr.mxu0 0.0
    %7960 = vmatpush1.msra.mxu0 0.0
    %7961 = vmatprep.subr.mxu0 0.0
    %7962 = vmatpush1.msra.mxu0 0.0
    %7963 = vmatprep.subr.mxu0 0.0
    %7964 = vmatpush1.msra.mxu0 0.0
    %7965 = vmatprep.subr.mxu0 0.0
    %7966 = vmatpush1.msra.mxu0 0.0
    %7967 = vmatprep.subr.mxu0 0.0
    %7968 = vmatpush1.msra.mxu0 0.0
    %7969 = vmatprep.subr.mxu0 %v7939
    %7970 = vmatpush1.msra.mxu0 %v7936
    %7971 = vmatprep.subr.mxu0 %v7927
    %7972 = vmatpush1.msra.mxu0 %v7926
    %7973 = vmatprep.subr.mxu0 0.0
    %7974 = vmatpush2.msra.mxu0 0.0
    %7975 = vmatprep.subr.mxu0 0.0
    %7976 = vmatpush2.msra.mxu0 0.0
    %7977 = vmatprep.subr.mxu0 0.0
    %7978 = vmatpush2.msra.mxu0 0.0
    %7979 = vmatprep.subr.mxu0 0.0
    %7980 = vmatpush2.msra.mxu0 0.0
    %7981 = vmatprep.subr.mxu0 0.0
    %7982 = vmatpush2.msra.mxu0 0.0
    %7983 = vmatprep.subr.mxu0 0.0
    %7984 = vmatpush2.msra.mxu0 0.0
    %7985 = vmatprep.subr.mxu0 0.0
    %7986 = vmatpush2.msra.mxu0 0.0
    %7987 = vmatprep.subr.mxu0 0.0
    %7988 = vmatpush2.msra.mxu0 0.0
    %7989 = vmatprep.subr.mxu0 0.0
    %7990 = vmatpush2.msra.mxu0 0.0
    %7991 = vmatprep.subr.mxu0 0.0
    %7992 = vmatpush2.msra.mxu0 0.0
    %7993 = vmatprep.subr.mxu0 0.0
    %7994 = vmatpush2.msra.mxu0 0.0
    %7995 = vmatprep.subr.mxu0 0.0
    %7996 = vmatpush2.msra.mxu0 0.0
    %7997 = vmatprep.subr.mxu0 0.0
    %7998 = vmatpush2.msra.mxu0 0.0
    %7999 = vmatprep.subr.mxu0 0.0
    %8000 = vmatpush2.msra.mxu0 0.0
    %8001 = vmatprep.subr.mxu0 0.0
    %8002 = vmatpush2.msra.mxu0 0.0
    %8003 = vmatprep.subr.mxu0 0.0
    %8004 = vmatpush2.msra.mxu0 0.0
    %8005 = vmatprep.mubr.f32.mxu0 0.0
    %8006 = vmatmul.mubr.f32.gmra.mxu0 %v7933
    %v8007 = vpop.f32.mrf.mxu0
    %v8008 = vadd.f32 0.0, %v8007
    %v8009 = vpop.f32.mrf.mxu0
    %v8010 = vadd.f32 0.0, %v8009
    %8011 = vdwg.mxu0
    %8012 = vst [vmem:[#allocation10] sm:$0xff] %v8008
    %8013 = vst [vmem:[#allocation10 + $0x8] sm:$0xff] %v8010
    %v8014 = vld [vmem:[#allocation10] sm:$0x3f]
    %v8015 = vld [vmem:[#allocation10 + $0x8] sm:$0x3f]
    %v8016 = vpack.c.bf16 %v8014, %v8014
    %v8017 = vpack.c.bf16 %v8015, %v8015
    %v8020 = vunpack.c.l.b16 %v8016
    %v8021 = vunpack.c.l.b16 %v8017
    %v8022 = vpack.c.b16 %v8021, %v8020
    %8024 = vst [vmem:[#allocation11] sm:$0x77] %v8022
    %v8025 = vld [vmem:[#allocation10] sm:$0x7e]
    %v8026 = vld [vmem:[#allocation10 + $0x8] sm:$0x7e]
    %v8027 = vpack.c.bf16 %v8025, %v8025
    %v8028 = vpack.c.bf16 %v8026, %v8026
    %v8031 = vunpack.c.l.b16 %v8027
    %v8032 = vunpack.c.l.b16 %v8028
    %v8033 = vpack.c.b16 %v8032, %v8031
    %v8035 = vshrl.u32 %v8033, 16
    %v8037 = vrot.slane %v8035, 4
    %v8038 = vshll.u32 %v8033, 16
    %v8040 = vrot.slane %v8038, 5
    %v8041 = vor.u32 %v8037, %v8040
    %v8042 = vrot.slane %v8041, 4
    %8044 = vst [vmem:[#allocation11 + $0x8] sm:$0x77] %v8042
    %v8045 = vld [vmem:[#allocation10] sm:$0xfc]
    %v8046 = vld [vmem:[#allocation10 + $0x8] sm:$0xfc]
    %v8047 = vpack.c.bf16 %v8045, %v8045
    %v8048 = vpack.c.bf16 %v8046, %v8046
    %v8051 = vunpack.c.l.b16 %v8047
    %v8052 = vunpack.c.l.b16 %v8048
    %v8053 = vpack.c.b16 %v8052, %v8051
    %v8054 = vrot.slane %v8053, 5
    %v8055 = vrot.slane %v8054, 4
    %8057 = vst [vmem:[#allocation11 + $0x10] sm:$0x77] %v8055
    %v8058 = vld [vmem:[#allocation11] sm:$0x77]
    %v8059 = vld [vmem:[#allocation11 + $0x8] sm:$0x77]
    %v8060 = vld [vmem:[#allocation11 + $0x10] sm:$0x77]
    %v8061 = vld [vmem:[#allocation23] sm:$0xff]
    %v8062 = vld [vmem:[#allocation23 + $0x8] sm:$0xff]
    %v8063 = vld [vmem:[#allocation23 + $0x10] sm:$0xff]
    %v8064 = vld [vmem:[#allocation23 + $0x18] sm:$0xff]
    %v8065 = vld [vmem:[#allocation23 + $0x20] sm:$0xff]
    %v8066 = vld [vmem:[#allocation23 + $0x28] sm:$0xff]
    %v8067 = vld [vmem:[#allocation23 + $0x30] sm:$0xff]
    %v8068 = vld [vmem:[#allocation23 + $0x38] sm:$0xff]
    %v8069 = vld [vmem:[#allocation23 + $0x40] sm:$0xff]
    %v8070 = vld [vmem:[#allocation23 + $0x48] sm:$0xff]
    %v8071 = vld [vmem:[#allocation23 + $0x50] sm:$0xff]
    %v8072 = vld [vmem:[#allocation23 + $0x58] sm:$0xff]
    %v8073 = vld [vmem:[#allocation23 + $0x60] sm:$0xff]
    %v8074 = vld [vmem:[#allocation23 + $0x68] sm:$0xff]
    %v8075 = vld [vmem:[#allocation23 + $0x70] sm:$0xff]
    %v8076 = vld [vmem:[#allocation23 + $0x78] sm:$0xff]
    %v8077 = vld [vmem:[#allocation23 + $0x80] sm:$0xff]
    %v8078 = vld [vmem:[#allocation23 + $0x88] sm:$0xff]
    %v8079 = vld [vmem:[#allocation23 + $0x90] sm:$0xff]
    %v8080 = vld [vmem:[#allocation23 + $0x98] sm:$0xff]
    %v8081 = vld [vmem:[#allocation23 + $0xa0] sm:$0xff]
    %v8082 = vld [vmem:[#allocation23 + $0xa8] sm:$0xff]
    %v8083 = vld [vmem:[#allocation23 + $0xb0] sm:$0xff]
    %v8084 = vld [vmem:[#allocation23 + $0xb8] sm:$0xff]
    %v8085 = vld [vmem:[#allocation23 + $0xc0] sm:$0xff]
    %v8086 = vld [vmem:[#allocation23 + $0xc8] sm:$0xff]
    %v8087 = vld [vmem:[#allocation23 + $0xd0] sm:$0xff]
    %v8088 = vld [vmem:[#allocation23 + $0xd8] sm:$0xff]
    %v8089 = vld [vmem:[#allocation23 + $0xe0] sm:$0xff]
    %v8090 = vld [vmem:[#allocation23 + $0xe8] sm:$0xff]
    %v8091 = vld [vmem:[#allocation23 + $0xf0] sm:$0xff]
    %v8092 = vld [vmem:[#allocation23 + $0xf8] sm:$0xff]
    %v8093 = vld [vmem:[#allocation23 + $0x100] sm:$0xff]
    %v8094 = vld [vmem:[#allocation23 + $0x108] sm:$0xff]
    %v8095 = vld [vmem:[#allocation23 + $0x110] sm:$0xff]
    %v8096 = vld [vmem:[#allocation23 + $0x118] sm:$0xff]
    %v8097 = vld [vmem:[#allocation23 + $0x120] sm:$0xff]
    %v8098 = vld [vmem:[#allocation23 + $0x128] sm:$0xff]
    %v8099 = vld [vmem:[#allocation23 + $0x130] sm:$0xff]
    %v8100 = vld [vmem:[#allocation23 + $0x138] sm:$0xff]
    %v8101 = vld [vmem:[#allocation23 + $0x140] sm:$0xff]
    %v8102 = vld [vmem:[#allocation23 + $0x148] sm:$0xff]
    %v8103 = vld [vmem:[#allocation23 + $0x150] sm:$0xff]
    %v8104 = vld [vmem:[#allocation23 + $0x158] sm:$0xff]
    %v8105 = vld [vmem:[#allocation23 + $0x160] sm:$0xff]
    %v8106 = vld [vmem:[#allocation23 + $0x168] sm:$0xff]
    %v8107 = vld [vmem:[#allocation23 + $0x170] sm:$0xff]
    %v8108 = vld [vmem:[#allocation23 + $0x178] sm:$0xff]
    %v8109 = vld [vmem:[#allocation23 + $0x180] sm:$0xff]
    %v8110 = vld [vmem:[#allocation23 + $0x188] sm:$0xff]
    %v8111 = vld [vmem:[#allocation23 + $0x190] sm:$0xff]
    %v8112 = vld [vmem:[#allocation23 + $0x198] sm:$0xff]
    %v8113 = vld [vmem:[#allocation23 + $0x1a0] sm:$0xff]
    %v8114 = vld [vmem:[#allocation23 + $0x1a8] sm:$0xff]
    %v8115 = vld [vmem:[#allocation23 + $0x1b0] sm:$0xff]
    %v8116 = vld [vmem:[#allocation23 + $0x1b8] sm:$0xff]
    %v8117 = vld [vmem:[#allocation23 + $0x1c0] sm:$0xff]
    %v8118 = vld [vmem:[#allocation23 + $0x1c8] sm:$0xff]
    %v8119 = vld [vmem:[#allocation23 + $0x1d0] sm:$0xff]
    %v8120 = vld [vmem:[#allocation23 + $0x1d8] sm:$0xff]
    %v8121 = vld [vmem:[#allocation23 + $0x1e0] sm:$0xff]
    %v8122 = vld [vmem:[#allocation23 + $0x1e8] sm:$0xff]
    %v8123 = vld [vmem:[#allocation23 + $0x1f0] sm:$0xff]
    %v8124 = vld [vmem:[#allocation23 + $0x1f8] sm:$0xff]
    %v8125 = vld [vmem:[#allocation23 + $0x200] sm:$0xff]
    %v8126 = vld [vmem:[#allocation23 + $0x208] sm:$0xff]
    %v8127 = vld [vmem:[#allocation23 + $0x210] sm:$0xff]
    %v8128 = vld [vmem:[#allocation23 + $0x218] sm:$0xff]
    %v8129 = vld [vmem:[#allocation23 + $0x220] sm:$0xff]
    %v8130 = vld [vmem:[#allocation23 + $0x228] sm:$0xff]
    %v8131 = vld [vmem:[#allocation23 + $0x230] sm:$0xff]
    %v8132 = vld [vmem:[#allocation23 + $0x238] sm:$0xff]
    %v8133 = vld [vmem:[#allocation23 + $0x240] sm:$0xff]
    %v8134 = vld [vmem:[#allocation23 + $0x248] sm:$0xff]
    %v8135 = vld [vmem:[#allocation23 + $0x250] sm:$0xff]
    %v8136 = vld [vmem:[#allocation23 + $0x258] sm:$0xff]
    %v8137 = vld [vmem:[#allocation23 + $0x260] sm:$0xff]
    %v8138 = vld [vmem:[#allocation23 + $0x268] sm:$0xff]
    %v8139 = vld [vmem:[#allocation23 + $0x270] sm:$0xff]
    %v8140 = vld [vmem:[#allocation23 + $0x278] sm:$0xff]
    %v8141 = vld [vmem:[#allocation23 + $0x280] sm:$0xff]
    %v8142 = vld [vmem:[#allocation23 + $0x288] sm:$0xff]
    %v8143 = vld [vmem:[#allocation23 + $0x290] sm:$0xff]
    %v8144 = vld [vmem:[#allocation23 + $0x298] sm:$0xff]
    %v8145 = vld [vmem:[#allocation23 + $0x2a0] sm:$0xff]
    %v8146 = vld [vmem:[#allocation23 + $0x2a8] sm:$0xff]
    %v8147 = vld [vmem:[#allocation23 + $0x2b0] sm:$0xff]
    %v8148 = vld [vmem:[#allocation23 + $0x2b8] sm:$0xff]
    %v8149 = vld [vmem:[#allocation23 + $0x2c0] sm:$0xff]
    %v8150 = vld [vmem:[#allocation23 + $0x2c8] sm:$0xff]
    %v8151 = vld [vmem:[#allocation23 + $0x2d0] sm:$0xff]
    %v8152 = vld [vmem:[#allocation23 + $0x2d8] sm:$0xff]
    %v8153 = vld [vmem:[#allocation23 + $0x2e0] sm:$0xff]
    %v8154 = vld [vmem:[#allocation23 + $0x2e8] sm:$0xff]
    %v8155 = vld [vmem:[#allocation23 + $0x2f0] sm:$0xff]
    %v8156 = vld [vmem:[#allocation23 + $0x2f8] sm:$0xff]
    %v8157 = vld [vmem:[%s35] sm:$0x3]
    %v8159 = vlaneseq
    %v8160 = vshrl.u32 %v8159, 7
    %v8161 = vsub.s32 0, %v8160
    %v8162 = vrot.slane %v8157, %v8161
    %v8163 = vlaneseq
    %v8164 = vshrl.u32 %v8163, 7
    %v8165 = vsub.s32 1, %v8164
    %v8166 = vrot.slane %v8157, %v8165
    %v8172 = vunpack.c.l.b16 %v8058
    %v8173 = vunpack.c.h.b16 %v8058
    %v8174 = vunpack.c.l.b16 %v8059
    %v8175 = vunpack.c.h.b16 %v8059
    %v8176 = vunpack.c.l.b16 %v8060
    %v8177 = vunpack.c.h.b16 %v8060
    %v8178 = vpack.c.b16 %v8172, %v8172
    %v8179 = vpack.c.b16 %v8173, %v8173
    %v8180 = vpack.c.b16 %v8174, %v8174
    %v8181 = vpack.c.b16 %v8175, %v8175
    %v8182 = vpack.c.b16 %v8176, %v8176
    %v8183 = vpack.c.b16 %v8177, %v8177
    %v8286 = vunpack.c.l.b16 %v8061
    %v8287 = vunpack.c.h.b16 %v8061
    %v8288 = vunpack.c.l.b16 %v8062
    %v8289 = vunpack.c.h.b16 %v8062
    %v8290 = vunpack.c.l.b16 %v8063
    %v8291 = vunpack.c.h.b16 %v8063
    %v8292 = vunpack.c.l.b16 %v8064
    %v8293 = vunpack.c.h.b16 %v8064
    %v8294 = vunpack.c.l.b16 %v8065
    %v8295 = vunpack.c.h.b16 %v8065
    %v8296 = vunpack.c.l.b16 %v8066
    %v8297 = vunpack.c.h.b16 %v8066
    %v8298 = vunpack.c.l.b16 %v8067
    %v8299 = vunpack.c.h.b16 %v8067
    %v8300 = vunpack.c.l.b16 %v8068
    %v8301 = vunpack.c.h.b16 %v8068
    %v8302 = vunpack.c.l.b16 %v8069
    %v8303 = vunpack.c.h.b16 %v8069
    %v8304 = vunpack.c.l.b16 %v8070
    %v8305 = vunpack.c.h.b16 %v8070
    %v8306 = vunpack.c.l.b16 %v8071
    %v8307 = vunpack.c.h.b16 %v8071
    %v8308 = vunpack.c.l.b16 %v8072
    %v8309 = vunpack.c.h.b16 %v8072
    %v8310 = vunpack.c.l.b16 %v8073
    %v8311 = vunpack.c.h.b16 %v8073
    %v8312 = vunpack.c.l.b16 %v8074
    %v8313 = vunpack.c.h.b16 %v8074
    %v8314 = vunpack.c.l.b16 %v8075
    %v8315 = vunpack.c.h.b16 %v8075
    %v8316 = vunpack.c.l.b16 %v8076
    %v8317 = vunpack.c.h.b16 %v8076
    %v8318 = vunpack.c.l.b16 %v8077
    %v8319 = vunpack.c.h.b16 %v8077
    %v8320 = vunpack.c.l.b16 %v8078
    %v8321 = vunpack.c.h.b16 %v8078
    %v8322 = vunpack.c.l.b16 %v8079
    %v8323 = vunpack.c.h.b16 %v8079
    %v8324 = vunpack.c.l.b16 %v8080
    %v8325 = vunpack.c.h.b16 %v8080
    %v8326 = vunpack.c.l.b16 %v8081
    %v8327 = vunpack.c.h.b16 %v8081
    %v8328 = vunpack.c.l.b16 %v8082
    %v8329 = vunpack.c.h.b16 %v8082
    %v8330 = vunpack.c.l.b16 %v8083
    %v8331 = vunpack.c.h.b16 %v8083
    %v8332 = vunpack.c.l.b16 %v8084
    %v8333 = vunpack.c.h.b16 %v8084
    %v8334 = vunpack.c.l.b16 %v8085
    %v8335 = vunpack.c.h.b16 %v8085
    %v8336 = vunpack.c.l.b16 %v8086
    %v8337 = vunpack.c.h.b16 %v8086
    %v8338 = vunpack.c.l.b16 %v8087
    %v8339 = vunpack.c.h.b16 %v8087
    %v8340 = vunpack.c.l.b16 %v8088
    %v8341 = vunpack.c.h.b16 %v8088
    %v8342 = vunpack.c.l.b16 %v8089
    %v8343 = vunpack.c.h.b16 %v8089
    %v8344 = vunpack.c.l.b16 %v8090
    %v8345 = vunpack.c.h.b16 %v8090
    %v8346 = vunpack.c.l.b16 %v8091
    %v8347 = vunpack.c.h.b16 %v8091
    %v8348 = vunpack.c.l.b16 %v8092
    %v8349 = vunpack.c.h.b16 %v8092
    %v8350 = vunpack.c.l.b16 %v8093
    %v8351 = vunpack.c.h.b16 %v8093
    %v8352 = vunpack.c.l.b16 %v8094
    %v8353 = vunpack.c.h.b16 %v8094
    %v8354 = vunpack.c.l.b16 %v8095
    %v8355 = vunpack.c.h.b16 %v8095
    %v8356 = vunpack.c.l.b16 %v8096
    %v8357 = vunpack.c.h.b16 %v8096
    %v8358 = vunpack.c.l.b16 %v8097
    %v8359 = vunpack.c.h.b16 %v8097
    %v8360 = vunpack.c.l.b16 %v8098
    %v8361 = vunpack.c.h.b16 %v8098
    %v8362 = vunpack.c.l.b16 %v8099
    %v8363 = vunpack.c.h.b16 %v8099
    %v8364 = vunpack.c.l.b16 %v8100
    %v8365 = vunpack.c.h.b16 %v8100
    %v8366 = vunpack.c.l.b16 %v8101
    %v8367 = vunpack.c.h.b16 %v8101
    %v8368 = vunpack.c.l.b16 %v8102
    %v8369 = vunpack.c.h.b16 %v8102
    %v8370 = vunpack.c.l.b16 %v8103
    %v8371 = vunpack.c.h.b16 %v8103
    %v8372 = vunpack.c.l.b16 %v8104
    %v8373 = vunpack.c.h.b16 %v8104
    %v8374 = vunpack.c.l.b16 %v8105
    %v8375 = vunpack.c.h.b16 %v8105
    %v8376 = vunpack.c.l.b16 %v8106
    %v8377 = vunpack.c.h.b16 %v8106
    %v8378 = vunpack.c.l.b16 %v8107
    %v8379 = vunpack.c.h.b16 %v8107
    %v8380 = vunpack.c.l.b16 %v8108
    %v8381 = vunpack.c.h.b16 %v8108
    %v8382 = vunpack.c.l.b16 %v8109
    %v8383 = vunpack.c.h.b16 %v8109
    %v8384 = vunpack.c.l.b16 %v8110
    %v8385 = vunpack.c.h.b16 %v8110
    %v8386 = vunpack.c.l.b16 %v8111
    %v8387 = vunpack.c.h.b16 %v8111
    %v8388 = vunpack.c.l.b16 %v8112
    %v8389 = vunpack.c.h.b16 %v8112
    %v8390 = vunpack.c.l.b16 %v8113
    %v8391 = vunpack.c.h.b16 %v8113
    %v8392 = vunpack.c.l.b16 %v8114
    %v8393 = vunpack.c.h.b16 %v8114
    %v8394 = vunpack.c.l.b16 %v8115
    %v8395 = vunpack.c.h.b16 %v8115
    %v8396 = vunpack.c.l.b16 %v8116
    %v8397 = vunpack.c.h.b16 %v8116
    %v8398 = vunpack.c.l.b16 %v8117
    %v8399 = vunpack.c.h.b16 %v8117
    %v8400 = vunpack.c.l.b16 %v8118
    %v8401 = vunpack.c.h.b16 %v8118
    %v8402 = vunpack.c.l.b16 %v8119
    %v8403 = vunpack.c.h.b16 %v8119
    %v8404 = vunpack.c.l.b16 %v8120
    %v8405 = vunpack.c.h.b16 %v8120
    %v8406 = vunpack.c.l.b16 %v8121
    %v8407 = vunpack.c.h.b16 %v8121
    %v8408 = vunpack.c.l.b16 %v8122
    %v8409 = vunpack.c.h.b16 %v8122
    %v8410 = vunpack.c.l.b16 %v8123
    %v8411 = vunpack.c.h.b16 %v8123
    %v8412 = vunpack.c.l.b16 %v8124
    %v8413 = vunpack.c.h.b16 %v8124
    %v8414 = vunpack.c.l.b16 %v8125
    %v8415 = vunpack.c.h.b16 %v8125
    %v8416 = vunpack.c.l.b16 %v8126
    %v8417 = vunpack.c.h.b16 %v8126
    %v8418 = vunpack.c.l.b16 %v8127
    %v8419 = vunpack.c.h.b16 %v8127
    %v8420 = vunpack.c.l.b16 %v8128
    %v8421 = vunpack.c.h.b16 %v8128
    %v8422 = vunpack.c.l.b16 %v8129
    %v8423 = vunpack.c.h.b16 %v8129
    %v8424 = vunpack.c.l.b16 %v8130
    %v8425 = vunpack.c.h.b16 %v8130
    %v8426 = vunpack.c.l.b16 %v8131
    %v8427 = vunpack.c.h.b16 %v8131
    %v8428 = vunpack.c.l.b16 %v8132
    %v8429 = vunpack.c.h.b16 %v8132
    %v8430 = vunpack.c.l.b16 %v8133
    %v8431 = vunpack.c.h.b16 %v8133
    %v8432 = vunpack.c.l.b16 %v8134
    %v8433 = vunpack.c.h.b16 %v8134
    %v8434 = vunpack.c.l.b16 %v8135
    %v8435 = vunpack.c.h.b16 %v8135
    %v8436 = vunpack.c.l.b16 %v8136
    %v8437 = vunpack.c.h.b16 %v8136
    %v8438 = vunpack.c.l.b16 %v8137
    %v8439 = vunpack.c.h.b16 %v8137
    %v8440 = vunpack.c.l.b16 %v8138
    %v8441 = vunpack.c.h.b16 %v8138
    %v8442 = vunpack.c.l.b16 %v8139
    %v8443 = vunpack.c.h.b16 %v8139
    %v8444 = vunpack.c.l.b16 %v8140
    %v8445 = vunpack.c.h.b16 %v8140
    %v8446 = vunpack.c.l.b16 %v8141
    %v8447 = vunpack.c.h.b16 %v8141
    %v8448 = vunpack.c.l.b16 %v8142
    %v8449 = vunpack.c.h.b16 %v8142
    %v8450 = vunpack.c.l.b16 %v8143
    %v8451 = vunpack.c.h.b16 %v8143
    %v8452 = vunpack.c.l.b16 %v8144
    %v8453 = vunpack.c.h.b16 %v8144
    %v8454 = vunpack.c.l.b16 %v8145
    %v8455 = vunpack.c.h.b16 %v8145
    %v8456 = vunpack.c.l.b16 %v8146
    %v8457 = vunpack.c.h.b16 %v8146
    %v8458 = vunpack.c.l.b16 %v8147
    %v8459 = vunpack.c.h.b16 %v8147
    %v8460 = vunpack.c.l.b16 %v8148
    %v8461 = vunpack.c.h.b16 %v8148
    %v8462 = vunpack.c.l.b16 %v8149
    %v8463 = vunpack.c.h.b16 %v8149
    %v8464 = vunpack.c.l.b16 %v8150
    %v8465 = vunpack.c.h.b16 %v8150
    %v8466 = vunpack.c.l.b16 %v8151
    %v8467 = vunpack.c.h.b16 %v8151
    %v8468 = vunpack.c.l.b16 %v8152
    %v8469 = vunpack.c.h.b16 %v8152
    %v8470 = vunpack.c.l.b16 %v8153
    %v8471 = vunpack.c.h.b16 %v8153
    %v8472 = vunpack.c.l.b16 %v8154
    %v8473 = vunpack.c.h.b16 %v8154
    %v8474 = vunpack.c.l.b16 %v8155
    %v8475 = vunpack.c.h.b16 %v8155
    %v8476 = vunpack.c.l.b16 %v8156
    %v8477 = vunpack.c.h.b16 %v8156
    %v8478 = vpack.c.b16 %v8288, %v8286
    %v8479 = vpack.c.b16 %v8289, %v8287
    %v8480 = vpack.c.b16 %v8292, %v8290
    %v8481 = vpack.c.b16 %v8293, %v8291
    %v8482 = vpack.c.b16 %v8296, %v8294
    %v8483 = vpack.c.b16 %v8297, %v8295
    %v8484 = vpack.c.b16 %v8300, %v8298
    %v8485 = vpack.c.b16 %v8301, %v8299
    %v8486 = vpack.c.b16 %v8304, %v8302
    %v8487 = vpack.c.b16 %v8305, %v8303
    %v8488 = vpack.c.b16 %v8308, %v8306
    %v8489 = vpack.c.b16 %v8309, %v8307
    %v8490 = vpack.c.b16 %v8312, %v8310
    %v8491 = vpack.c.b16 %v8313, %v8311
    %v8492 = vpack.c.b16 %v8316, %v8314
    %v8493 = vpack.c.b16 %v8317, %v8315
    %v8494 = vpack.c.b16 %v8320, %v8318
    %v8495 = vpack.c.b16 %v8321, %v8319
    %v8496 = vpack.c.b16 %v8324, %v8322
    %v8497 = vpack.c.b16 %v8325, %v8323
    %v8498 = vpack.c.b16 %v8328, %v8326
    %v8499 = vpack.c.b16 %v8329, %v8327
    %v8500 = vpack.c.b16 %v8332, %v8330
    %v8501 = vpack.c.b16 %v8333, %v8331
    %v8502 = vpack.c.b16 %v8336, %v8334
    %v8503 = vpack.c.b16 %v8337, %v8335
    %v8504 = vpack.c.b16 %v8340, %v8338
    %v8505 = vpack.c.b16 %v8341, %v8339
    %v8506 = vpack.c.b16 %v8344, %v8342
    %v8507 = vpack.c.b16 %v8345, %v8343
    %v8508 = vpack.c.b16 %v8348, %v8346
    %v8509 = vpack.c.b16 %v8349, %v8347
    %v8510 = vpack.c.b16 %v8352, %v8350
    %v8511 = vpack.c.b16 %v8353, %v8351
    %v8512 = vpack.c.b16 %v8356, %v8354
    %v8513 = vpack.c.b16 %v8357, %v8355
    %v8514 = vpack.c.b16 %v8360, %v8358
    %v8515 = vpack.c.b16 %v8361, %v8359
    %v8516 = vpack.c.b16 %v8364, %v8362
    %v8517 = vpack.c.b16 %v8365, %v8363
    %v8518 = vpack.c.b16 %v8368, %v8366
    %v8519 = vpack.c.b16 %v8369, %v8367
    %v8520 = vpack.c.b16 %v8372, %v8370
    %v8521 = vpack.c.b16 %v8373, %v8371
    %v8522 = vpack.c.b16 %v8376, %v8374
    %v8523 = vpack.c.b16 %v8377, %v8375
    %v8524 = vpack.c.b16 %v8380, %v8378
    %v8525 = vpack.c.b16 %v8381, %v8379
    %v8526 = vpack.c.b16 %v8384, %v8382
    %v8527 = vpack.c.b16 %v8385, %v8383
    %v8528 = vpack.c.b16 %v8388, %v8386
    %v8529 = vpack.c.b16 %v8389, %v8387
    %v8530 = vpack.c.b16 %v8392, %v8390
    %v8531 = vpack.c.b16 %v8393, %v8391
    %v8532 = vpack.c.b16 %v8396, %v8394
    %v8533 = vpack.c.b16 %v8397, %v8395
    %v8534 = vpack.c.b16 %v8400, %v8398
    %v8535 = vpack.c.b16 %v8401, %v8399
    %v8536 = vpack.c.b16 %v8404, %v8402
    %v8537 = vpack.c.b16 %v8405, %v8403
    %v8538 = vpack.c.b16 %v8408, %v8406
    %v8539 = vpack.c.b16 %v8409, %v8407
    %v8540 = vpack.c.b16 %v8412, %v8410
    %v8541 = vpack.c.b16 %v8413, %v8411
    %v8542 = vpack.c.b16 %v8416, %v8414
    %v8543 = vpack.c.b16 %v8417, %v8415
    %v8544 = vpack.c.b16 %v8420, %v8418
    %v8545 = vpack.c.b16 %v8421, %v8419
    %v8546 = vpack.c.b16 %v8424, %v8422
    %v8547 = vpack.c.b16 %v8425, %v8423
    %v8548 = vpack.c.b16 %v8428, %v8426
    %v8549 = vpack.c.b16 %v8429, %v8427
    %v8550 = vpack.c.b16 %v8432, %v8430
    %v8551 = vpack.c.b16 %v8433, %v8431
    %v8552 = vpack.c.b16 %v8436, %v8434
    %v8553 = vpack.c.b16 %v8437, %v8435
    %v8554 = vpack.c.b16 %v8440, %v8438
    %v8555 = vpack.c.b16 %v8441, %v8439
    %v8556 = vpack.c.b16 %v8444, %v8442
    %v8557 = vpack.c.b16 %v8445, %v8443
    %v8558 = vpack.c.b16 %v8448, %v8446
    %v8559 = vpack.c.b16 %v8449, %v8447
    %v8560 = vpack.c.b16 %v8452, %v8450
    %v8561 = vpack.c.b16 %v8453, %v8451
    %v8562 = vpack.c.b16 %v8456, %v8454
    %v8563 = vpack.c.b16 %v8457, %v8455
    %v8564 = vpack.c.b16 %v8460, %v8458
    %v8565 = vpack.c.b16 %v8461, %v8459
    %v8566 = vpack.c.b16 %v8464, %v8462
    %v8567 = vpack.c.b16 %v8465, %v8463
    %v8568 = vpack.c.b16 %v8468, %v8466
    %v8569 = vpack.c.b16 %v8469, %v8467
    %v8570 = vpack.c.b16 %v8472, %v8470
    %v8571 = vpack.c.b16 %v8473, %v8471
    %v8572 = vpack.c.b16 %v8476, %v8474
    %v8573 = vpack.c.b16 %v8477, %v8475
    %8670 = vmatprep.subr.bf16.mxu0 %v8493
    %8671 = vmatpush1.bf16.msra.mxu0 %v8492
    %8672 = vmatprep.subr.bf16.mxu0 %v8491
    %8673 = vmatpush1.bf16.msra.mxu0 %v8490
    %8674 = vmatprep.subr.bf16.mxu0 %v8489
    %8675 = vmatpush1.bf16.msra.mxu0 %v8488
    %8676 = vmatprep.subr.bf16.mxu0 %v8487
    %8677 = vmatpush1.bf16.msra.mxu0 %v8486
    %8678 = vmatprep.subr.bf16.mxu0 %v8485
    %8679 = vmatpush1.bf16.msra.mxu0 %v8484
    %8680 = vmatprep.subr.bf16.mxu0 %v8483
    %8681 = vmatpush1.bf16.msra.mxu0 %v8482
    %8682 = vmatprep.subr.bf16.mxu0 %v8481
    %8683 = vmatpush1.bf16.msra.mxu0 %v8480
    %8684 = vmatprep.subr.bf16.mxu0 %v8479
    %8685 = vmatpush1.bf16.msra.mxu0 %v8478
    %8686 = vmatprep.subr.bf16.mxu0 %v8509
    %8687 = vmatpush2.bf16.msra.mxu0 %v8508
    %8688 = vmatprep.subr.bf16.mxu0 %v8507
    %8689 = vmatpush2.bf16.msra.mxu0 %v8506
    %8690 = vmatprep.subr.bf16.mxu0 %v8505
    %8691 = vmatpush2.bf16.msra.mxu0 %v8504
    %8692 = vmatprep.subr.bf16.mxu0 %v8503
    %8693 = vmatpush2.bf16.msra.mxu0 %v8502
    %8694 = vmatprep.subr.bf16.mxu0 %v8501
    %8695 = vmatpush2.bf16.msra.mxu0 %v8500
    %8696 = vmatprep.subr.bf16.mxu0 %v8499
    %8697 = vmatpush2.bf16.msra.mxu0 %v8498
    %8698 = vmatprep.subr.bf16.mxu0 %v8497
    %8699 = vmatpush2.bf16.msra.mxu0 %v8496
    %8700 = vmatprep.subr.bf16.mxu0 %v8495
    %8701 = vmatpush2.bf16.msra.mxu0 %v8494
    %8702 = vmatprep.mubr.bf16.mxu0 %v8179
    %8703 = vmatmul.mubr.bf16.gmra.mxu0 %v8178
    %v8704 = vpop.f32.mrf.mxu0
    %v8705 = vadd.f32 %v8162, %v8704
    %v8706 = vpop.f32.mrf.mxu0
    %v8707 = vadd.f32 %v8166, %v8706
    %v8708 = vpop.f32.mrf.mxu0
    %v8709 = vpop.f32.mrf.mxu0
    %8710 = vdwg.mxu0
    %8711 = vmatprep.subr.bf16.mxu0 %v8525
    %8712 = vmatpush1.bf16.msra.mxu0 %v8524
    %8713 = vmatprep.subr.bf16.mxu0 %v8523
    %8714 = vmatpush1.bf16.msra.mxu0 %v8522
    %8715 = vmatprep.subr.bf16.mxu0 %v8521
    %8716 = vmatpush1.bf16.msra.mxu0 %v8520
    %8717 = vmatprep.subr.bf16.mxu0 %v8519
    %8718 = vmatpush1.bf16.msra.mxu0 %v8518
    %8719 = vmatprep.subr.bf16.mxu0 %v8517
    %8720 = vmatpush1.bf16.msra.mxu0 %v8516
    %8721 = vmatprep.subr.bf16.mxu0 %v8515
    %8722 = vmatpush1.bf16.msra.mxu0 %v8514
    %8723 = vmatprep.subr.bf16.mxu0 %v8513
    %8724 = vmatpush1.bf16.msra.mxu0 %v8512
    %8725 = vmatprep.subr.bf16.mxu0 %v8511
    %8726 = vmatpush1.bf16.msra.mxu0 %v8510
    %8727 = vmatprep.subr.bf16.mxu0 %v8541
    %8728 = vmatpush2.bf16.msra.mxu0 %v8540
    %8729 = vmatprep.subr.bf16.mxu0 %v8539
    %8730 = vmatpush2.bf16.msra.mxu0 %v8538
    %8731 = vmatprep.subr.bf16.mxu0 %v8537
    %8732 = vmatpush2.bf16.msra.mxu0 %v8536
    %8733 = vmatprep.subr.bf16.mxu0 %v8535
    %8734 = vmatpush2.bf16.msra.mxu0 %v8534
    %8735 = vmatprep.subr.bf16.mxu0 %v8533
    %8736 = vmatpush2.bf16.msra.mxu0 %v8532
    %8737 = vmatprep.subr.bf16.mxu0 %v8531
    %8738 = vmatpush2.bf16.msra.mxu0 %v8530
    %8739 = vmatprep.subr.bf16.mxu0 %v8529
    %8740 = vmatpush2.bf16.msra.mxu0 %v8528
    %8741 = vmatprep.subr.bf16.mxu0 %v8527
    %8742 = vmatpush2.bf16.msra.mxu0 %v8526
    %8743 = vmatprep.mubr.bf16.mxu0 %v8181
    %8744 = vmatmul.mubr.bf16.gmra.mxu0 %v8180
    %v8745 = vpop.f32.mrf.mxu0
    %v8746 = vadd.f32 %v8705, %v8745
    %v8747 = vpop.f32.mrf.mxu0
    %v8748 = vadd.f32 %v8707, %v8747
    %v8749 = vpop.f32.mrf.mxu0
    %v8750 = vpop.f32.mrf.mxu0
    %8751 = vdwg.mxu0
    %8752 = vmatprep.subr.bf16.mxu0 %v8557
    %8753 = vmatpush1.bf16.msra.mxu0 %v8556
    %8754 = vmatprep.subr.bf16.mxu0 %v8555
    %8755 = vmatpush1.bf16.msra.mxu0 %v8554
    %8756 = vmatprep.subr.bf16.mxu0 %v8553
    %8757 = vmatpush1.bf16.msra.mxu0 %v8552
    %8758 = vmatprep.subr.bf16.mxu0 %v8551
    %8759 = vmatpush1.bf16.msra.mxu0 %v8550
    %8760 = vmatprep.subr.bf16.mxu0 %v8549
    %8761 = vmatpush1.bf16.msra.mxu0 %v8548
    %8762 = vmatprep.subr.bf16.mxu0 %v8547
    %8763 = vmatpush1.bf16.msra.mxu0 %v8546
    %8764 = vmatprep.subr.bf16.mxu0 %v8545
    %8765 = vmatpush1.bf16.msra.mxu0 %v8544
    %8766 = vmatprep.subr.bf16.mxu0 %v8543
    %8767 = vmatpush1.bf16.msra.mxu0 %v8542
    %8768 = vmatprep.subr.bf16.mxu0 %v8573
    %8769 = vmatpush2.bf16.msra.mxu0 %v8572
    %8770 = vmatprep.subr.bf16.mxu0 %v8571
    %8771 = vmatpush2.bf16.msra.mxu0 %v8570
    %8772 = vmatprep.subr.bf16.mxu0 %v8569
    %8773 = vmatpush2.bf16.msra.mxu0 %v8568
    %8774 = vmatprep.subr.bf16.mxu0 %v8567
    %8775 = vmatpush2.bf16.msra.mxu0 %v8566
    %8776 = vmatprep.subr.bf16.mxu0 %v8565
    %8777 = vmatpush2.bf16.msra.mxu0 %v8564
    %8778 = vmatprep.subr.bf16.mxu0 %v8563
    %8779 = vmatpush2.bf16.msra.mxu0 %v8562
    %8780 = vmatprep.subr.bf16.mxu0 %v8561
    %8781 = vmatpush2.bf16.msra.mxu0 %v8560
    %8782 = vmatprep.subr.bf16.mxu0 %v8559
    %8783 = vmatpush2.bf16.msra.mxu0 %v8558
    %8784 = vmatprep.mubr.bf16.mxu0 %v8183
    %8785 = vmatmul.mubr.bf16.gmra.mxu0 %v8182
    %v8786 = vpop.f32.mrf.mxu0
    %v8787 = vadd.f32 %v8746, %v8786
    %v8788 = vpop.f32.mrf.mxu0
    %v8789 = vadd.f32 %v8748, %v8788
    %v8790 = vpop.f32.mrf.mxu0
    %v8791 = vpop.f32.mrf.mxu0
    %8792 = vdwg.mxu0
    %v8793 = vmul.f32 %v8787, 0.2
    %v8794 = vmul.f32 %v8789, 0.2
    %v8795 = vmax.f32 %v8787, %v8793
    %v8796 = vmax.f32 %v8789, %v8794
    %v8797 = vld [vmem:[%s41] sm:$0x3f]
    %8799 = vset.pattern.permute.xlu0 0
    %8800 = vperm.xlu0 %8799, %v8797
    %v8801 = vpop.permute.xlu0 %8800
    %v8803 = vmul.f32 %v8795, %v8801
    %v8804 = vmul.f32 %v8796, %v8801
    %v8807 = vrot.slane %v8803, 7
    %v8808 = vrot.slane %v8804, 7
    %8811 = vst [vmem:[#allocation12] sm:$0x7e] %v8807
    %8812 = vst [vmem:[#allocation12 + $0x8] sm:$0x7e] %v8808
    %v8813 = vld [vmem:[#allocation12] sm:$0x3f]
    %v8814 = vld [vmem:[#allocation12 + $0x8] sm:$0x3f]
    %v8815 = vpack.c.bf16 %v8813, %v8813
    %v8816 = vpack.c.bf16 %v8814, %v8814
    %v8819 = vunpack.c.l.b16 %v8815
    %v8820 = vunpack.c.l.b16 %v8816
    %v8821 = vpack.c.b16 %v8820, %v8819
    %8823 = vst [vmem:[#allocation13] sm:$0x77] %v8821
    %v8824 = vld [vmem:[#allocation12] sm:$0x7e]
    %v8825 = vld [vmem:[#allocation12 + $0x8] sm:$0x7e]
    %v8826 = vpack.c.bf16 %v8824, %v8824
    %v8827 = vpack.c.bf16 %v8825, %v8825
    %v8830 = vunpack.c.l.b16 %v8826
    %v8831 = vunpack.c.l.b16 %v8827
    %v8832 = vpack.c.b16 %v8831, %v8830
    %v8834 = vshrl.u32 %v8832, 16
    %v8836 = vrot.slane %v8834, 4
    %v8837 = vshll.u32 %v8832, 16
    %v8839 = vrot.slane %v8837, 5
    %v8840 = vor.u32 %v8836, %v8839
    %v8841 = vrot.slane %v8840, 4
    %8843 = vst [vmem:[#allocation13 + $0x8] sm:$0x77] %v8841
    %v8844 = vld [vmem:[#allocation12] sm:$0xfc]
    %v8845 = vld [vmem:[#allocation12 + $0x8] sm:$0xfc]
    %v8846 = vpack.c.bf16 %v8844, %v8844
    %v8847 = vpack.c.bf16 %v8845, %v8845
    %v8850 = vunpack.c.l.b16 %v8846
    %v8851 = vunpack.c.l.b16 %v8847
    %v8852 = vpack.c.b16 %v8851, %v8850
    %v8853 = vrot.slane %v8852, 5
    %v8854 = vrot.slane %v8853, 4
    %8856 = vst [vmem:[#allocation13 + $0x10] sm:$0x77] %v8854
    %v8857 = vld [vmem:[#allocation13] sm:$0x77]
    %v8858 = vld [vmem:[#allocation13 + $0x8] sm:$0x77]
    %v8859 = vld [vmem:[#allocation13 + $0x10] sm:$0x77]
    %v8860 = vld [vmem:[#allocation25] sm:$0xff]
    %v8861 = vld [vmem:[#allocation25 + $0x8] sm:$0xff]
    %v8862 = vld [vmem:[#allocation25 + $0x10] sm:$0xff]
    %v8863 = vld [vmem:[#allocation25 + $0x18] sm:$0xff]
    %v8864 = vld [vmem:[#allocation25 + $0x20] sm:$0xff]
    %v8865 = vld [vmem:[#allocation25 + $0x28] sm:$0xff]
    %v8866 = vld [vmem:[#allocation25 + $0x30] sm:$0xff]
    %v8867 = vld [vmem:[#allocation25 + $0x38] sm:$0xff]
    %v8868 = vld [vmem:[#allocation25 + $0x40] sm:$0xff]
    %v8869 = vld [vmem:[#allocation25 + $0x48] sm:$0xff]
    %v8870 = vld [vmem:[#allocation25 + $0x50] sm:$0xff]
    %v8871 = vld [vmem:[#allocation25 + $0x58] sm:$0xff]
    %v8872 = vld [vmem:[#allocation25 + $0x60] sm:$0xff]
    %v8873 = vld [vmem:[#allocation25 + $0x68] sm:$0xff]
    %v8874 = vld [vmem:[#allocation25 + $0x70] sm:$0xff]
    %v8875 = vld [vmem:[#allocation25 + $0x78] sm:$0xff]
    %v8876 = vld [vmem:[#allocation25 + $0x80] sm:$0xff]
    %v8877 = vld [vmem:[#allocation25 + $0x88] sm:$0xff]
    %v8878 = vld [vmem:[#allocation25 + $0x90] sm:$0xff]
    %v8879 = vld [vmem:[#allocation25 + $0x98] sm:$0xff]
    %v8880 = vld [vmem:[#allocation25 + $0xa0] sm:$0xff]
    %v8881 = vld [vmem:[#allocation25 + $0xa8] sm:$0xff]
    %v8882 = vld [vmem:[#allocation25 + $0xb0] sm:$0xff]
    %v8883 = vld [vmem:[#allocation25 + $0xb8] sm:$0xff]
    %v8884 = vld [vmem:[#allocation25 + $0xc0] sm:$0xff]
    %v8885 = vld [vmem:[#allocation25 + $0xc8] sm:$0xff]
    %v8886 = vld [vmem:[#allocation25 + $0xd0] sm:$0xff]
    %v8887 = vld [vmem:[#allocation25 + $0xd8] sm:$0xff]
    %v8888 = vld [vmem:[#allocation25 + $0xe0] sm:$0xff]
    %v8889 = vld [vmem:[#allocation25 + $0xe8] sm:$0xff]
    %v8890 = vld [vmem:[#allocation25 + $0xf0] sm:$0xff]
    %v8891 = vld [vmem:[#allocation25 + $0xf8] sm:$0xff]
    %v8892 = vld [vmem:[#allocation25 + $0x100] sm:$0xff]
    %v8893 = vld [vmem:[#allocation25 + $0x108] sm:$0xff]
    %v8894 = vld [vmem:[#allocation25 + $0x110] sm:$0xff]
    %v8895 = vld [vmem:[#allocation25 + $0x118] sm:$0xff]
    %v8896 = vld [vmem:[#allocation25 + $0x120] sm:$0xff]
    %v8897 = vld [vmem:[#allocation25 + $0x128] sm:$0xff]
    %v8898 = vld [vmem:[#allocation25 + $0x130] sm:$0xff]
    %v8899 = vld [vmem:[#allocation25 + $0x138] sm:$0xff]
    %v8900 = vld [vmem:[#allocation25 + $0x140] sm:$0xff]
    %v8901 = vld [vmem:[#allocation25 + $0x148] sm:$0xff]
    %v8902 = vld [vmem:[#allocation25 + $0x150] sm:$0xff]
    %v8903 = vld [vmem:[#allocation25 + $0x158] sm:$0xff]
    %v8904 = vld [vmem:[#allocation25 + $0x160] sm:$0xff]
    %v8905 = vld [vmem:[#allocation25 + $0x168] sm:$0xff]
    %v8906 = vld [vmem:[#allocation25 + $0x170] sm:$0xff]
    %v8907 = vld [vmem:[#allocation25 + $0x178] sm:$0xff]
    %v8908 = vld [vmem:[#allocation25 + $0x180] sm:$0xff]
    %v8909 = vld [vmem:[#allocation25 + $0x188] sm:$0xff]
    %v8910 = vld [vmem:[#allocation25 + $0x190] sm:$0xff]
    %v8911 = vld [vmem:[#allocation25 + $0x198] sm:$0xff]
    %v8912 = vld [vmem:[#allocation25 + $0x1a0] sm:$0xff]
    %v8913 = vld [vmem:[#allocation25 + $0x1a8] sm:$0xff]
    %v8914 = vld [vmem:[#allocation25 + $0x1b0] sm:$0xff]
    %v8915 = vld [vmem:[#allocation25 + $0x1b8] sm:$0xff]
    %v8916 = vld [vmem:[#allocation25 + $0x1c0] sm:$0xff]
    %v8917 = vld [vmem:[#allocation25 + $0x1c8] sm:$0xff]
    %v8918 = vld [vmem:[#allocation25 + $0x1d0] sm:$0xff]
    %v8919 = vld [vmem:[#allocation25 + $0x1d8] sm:$0xff]
    %v8920 = vld [vmem:[#allocation25 + $0x1e0] sm:$0xff]
    %v8921 = vld [vmem:[#allocation25 + $0x1e8] sm:$0xff]
    %v8922 = vld [vmem:[#allocation25 + $0x1f0] sm:$0xff]
    %v8923 = vld [vmem:[#allocation25 + $0x1f8] sm:$0xff]
    %v8924 = vld [vmem:[#allocation25 + $0x200] sm:$0xff]
    %v8925 = vld [vmem:[#allocation25 + $0x208] sm:$0xff]
    %v8926 = vld [vmem:[#allocation25 + $0x210] sm:$0xff]
    %v8927 = vld [vmem:[#allocation25 + $0x218] sm:$0xff]
    %v8928 = vld [vmem:[#allocation25 + $0x220] sm:$0xff]
    %v8929 = vld [vmem:[#allocation25 + $0x228] sm:$0xff]
    %v8930 = vld [vmem:[#allocation25 + $0x230] sm:$0xff]
    %v8931 = vld [vmem:[#allocation25 + $0x238] sm:$0xff]
    %v8932 = vld [vmem:[#allocation25 + $0x240] sm:$0xff]
    %v8933 = vld [vmem:[#allocation25 + $0x248] sm:$0xff]
    %v8934 = vld [vmem:[#allocation25 + $0x250] sm:$0xff]
    %v8935 = vld [vmem:[#allocation25 + $0x258] sm:$0xff]
    %v8936 = vld [vmem:[#allocation25 + $0x260] sm:$0xff]
    %v8937 = vld [vmem:[#allocation25 + $0x268] sm:$0xff]
    %v8938 = vld [vmem:[#allocation25 + $0x270] sm:$0xff]
    %v8939 = vld [vmem:[#allocation25 + $0x278] sm:$0xff]
    %v8940 = vld [vmem:[#allocation25 + $0x280] sm:$0xff]
    %v8941 = vld [vmem:[#allocation25 + $0x288] sm:$0xff]
    %v8942 = vld [vmem:[#allocation25 + $0x290] sm:$0xff]
    %v8943 = vld [vmem:[#allocation25 + $0x298] sm:$0xff]
    %v8944 = vld [vmem:[#allocation25 + $0x2a0] sm:$0xff]
    %v8945 = vld [vmem:[#allocation25 + $0x2a8] sm:$0xff]
    %v8946 = vld [vmem:[#allocation25 + $0x2b0] sm:$0xff]
    %v8947 = vld [vmem:[#allocation25 + $0x2b8] sm:$0xff]
    %v8948 = vld [vmem:[#allocation25 + $0x2c0] sm:$0xff]
    %v8949 = vld [vmem:[#allocation25 + $0x2c8] sm:$0xff]
    %v8950 = vld [vmem:[#allocation25 + $0x2d0] sm:$0xff]
    %v8951 = vld [vmem:[#allocation25 + $0x2d8] sm:$0xff]
    %v8952 = vld [vmem:[#allocation25 + $0x2e0] sm:$0xff]
    %v8953 = vld [vmem:[#allocation25 + $0x2e8] sm:$0xff]
    %v8954 = vld [vmem:[#allocation25 + $0x2f0] sm:$0xff]
    %v8955 = vld [vmem:[#allocation25 + $0x2f8] sm:$0xff]
    %v8956 = vld [vmem:[%s39] sm:$0x3]
    %v8958 = vlaneseq
    %v8959 = vshrl.u32 %v8958, 7
    %v8960 = vsub.s32 0, %v8959
    %v8961 = vrot.slane %v8956, %v8960
    %v8962 = vlaneseq
    %v8963 = vshrl.u32 %v8962, 7
    %v8964 = vsub.s32 1, %v8963
    %v8965 = vrot.slane %v8956, %v8964
    %v8971 = vunpack.c.l.b16 %v8857
    %v8972 = vunpack.c.h.b16 %v8857
    %v8973 = vunpack.c.l.b16 %v8858
    %v8974 = vunpack.c.h.b16 %v8858
    %v8975 = vunpack.c.l.b16 %v8859
    %v8976 = vunpack.c.h.b16 %v8859
    %v8977 = vpack.c.b16 %v8971, %v8971
    %v8978 = vpack.c.b16 %v8972, %v8972
    %v8979 = vpack.c.b16 %v8973, %v8973
    %v8980 = vpack.c.b16 %v8974, %v8974
    %v8981 = vpack.c.b16 %v8975, %v8975
    %v8982 = vpack.c.b16 %v8976, %v8976
    %v9085 = vunpack.c.l.b16 %v8860
    %v9086 = vunpack.c.h.b16 %v8860
    %v9087 = vunpack.c.l.b16 %v8861
    %v9088 = vunpack.c.h.b16 %v8861
    %v9089 = vunpack.c.l.b16 %v8862
    %v9090 = vunpack.c.h.b16 %v8862
    %v9091 = vunpack.c.l.b16 %v8863
    %v9092 = vunpack.c.h.b16 %v8863
    %v9093 = vunpack.c.l.b16 %v8864
    %v9094 = vunpack.c.h.b16 %v8864
    %v9095 = vunpack.c.l.b16 %v8865
    %v9096 = vunpack.c.h.b16 %v8865
    %v9097 = vunpack.c.l.b16 %v8866
    %v9098 = vunpack.c.h.b16 %v8866
    %v9099 = vunpack.c.l.b16 %v8867
    %v9100 = vunpack.c.h.b16 %v8867
    %v9101 = vunpack.c.l.b16 %v8868
    %v9102 = vunpack.c.h.b16 %v8868
    %v9103 = vunpack.c.l.b16 %v8869
    %v9104 = vunpack.c.h.b16 %v8869
    %v9105 = vunpack.c.l.b16 %v8870
    %v9106 = vunpack.c.h.b16 %v8870
    %v9107 = vunpack.c.l.b16 %v8871
    %v9108 = vunpack.c.h.b16 %v8871
    %v9109 = vunpack.c.l.b16 %v8872
    %v9110 = vunpack.c.h.b16 %v8872
    %v9111 = vunpack.c.l.b16 %v8873
    %v9112 = vunpack.c.h.b16 %v8873
    %v9113 = vunpack.c.l.b16 %v8874
    %v9114 = vunpack.c.h.b16 %v8874
    %v9115 = vunpack.c.l.b16 %v8875
    %v9116 = vunpack.c.h.b16 %v8875
    %v9117 = vunpack.c.l.b16 %v8876
    %v9118 = vunpack.c.h.b16 %v8876
    %v9119 = vunpack.c.l.b16 %v8877
    %v9120 = vunpack.c.h.b16 %v8877
    %v9121 = vunpack.c.l.b16 %v8878
    %v9122 = vunpack.c.h.b16 %v8878
    %v9123 = vunpack.c.l.b16 %v8879
    %v9124 = vunpack.c.h.b16 %v8879
    %v9125 = vunpack.c.l.b16 %v8880
    %v9126 = vunpack.c.h.b16 %v8880
    %v9127 = vunpack.c.l.b16 %v8881
    %v9128 = vunpack.c.h.b16 %v8881
    %v9129 = vunpack.c.l.b16 %v8882
    %v9130 = vunpack.c.h.b16 %v8882
    %v9131 = vunpack.c.l.b16 %v8883
    %v9132 = vunpack.c.h.b16 %v8883
    %v9133 = vunpack.c.l.b16 %v8884
    %v9134 = vunpack.c.h.b16 %v8884
    %v9135 = vunpack.c.l.b16 %v8885
    %v9136 = vunpack.c.h.b16 %v8885
    %v9137 = vunpack.c.l.b16 %v8886
    %v9138 = vunpack.c.h.b16 %v8886
    %v9139 = vunpack.c.l.b16 %v8887
    %v9140 = vunpack.c.h.b16 %v8887
    %v9141 = vunpack.c.l.b16 %v8888
    %v9142 = vunpack.c.h.b16 %v8888
    %v9143 = vunpack.c.l.b16 %v8889
    %v9144 = vunpack.c.h.b16 %v8889
    %v9145 = vunpack.c.l.b16 %v8890
    %v9146 = vunpack.c.h.b16 %v8890
    %v9147 = vunpack.c.l.b16 %v8891
    %v9148 = vunpack.c.h.b16 %v8891
    %v9149 = vunpack.c.l.b16 %v8892
    %v9150 = vunpack.c.h.b16 %v8892
    %v9151 = vunpack.c.l.b16 %v8893
    %v9152 = vunpack.c.h.b16 %v8893
    %v9153 = vunpack.c.l.b16 %v8894
    %v9154 = vunpack.c.h.b16 %v8894
    %v9155 = vunpack.c.l.b16 %v8895
    %v9156 = vunpack.c.h.b16 %v8895
    %v9157 = vunpack.c.l.b16 %v8896
    %v9158 = vunpack.c.h.b16 %v8896
    %v9159 = vunpack.c.l.b16 %v8897
    %v9160 = vunpack.c.h.b16 %v8897
    %v9161 = vunpack.c.l.b16 %v8898
    %v9162 = vunpack.c.h.b16 %v8898
    %v9163 = vunpack.c.l.b16 %v8899
    %v9164 = vunpack.c.h.b16 %v8899
    %v9165 = vunpack.c.l.b16 %v8900
    %v9166 = vunpack.c.h.b16 %v8900
    %v9167 = vunpack.c.l.b16 %v8901
    %v9168 = vunpack.c.h.b16 %v8901
    %v9169 = vunpack.c.l.b16 %v8902
    %v9170 = vunpack.c.h.b16 %v8902
    %v9171 = vunpack.c.l.b16 %v8903
    %v9172 = vunpack.c.h.b16 %v8903
    %v9173 = vunpack.c.l.b16 %v8904
    %v9174 = vunpack.c.h.b16 %v8904
    %v9175 = vunpack.c.l.b16 %v8905
    %v9176 = vunpack.c.h.b16 %v8905
    %v9177 = vunpack.c.l.b16 %v8906
    %v9178 = vunpack.c.h.b16 %v8906
    %v9179 = vunpack.c.l.b16 %v8907
    %v9180 = vunpack.c.h.b16 %v8907
    %v9181 = vunpack.c.l.b16 %v8908
    %v9182 = vunpack.c.h.b16 %v8908
    %v9183 = vunpack.c.l.b16 %v8909
    %v9184 = vunpack.c.h.b16 %v8909
    %v9185 = vunpack.c.l.b16 %v8910
    %v9186 = vunpack.c.h.b16 %v8910
    %v9187 = vunpack.c.l.b16 %v8911
    %v9188 = vunpack.c.h.b16 %v8911
    %v9189 = vunpack.c.l.b16 %v8912
    %v9190 = vunpack.c.h.b16 %v8912
    %v9191 = vunpack.c.l.b16 %v8913
    %v9192 = vunpack.c.h.b16 %v8913
    %v9193 = vunpack.c.l.b16 %v8914
    %v9194 = vunpack.c.h.b16 %v8914
    %v9195 = vunpack.c.l.b16 %v8915
    %v9196 = vunpack.c.h.b16 %v8915
    %v9197 = vunpack.c.l.b16 %v8916
    %v9198 = vunpack.c.h.b16 %v8916
    %v9199 = vunpack.c.l.b16 %v8917
    %v9200 = vunpack.c.h.b16 %v8917
    %v9201 = vunpack.c.l.b16 %v8918
    %v9202 = vunpack.c.h.b16 %v8918
    %v9203 = vunpack.c.l.b16 %v8919
    %v9204 = vunpack.c.h.b16 %v8919
    %v9205 = vunpack.c.l.b16 %v8920
    %v9206 = vunpack.c.h.b16 %v8920
    %v9207 = vunpack.c.l.b16 %v8921
    %v9208 = vunpack.c.h.b16 %v8921
    %v9209 = vunpack.c.l.b16 %v8922
    %v9210 = vunpack.c.h.b16 %v8922
    %v9211 = vunpack.c.l.b16 %v8923
    %v9212 = vunpack.c.h.b16 %v8923
    %v9213 = vunpack.c.l.b16 %v8924
    %v9214 = vunpack.c.h.b16 %v8924
    %v9215 = vunpack.c.l.b16 %v8925
    %v9216 = vunpack.c.h.b16 %v8925
    %v9217 = vunpack.c.l.b16 %v8926
    %v9218 = vunpack.c.h.b16 %v8926
    %v9219 = vunpack.c.l.b16 %v8927
    %v9220 = vunpack.c.h.b16 %v8927
    %v9221 = vunpack.c.l.b16 %v8928
    %v9222 = vunpack.c.h.b16 %v8928
    %v9223 = vunpack.c.l.b16 %v8929
    %v9224 = vunpack.c.h.b16 %v8929
    %v9225 = vunpack.c.l.b16 %v8930
    %v9226 = vunpack.c.h.b16 %v8930
    %v9227 = vunpack.c.l.b16 %v8931
    %v9228 = vunpack.c.h.b16 %v8931
    %v9229 = vunpack.c.l.b16 %v8932
    %v9230 = vunpack.c.h.b16 %v8932
    %v9231 = vunpack.c.l.b16 %v8933
    %v9232 = vunpack.c.h.b16 %v8933
    %v9233 = vunpack.c.l.b16 %v8934
    %v9234 = vunpack.c.h.b16 %v8934
    %v9235 = vunpack.c.l.b16 %v8935
    %v9236 = vunpack.c.h.b16 %v8935
    %v9237 = vunpack.c.l.b16 %v8936
    %v9238 = vunpack.c.h.b16 %v8936
    %v9239 = vunpack.c.l.b16 %v8937
    %v9240 = vunpack.c.h.b16 %v8937
    %v9241 = vunpack.c.l.b16 %v8938
    %v9242 = vunpack.c.h.b16 %v8938
    %v9243 = vunpack.c.l.b16 %v8939
    %v9244 = vunpack.c.h.b16 %v8939
    %v9245 = vunpack.c.l.b16 %v8940
    %v9246 = vunpack.c.h.b16 %v8940
    %v9247 = vunpack.c.l.b16 %v8941
    %v9248 = vunpack.c.h.b16 %v8941
    %v9249 = vunpack.c.l.b16 %v8942
    %v9250 = vunpack.c.h.b16 %v8942
    %v9251 = vunpack.c.l.b16 %v8943
    %v9252 = vunpack.c.h.b16 %v8943
    %v9253 = vunpack.c.l.b16 %v8944
    %v9254 = vunpack.c.h.b16 %v8944
    %v9255 = vunpack.c.l.b16 %v8945
    %v9256 = vunpack.c.h.b16 %v8945
    %v9257 = vunpack.c.l.b16 %v8946
    %v9258 = vunpack.c.h.b16 %v8946
    %v9259 = vunpack.c.l.b16 %v8947
    %v9260 = vunpack.c.h.b16 %v8947
    %v9261 = vunpack.c.l.b16 %v8948
    %v9262 = vunpack.c.h.b16 %v8948
    %v9263 = vunpack.c.l.b16 %v8949
    %v9264 = vunpack.c.h.b16 %v8949
    %v9265 = vunpack.c.l.b16 %v8950
    %v9266 = vunpack.c.h.b16 %v8950
    %v9267 = vunpack.c.l.b16 %v8951
    %v9268 = vunpack.c.h.b16 %v8951
    %v9269 = vunpack.c.l.b16 %v8952
    %v9270 = vunpack.c.h.b16 %v8952
    %v9271 = vunpack.c.l.b16 %v8953
    %v9272 = vunpack.c.h.b16 %v8953
    %v9273 = vunpack.c.l.b16 %v8954
    %v9274 = vunpack.c.h.b16 %v8954
    %v9275 = vunpack.c.l.b16 %v8955
    %v9276 = vunpack.c.h.b16 %v8955
    %v9277 = vpack.c.b16 %v9087, %v9085
    %v9278 = vpack.c.b16 %v9088, %v9086
    %v9279 = vpack.c.b16 %v9091, %v9089
    %v9280 = vpack.c.b16 %v9092, %v9090
    %v9281 = vpack.c.b16 %v9095, %v9093
    %v9282 = vpack.c.b16 %v9096, %v9094
    %v9283 = vpack.c.b16 %v9099, %v9097
    %v9284 = vpack.c.b16 %v9100, %v9098
    %v9285 = vpack.c.b16 %v9103, %v9101
    %v9286 = vpack.c.b16 %v9104, %v9102
    %v9287 = vpack.c.b16 %v9107, %v9105
    %v9288 = vpack.c.b16 %v9108, %v9106
    %v9289 = vpack.c.b16 %v9111, %v9109
    %v9290 = vpack.c.b16 %v9112, %v9110
    %v9291 = vpack.c.b16 %v9115, %v9113
    %v9292 = vpack.c.b16 %v9116, %v9114
    %v9293 = vpack.c.b16 %v9119, %v9117
    %v9294 = vpack.c.b16 %v9120, %v9118
    %v9295 = vpack.c.b16 %v9123, %v9121
    %v9296 = vpack.c.b16 %v9124, %v9122
    %v9297 = vpack.c.b16 %v9127, %v9125
    %v9298 = vpack.c.b16 %v9128, %v9126
    %v9299 = vpack.c.b16 %v9131, %v9129
    %v9300 = vpack.c.b16 %v9132, %v9130
    %v9301 = vpack.c.b16 %v9135, %v9133
    %v9302 = vpack.c.b16 %v9136, %v9134
    %v9303 = vpack.c.b16 %v9139, %v9137
    %v9304 = vpack.c.b16 %v9140, %v9138
    %v9305 = vpack.c.b16 %v9143, %v9141
    %v9306 = vpack.c.b16 %v9144, %v9142
    %v9307 = vpack.c.b16 %v9147, %v9145
    %v9308 = vpack.c.b16 %v9148, %v9146
    %v9309 = vpack.c.b16 %v9151, %v9149
    %v9310 = vpack.c.b16 %v9152, %v9150
    %v9311 = vpack.c.b16 %v9155, %v9153
    %v9312 = vpack.c.b16 %v9156, %v9154
    %v9313 = vpack.c.b16 %v9159, %v9157
    %v9314 = vpack.c.b16 %v9160, %v9158
    %v9315 = vpack.c.b16 %v9163, %v9161
    %v9316 = vpack.c.b16 %v9164, %v9162
    %v9317 = vpack.c.b16 %v9167, %v9165
    %v9318 = vpack.c.b16 %v9168, %v9166
    %v9319 = vpack.c.b16 %v9171, %v9169
    %v9320 = vpack.c.b16 %v9172, %v9170
    %v9321 = vpack.c.b16 %v9175, %v9173
    %v9322 = vpack.c.b16 %v9176, %v9174
    %v9323 = vpack.c.b16 %v9179, %v9177
    %v9324 = vpack.c.b16 %v9180, %v9178
    %v9325 = vpack.c.b16 %v9183, %v9181
    %v9326 = vpack.c.b16 %v9184, %v9182
    %v9327 = vpack.c.b16 %v9187, %v9185
    %v9328 = vpack.c.b16 %v9188, %v9186
    %v9329 = vpack.c.b16 %v9191, %v9189
    %v9330 = vpack.c.b16 %v9192, %v9190
    %v9331 = vpack.c.b16 %v9195, %v9193
    %v9332 = vpack.c.b16 %v9196, %v9194
    %v9333 = vpack.c.b16 %v9199, %v9197
    %v9334 = vpack.c.b16 %v9200, %v9198
    %v9335 = vpack.c.b16 %v9203, %v9201
    %v9336 = vpack.c.b16 %v9204, %v9202
    %v9337 = vpack.c.b16 %v9207, %v9205
    %v9338 = vpack.c.b16 %v9208, %v9206
    %v9339 = vpack.c.b16 %v9211, %v9209
    %v9340 = vpack.c.b16 %v9212, %v9210
    %v9341 = vpack.c.b16 %v9215, %v9213
    %v9342 = vpack.c.b16 %v9216, %v9214
    %v9343 = vpack.c.b16 %v9219, %v9217
    %v9344 = vpack.c.b16 %v9220, %v9218
    %v9345 = vpack.c.b16 %v9223, %v9221
    %v9346 = vpack.c.b16 %v9224, %v9222
    %v9347 = vpack.c.b16 %v9227, %v9225
    %v9348 = vpack.c.b16 %v9228, %v9226
    %v9349 = vpack.c.b16 %v9231, %v9229
    %v9350 = vpack.c.b16 %v9232, %v9230
    %v9351 = vpack.c.b16 %v9235, %v9233
    %v9352 = vpack.c.b16 %v9236, %v9234
    %v9353 = vpack.c.b16 %v9239, %v9237
    %v9354 = vpack.c.b16 %v9240, %v9238
    %v9355 = vpack.c.b16 %v9243, %v9241
    %v9356 = vpack.c.b16 %v9244, %v9242
    %v9357 = vpack.c.b16 %v9247, %v9245
    %v9358 = vpack.c.b16 %v9248, %v9246
    %v9359 = vpack.c.b16 %v9251, %v9249
    %v9360 = vpack.c.b16 %v9252, %v9250
    %v9361 = vpack.c.b16 %v9255, %v9253
    %v9362 = vpack.c.b16 %v9256, %v9254
    %v9363 = vpack.c.b16 %v9259, %v9257
    %v9364 = vpack.c.b16 %v9260, %v9258
    %v9365 = vpack.c.b16 %v9263, %v9261
    %v9366 = vpack.c.b16 %v9264, %v9262
    %v9367 = vpack.c.b16 %v9267, %v9265
    %v9368 = vpack.c.b16 %v9268, %v9266
    %v9369 = vpack.c.b16 %v9271, %v9269
    %v9370 = vpack.c.b16 %v9272, %v9270
    %v9371 = vpack.c.b16 %v9275, %v9273
    %v9372 = vpack.c.b16 %v9276, %v9274
    %9469 = vmatprep.subr.bf16.mxu0 %v9292
    %9470 = vmatpush1.bf16.msra.mxu0 %v9291
    %9471 = vmatprep.subr.bf16.mxu0 %v9290
    %9472 = vmatpush1.bf16.msra.mxu0 %v9289
    %9473 = vmatprep.subr.bf16.mxu0 %v9288
    %9474 = vmatpush1.bf16.msra.mxu0 %v9287
    %9475 = vmatprep.subr.bf16.mxu0 %v9286
    %9476 = vmatpush1.bf16.msra.mxu0 %v9285
    %9477 = vmatprep.subr.bf16.mxu0 %v9284
    %9478 = vmatpush1.bf16.msra.mxu0 %v9283
    %9479 = vmatprep.subr.bf16.mxu0 %v9282
    %9480 = vmatpush1.bf16.msra.mxu0 %v9281
    %9481 = vmatprep.subr.bf16.mxu0 %v9280
    %9482 = vmatpush1.bf16.msra.mxu0 %v9279
    %9483 = vmatprep.subr.bf16.mxu0 %v9278
    %9484 = vmatpush1.bf16.msra.mxu0 %v9277
    %9485 = vmatprep.subr.bf16.mxu0 %v9308
    %9486 = vmatpush2.bf16.msra.mxu0 %v9307
    %9487 = vmatprep.subr.bf16.mxu0 %v9306
    %9488 = vmatpush2.bf16.msra.mxu0 %v9305
    %9489 = vmatprep.subr.bf16.mxu0 %v9304
    %9490 = vmatpush2.bf16.msra.mxu0 %v9303
    %9491 = vmatprep.subr.bf16.mxu0 %v9302
    %9492 = vmatpush2.bf16.msra.mxu0 %v9301
    %9493 = vmatprep.subr.bf16.mxu0 %v9300
    %9494 = vmatpush2.bf16.msra.mxu0 %v9299
    %9495 = vmatprep.subr.bf16.mxu0 %v9298
    %9496 = vmatpush2.bf16.msra.mxu0 %v9297
    %9497 = vmatprep.subr.bf16.mxu0 %v9296
    %9498 = vmatpush2.bf16.msra.mxu0 %v9295
    %9499 = vmatprep.subr.bf16.mxu0 %v9294
    %9500 = vmatpush2.bf16.msra.mxu0 %v9293
    %9501 = vmatprep.mubr.bf16.mxu0 %v8978
    %9502 = vmatmul.mubr.bf16.gmra.mxu0 %v8977
    %v9503 = vpop.f32.mrf.mxu0
    %v9504 = vadd.f32 %v8961, %v9503
    %v9505 = vpop.f32.mrf.mxu0
    %v9506 = vadd.f32 %v8965, %v9505
    %v9507 = vpop.f32.mrf.mxu0
    %v9508 = vpop.f32.mrf.mxu0
    %9509 = vdwg.mxu0
    %9510 = vmatprep.subr.bf16.mxu0 %v9324
    %9511 = vmatpush1.bf16.msra.mxu0 %v9323
    %9512 = vmatprep.subr.bf16.mxu0 %v9322
    %9513 = vmatpush1.bf16.msra.mxu0 %v9321
    %9514 = vmatprep.subr.bf16.mxu0 %v9320
    %9515 = vmatpush1.bf16.msra.mxu0 %v9319
    %9516 = vmatprep.subr.bf16.mxu0 %v9318
    %9517 = vmatpush1.bf16.msra.mxu0 %v9317
    %9518 = vmatprep.subr.bf16.mxu0 %v9316
    %9519 = vmatpush1.bf16.msra.mxu0 %v9315
    %9520 = vmatprep.subr.bf16.mxu0 %v9314
    %9521 = vmatpush1.bf16.msra.mxu0 %v9313
    %9522 = vmatprep.subr.bf16.mxu0 %v9312
    %9523 = vmatpush1.bf16.msra.mxu0 %v9311
    %9524 = vmatprep.subr.bf16.mxu0 %v9310
    %9525 = vmatpush1.bf16.msra.mxu0 %v9309
    %9526 = vmatprep.subr.bf16.mxu0 %v9340
    %9527 = vmatpush2.bf16.msra.mxu0 %v9339
    %9528 = vmatprep.subr.bf16.mxu0 %v9338
    %9529 = vmatpush2.bf16.msra.mxu0 %v9337
    %9530 = vmatprep.subr.bf16.mxu0 %v9336
    %9531 = vmatpush2.bf16.msra.mxu0 %v9335
    %9532 = vmatprep.subr.bf16.mxu0 %v9334
    %9533 = vmatpush2.bf16.msra.mxu0 %v9333
    %9534 = vmatprep.subr.bf16.mxu0 %v9332
    %9535 = vmatpush2.bf16.msra.mxu0 %v9331
    %9536 = vmatprep.subr.bf16.mxu0 %v9330
    %9537 = vmatpush2.bf16.msra.mxu0 %v9329
    %9538 = vmatprep.subr.bf16.mxu0 %v9328
    %9539 = vmatpush2.bf16.msra.mxu0 %v9327
    %9540 = vmatprep.subr.bf16.mxu0 %v9326
    %9541 = vmatpush2.bf16.msra.mxu0 %v9325
    %9542 = vmatprep.mubr.bf16.mxu0 %v8980
    %9543 = vmatmul.mubr.bf16.gmra.mxu0 %v8979
    %v9544 = vpop.f32.mrf.mxu0
    %v9545 = vadd.f32 %v9504, %v9544
    %v9546 = vpop.f32.mrf.mxu0
    %v9547 = vadd.f32 %v9506, %v9546
    %v9548 = vpop.f32.mrf.mxu0
    %v9549 = vpop.f32.mrf.mxu0
    %9550 = vdwg.mxu0
    %9551 = vmatprep.subr.bf16.mxu0 %v9356
    %9552 = vmatpush1.bf16.msra.mxu0 %v9355
    %9553 = vmatprep.subr.bf16.mxu0 %v9354
    %9554 = vmatpush1.bf16.msra.mxu0 %v9353
    %9555 = vmatprep.subr.bf16.mxu0 %v9352
    %9556 = vmatpush1.bf16.msra.mxu0 %v9351
    %9557 = vmatprep.subr.bf16.mxu0 %v9350
    %9558 = vmatpush1.bf16.msra.mxu0 %v9349
    %9559 = vmatprep.subr.bf16.mxu0 %v9348
    %9560 = vmatpush1.bf16.msra.mxu0 %v9347
    %9561 = vmatprep.subr.bf16.mxu0 %v9346
    %9562 = vmatpush1.bf16.msra.mxu0 %v9345
    %9563 = vmatprep.subr.bf16.mxu0 %v9344
    %9564 = vmatpush1.bf16.msra.mxu0 %v9343
    %9565 = vmatprep.subr.bf16.mxu0 %v9342
    %9566 = vmatpush1.bf16.msra.mxu0 %v9341
    %9567 = vmatprep.subr.bf16.mxu0 %v9372
    %9568 = vmatpush2.bf16.msra.mxu0 %v9371
    %9569 = vmatprep.subr.bf16.mxu0 %v9370
    %9570 = vmatpush2.bf16.msra.mxu0 %v9369
    %9571 = vmatprep.subr.bf16.mxu0 %v9368
    %9572 = vmatpush2.bf16.msra.mxu0 %v9367
    %9573 = vmatprep.subr.bf16.mxu0 %v9366
    %9574 = vmatpush2.bf16.msra.mxu0 %v9365
    %9575 = vmatprep.subr.bf16.mxu0 %v9364
    %9576 = vmatpush2.bf16.msra.mxu0 %v9363
    %9577 = vmatprep.subr.bf16.mxu0 %v9362
    %9578 = vmatpush2.bf16.msra.mxu0 %v9361
    %9579 = vmatprep.subr.bf16.mxu0 %v9360
    %9580 = vmatpush2.bf16.msra.mxu0 %v9359
    %9581 = vmatprep.subr.bf16.mxu0 %v9358
    %9582 = vmatpush2.bf16.msra.mxu0 %v9357
    %9583 = vmatprep.mubr.bf16.mxu0 %v8982
    %9584 = vmatmul.mubr.bf16.gmra.mxu0 %v8981
    %v9585 = vpop.f32.mrf.mxu0
    %v9586 = vadd.f32 %v9545, %v9585
    %v9587 = vpop.f32.mrf.mxu0
    %v9588 = vadd.f32 %v9547, %v9587
    %v9589 = vpop.f32.mrf.mxu0
    %v9590 = vpop.f32.mrf.mxu0
    %9591 = vdwg.mxu0
    %v9592 = vmul.f32 %v9586, 0.2
    %v9593 = vmul.f32 %v9588, 0.2
    %v9594 = vmax.f32 %v9586, %v9592
    %v9595 = vmax.f32 %v9588, %v9593
    %v9596 = vld [vmem:[%s43] sm:$0x3f]
    %vm9597 = vcmask 48128
    %v9599 = vsel %vm9597, %v9596, 0
    %vm9601 = vcmask 1045504
    %v9603 = vsel %vm9601, %v9594, 0
    %v9606 = vsel %vm9601, %v9595, 0
    %9608 = vmatprep.subr.mxu0 0.0
    %9609 = vmatpush1.msra.mxu0 0.0
    %9610 = vmatprep.subr.mxu0 0.0
    %9611 = vmatpush1.msra.mxu0 0.0
    %9612 = vmatprep.subr.mxu0 0.0
    %9613 = vmatpush1.msra.mxu0 0.0
    %9614 = vmatprep.subr.mxu0 0.0
    %9615 = vmatpush1.msra.mxu0 0.0
    %9616 = vmatprep.subr.mxu0 0.0
    %9617 = vmatpush1.msra.mxu0 0.0
    %9618 = vmatprep.subr.mxu0 0.0
    %9619 = vmatpush1.msra.mxu0 0.0
    %9620 = vmatprep.subr.mxu0 0.0
    %9621 = vmatpush1.msra.mxu0 0.0
    %9622 = vmatprep.subr.mxu0 0.0
    %9623 = vmatpush1.msra.mxu0 0.0
    %9624 = vmatprep.subr.mxu0 0.0
    %9625 = vmatpush1.msra.mxu0 0.0
    %9626 = vmatprep.subr.mxu0 0.0
    %9627 = vmatpush1.msra.mxu0 0.0
    %9628 = vmatprep.subr.mxu0 0.0
    %9629 = vmatpush1.msra.mxu0 0.0
    %9630 = vmatprep.subr.mxu0 0.0
    %9631 = vmatpush1.msra.mxu0 0.0
    %9632 = vmatprep.subr.mxu0 0.0
    %9633 = vmatpush1.msra.mxu0 0.0
    %9634 = vmatprep.subr.mxu0 0.0
    %9635 = vmatpush1.msra.mxu0 0.0
    %9636 = vmatprep.subr.mxu0 0.0
    %9637 = vmatpush1.msra.mxu0 0.0
    %9638 = vmatprep.subr.mxu0 %v9606
    %9639 = vmatpush1.msra.mxu0 %v9603
    %9640 = vmatprep.subr.mxu0 0.0
    %9641 = vmatpush2.msra.mxu0 0.0
    %9642 = vmatprep.subr.mxu0 0.0
    %9643 = vmatpush2.msra.mxu0 0.0
    %9644 = vmatprep.subr.mxu0 0.0
    %9645 = vmatpush2.msra.mxu0 0.0
    %9646 = vmatprep.subr.mxu0 0.0
    %9647 = vmatpush2.msra.mxu0 0.0
    %9648 = vmatprep.subr.mxu0 0.0
    %9649 = vmatpush2.msra.mxu0 0.0
    %9650 = vmatprep.subr.mxu0 0.0
    %9651 = vmatpush2.msra.mxu0 0.0
    %9652 = vmatprep.subr.mxu0 0.0
    %9653 = vmatpush2.msra.mxu0 0.0
    %9654 = vmatprep.subr.mxu0 0.0
    %9655 = vmatpush2.msra.mxu0 0.0
    %9656 = vmatprep.subr.mxu0 0.0
    %9657 = vmatpush2.msra.mxu0 0.0
    %9658 = vmatprep.subr.mxu0 0.0
    %9659 = vmatpush2.msra.mxu0 0.0
    %9660 = vmatprep.subr.mxu0 0.0
    %9661 = vmatpush2.msra.mxu0 0.0
    %9662 = vmatprep.subr.mxu0 0.0
    %9663 = vmatpush2.msra.mxu0 0.0
    %9664 = vmatprep.subr.mxu0 0.0
    %9665 = vmatpush2.msra.mxu0 0.0
    %9666 = vmatprep.subr.mxu0 0.0
    %9667 = vmatpush2.msra.mxu0 0.0
    %9668 = vmatprep.subr.mxu0 0.0
    %9669 = vmatpush2.msra.mxu0 0.0
    %9670 = vmatprep.subr.mxu0 0.0
    %9671 = vmatpush2.msra.mxu0 0.0
    %9672 = vmatprep.mubr.f32.mxu0 0.0
    %9673 = vmatmul.mubr.f32.gmra.mxu0 %v9599
    %v9674 = vpop.f32.mrf.mxu0
    %v9675 = vadd.f32 0.0, %v9674
    %v9676 = vpop.f32.mrf.mxu0
    %v9677 = vadd.f32 0.0, %v9676
    %9678 = vdwg.mxu0
    %9679 = vst [vmem:[#allocation14] sm:$0x3f] %v9675
    %9680 = vst [vmem:[#allocation14 + $0x8] sm:$0x3f] %v9677
    %v9681 = vld [vmem:[#allocation14] sm:$0xf]
    %v9682 = vld [vmem:[#allocation14 + $0x8] sm:$0xf]
    %v9683 = vpack.c.bf16 %v9681, %v9681
    %v9684 = vpack.c.bf16 %v9682, %v9682
    %v9687 = vcombine.low %v9683, %v9684
    %v9689 = vunpack.c.l.s4 1983009808
    %v9690 = vunpack.c.0.s8 %v9689
    %v9691 = vlaneseq
    %v9692 = vshrl.u32 %v9691, 7
    %v9693 = vsub.s32 %v9690, %v9692
    %v9694 = vrot.slane %v9687, %v9693
    %9696 = vst [vmem:[#allocation15] sm:$0xf] %v9694
    %v9697 = vld [vmem:[#allocation14] sm:$0x1e]
    %v9698 = vld [vmem:[#allocation14 + $0x8] sm:$0x1e]
    %v9699 = vpack.c.bf16 %v9697, %v9697
    %v9700 = vpack.c.bf16 %v9698, %v9698
    %v9703 = vcombine.low %v9699, %v9700
    %v9705 = vunpack.c.l.s4 1983009808
    %v9706 = vunpack.c.0.s8 %v9705
    %v9707 = vlaneseq
    %v9708 = vshrl.u32 %v9707, 7
    %v9709 = vsub.s32 %v9706, %v9708
    %v9710 = vrot.slane %v9703, %v9709
    %v9711 = vcombine.high %v9710, %v9710
    %vm9712 = vsmask.f32 1280
    %vm9713 = vsmask.f32 3336
    %vm9714 = vmor %vm9712, %vm9713
    %vm9715 = vsmask.f32 5392
    %vm9716 = vmor %vm9714, %vm9715
    %vm9717 = vsmask.f32 7448
    %vm9718 = vmor %vm9716, %vm9717
    %v9720 = vshrl.u32 %v9710, 16
    %v9722 = vrot.slane %v9720, 6
    %v9723 = vshll.u32 %v9710, 16
    %v9725 = vrot.slane %v9723, 7
    %v9726 = vor.u32 %v9722, %v9725
    %v9727 = vrot.slane %v9726, 2
    %v9729 = vshll.u32 %v9711, 16
    %v9731 = vrot.slane %v9729, 7
    %v9732 = vsel %vm9718, %v9727, %v9731
    %9734 = vst [vmem:[#allocation15 + $0x4] sm:$0xf] %v9732
    %v9735 = vld [vmem:[#allocation14] sm:$0x3c]
    %v9736 = vld [vmem:[#allocation14 + $0x8] sm:$0x3c]
    %v9737 = vpack.c.bf16 %v9735, %v9735
    %v9738 = vpack.c.bf16 %v9736, %v9736
    %v9741 = vcombine.low %v9737, %v9738
    %v9743 = vunpack.c.l.s4 1983009808
    %v9744 = vunpack.c.0.s8 %v9743
    %v9745 = vlaneseq
    %v9746 = vshrl.u32 %v9745, 7
    %v9747 = vsub.s32 %v9744, %v9746
    %v9748 = vrot.slane %v9741, %v9747
    %v9749 = vcombine.high %v9748, %v9748
    %vm9750 = vcmask 1040384
    %vm9751 = vcmask 1042434
    %vm9752 = vmor %vm9750, %vm9751
    %vm9753 = vcmask 1044484
    %vm9754 = vmor %vm9752, %vm9753
    %vm9755 = vcmask 1046534
    %vm9756 = vmor %vm9754, %vm9755
    %v9757 = vrot.slane %v9748, 7
    %v9758 = vrot.slane %v9757, 2
    %v9759 = vrot.slane %v9749, 7
    %v9760 = vsel %vm9756, %v9758, %v9759
    %9762 = vst [vmem:[#allocation15 + $0x8] sm:$0xf] %v9760
    %v9763 = vld [vmem:[#allocation15] sm:$0xff]
    %v9764 = vld [vmem:[#allocation15 + $0x8] sm:$0xf]
    %v9765 = vld [vmem:[#allocation26] sm:$0xff]
    %v9766 = vld [vmem:[#allocation26 + $0x8] sm:$0xff]
    %v9767 = vld [vmem:[#allocation26 + $0x10] sm:$0xff]
    %v9768 = vld [vmem:[#allocation26 + $0x18] sm:$0xff]
    %v9769 = vld [vmem:[#allocation26 + $0x20] sm:$0xff]
    %v9770 = vld [vmem:[#allocation26 + $0x28] sm:$0xff]
    %v9771 = vld [vmem:[#allocation26 + $0x30] sm:$0xff]
    %v9772 = vld [vmem:[#allocation26 + $0x38] sm:$0xff]
    %v9773 = vld [vmem:[#allocation26 + $0x40] sm:$0xff]
    %v9774 = vld [vmem:[#allocation26 + $0x48] sm:$0xff]
    %v9775 = vld [vmem:[#allocation26 + $0x50] sm:$0xff]
    %v9776 = vld [vmem:[#allocation26 + $0x58] sm:$0xff]
    %v9777 = vld [vmem:[#allocation26 + $0x60] sm:$0xff]
    %v9778 = vld [vmem:[#allocation26 + $0x68] sm:$0xff]
    %v9779 = vld [vmem:[#allocation26 + $0x70] sm:$0xff]
    %v9780 = vld [vmem:[#allocation26 + $0x78] sm:$0xff]
    %v9781 = vld [vmem:[#allocation26 + $0x80] sm:$0xff]
    %v9782 = vld [vmem:[#allocation26 + $0x88] sm:$0xff]
    %v9783 = vld [vmem:[#allocation26 + $0x90] sm:$0xff]
    %v9784 = vld [vmem:[#allocation26 + $0x98] sm:$0xff]
    %v9785 = vld [vmem:[#allocation26 + $0xa0] sm:$0xff]
    %v9786 = vld [vmem:[#allocation26 + $0xa8] sm:$0xff]
    %v9787 = vld [vmem:[#allocation26 + $0xb0] sm:$0xff]
    %v9788 = vld [vmem:[#allocation26 + $0xb8] sm:$0xff]
    %v9789 = vld [vmem:[#allocation26 + $0xc0] sm:$0xff]
    %v9790 = vld [vmem:[#allocation26 + $0xc8] sm:$0xff]
    %v9791 = vld [vmem:[#allocation26 + $0xd0] sm:$0xff]
    %v9792 = vld [vmem:[#allocation26 + $0xd8] sm:$0xff]
    %v9793 = vld [vmem:[#allocation26 + $0xe0] sm:$0xff]
    %v9794 = vld [vmem:[#allocation26 + $0xe8] sm:$0xff]
    %v9795 = vld [vmem:[#allocation26 + $0xf0] sm:$0xff]
    %v9796 = vld [vmem:[#allocation26 + $0xf8] sm:$0xff]
    %v9797 = vld [vmem:[#allocation26 + $0x100] sm:$0xff]
    %v9798 = vld [vmem:[#allocation26 + $0x108] sm:$0xff]
    %v9799 = vld [vmem:[#allocation26 + $0x110] sm:$0xff]
    %v9800 = vld [vmem:[#allocation26 + $0x118] sm:$0xff]
    %v9801 = vld [vmem:[#allocation26 + $0x120] sm:$0xff]
    %v9802 = vld [vmem:[#allocation26 + $0x128] sm:$0xff]
    %v9803 = vld [vmem:[#allocation26 + $0x130] sm:$0xff]
    %v9804 = vld [vmem:[#allocation26 + $0x138] sm:$0xff]
    %v9805 = vld [vmem:[#allocation26 + $0x140] sm:$0xff]
    %v9806 = vld [vmem:[#allocation26 + $0x148] sm:$0xff]
    %v9807 = vld [vmem:[#allocation26 + $0x150] sm:$0xff]
    %v9808 = vld [vmem:[#allocation26 + $0x158] sm:$0xff]
    %v9809 = vld [vmem:[#allocation26 + $0x160] sm:$0xff]
    %v9810 = vld [vmem:[#allocation26 + $0x168] sm:$0xff]
    %v9811 = vld [vmem:[#allocation26 + $0x170] sm:$0xff]
    %v9812 = vld [vmem:[#allocation26 + $0x178] sm:$0xff]
    %v9813 = vld [vmem:[#allocation26 + $0x180] sm:$0xff]
    %v9814 = vld [vmem:[#allocation26 + $0x188] sm:$0xff]
    %v9815 = vld [vmem:[#allocation26 + $0x190] sm:$0xff]
    %v9816 = vld [vmem:[#allocation26 + $0x198] sm:$0xff]
    %v9817 = vld [vmem:[#allocation26 + $0x1a0] sm:$0xff]
    %v9818 = vld [vmem:[#allocation26 + $0x1a8] sm:$0xff]
    %v9819 = vld [vmem:[#allocation26 + $0x1b0] sm:$0xff]
    %v9820 = vld [vmem:[#allocation26 + $0x1b8] sm:$0xff]
    %v9821 = vld [vmem:[#allocation26 + $0x1c0] sm:$0xff]
    %v9822 = vld [vmem:[#allocation26 + $0x1c8] sm:$0xff]
    %v9823 = vld [vmem:[#allocation26 + $0x1d0] sm:$0xff]
    %v9824 = vld [vmem:[#allocation26 + $0x1d8] sm:$0xff]
    %v9825 = vld [vmem:[#allocation26 + $0x1e0] sm:$0xff]
    %v9826 = vld [vmem:[#allocation26 + $0x1e8] sm:$0xff]
    %v9827 = vld [vmem:[#allocation26 + $0x1f0] sm:$0xff]
    %v9828 = vld [vmem:[#allocation26 + $0x1f8] sm:$0xff]
    %v9829 = vld [vmem:[#allocation26 + $0x200] sm:$0xff]
    %v9830 = vld [vmem:[#allocation26 + $0x208] sm:$0xff]
    %v9831 = vld [vmem:[#allocation26 + $0x210] sm:$0xff]
    %v9832 = vld [vmem:[#allocation26 + $0x218] sm:$0xff]
    %v9833 = vld [vmem:[#allocation26 + $0x220] sm:$0xff]
    %v9834 = vld [vmem:[#allocation26 + $0x228] sm:$0xff]
    %v9835 = vld [vmem:[#allocation26 + $0x230] sm:$0xff]
    %v9836 = vld [vmem:[#allocation26 + $0x238] sm:$0xff]
    %v9837 = vld [vmem:[#allocation26 + $0x240] sm:$0xff]
    %v9838 = vld [vmem:[#allocation26 + $0x248] sm:$0xff]
    %v9839 = vld [vmem:[#allocation26 + $0x250] sm:$0xff]
    %v9840 = vld [vmem:[#allocation26 + $0x258] sm:$0xff]
    %v9841 = vld [vmem:[#allocation26 + $0x260] sm:$0xff]
    %v9842 = vld [vmem:[#allocation26 + $0x268] sm:$0xff]
    %v9843 = vld [vmem:[#allocation26 + $0x270] sm:$0xff]
    %v9844 = vld [vmem:[#allocation26 + $0x278] sm:$0xff]
    %v9845 = vld [vmem:[#allocation26 + $0x280] sm:$0xff]
    %v9846 = vld [vmem:[#allocation26 + $0x288] sm:$0xff]
    %v9847 = vld [vmem:[#allocation26 + $0x290] sm:$0xff]
    %v9848 = vld [vmem:[#allocation26 + $0x298] sm:$0xff]
    %v9849 = vld [vmem:[#allocation26 + $0x2a0] sm:$0xff]
    %v9850 = vld [vmem:[#allocation26 + $0x2a8] sm:$0xff]
    %v9851 = vld [vmem:[#allocation26 + $0x2b0] sm:$0xff]
    %v9852 = vld [vmem:[#allocation26 + $0x2b8] sm:$0xff]
    %v9853 = vld [vmem:[#allocation26 + $0x2c0] sm:$0xff]
    %v9854 = vld [vmem:[#allocation26 + $0x2c8] sm:$0xff]
    %v9855 = vld [vmem:[#allocation26 + $0x2d0] sm:$0xff]
    %v9856 = vld [vmem:[#allocation26 + $0x2d8] sm:$0xff]
    %v9857 = vld [vmem:[#allocation26 + $0x2e0] sm:$0xff]
    %v9858 = vld [vmem:[#allocation26 + $0x2e8] sm:$0xff]
    %v9859 = vld [vmem:[#allocation26 + $0x2f0] sm:$0xff]
    %v9860 = vld [vmem:[#allocation26 + $0x2f8] sm:$0xff]
    %v9861 = vld [vmem:[%s47] sm:$0x3]
    %v9863 = vlaneseq
    %v9864 = vshrl.u32 %v9863, 7
    %v9865 = vsub.s32 0, %v9864
    %v9866 = vrot.slane %v9861, %v9865
    %v9867 = vlaneseq
    %v9868 = vshrl.u32 %v9867, 7
    %v9869 = vsub.s32 1, %v9868
    %v9870 = vrot.slane %v9861, %v9869
    %v9875 = vcombine.high %v9763, %v9763
    %v9877 = vunpack.c.l.s4 1983009808
    %v9878 = vunpack.c.0.s8 %v9877
    %v9879 = vlaneseq
    %v9880 = vshrl.u32 %v9879, 7
    %v9881 = vsub.s32 %v9878, %v9880
    %v9882 = vrot.slane %v9763, %v9881
    %v9884 = vunpack.c.l.s4 1983009808
    %v9885 = vunpack.c.0.s8 %v9884
    %v9886 = vlaneseq
    %v9887 = vshrl.u32 %v9886, 7
    %v9888 = vsub.s32 %v9885, %v9887
    %v9889 = vrot.slane %v9875, %v9888
    %v9890 = vcombine.high %v9882, %v9882
    %v9891 = vcombine.high %v9889, %v9889
    %v9893 = vunpack.c.l.s4 1983009808
    %v9894 = vunpack.c.0.s8 %v9893
    %v9895 = vlaneseq
    %v9896 = vshrl.u32 %v9895, 7
    %v9897 = vsub.s32 %v9894, %v9896
    %v9898 = vrot.slane %v9764, %v9897
    %v9899 = vcombine.high %v9898, %v9898
    %v10002 = vunpack.c.l.b16 %v9765
    %v10003 = vunpack.c.h.b16 %v9765
    %v10004 = vunpack.c.l.b16 %v9766
    %v10005 = vunpack.c.h.b16 %v9766
    %v10006 = vunpack.c.l.b16 %v9767
    %v10007 = vunpack.c.h.b16 %v9767
    %v10008 = vunpack.c.l.b16 %v9768
    %v10009 = vunpack.c.h.b16 %v9768
    %v10010 = vunpack.c.l.b16 %v9769
    %v10011 = vunpack.c.h.b16 %v9769
    %v10012 = vunpack.c.l.b16 %v9770
    %v10013 = vunpack.c.h.b16 %v9770
    %v10014 = vunpack.c.l.b16 %v9771
    %v10015 = vunpack.c.h.b16 %v9771
    %v10016 = vunpack.c.l.b16 %v9772
    %v10017 = vunpack.c.h.b16 %v9772
    %v10018 = vunpack.c.l.b16 %v9773
    %v10019 = vunpack.c.h.b16 %v9773
    %v10020 = vunpack.c.l.b16 %v9774
    %v10021 = vunpack.c.h.b16 %v9774
    %v10022 = vunpack.c.l.b16 %v9775
    %v10023 = vunpack.c.h.b16 %v9775
    %v10024 = vunpack.c.l.b16 %v9776
    %v10025 = vunpack.c.h.b16 %v9776
    %v10026 = vunpack.c.l.b16 %v9777
    %v10027 = vunpack.c.h.b16 %v9777
    %v10028 = vunpack.c.l.b16 %v9778
    %v10029 = vunpack.c.h.b16 %v9778
    %v10030 = vunpack.c.l.b16 %v9779
    %v10031 = vunpack.c.h.b16 %v9779
    %v10032 = vunpack.c.l.b16 %v9780
    %v10033 = vunpack.c.h.b16 %v9780
    %v10034 = vunpack.c.l.b16 %v9781
    %v10035 = vunpack.c.h.b16 %v9781
    %v10036 = vunpack.c.l.b16 %v9782
    %v10037 = vunpack.c.h.b16 %v9782
    %v10038 = vunpack.c.l.b16 %v9783
    %v10039 = vunpack.c.h.b16 %v9783
    %v10040 = vunpack.c.l.b16 %v9784
    %v10041 = vunpack.c.h.b16 %v9784
    %v10042 = vunpack.c.l.b16 %v9785
    %v10043 = vunpack.c.h.b16 %v9785
    %v10044 = vunpack.c.l.b16 %v9786
    %v10045 = vunpack.c.h.b16 %v9786
    %v10046 = vunpack.c.l.b16 %v9787
    %v10047 = vunpack.c.h.b16 %v9787
    %v10048 = vunpack.c.l.b16 %v9788
    %v10049 = vunpack.c.h.b16 %v9788
    %v10050 = vunpack.c.l.b16 %v9789
    %v10051 = vunpack.c.h.b16 %v9789
    %v10052 = vunpack.c.l.b16 %v9790
    %v10053 = vunpack.c.h.b16 %v9790
    %v10054 = vunpack.c.l.b16 %v9791
    %v10055 = vunpack.c.h.b16 %v9791
    %v10056 = vunpack.c.l.b16 %v9792
    %v10057 = vunpack.c.h.b16 %v9792
    %v10058 = vunpack.c.l.b16 %v9793
    %v10059 = vunpack.c.h.b16 %v9793
    %v10060 = vunpack.c.l.b16 %v9794
    %v10061 = vunpack.c.h.b16 %v9794
    %v10062 = vunpack.c.l.b16 %v9795
    %v10063 = vunpack.c.h.b16 %v9795
    %v10064 = vunpack.c.l.b16 %v9796
    %v10065 = vunpack.c.h.b16 %v9796
    %v10066 = vunpack.c.l.b16 %v9797
    %v10067 = vunpack.c.h.b16 %v9797
    %v10068 = vunpack.c.l.b16 %v9798
    %v10069 = vunpack.c.h.b16 %v9798
    %v10070 = vunpack.c.l.b16 %v9799
    %v10071 = vunpack.c.h.b16 %v9799
    %v10072 = vunpack.c.l.b16 %v9800
    %v10073 = vunpack.c.h.b16 %v9800
    %v10074 = vunpack.c.l.b16 %v9801
    %v10075 = vunpack.c.h.b16 %v9801
    %v10076 = vunpack.c.l.b16 %v9802
    %v10077 = vunpack.c.h.b16 %v9802
    %v10078 = vunpack.c.l.b16 %v9803
    %v10079 = vunpack.c.h.b16 %v9803
    %v10080 = vunpack.c.l.b16 %v9804
    %v10081 = vunpack.c.h.b16 %v9804
    %v10082 = vunpack.c.l.b16 %v9805
    %v10083 = vunpack.c.h.b16 %v9805
    %v10084 = vunpack.c.l.b16 %v9806
    %v10085 = vunpack.c.h.b16 %v9806
    %v10086 = vunpack.c.l.b16 %v9807
    %v10087 = vunpack.c.h.b16 %v9807
    %v10088 = vunpack.c.l.b16 %v9808
    %v10089 = vunpack.c.h.b16 %v9808
    %v10090 = vunpack.c.l.b16 %v9809
    %v10091 = vunpack.c.h.b16 %v9809
    %v10092 = vunpack.c.l.b16 %v9810
    %v10093 = vunpack.c.h.b16 %v9810
    %v10094 = vunpack.c.l.b16 %v9811
    %v10095 = vunpack.c.h.b16 %v9811
    %v10096 = vunpack.c.l.b16 %v9812
    %v10097 = vunpack.c.h.b16 %v9812
    %v10098 = vunpack.c.l.b16 %v9813
    %v10099 = vunpack.c.h.b16 %v9813
    %v10100 = vunpack.c.l.b16 %v9814
    %v10101 = vunpack.c.h.b16 %v9814
    %v10102 = vunpack.c.l.b16 %v9815
    %v10103 = vunpack.c.h.b16 %v9815
    %v10104 = vunpack.c.l.b16 %v9816
    %v10105 = vunpack.c.h.b16 %v9816
    %v10106 = vunpack.c.l.b16 %v9817
    %v10107 = vunpack.c.h.b16 %v9817
    %v10108 = vunpack.c.l.b16 %v9818
    %v10109 = vunpack.c.h.b16 %v9818
    %v10110 = vunpack.c.l.b16 %v9819
    %v10111 = vunpack.c.h.b16 %v9819
    %v10112 = vunpack.c.l.b16 %v9820
    %v10113 = vunpack.c.h.b16 %v9820
    %v10114 = vunpack.c.l.b16 %v9821
    %v10115 = vunpack.c.h.b16 %v9821
    %v10116 = vunpack.c.l.b16 %v9822
    %v10117 = vunpack.c.h.b16 %v9822
    %v10118 = vunpack.c.l.b16 %v9823
    %v10119 = vunpack.c.h.b16 %v9823
    %v10120 = vunpack.c.l.b16 %v9824
    %v10121 = vunpack.c.h.b16 %v9824
    %v10122 = vunpack.c.l.b16 %v9825
    %v10123 = vunpack.c.h.b16 %v9825
    %v10124 = vunpack.c.l.b16 %v9826
    %v10125 = vunpack.c.h.b16 %v9826
    %v10126 = vunpack.c.l.b16 %v9827
    %v10127 = vunpack.c.h.b16 %v9827
    %v10128 = vunpack.c.l.b16 %v9828
    %v10129 = vunpack.c.h.b16 %v9828
    %v10130 = vunpack.c.l.b16 %v9829
    %v10131 = vunpack.c.h.b16 %v9829
    %v10132 = vunpack.c.l.b16 %v9830
    %v10133 = vunpack.c.h.b16 %v9830
    %v10134 = vunpack.c.l.b16 %v9831
    %v10135 = vunpack.c.h.b16 %v9831
    %v10136 = vunpack.c.l.b16 %v9832
    %v10137 = vunpack.c.h.b16 %v9832
    %v10138 = vunpack.c.l.b16 %v9833
    %v10139 = vunpack.c.h.b16 %v9833
    %v10140 = vunpack.c.l.b16 %v9834
    %v10141 = vunpack.c.h.b16 %v9834
    %v10142 = vunpack.c.l.b16 %v9835
    %v10143 = vunpack.c.h.b16 %v9835
    %v10144 = vunpack.c.l.b16 %v9836
    %v10145 = vunpack.c.h.b16 %v9836
    %v10146 = vunpack.c.l.b16 %v9837
    %v10147 = vunpack.c.h.b16 %v9837
    %v10148 = vunpack.c.l.b16 %v9838
    %v10149 = vunpack.c.h.b16 %v9838
    %v10150 = vunpack.c.l.b16 %v9839
    %v10151 = vunpack.c.h.b16 %v9839
    %v10152 = vunpack.c.l.b16 %v9840
    %v10153 = vunpack.c.h.b16 %v9840
    %v10154 = vunpack.c.l.b16 %v9841
    %v10155 = vunpack.c.h.b16 %v9841
    %v10156 = vunpack.c.l.b16 %v9842
    %v10157 = vunpack.c.h.b16 %v9842
    %v10158 = vunpack.c.l.b16 %v9843
    %v10159 = vunpack.c.h.b16 %v9843
    %v10160 = vunpack.c.l.b16 %v9844
    %v10161 = vunpack.c.h.b16 %v9844
    %v10162 = vunpack.c.l.b16 %v9845
    %v10163 = vunpack.c.h.b16 %v9845
    %v10164 = vunpack.c.l.b16 %v9846
    %v10165 = vunpack.c.h.b16 %v9846
    %v10166 = vunpack.c.l.b16 %v9847
    %v10167 = vunpack.c.h.b16 %v9847
    %v10168 = vunpack.c.l.b16 %v9848
    %v10169 = vunpack.c.h.b16 %v9848
    %v10170 = vunpack.c.l.b16 %v9849
    %v10171 = vunpack.c.h.b16 %v9849
    %v10172 = vunpack.c.l.b16 %v9850
    %v10173 = vunpack.c.h.b16 %v9850
    %v10174 = vunpack.c.l.b16 %v9851
    %v10175 = vunpack.c.h.b16 %v9851
    %v10176 = vunpack.c.l.b16 %v9852
    %v10177 = vunpack.c.h.b16 %v9852
    %v10178 = vunpack.c.l.b16 %v9853
    %v10179 = vunpack.c.h.b16 %v9853
    %v10180 = vunpack.c.l.b16 %v9854
    %v10181 = vunpack.c.h.b16 %v9854
    %v10182 = vunpack.c.l.b16 %v9855
    %v10183 = vunpack.c.h.b16 %v9855
    %v10184 = vunpack.c.l.b16 %v9856
    %v10185 = vunpack.c.h.b16 %v9856
    %v10186 = vunpack.c.l.b16 %v9857
    %v10187 = vunpack.c.h.b16 %v9857
    %v10188 = vunpack.c.l.b16 %v9858
    %v10189 = vunpack.c.h.b16 %v9858
    %v10190 = vunpack.c.l.b16 %v9859
    %v10191 = vunpack.c.h.b16 %v9859
    %v10192 = vunpack.c.l.b16 %v9860
    %v10193 = vunpack.c.h.b16 %v9860
    %v10194 = vpack.c.b16 %v10004, %v10002
    %v10195 = vpack.c.b16 %v10005, %v10003
    %v10196 = vpack.c.b16 %v10008, %v10006
    %v10197 = vpack.c.b16 %v10009, %v10007
    %v10198 = vpack.c.b16 %v10012, %v10010
    %v10199 = vpack.c.b16 %v10013, %v10011
    %v10200 = vpack.c.b16 %v10016, %v10014
    %v10201 = vpack.c.b16 %v10017, %v10015
    %v10202 = vpack.c.b16 %v10020, %v10018
    %v10203 = vpack.c.b16 %v10021, %v10019
    %v10204 = vpack.c.b16 %v10024, %v10022
    %v10205 = vpack.c.b16 %v10025, %v10023
    %v10206 = vpack.c.b16 %v10028, %v10026
    %v10207 = vpack.c.b16 %v10029, %v10027
    %v10208 = vpack.c.b16 %v10032, %v10030
    %v10209 = vpack.c.b16 %v10033, %v10031
    %v10210 = vpack.c.b16 %v10036, %v10034
    %v10211 = vpack.c.b16 %v10037, %v10035
    %v10212 = vpack.c.b16 %v10040, %v10038
    %v10213 = vpack.c.b16 %v10041, %v10039
    %v10214 = vpack.c.b16 %v10044, %v10042
    %v10215 = vpack.c.b16 %v10045, %v10043
    %v10216 = vpack.c.b16 %v10048, %v10046
    %v10217 = vpack.c.b16 %v10049, %v10047
    %v10218 = vpack.c.b16 %v10052, %v10050
    %v10219 = vpack.c.b16 %v10053, %v10051
    %v10220 = vpack.c.b16 %v10056, %v10054
    %v10221 = vpack.c.b16 %v10057, %v10055
    %v10222 = vpack.c.b16 %v10060, %v10058
    %v10223 = vpack.c.b16 %v10061, %v10059
    %v10224 = vpack.c.b16 %v10064, %v10062
    %v10225 = vpack.c.b16 %v10065, %v10063
    %v10226 = vpack.c.b16 %v10068, %v10066
    %v10227 = vpack.c.b16 %v10069, %v10067
    %v10228 = vpack.c.b16 %v10072, %v10070
    %v10229 = vpack.c.b16 %v10073, %v10071
    %v10230 = vpack.c.b16 %v10076, %v10074
    %v10231 = vpack.c.b16 %v10077, %v10075
    %v10232 = vpack.c.b16 %v10080, %v10078
    %v10233 = vpack.c.b16 %v10081, %v10079
    %v10234 = vpack.c.b16 %v10084, %v10082
    %v10235 = vpack.c.b16 %v10085, %v10083
    %v10236 = vpack.c.b16 %v10088, %v10086
    %v10237 = vpack.c.b16 %v10089, %v10087
    %v10238 = vpack.c.b16 %v10092, %v10090
    %v10239 = vpack.c.b16 %v10093, %v10091
    %v10240 = vpack.c.b16 %v10096, %v10094
    %v10241 = vpack.c.b16 %v10097, %v10095
    %v10242 = vpack.c.b16 %v10100, %v10098
    %v10243 = vpack.c.b16 %v10101, %v10099
    %v10244 = vpack.c.b16 %v10104, %v10102
    %v10245 = vpack.c.b16 %v10105, %v10103
    %v10246 = vpack.c.b16 %v10108, %v10106
    %v10247 = vpack.c.b16 %v10109, %v10107
    %v10248 = vpack.c.b16 %v10112, %v10110
    %v10249 = vpack.c.b16 %v10113, %v10111
    %v10250 = vpack.c.b16 %v10116, %v10114
    %v10251 = vpack.c.b16 %v10117, %v10115
    %v10252 = vpack.c.b16 %v10120, %v10118
    %v10253 = vpack.c.b16 %v10121, %v10119
    %v10254 = vpack.c.b16 %v10124, %v10122
    %v10255 = vpack.c.b16 %v10125, %v10123
    %v10256 = vpack.c.b16 %v10128, %v10126
    %v10257 = vpack.c.b16 %v10129, %v10127
    %v10258 = vpack.c.b16 %v10132, %v10130
    %v10259 = vpack.c.b16 %v10133, %v10131
    %v10260 = vpack.c.b16 %v10136, %v10134
    %v10261 = vpack.c.b16 %v10137, %v10135
    %v10262 = vpack.c.b16 %v10140, %v10138
    %v10263 = vpack.c.b16 %v10141, %v10139
    %v10264 = vpack.c.b16 %v10144, %v10142
    %v10265 = vpack.c.b16 %v10145, %v10143
    %v10266 = vpack.c.b16 %v10148, %v10146
    %v10267 = vpack.c.b16 %v10149, %v10147
    %v10268 = vpack.c.b16 %v10152, %v10150
    %v10269 = vpack.c.b16 %v10153, %v10151
    %v10270 = vpack.c.b16 %v10156, %v10154
    %v10271 = vpack.c.b16 %v10157, %v10155
    %v10272 = vpack.c.b16 %v10160, %v10158
    %v10273 = vpack.c.b16 %v10161, %v10159
    %v10274 = vpack.c.b16 %v10164, %v10162
    %v10275 = vpack.c.b16 %v10165, %v10163
    %v10276 = vpack.c.b16 %v10168, %v10166
    %v10277 = vpack.c.b16 %v10169, %v10167
    %v10278 = vpack.c.b16 %v10172, %v10170
    %v10279 = vpack.c.b16 %v10173, %v10171
    %v10280 = vpack.c.b16 %v10176, %v10174
    %v10281 = vpack.c.b16 %v10177, %v10175
    %v10282 = vpack.c.b16 %v10180, %v10178
    %v10283 = vpack.c.b16 %v10181, %v10179
    %v10284 = vpack.c.b16 %v10184, %v10182
    %v10285 = vpack.c.b16 %v10185, %v10183
    %v10286 = vpack.c.b16 %v10188, %v10186
    %v10287 = vpack.c.b16 %v10189, %v10187
    %v10288 = vpack.c.b16 %v10192, %v10190
    %v10289 = vpack.c.b16 %v10193, %v10191
    %10386 = vmatprep.subr.bf16.mxu0 %v10209
    %10387 = vmatpush1.bf16.msra.mxu0 %v10208
    %10388 = vmatprep.subr.bf16.mxu0 %v10207
    %10389 = vmatpush1.bf16.msra.mxu0 %v10206
    %10390 = vmatprep.subr.bf16.mxu0 %v10205
    %10391 = vmatpush1.bf16.msra.mxu0 %v10204
    %10392 = vmatprep.subr.bf16.mxu0 %v10203
    %10393 = vmatpush1.bf16.msra.mxu0 %v10202
    %10394 = vmatprep.subr.bf16.mxu0 %v10201
    %10395 = vmatpush1.bf16.msra.mxu0 %v10200
    %10396 = vmatprep.subr.bf16.mxu0 %v10199
    %10397 = vmatpush1.bf16.msra.mxu0 %v10198
    %10398 = vmatprep.subr.bf16.mxu0 %v10197
    %10399 = vmatpush1.bf16.msra.mxu0 %v10196
    %10400 = vmatprep.subr.bf16.mxu0 %v10195
    %10401 = vmatpush1.bf16.msra.mxu0 %v10194
    %10402 = vmatprep.subr.bf16.mxu0 %v10225
    %10403 = vmatpush2.bf16.msra.mxu0 %v10224
    %10404 = vmatprep.subr.bf16.mxu0 %v10223
    %10405 = vmatpush2.bf16.msra.mxu0 %v10222
    %10406 = vmatprep.subr.bf16.mxu0 %v10221
    %10407 = vmatpush2.bf16.msra.mxu0 %v10220
    %10408 = vmatprep.subr.bf16.mxu0 %v10219
    %10409 = vmatpush2.bf16.msra.mxu0 %v10218
    %10410 = vmatprep.subr.bf16.mxu0 %v10217
    %10411 = vmatpush2.bf16.msra.mxu0 %v10216
    %10412 = vmatprep.subr.bf16.mxu0 %v10215
    %10413 = vmatpush2.bf16.msra.mxu0 %v10214
    %10414 = vmatprep.subr.bf16.mxu0 %v10213
    %10415 = vmatpush2.bf16.msra.mxu0 %v10212
    %10416 = vmatprep.subr.bf16.mxu0 %v10211
    %10417 = vmatpush2.bf16.msra.mxu0 %v10210
    %10418 = vmatprep.mubr.bf16.mxu0 %v9890
    %10419 = vmatmul.mubr.bf16.gmra.mxu0 %v9882
    %v10420 = vpop.f32.mrf.mxu0
    %v10421 = vadd.f32 %v9866, %v10420
    %v10422 = vpop.f32.mrf.mxu0
    %v10423 = vadd.f32 %v9870, %v10422
    %v10424 = vpop.f32.mrf.mxu0
    %v10425 = vpop.f32.mrf.mxu0
    %10426 = vdwg.mxu0
    %10427 = vmatprep.subr.bf16.mxu0 %v10241
    %10428 = vmatpush1.bf16.msra.mxu0 %v10240
    %10429 = vmatprep.subr.bf16.mxu0 %v10239
    %10430 = vmatpush1.bf16.msra.mxu0 %v10238
    %10431 = vmatprep.subr.bf16.mxu0 %v10237
    %10432 = vmatpush1.bf16.msra.mxu0 %v10236
    %10433 = vmatprep.subr.bf16.mxu0 %v10235
    %10434 = vmatpush1.bf16.msra.mxu0 %v10234
    %10435 = vmatprep.subr.bf16.mxu0 %v10233
    %10436 = vmatpush1.bf16.msra.mxu0 %v10232
    %10437 = vmatprep.subr.bf16.mxu0 %v10231
    %10438 = vmatpush1.bf16.msra.mxu0 %v10230
    %10439 = vmatprep.subr.bf16.mxu0 %v10229
    %10440 = vmatpush1.bf16.msra.mxu0 %v10228
    %10441 = vmatprep.subr.bf16.mxu0 %v10227
    %10442 = vmatpush1.bf16.msra.mxu0 %v10226
    %10443 = vmatprep.subr.bf16.mxu0 %v10257
    %10444 = vmatpush2.bf16.msra.mxu0 %v10256
    %10445 = vmatprep.subr.bf16.mxu0 %v10255
    %10446 = vmatpush2.bf16.msra.mxu0 %v10254
    %10447 = vmatprep.subr.bf16.mxu0 %v10253
    %10448 = vmatpush2.bf16.msra.mxu0 %v10252
    %10449 = vmatprep.subr.bf16.mxu0 %v10251
    %10450 = vmatpush2.bf16.msra.mxu0 %v10250
    %10451 = vmatprep.subr.bf16.mxu0 %v10249
    %10452 = vmatpush2.bf16.msra.mxu0 %v10248
    %10453 = vmatprep.subr.bf16.mxu0 %v10247
    %10454 = vmatpush2.bf16.msra.mxu0 %v10246
    %10455 = vmatprep.subr.bf16.mxu0 %v10245
    %10456 = vmatpush2.bf16.msra.mxu0 %v10244
    %10457 = vmatprep.subr.bf16.mxu0 %v10243
    %10458 = vmatpush2.bf16.msra.mxu0 %v10242
    %10459 = vmatprep.mubr.bf16.mxu0 %v9891
    %10460 = vmatmul.mubr.bf16.gmra.mxu0 %v9889
    %v10461 = vpop.f32.mrf.mxu0
    %v10462 = vadd.f32 %v10421, %v10461
    %v10463 = vpop.f32.mrf.mxu0
    %v10464 = vadd.f32 %v10423, %v10463
    %v10465 = vpop.f32.mrf.mxu0
    %v10466 = vpop.f32.mrf.mxu0
    %10467 = vdwg.mxu0
    %10468 = vmatprep.subr.bf16.mxu0 %v10273
    %10469 = vmatpush1.bf16.msra.mxu0 %v10272
    %10470 = vmatprep.subr.bf16.mxu0 %v10271
    %10471 = vmatpush1.bf16.msra.mxu0 %v10270
    %10472 = vmatprep.subr.bf16.mxu0 %v10269
    %10473 = vmatpush1.bf16.msra.mxu0 %v10268
    %10474 = vmatprep.subr.bf16.mxu0 %v10267
    %10475 = vmatpush1.bf16.msra.mxu0 %v10266
    %10476 = vmatprep.subr.bf16.mxu0 %v10265
    %10477 = vmatpush1.bf16.msra.mxu0 %v10264
    %10478 = vmatprep.subr.bf16.mxu0 %v10263
    %10479 = vmatpush1.bf16.msra.mxu0 %v10262
    %10480 = vmatprep.subr.bf16.mxu0 %v10261
    %10481 = vmatpush1.bf16.msra.mxu0 %v10260
    %10482 = vmatprep.subr.bf16.mxu0 %v10259
    %10483 = vmatpush1.bf16.msra.mxu0 %v10258
    %10484 = vmatprep.subr.bf16.mxu0 %v10289
    %10485 = vmatpush2.bf16.msra.mxu0 %v10288
    %10486 = vmatprep.subr.bf16.mxu0 %v10287
    %10487 = vmatpush2.bf16.msra.mxu0 %v10286
    %10488 = vmatprep.subr.bf16.mxu0 %v10285
    %10489 = vmatpush2.bf16.msra.mxu0 %v10284
    %10490 = vmatprep.subr.bf16.mxu0 %v10283
    %10491 = vmatpush2.bf16.msra.mxu0 %v10282
    %10492 = vmatprep.subr.bf16.mxu0 %v10281
    %10493 = vmatpush2.bf16.msra.mxu0 %v10280
    %10494 = vmatprep.subr.bf16.mxu0 %v10279
    %10495 = vmatpush2.bf16.msra.mxu0 %v10278
    %10496 = vmatprep.subr.bf16.mxu0 %v10277
    %10497 = vmatpush2.bf16.msra.mxu0 %v10276
    %10498 = vmatprep.subr.bf16.mxu0 %v10275
    %10499 = vmatpush2.bf16.msra.mxu0 %v10274
    %10500 = vmatprep.mubr.bf16.mxu0 %v9899
    %10501 = vmatmul.mubr.bf16.gmra.mxu0 %v9898
    %v10502 = vpop.f32.mrf.mxu0
    %v10503 = vadd.f32 %v10462, %v10502
    %v10504 = vpop.f32.mrf.mxu0
    %v10505 = vadd.f32 %v10464, %v10504
    %v10506 = vpop.f32.mrf.mxu0
    %v10507 = vpop.f32.mrf.mxu0
    %10508 = vdwg.mxu0
    %v10509 = vmul.f32 %v10503, 0.2
    %v10510 = vmul.f32 %v10505, 0.2
    %v10511 = vmax.f32 %v10503, %v10509
    %v10512 = vmax.f32 %v10505, %v10510
    %v10513 = vld [vmem:[%s53] sm:$0xf]
    %10515 = vset.pattern.permute.xlu0 0
    %10516 = vperm.xlu0 %10515, %v10513
    %v10517 = vpop.permute.xlu0 %10516
    %v10519 = vmul.f32 %v10511, %v10517
    %v10520 = vmul.f32 %v10512, %v10517
    %v10523 = vrot.slane %v10519, 7
    %v10524 = vrot.slane %v10520, 7
    %10527 = vst [vmem:[#allocation16] sm:$0x1e] %v10523
    %10528 = vst [vmem:[#allocation16 + $0x8] sm:$0x1e] %v10524
    %v10529 = vld [vmem:[#allocation16] sm:$0xf]
    %v10530 = vld [vmem:[#allocation16 + $0x8] sm:$0xf]
    %v10531 = vpack.c.bf16 %v10529, %v10529
    %v10532 = vpack.c.bf16 %v10530, %v10530
    %v10535 = vcombine.low %v10531, %v10532
    %v10537 = vunpack.c.l.s4 1983009808
    %v10538 = vunpack.c.0.s8 %v10537
    %v10539 = vlaneseq
    %v10540 = vshrl.u32 %v10539, 7
    %v10541 = vsub.s32 %v10538, %v10540
    %v10542 = vrot.slane %v10535, %v10541
    %10544 = vst [vmem:[#allocation17] sm:$0xf] %v10542
    %v10545 = vld [vmem:[#allocation16] sm:$0x1e]
    %v10546 = vld [vmem:[#allocation16 + $0x8] sm:$0x1e]
    %v10547 = vpack.c.bf16 %v10545, %v10545
    %v10548 = vpack.c.bf16 %v10546, %v10546
    %v10551 = vcombine.low %v10547, %v10548
    %v10553 = vunpack.c.l.s4 1983009808
    %v10554 = vunpack.c.0.s8 %v10553
    %v10555 = vlaneseq
    %v10556 = vshrl.u32 %v10555, 7
    %v10557 = vsub.s32 %v10554, %v10556
    %v10558 = vrot.slane %v10551, %v10557
    %v10559 = vcombine.high %v10558, %v10558
    %v10561 = vshrl.u32 %v10558, 16
    %v10563 = vrot.slane %v10561, 6
    %v10564 = vshll.u32 %v10558, 16
    %v10566 = vrot.slane %v10564, 7
    %v10567 = vor.u32 %v10563, %v10566
    %v10568 = vrot.slane %v10567, 2
    %v10570 = vshll.u32 %v10559, 16
    %v10572 = vrot.slane %v10570, 7
    %v10573 = vsel %vm9718, %v10568, %v10572
    %10575 = vst [vmem:[#allocation17 + $0x4] sm:$0xf] %v10573
    %v10576 = vld [vmem:[#allocation16] sm:$0x3c]
    %v10577 = vld [vmem:[#allocation16 + $0x8] sm:$0x3c]
    %v10578 = vpack.c.bf16 %v10576, %v10576
    %v10579 = vpack.c.bf16 %v10577, %v10577
    %v10582 = vcombine.low %v10578, %v10579
    %v10584 = vunpack.c.l.s4 1983009808
    %v10585 = vunpack.c.0.s8 %v10584
    %v10586 = vlaneseq
    %v10587 = vshrl.u32 %v10586, 7
    %v10588 = vsub.s32 %v10585, %v10587
    %v10589 = vrot.slane %v10582, %v10588
    %v10590 = vcombine.high %v10589, %v10589
    %v10591 = vrot.slane %v10589, 7
    %v10592 = vrot.slane %v10591, 2
    %v10593 = vrot.slane %v10590, 7
    %v10594 = vsel %vm9756, %v10592, %v10593
    %10596 = vst [vmem:[#allocation17 + $0x8] sm:$0xf] %v10594
    %v10597 = vld [vmem:[#allocation17] sm:$0xff]
    %v10598 = vld [vmem:[#allocation17 + $0x8] sm:$0xf]
    %v10599 = vld [vmem:[#allocation28] sm:$0xff]
    %v10600 = vld [vmem:[#allocation28 + $0x8] sm:$0xff]
    %v10601 = vld [vmem:[#allocation28 + $0x10] sm:$0xff]
    %v10602 = vld [vmem:[#allocation28 + $0x18] sm:$0xff]
    %v10603 = vld [vmem:[#allocation28 + $0x20] sm:$0xff]
    %v10604 = vld [vmem:[#allocation28 + $0x28] sm:$0xff]
    %v10605 = vld [vmem:[#allocation28 + $0x30] sm:$0xff]
    %v10606 = vld [vmem:[#allocation28 + $0x38] sm:$0xff]
    %v10607 = vld [vmem:[#allocation28 + $0x40] sm:$0xff]
    %v10608 = vld [vmem:[#allocation28 + $0x48] sm:$0xff]
    %v10609 = vld [vmem:[#allocation28 + $0x50] sm:$0xff]
    %v10610 = vld [vmem:[#allocation28 + $0x58] sm:$0xff]
    %v10611 = vld [vmem:[#allocation28 + $0x60] sm:$0xff]
    %v10612 = vld [vmem:[#allocation28 + $0x68] sm:$0xff]
    %v10613 = vld [vmem:[#allocation28 + $0x70] sm:$0xff]
    %v10614 = vld [vmem:[#allocation28 + $0x78] sm:$0xff]
    %v10615 = vld [vmem:[#allocation28 + $0x80] sm:$0xff]
    %v10616 = vld [vmem:[#allocation28 + $0x88] sm:$0xff]
    %v10617 = vld [vmem:[#allocation28 + $0x90] sm:$0xff]
    %v10618 = vld [vmem:[#allocation28 + $0x98] sm:$0xff]
    %v10619 = vld [vmem:[#allocation28 + $0xa0] sm:$0xff]
    %v10620 = vld [vmem:[#allocation28 + $0xa8] sm:$0xff]
    %v10621 = vld [vmem:[#allocation28 + $0xb0] sm:$0xff]
    %v10622 = vld [vmem:[#allocation28 + $0xb8] sm:$0xff]
    %v10623 = vld [vmem:[#allocation28 + $0xc0] sm:$0xff]
    %v10624 = vld [vmem:[#allocation28 + $0xc8] sm:$0xff]
    %v10625 = vld [vmem:[#allocation28 + $0xd0] sm:$0xff]
    %v10626 = vld [vmem:[#allocation28 + $0xd8] sm:$0xff]
    %v10627 = vld [vmem:[#allocation28 + $0xe0] sm:$0xff]
    %v10628 = vld [vmem:[#allocation28 + $0xe8] sm:$0xff]
    %v10629 = vld [vmem:[#allocation28 + $0xf0] sm:$0xff]
    %v10630 = vld [vmem:[#allocation28 + $0xf8] sm:$0xff]
    %v10631 = vld [vmem:[#allocation28 + $0x100] sm:$0xff]
    %v10632 = vld [vmem:[#allocation28 + $0x108] sm:$0xff]
    %v10633 = vld [vmem:[#allocation28 + $0x110] sm:$0xff]
    %v10634 = vld [vmem:[#allocation28 + $0x118] sm:$0xff]
    %v10635 = vld [vmem:[#allocation28 + $0x120] sm:$0xff]
    %v10636 = vld [vmem:[#allocation28 + $0x128] sm:$0xff]
    %v10637 = vld [vmem:[#allocation28 + $0x130] sm:$0xff]
    %v10638 = vld [vmem:[#allocation28 + $0x138] sm:$0xff]
    %v10639 = vld [vmem:[#allocation28 + $0x140] sm:$0xff]
    %v10640 = vld [vmem:[#allocation28 + $0x148] sm:$0xff]
    %v10641 = vld [vmem:[#allocation28 + $0x150] sm:$0xff]
    %v10642 = vld [vmem:[#allocation28 + $0x158] sm:$0xff]
    %v10643 = vld [vmem:[#allocation28 + $0x160] sm:$0xff]
    %v10644 = vld [vmem:[#allocation28 + $0x168] sm:$0xff]
    %v10645 = vld [vmem:[#allocation28 + $0x170] sm:$0xff]
    %v10646 = vld [vmem:[#allocation28 + $0x178] sm:$0xff]
    %v10647 = vld [vmem:[#allocation28 + $0x180] sm:$0xff]
    %v10648 = vld [vmem:[#allocation28 + $0x188] sm:$0xff]
    %v10649 = vld [vmem:[#allocation28 + $0x190] sm:$0xff]
    %v10650 = vld [vmem:[#allocation28 + $0x198] sm:$0xff]
    %v10651 = vld [vmem:[#allocation28 + $0x1a0] sm:$0xff]
    %v10652 = vld [vmem:[#allocation28 + $0x1a8] sm:$0xff]
    %v10653 = vld [vmem:[#allocation28 + $0x1b0] sm:$0xff]
    %v10654 = vld [vmem:[#allocation28 + $0x1b8] sm:$0xff]
    %v10655 = vld [vmem:[#allocation28 + $0x1c0] sm:$0xff]
    %v10656 = vld [vmem:[#allocation28 + $0x1c8] sm:$0xff]
    %v10657 = vld [vmem:[#allocation28 + $0x1d0] sm:$0xff]
    %v10658 = vld [vmem:[#allocation28 + $0x1d8] sm:$0xff]
    %v10659 = vld [vmem:[#allocation28 + $0x1e0] sm:$0xff]
    %v10660 = vld [vmem:[#allocation28 + $0x1e8] sm:$0xff]
    %v10661 = vld [vmem:[#allocation28 + $0x1f0] sm:$0xff]
    %v10662 = vld [vmem:[#allocation28 + $0x1f8] sm:$0xff]
    %v10663 = vld [vmem:[#allocation28 + $0x200] sm:$0xff]
    %v10664 = vld [vmem:[#allocation28 + $0x208] sm:$0xff]
    %v10665 = vld [vmem:[#allocation28 + $0x210] sm:$0xff]
    %v10666 = vld [vmem:[#allocation28 + $0x218] sm:$0xff]
    %v10667 = vld [vmem:[#allocation28 + $0x220] sm:$0xff]
    %v10668 = vld [vmem:[#allocation28 + $0x228] sm:$0xff]
    %v10669 = vld [vmem:[#allocation28 + $0x230] sm:$0xff]
    %v10670 = vld [vmem:[#allocation28 + $0x238] sm:$0xff]
    %v10671 = vld [vmem:[#allocation28 + $0x240] sm:$0xff]
    %v10672 = vld [vmem:[#allocation28 + $0x248] sm:$0xff]
    %v10673 = vld [vmem:[#allocation28 + $0x250] sm:$0xff]
    %v10674 = vld [vmem:[#allocation28 + $0x258] sm:$0xff]
    %v10675 = vld [vmem:[#allocation28 + $0x260] sm:$0xff]
    %v10676 = vld [vmem:[#allocation28 + $0x268] sm:$0xff]
    %v10677 = vld [vmem:[#allocation28 + $0x270] sm:$0xff]
    %v10678 = vld [vmem:[#allocation28 + $0x278] sm:$0xff]
    %v10679 = vld [vmem:[#allocation28 + $0x280] sm:$0xff]
    %v10680 = vld [vmem:[#allocation28 + $0x288] sm:$0xff]
    %v10681 = vld [vmem:[#allocation28 + $0x290] sm:$0xff]
    %v10682 = vld [vmem:[#allocation28 + $0x298] sm:$0xff]
    %v10683 = vld [vmem:[#allocation28 + $0x2a0] sm:$0xff]
    %v10684 = vld [vmem:[#allocation28 + $0x2a8] sm:$0xff]
    %v10685 = vld [vmem:[#allocation28 + $0x2b0] sm:$0xff]
    %v10686 = vld [vmem:[#allocation28 + $0x2b8] sm:$0xff]
    %v10687 = vld [vmem:[#allocation28 + $0x2c0] sm:$0xff]
    %v10688 = vld [vmem:[#allocation28 + $0x2c8] sm:$0xff]
    %v10689 = vld [vmem:[#allocation28 + $0x2d0] sm:$0xff]
    %v10690 = vld [vmem:[#allocation28 + $0x2d8] sm:$0xff]
    %v10691 = vld [vmem:[#allocation28 + $0x2e0] sm:$0xff]
    %v10692 = vld [vmem:[#allocation28 + $0x2e8] sm:$0xff]
    %v10693 = vld [vmem:[#allocation28 + $0x2f0] sm:$0xff]
    %v10694 = vld [vmem:[#allocation28 + $0x2f8] sm:$0xff]
    %v10695 = vld [vmem:[%s51] sm:$0x3]
    %v10697 = vlaneseq
    %v10698 = vshrl.u32 %v10697, 7
    %v10699 = vsub.s32 0, %v10698
    %v10700 = vrot.slane %v10695, %v10699
    %v10701 = vlaneseq
    %v10702 = vshrl.u32 %v10701, 7
    %v10703 = vsub.s32 1, %v10702
    %v10704 = vrot.slane %v10695, %v10703
    %v10709 = vcombine.high %v10597, %v10597
    %v10711 = vunpack.c.l.s4 1983009808
    %v10712 = vunpack.c.0.s8 %v10711
    %v10713 = vlaneseq
    %v10714 = vshrl.u32 %v10713, 7
    %v10715 = vsub.s32 %v10712, %v10714
    %v10716 = vrot.slane %v10597, %v10715
    %v10718 = vunpack.c.l.s4 1983009808
    %v10719 = vunpack.c.0.s8 %v10718
    %v10720 = vlaneseq
    %v10721 = vshrl.u32 %v10720, 7
    %v10722 = vsub.s32 %v10719, %v10721
    %v10723 = vrot.slane %v10709, %v10722
    %v10724 = vcombine.high %v10716, %v10716
    %v10725 = vcombine.high %v10723, %v10723
    %v10727 = vunpack.c.l.s4 1983009808
    %v10728 = vunpack.c.0.s8 %v10727
    %v10729 = vlaneseq
    %v10730 = vshrl.u32 %v10729, 7
    %v10731 = vsub.s32 %v10728, %v10730
    %v10732 = vrot.slane %v10598, %v10731
    %v10733 = vcombine.high %v10732, %v10732
    %v10836 = vunpack.c.l.b16 %v10599
    %v10837 = vunpack.c.h.b16 %v10599
    %v10838 = vunpack.c.l.b16 %v10600
    %v10839 = vunpack.c.h.b16 %v10600
    %v10840 = vunpack.c.l.b16 %v10601
    %v10841 = vunpack.c.h.b16 %v10601
    %v10842 = vunpack.c.l.b16 %v10602
    %v10843 = vunpack.c.h.b16 %v10602
    %v10844 = vunpack.c.l.b16 %v10603
    %v10845 = vunpack.c.h.b16 %v10603
    %v10846 = vunpack.c.l.b16 %v10604
    %v10847 = vunpack.c.h.b16 %v10604
    %v10848 = vunpack.c.l.b16 %v10605
    %v10849 = vunpack.c.h.b16 %v10605
    %v10850 = vunpack.c.l.b16 %v10606
    %v10851 = vunpack.c.h.b16 %v10606
    %v10852 = vunpack.c.l.b16 %v10607
    %v10853 = vunpack.c.h.b16 %v10607
    %v10854 = vunpack.c.l.b16 %v10608
    %v10855 = vunpack.c.h.b16 %v10608
    %v10856 = vunpack.c.l.b16 %v10609
    %v10857 = vunpack.c.h.b16 %v10609
    %v10858 = vunpack.c.l.b16 %v10610
    %v10859 = vunpack.c.h.b16 %v10610
    %v10860 = vunpack.c.l.b16 %v10611
    %v10861 = vunpack.c.h.b16 %v10611
    %v10862 = vunpack.c.l.b16 %v10612
    %v10863 = vunpack.c.h.b16 %v10612
    %v10864 = vunpack.c.l.b16 %v10613
    %v10865 = vunpack.c.h.b16 %v10613
    %v10866 = vunpack.c.l.b16 %v10614
    %v10867 = vunpack.c.h.b16 %v10614
    %v10868 = vunpack.c.l.b16 %v10615
    %v10869 = vunpack.c.h.b16 %v10615
    %v10870 = vunpack.c.l.b16 %v10616
    %v10871 = vunpack.c.h.b16 %v10616
    %v10872 = vunpack.c.l.b16 %v10617
    %v10873 = vunpack.c.h.b16 %v10617
    %v10874 = vunpack.c.l.b16 %v10618
    %v10875 = vunpack.c.h.b16 %v10618
    %v10876 = vunpack.c.l.b16 %v10619
    %v10877 = vunpack.c.h.b16 %v10619
    %v10878 = vunpack.c.l.b16 %v10620
    %v10879 = vunpack.c.h.b16 %v10620
    %v10880 = vunpack.c.l.b16 %v10621
    %v10881 = vunpack.c.h.b16 %v10621
    %v10882 = vunpack.c.l.b16 %v10622
    %v10883 = vunpack.c.h.b16 %v10622
    %v10884 = vunpack.c.l.b16 %v10623
    %v10885 = vunpack.c.h.b16 %v10623
    %v10886 = vunpack.c.l.b16 %v10624
    %v10887 = vunpack.c.h.b16 %v10624
    %v10888 = vunpack.c.l.b16 %v10625
    %v10889 = vunpack.c.h.b16 %v10625
    %v10890 = vunpack.c.l.b16 %v10626
    %v10891 = vunpack.c.h.b16 %v10626
    %v10892 = vunpack.c.l.b16 %v10627
    %v10893 = vunpack.c.h.b16 %v10627
    %v10894 = vunpack.c.l.b16 %v10628
    %v10895 = vunpack.c.h.b16 %v10628
    %v10896 = vunpack.c.l.b16 %v10629
    %v10897 = vunpack.c.h.b16 %v10629
    %v10898 = vunpack.c.l.b16 %v10630
    %v10899 = vunpack.c.h.b16 %v10630
    %v10900 = vunpack.c.l.b16 %v10631
    %v10901 = vunpack.c.h.b16 %v10631
    %v10902 = vunpack.c.l.b16 %v10632
    %v10903 = vunpack.c.h.b16 %v10632
    %v10904 = vunpack.c.l.b16 %v10633
    %v10905 = vunpack.c.h.b16 %v10633
    %v10906 = vunpack.c.l.b16 %v10634
    %v10907 = vunpack.c.h.b16 %v10634
    %v10908 = vunpack.c.l.b16 %v10635
    %v10909 = vunpack.c.h.b16 %v10635
    %v10910 = vunpack.c.l.b16 %v10636
    %v10911 = vunpack.c.h.b16 %v10636
    %v10912 = vunpack.c.l.b16 %v10637
    %v10913 = vunpack.c.h.b16 %v10637
    %v10914 = vunpack.c.l.b16 %v10638
    %v10915 = vunpack.c.h.b16 %v10638
    %v10916 = vunpack.c.l.b16 %v10639
    %v10917 = vunpack.c.h.b16 %v10639
    %v10918 = vunpack.c.l.b16 %v10640
    %v10919 = vunpack.c.h.b16 %v10640
    %v10920 = vunpack.c.l.b16 %v10641
    %v10921 = vunpack.c.h.b16 %v10641
    %v10922 = vunpack.c.l.b16 %v10642
    %v10923 = vunpack.c.h.b16 %v10642
    %v10924 = vunpack.c.l.b16 %v10643
    %v10925 = vunpack.c.h.b16 %v10643
    %v10926 = vunpack.c.l.b16 %v10644
    %v10927 = vunpack.c.h.b16 %v10644
    %v10928 = vunpack.c.l.b16 %v10645
    %v10929 = vunpack.c.h.b16 %v10645
    %v10930 = vunpack.c.l.b16 %v10646
    %v10931 = vunpack.c.h.b16 %v10646
    %v10932 = vunpack.c.l.b16 %v10647
    %v10933 = vunpack.c.h.b16 %v10647
    %v10934 = vunpack.c.l.b16 %v10648
    %v10935 = vunpack.c.h.b16 %v10648
    %v10936 = vunpack.c.l.b16 %v10649
    %v10937 = vunpack.c.h.b16 %v10649
    %v10938 = vunpack.c.l.b16 %v10650
    %v10939 = vunpack.c.h.b16 %v10650
    %v10940 = vunpack.c.l.b16 %v10651
    %v10941 = vunpack.c.h.b16 %v10651
    %v10942 = vunpack.c.l.b16 %v10652
    %v10943 = vunpack.c.h.b16 %v10652
    %v10944 = vunpack.c.l.b16 %v10653
    %v10945 = vunpack.c.h.b16 %v10653
    %v10946 = vunpack.c.l.b16 %v10654
    %v10947 = vunpack.c.h.b16 %v10654
    %v10948 = vunpack.c.l.b16 %v10655
    %v10949 = vunpack.c.h.b16 %v10655
    %v10950 = vunpack.c.l.b16 %v10656
    %v10951 = vunpack.c.h.b16 %v10656
    %v10952 = vunpack.c.l.b16 %v10657
    %v10953 = vunpack.c.h.b16 %v10657
    %v10954 = vunpack.c.l.b16 %v10658
    %v10955 = vunpack.c.h.b16 %v10658
    %v10956 = vunpack.c.l.b16 %v10659
    %v10957 = vunpack.c.h.b16 %v10659
    %v10958 = vunpack.c.l.b16 %v10660
    %v10959 = vunpack.c.h.b16 %v10660
    %v10960 = vunpack.c.l.b16 %v10661
    %v10961 = vunpack.c.h.b16 %v10661
    %v10962 = vunpack.c.l.b16 %v10662
    %v10963 = vunpack.c.h.b16 %v10662
    %v10964 = vunpack.c.l.b16 %v10663
    %v10965 = vunpack.c.h.b16 %v10663
    %v10966 = vunpack.c.l.b16 %v10664
    %v10967 = vunpack.c.h.b16 %v10664
    %v10968 = vunpack.c.l.b16 %v10665
    %v10969 = vunpack.c.h.b16 %v10665
    %v10970 = vunpack.c.l.b16 %v10666
    %v10971 = vunpack.c.h.b16 %v10666
    %v10972 = vunpack.c.l.b16 %v10667
    %v10973 = vunpack.c.h.b16 %v10667
    %v10974 = vunpack.c.l.b16 %v10668
    %v10975 = vunpack.c.h.b16 %v10668
    %v10976 = vunpack.c.l.b16 %v10669
    %v10977 = vunpack.c.h.b16 %v10669
    %v10978 = vunpack.c.l.b16 %v10670
    %v10979 = vunpack.c.h.b16 %v10670
    %v10980 = vunpack.c.l.b16 %v10671
    %v10981 = vunpack.c.h.b16 %v10671
    %v10982 = vunpack.c.l.b16 %v10672
    %v10983 = vunpack.c.h.b16 %v10672
    %v10984 = vunpack.c.l.b16 %v10673
    %v10985 = vunpack.c.h.b16 %v10673
    %v10986 = vunpack.c.l.b16 %v10674
    %v10987 = vunpack.c.h.b16 %v10674
    %v10988 = vunpack.c.l.b16 %v10675
    %v10989 = vunpack.c.h.b16 %v10675
    %v10990 = vunpack.c.l.b16 %v10676
    %v10991 = vunpack.c.h.b16 %v10676
    %v10992 = vunpack.c.l.b16 %v10677
    %v10993 = vunpack.c.h.b16 %v10677
    %v10994 = vunpack.c.l.b16 %v10678
    %v10995 = vunpack.c.h.b16 %v10678
    %v10996 = vunpack.c.l.b16 %v10679
    %v10997 = vunpack.c.h.b16 %v10679
    %v10998 = vunpack.c.l.b16 %v10680
    %v10999 = vunpack.c.h.b16 %v10680
    %v11000 = vunpack.c.l.b16 %v10681
    %v11001 = vunpack.c.h.b16 %v10681
    %v11002 = vunpack.c.l.b16 %v10682
    %v11003 = vunpack.c.h.b16 %v10682
    %v11004 = vunpack.c.l.b16 %v10683
    %v11005 = vunpack.c.h.b16 %v10683
    %v11006 = vunpack.c.l.b16 %v10684
    %v11007 = vunpack.c.h.b16 %v10684
    %v11008 = vunpack.c.l.b16 %v10685
    %v11009 = vunpack.c.h.b16 %v10685
    %v11010 = vunpack.c.l.b16 %v10686
    %v11011 = vunpack.c.h.b16 %v10686
    %v11012 = vunpack.c.l.b16 %v10687
    %v11013 = vunpack.c.h.b16 %v10687
    %v11014 = vunpack.c.l.b16 %v10688
    %v11015 = vunpack.c.h.b16 %v10688
    %v11016 = vunpack.c.l.b16 %v10689
    %v11017 = vunpack.c.h.b16 %v10689
    %v11018 = vunpack.c.l.b16 %v10690
    %v11019 = vunpack.c.h.b16 %v10690
    %v11020 = vunpack.c.l.b16 %v10691
    %v11021 = vunpack.c.h.b16 %v10691
    %v11022 = vunpack.c.l.b16 %v10692
    %v11023 = vunpack.c.h.b16 %v10692
    %v11024 = vunpack.c.l.b16 %v10693
    %v11025 = vunpack.c.h.b16 %v10693
    %v11026 = vunpack.c.l.b16 %v10694
    %v11027 = vunpack.c.h.b16 %v10694
    %v11028 = vpack.c.b16 %v10838, %v10836
    %v11029 = vpack.c.b16 %v10839, %v10837
    %v11030 = vpack.c.b16 %v10842, %v10840
    %v11031 = vpack.c.b16 %v10843, %v10841
    %v11032 = vpack.c.b16 %v10846, %v10844
    %v11033 = vpack.c.b16 %v10847, %v10845
    %v11034 = vpack.c.b16 %v10850, %v10848
    %v11035 = vpack.c.b16 %v10851, %v10849
    %v11036 = vpack.c.b16 %v10854, %v10852
    %v11037 = vpack.c.b16 %v10855, %v10853
    %v11038 = vpack.c.b16 %v10858, %v10856
    %v11039 = vpack.c.b16 %v10859, %v10857
    %v11040 = vpack.c.b16 %v10862, %v10860
    %v11041 = vpack.c.b16 %v10863, %v10861
    %v11042 = vpack.c.b16 %v10866, %v10864
    %v11043 = vpack.c.b16 %v10867, %v10865
    %v11044 = vpack.c.b16 %v10870, %v10868
    %v11045 = vpack.c.b16 %v10871, %v10869
    %v11046 = vpack.c.b16 %v10874, %v10872
    %v11047 = vpack.c.b16 %v10875, %v10873
    %v11048 = vpack.c.b16 %v10878, %v10876
    %v11049 = vpack.c.b16 %v10879, %v10877
    %v11050 = vpack.c.b16 %v10882, %v10880
    %v11051 = vpack.c.b16 %v10883, %v10881
    %v11052 = vpack.c.b16 %v10886, %v10884
    %v11053 = vpack.c.b16 %v10887, %v10885
    %v11054 = vpack.c.b16 %v10890, %v10888
    %v11055 = vpack.c.b16 %v10891, %v10889
    %v11056 = vpack.c.b16 %v10894, %v10892
    %v11057 = vpack.c.b16 %v10895, %v10893
    %v11058 = vpack.c.b16 %v10898, %v10896
    %v11059 = vpack.c.b16 %v10899, %v10897
    %v11060 = vpack.c.b16 %v10902, %v10900
    %v11061 = vpack.c.b16 %v10903, %v10901
    %v11062 = vpack.c.b16 %v10906, %v10904
    %v11063 = vpack.c.b16 %v10907, %v10905
    %v11064 = vpack.c.b16 %v10910, %v10908
    %v11065 = vpack.c.b16 %v10911, %v10909
    %v11066 = vpack.c.b16 %v10914, %v10912
    %v11067 = vpack.c.b16 %v10915, %v10913
    %v11068 = vpack.c.b16 %v10918, %v10916
    %v11069 = vpack.c.b16 %v10919, %v10917
    %v11070 = vpack.c.b16 %v10922, %v10920
    %v11071 = vpack.c.b16 %v10923, %v10921
    %v11072 = vpack.c.b16 %v10926, %v10924
    %v11073 = vpack.c.b16 %v10927, %v10925
    %v11074 = vpack.c.b16 %v10930, %v10928
    %v11075 = vpack.c.b16 %v10931, %v10929
    %v11076 = vpack.c.b16 %v10934, %v10932
    %v11077 = vpack.c.b16 %v10935, %v10933
    %v11078 = vpack.c.b16 %v10938, %v10936
    %v11079 = vpack.c.b16 %v10939, %v10937
    %v11080 = vpack.c.b16 %v10942, %v10940
    %v11081 = vpack.c.b16 %v10943, %v10941
    %v11082 = vpack.c.b16 %v10946, %v10944
    %v11083 = vpack.c.b16 %v10947, %v10945
    %v11084 = vpack.c.b16 %v10950, %v10948
    %v11085 = vpack.c.b16 %v10951, %v10949
    %v11086 = vpack.c.b16 %v10954, %v10952
    %v11087 = vpack.c.b16 %v10955, %v10953
    %v11088 = vpack.c.b16 %v10958, %v10956
    %v11089 = vpack.c.b16 %v10959, %v10957
    %v11090 = vpack.c.b16 %v10962, %v10960
    %v11091 = vpack.c.b16 %v10963, %v10961
    %v11092 = vpack.c.b16 %v10966, %v10964
    %v11093 = vpack.c.b16 %v10967, %v10965
    %v11094 = vpack.c.b16 %v10970, %v10968
    %v11095 = vpack.c.b16 %v10971, %v10969
    %v11096 = vpack.c.b16 %v10974, %v10972
    %v11097 = vpack.c.b16 %v10975, %v10973
    %v11098 = vpack.c.b16 %v10978, %v10976
    %v11099 = vpack.c.b16 %v10979, %v10977
    %v11100 = vpack.c.b16 %v10982, %v10980
    %v11101 = vpack.c.b16 %v10983, %v10981
    %v11102 = vpack.c.b16 %v10986, %v10984
    %v11103 = vpack.c.b16 %v10987, %v10985
    %v11104 = vpack.c.b16 %v10990, %v10988
    %v11105 = vpack.c.b16 %v10991, %v10989
    %v11106 = vpack.c.b16 %v10994, %v10992
    %v11107 = vpack.c.b16 %v10995, %v10993
    %v11108 = vpack.c.b16 %v10998, %v10996
    %v11109 = vpack.c.b16 %v10999, %v10997
    %v11110 = vpack.c.b16 %v11002, %v11000
    %v11111 = vpack.c.b16 %v11003, %v11001
    %v11112 = vpack.c.b16 %v11006, %v11004
    %v11113 = vpack.c.b16 %v11007, %v11005
    %v11114 = vpack.c.b16 %v11010, %v11008
    %v11115 = vpack.c.b16 %v11011, %v11009
    %v11116 = vpack.c.b16 %v11014, %v11012
    %v11117 = vpack.c.b16 %v11015, %v11013
    %v11118 = vpack.c.b16 %v11018, %v11016
    %v11119 = vpack.c.b16 %v11019, %v11017
    %v11120 = vpack.c.b16 %v11022, %v11020
    %v11121 = vpack.c.b16 %v11023, %v11021
    %v11122 = vpack.c.b16 %v11026, %v11024
    %v11123 = vpack.c.b16 %v11027, %v11025
    %11220 = vmatprep.subr.bf16.mxu0 %v11043
    %11221 = vmatpush1.bf16.msra.mxu0 %v11042
    %11222 = vmatprep.subr.bf16.mxu0 %v11041
    %11223 = vmatpush1.bf16.msra.mxu0 %v11040
    %11224 = vmatprep.subr.bf16.mxu0 %v11039
    %11225 = vmatpush1.bf16.msra.mxu0 %v11038
    %11226 = vmatprep.subr.bf16.mxu0 %v11037
    %11227 = vmatpush1.bf16.msra.mxu0 %v11036
    %11228 = vmatprep.subr.bf16.mxu0 %v11035
    %11229 = vmatpush1.bf16.msra.mxu0 %v11034
    %11230 = vmatprep.subr.bf16.mxu0 %v11033
    %11231 = vmatpush1.bf16.msra.mxu0 %v11032
    %11232 = vmatprep.subr.bf16.mxu0 %v11031
    %11233 = vmatpush1.bf16.msra.mxu0 %v11030
    %11234 = vmatprep.subr.bf16.mxu0 %v11029
    %11235 = vmatpush1.bf16.msra.mxu0 %v11028
    %11236 = vmatprep.subr.bf16.mxu0 %v11059
    %11237 = vmatpush2.bf16.msra.mxu0 %v11058
    %11238 = vmatprep.subr.bf16.mxu0 %v11057
    %11239 = vmatpush2.bf16.msra.mxu0 %v11056
    %11240 = vmatprep.subr.bf16.mxu0 %v11055
    %11241 = vmatpush2.bf16.msra.mxu0 %v11054
    %11242 = vmatprep.subr.bf16.mxu0 %v11053
    %11243 = vmatpush2.bf16.msra.mxu0 %v11052
    %11244 = vmatprep.subr.bf16.mxu0 %v11051
    %11245 = vmatpush2.bf16.msra.mxu0 %v11050
    %11246 = vmatprep.subr.bf16.mxu0 %v11049
    %11247 = vmatpush2.bf16.msra.mxu0 %v11048
    %11248 = vmatprep.subr.bf16.mxu0 %v11047
    %11249 = vmatpush2.bf16.msra.mxu0 %v11046
    %11250 = vmatprep.subr.bf16.mxu0 %v11045
    %11251 = vmatpush2.bf16.msra.mxu0 %v11044
    %11252 = vmatprep.mubr.bf16.mxu0 %v10724
    %11253 = vmatmul.mubr.bf16.gmra.mxu0 %v10716
    %v11254 = vpop.f32.mrf.mxu0
    %v11255 = vadd.f32 %v10700, %v11254
    %v11256 = vpop.f32.mrf.mxu0
    %v11257 = vadd.f32 %v10704, %v11256
    %v11258 = vpop.f32.mrf.mxu0
    %v11259 = vpop.f32.mrf.mxu0
    %11260 = vdwg.mxu0
    %11261 = vmatprep.subr.bf16.mxu0 %v11075
    %11262 = vmatpush1.bf16.msra.mxu0 %v11074
    %11263 = vmatprep.subr.bf16.mxu0 %v11073
    %11264 = vmatpush1.bf16.msra.mxu0 %v11072
    %11265 = vmatprep.subr.bf16.mxu0 %v11071
    %11266 = vmatpush1.bf16.msra.mxu0 %v11070
    %11267 = vmatprep.subr.bf16.mxu0 %v11069
    %11268 = vmatpush1.bf16.msra.mxu0 %v11068
    %11269 = vmatprep.subr.bf16.mxu0 %v11067
    %11270 = vmatpush1.bf16.msra.mxu0 %v11066
    %11271 = vmatprep.subr.bf16.mxu0 %v11065
    %11272 = vmatpush1.bf16.msra.mxu0 %v11064
    %11273 = vmatprep.subr.bf16.mxu0 %v11063
    %11274 = vmatpush1.bf16.msra.mxu0 %v11062
    %11275 = vmatprep.subr.bf16.mxu0 %v11061
    %11276 = vmatpush1.bf16.msra.mxu0 %v11060
    %11277 = vmatprep.subr.bf16.mxu0 %v11091
    %11278 = vmatpush2.bf16.msra.mxu0 %v11090
    %11279 = vmatprep.subr.bf16.mxu0 %v11089
    %11280 = vmatpush2.bf16.msra.mxu0 %v11088
    %11281 = vmatprep.subr.bf16.mxu0 %v11087
    %11282 = vmatpush2.bf16.msra.mxu0 %v11086
    %11283 = vmatprep.subr.bf16.mxu0 %v11085
    %11284 = vmatpush2.bf16.msra.mxu0 %v11084
    %11285 = vmatprep.subr.bf16.mxu0 %v11083
    %11286 = vmatpush2.bf16.msra.mxu0 %v11082
    %11287 = vmatprep.subr.bf16.mxu0 %v11081
    %11288 = vmatpush2.bf16.msra.mxu0 %v11080
    %11289 = vmatprep.subr.bf16.mxu0 %v11079
    %11290 = vmatpush2.bf16.msra.mxu0 %v11078
    %11291 = vmatprep.subr.bf16.mxu0 %v11077
    %11292 = vmatpush2.bf16.msra.mxu0 %v11076
    %11293 = vmatprep.mubr.bf16.mxu0 %v10725
    %11294 = vmatmul.mubr.bf16.gmra.mxu0 %v10723
    %v11295 = vpop.f32.mrf.mxu0
    %v11296 = vadd.f32 %v11255, %v11295
    %v11297 = vpop.f32.mrf.mxu0
    %v11298 = vadd.f32 %v11257, %v11297
    %v11299 = vpop.f32.mrf.mxu0
    %v11300 = vpop.f32.mrf.mxu0
    %11301 = vdwg.mxu0
    %11302 = vmatprep.subr.bf16.mxu0 %v11107
    %11303 = vmatpush1.bf16.msra.mxu0 %v11106
    %11304 = vmatprep.subr.bf16.mxu0 %v11105
    %11305 = vmatpush1.bf16.msra.mxu0 %v11104
    %11306 = vmatprep.subr.bf16.mxu0 %v11103
    %11307 = vmatpush1.bf16.msra.mxu0 %v11102
    %11308 = vmatprep.subr.bf16.mxu0 %v11101
    %11309 = vmatpush1.bf16.msra.mxu0 %v11100
    %11310 = vmatprep.subr.bf16.mxu0 %v11099
    %11311 = vmatpush1.bf16.msra.mxu0 %v11098
    %11312 = vmatprep.subr.bf16.mxu0 %v11097
    %11313 = vmatpush1.bf16.msra.mxu0 %v11096
    %11314 = vmatprep.subr.bf16.mxu0 %v11095
    %11315 = vmatpush1.bf16.msra.mxu0 %v11094
    %11316 = vmatprep.subr.bf16.mxu0 %v11093
    %11317 = vmatpush1.bf16.msra.mxu0 %v11092
    %11318 = vmatprep.subr.bf16.mxu0 %v11123
    %11319 = vmatpush2.bf16.msra.mxu0 %v11122
    %11320 = vmatprep.subr.bf16.mxu0 %v11121
    %11321 = vmatpush2.bf16.msra.mxu0 %v11120
    %11322 = vmatprep.subr.bf16.mxu0 %v11119
    %11323 = vmatpush2.bf16.msra.mxu0 %v11118
    %11324 = vmatprep.subr.bf16.mxu0 %v11117
    %11325 = vmatpush2.bf16.msra.mxu0 %v11116
    %11326 = vmatprep.subr.bf16.mxu0 %v11115
    %11327 = vmatpush2.bf16.msra.mxu0 %v11114
    %11328 = vmatprep.subr.bf16.mxu0 %v11113
    %11329 = vmatpush2.bf16.msra.mxu0 %v11112
    %11330 = vmatprep.subr.bf16.mxu0 %v11111
    %11331 = vmatpush2.bf16.msra.mxu0 %v11110
    %11332 = vmatprep.subr.bf16.mxu0 %v11109
    %11333 = vmatpush2.bf16.msra.mxu0 %v11108
    %11334 = vmatprep.mubr.bf16.mxu0 %v10733
    %11335 = vmatmul.mubr.bf16.gmra.mxu0 %v10732
    %v11336 = vpop.f32.mrf.mxu0
    %v11337 = vadd.f32 %v11296, %v11336
    %v11338 = vpop.f32.mrf.mxu0
    %v11339 = vadd.f32 %v11298, %v11338
    %v11340 = vpop.f32.mrf.mxu0
    %v11341 = vpop.f32.mrf.mxu0
    %11342 = vdwg.mxu0
    %v11343 = vmul.f32 %v11337, 0.2
    %v11344 = vmul.f32 %v11339, 0.2
    %v11345 = vmax.f32 %v11337, %v11343
    %v11346 = vmax.f32 %v11339, %v11344
    %v11347 = vpack.c.bf16 %v11345, %v11345
    %v11348 = vpack.c.bf16 %v11346, %v11346
    %v11349 = vld [vmem:[%s55] sm:$0xf]
    %v11350 = vld [vmem:[%s55 + $0x4] sm:$0xf]
    %v11351 = vld [vmem:[%s55 + $0x8] sm:$0xf]
    %v11352 = vld [vmem:[%s55 + $0xc] sm:$0xf]
    %v11353 = vld [vmem:[%s55 + $0x10] sm:$0xf]
    %v11354 = vld [vmem:[%s55 + $0x14] sm:$0xf]
    %v11355 = vld [vmem:[%s55 + $0x18] sm:$0xf]
    %v11356 = vld [vmem:[%s55 + $0x1c] sm:$0xf]
    %v11357 = vld [vmem:[%s55 + $0x20] sm:$0xf]
    %v11358 = vld [vmem:[%s55 + $0x24] sm:$0xf]
    %v11359 = vld [vmem:[%s55 + $0x28] sm:$0xf]
    %v11360 = vld [vmem:[%s55 + $0x2c] sm:$0xf]
    %v11361 = vld [vmem:[%s55 + $0x30] sm:$0xf]
    %v11362 = vld [vmem:[%s55 + $0x34] sm:$0xf]
    %v11363 = vld [vmem:[%s55 + $0x38] sm:$0xf]
    %v11364 = vld [vmem:[%s55 + $0x3c] sm:$0xf]
    %v11365 = vld [vmem:[%s55 + $0x40] sm:$0xf]
    %v11366 = vld [vmem:[%s55 + $0x44] sm:$0xf]
    %v11367 = vld [vmem:[%s55 + $0x48] sm:$0xf]
    %v11368 = vld [vmem:[%s55 + $0x4c] sm:$0xf]
    %v11369 = vld [vmem:[%s55 + $0x50] sm:$0xf]
    %v11370 = vld [vmem:[%s55 + $0x54] sm:$0xf]
    %v11371 = vld [vmem:[%s55 + $0x58] sm:$0xf]
    %v11372 = vld [vmem:[%s55 + $0x5c] sm:$0xf]
    %v11373 = vld [vmem:[%s55 + $0x60] sm:$0xf]
    %v11374 = vld [vmem:[%s55 + $0x64] sm:$0xf]
    %v11375 = vld [vmem:[%s55 + $0x68] sm:$0xf]
    %v11376 = vld [vmem:[%s55 + $0x6c] sm:$0xf]
    %v11377 = vld [vmem:[%s55 + $0x70] sm:$0xf]
    %v11378 = vld [vmem:[%s55 + $0x74] sm:$0xf]
    %v11379 = vld [vmem:[%s55 + $0x78] sm:$0xf]
    %v11380 = vld [vmem:[%s55 + $0x7c] sm:$0xf]
    %v11381 = vld [vmem:[%s57] sm:$0x1]
    %v11383 = vlaneseq
    %v11384 = vshrl.u32 %v11383, 7
    %v11385 = vsub.s32 0, %v11384
    %v11386 = vrot.slane %v11381, %v11385
    %v11420 = vunpack.c.l.b16 %v11349
    %v11421 = vunpack.c.l.b16 %v11350
    %v11422 = vunpack.c.l.b16 %v11351
    %v11423 = vunpack.c.l.b16 %v11352
    %v11424 = vunpack.c.l.b16 %v11353
    %v11425 = vunpack.c.l.b16 %v11354
    %v11426 = vunpack.c.l.b16 %v11355
    %v11427 = vunpack.c.l.b16 %v11356
    %v11428 = vunpack.c.l.b16 %v11357
    %v11429 = vunpack.c.l.b16 %v11358
    %v11430 = vunpack.c.l.b16 %v11359
    %v11431 = vunpack.c.l.b16 %v11360
    %v11432 = vunpack.c.l.b16 %v11361
    %v11433 = vunpack.c.l.b16 %v11362
    %v11434 = vunpack.c.l.b16 %v11363
    %v11435 = vunpack.c.l.b16 %v11364
    %v11436 = vunpack.c.l.b16 %v11365
    %v11437 = vunpack.c.l.b16 %v11366
    %v11438 = vunpack.c.l.b16 %v11367
    %v11439 = vunpack.c.l.b16 %v11368
    %v11440 = vunpack.c.l.b16 %v11369
    %v11441 = vunpack.c.l.b16 %v11370
    %v11442 = vunpack.c.l.b16 %v11371
    %v11443 = vunpack.c.l.b16 %v11372
    %v11444 = vunpack.c.l.b16 %v11373
    %v11445 = vunpack.c.l.b16 %v11374
    %v11446 = vunpack.c.l.b16 %v11375
    %v11447 = vunpack.c.l.b16 %v11376
    %v11448 = vunpack.c.l.b16 %v11377
    %v11449 = vunpack.c.l.b16 %v11378
    %v11450 = vunpack.c.l.b16 %v11379
    %v11451 = vunpack.c.l.b16 %v11380
    %v11452 = vpack.c.b16 %v11421, %v11420
    %v11453 = vpack.c.b16 %v11423, %v11422
    %v11454 = vpack.c.b16 %v11425, %v11424
    %v11455 = vpack.c.b16 %v11427, %v11426
    %v11456 = vpack.c.b16 %v11429, %v11428
    %v11457 = vpack.c.b16 %v11431, %v11430
    %v11458 = vpack.c.b16 %v11433, %v11432
    %v11459 = vpack.c.b16 %v11435, %v11434
    %v11460 = vpack.c.b16 %v11437, %v11436
    %v11461 = vpack.c.b16 %v11439, %v11438
    %v11462 = vpack.c.b16 %v11441, %v11440
    %v11463 = vpack.c.b16 %v11443, %v11442
    %v11464 = vpack.c.b16 %v11445, %v11444
    %v11465 = vpack.c.b16 %v11447, %v11446
    %v11466 = vpack.c.b16 %v11449, %v11448
    %v11467 = vpack.c.b16 %v11451, %v11450
    %11484 = vmatprep.subr.bf16.mxu0 0
    %11485 = vmatpush1.bf16.msra.mxu0 %v11459
    %11486 = vmatprep.subr.bf16.mxu0 0
    %11487 = vmatpush1.bf16.msra.mxu0 %v11458
    %11488 = vmatprep.subr.bf16.mxu0 0
    %11489 = vmatpush1.bf16.msra.mxu0 %v11457
    %11490 = vmatprep.subr.bf16.mxu0 0
    %11491 = vmatpush1.bf16.msra.mxu0 %v11456
    %11492 = vmatprep.subr.bf16.mxu0 0
    %11493 = vmatpush1.bf16.msra.mxu0 %v11455
    %11494 = vmatprep.subr.bf16.mxu0 0
    %11495 = vmatpush1.bf16.msra.mxu0 %v11454
    %11496 = vmatprep.subr.bf16.mxu0 0
    %11497 = vmatpush1.bf16.msra.mxu0 %v11453
    %11498 = vmatprep.subr.bf16.mxu0 0
    %11499 = vmatpush1.bf16.msra.mxu0 %v11452
    %11500 = vmatprep.subr.bf16.mxu0 0
    %11501 = vmatpush2.bf16.msra.mxu0 %v11467
    %11502 = vmatprep.subr.bf16.mxu0 0
    %11503 = vmatpush2.bf16.msra.mxu0 %v11466
    %11504 = vmatprep.subr.bf16.mxu0 0
    %11505 = vmatpush2.bf16.msra.mxu0 %v11465
    %11506 = vmatprep.subr.bf16.mxu0 0
    %11507 = vmatpush2.bf16.msra.mxu0 %v11464
    %11508 = vmatprep.subr.bf16.mxu0 0
    %11509 = vmatpush2.bf16.msra.mxu0 %v11463
    %11510 = vmatprep.subr.bf16.mxu0 0
    %11511 = vmatpush2.bf16.msra.mxu0 %v11462
    %11512 = vmatprep.subr.bf16.mxu0 0
    %11513 = vmatpush2.bf16.msra.mxu0 %v11461
    %11514 = vmatprep.subr.bf16.mxu0 0
    %11515 = vmatpush2.bf16.msra.mxu0 %v11460
    %11516 = vmatprep.mubr.bf16.mxu0 %v11348
    %11517 = vmatmul.mubr.bf16.gmra.mxu0 %v11347
    %v11518 = vpop.f32.mrf.mxu0
    %v11519 = vadd.f32 %v11386, %v11518
    %v11520 = vpop.f32.mrf.mxu0
    %v11521 = vpop.f32.mrf.mxu0
    %v11522 = vpop.f32.mrf.mxu0
    %11523 = vdwg.mxu0
    %11524 = vst [vmem:[%s59] sm:$0xf] %v11519
    // Predicated region
    $region150: #{_lambda_.1} parent=1 // pred_check
      _
    $region151: #{_lambda_.1} parent=1 // pred_check_branch
      %11526 = sbr.rel (0) target = $region153
    $region152: #{_lambda_.1} parent=1 // pred_region
      _
    $region153: #{_lambda_.1} parent=1 // pred_fallthru
      _
    // Predicated region
    $region154: #{_lambda_.1} parent=1 // pred_check
      _
    $region155: #{_lambda_.1} parent=1 // pred_check_branch
      %11528 = sbr.rel (0) target = $region157
    $region156: #{_lambda_.1} parent=1 // pred_region
      _
    $region157: #{_lambda_.1} parent=1 // pred_fallthru
      _
    %11529 = vsyncpa [#allocation19], 1
    %11530 = vsyncpa [#allocation21], 1
    %11531 = vsyncpa [#allocation24], 1
    %11532 = vsyncpa [#allocation27], 1

</llo_original>
